<compile_context>
chip_gen: v5e
topology: v5e:2x2
jax: 0.10.0
libtpu: 0.0.40
codegen_flags: <defaults>
</compile_context>

<pallas_src>
import functools

import jax
import jax.numpy as jnp
from jax.experimental import pallas as pl
from jax.experimental.pallas import tpu as pltpu

_BN_EPS = 1e-5
_LANE = 128


def _round_up(x, m):
    return (x + m - 1) // m * m


def _conv3x3_taps(flat_in, w_ref, rows_out, wp):
    """3x3 conv as 9 shifted-row matmuls on a row-flattened (rows*(W+2), C) tile.

    flat_in: ((rows_out + 2) * wp + slack, C) value.
    w_ref:   (3, 3, C, Cout) VMEM ref.
    Returns f32 (rows_out * wp, Cout) "wide" accumulator; the last 2 columns of each
    output row are wrap-around garbage and are discarded by the caller.
    """
    p = rows_out * wp
    cout = w_ref.shape[-1]
    acc = jnp.zeros((p, cout), jnp.float32)
    for dy in range(3):
        for dx in range(3):
            off = dy * wp + dx
            acc = acc + jnp.dot(flat_in[off:off + p, :], w_ref[dy, dx],
                                preferred_element_type=jnp.float32)
    return acc


def _double_conv_kernel(x_hbm, w1_ref, w2_ref, s1_ref, b1_ref, s2_ref, b2_ref,
                        o_ref, x_tile, h_tile, dma_sem, *, H, W, TH):
    """Fused (conv3x3 -> affine -> ReLU) x2 for one (batch, row-tile) grid step.

    x_hbm:  (N, H+4, W+2, C1) padded NHWC input, left in HBM (pl.ANY).
    w*_ref: (3, 3, Cin, Cout) weights in VMEM (constant block, stays resident).
    s*/b*:  (1, Cout) folded BN scale / bias in VMEM.
    o_ref:  (1, TH, W, C2) output block (auto-pipelined, lane-dense C2).
    x_tile: (TH+5, W+2, C1) VMEM scratch: input row tile + 2-row halo + slack row.
    h_tile: (TH+3, W+2, C2) VMEM scratch: intermediate tile incl. conv2's zero
            padding (col 0, col W+1, out-of-image rows) + slack row.
    """
    wp = W + 2
    n = pl.program_id(0)
    r = pl.program_id(1)
    row0 = pl.multiple_of(r * TH, TH)          # first output row of this tile

    c1 = x_tile.shape[-1]
    c2 = o_ref.shape[-1]

    # Slack row is only read by discarded wrap-around flat positions; keep it
    # deterministic.  Written before issuing the DMA (no overlap hazard).
    x_tile[TH + 4] = jnp.zeros((wp, c1), x_tile.dtype)

    # Fetch padded-input rows [row0, row0 + TH + 4): this tile's output rows plus a
    # 2-row halo each side (1 per conv).  Always in bounds: wrapper padded 2 rows.
    cp = pltpu.make_async_copy(x_hbm.at[n, pl.ds(row0, TH + 4)],
                               x_tile.at[pl.ds(0, TH + 4)],
                               dma_sem)
    cp.start()

    # Overlap with the DMA: clear the intermediate buffer (its borders are conv2's
    # zero padding, so they must be exactly zero).
    h_tile[...] = jnp.zeros_like(h_tile)

    cp.wait()

    # ---- conv1 + BN + ReLU: TH+2 intermediate rows (1-row halo for conv2) ----
    x_flat = x_tile[...].reshape((TH + 5) * wp, c1)
    acc1 = _conv3x3_taps(x_flat, w1_ref, TH + 2, wp)
    y1 = jnp.maximum(acc1 * s1_ref[...] + b1_ref[...], 0.0)
    y1 = y1.reshape(TH + 2, wp, c2)[:, :W, :]
    # Intermediate rows falling outside the image are conv2's zero padding.
    g_row = jax.lax.broadcasted_iota(jnp.int32, (TH + 2, 1), 0) + (row0 - 1)
    in_image = jnp.logical_and(g_row >= 0, g_row < H).reshape(TH + 2, 1, 1)
    y1 = y1 * in_image.astype(y1.dtype)
    h_tile[pl.ds(0, TH + 2), pl.ds(1, W), :] = y1.astype(h_tile.dtype)

    # ---- conv2 + BN + ReLU: the TH output rows of this tile ----
    h_flat = h_tile[...].reshape((TH + 3) * wp, c2)
    acc2 = _conv3x3_taps(h_flat, w2_ref, TH, wp)
    y2 = jnp.maximum(acc2 * s2_ref[...] + b2_ref[...], 0.0)
    o_ref[0] = y2.reshape(TH, wp, c2)[:, :W, :].astype(o_ref.dtype)


def _pick_tile_h(H, W, c1, c2, itemsize, budget_bytes=20 * 1024 * 1024):
    """Largest divisor of H whose fused tile fits a conservative (v7x-safe) VMEM budget."""
    weights = 9 * (c1 + c2) * c2 * itemsize
    for th in sorted((d for d in range(1, H + 1) if H % d == 0), reverse=True):
        tile = ((th + 5) * (W + 2) * c1          # input tile (+halo, +slack)
                + (th + 3) * (W + 2) * c2        # intermediate tile
                + 2 * th * W * c2                # double-buffered output block
                ) * itemsize
        if tile + weights <= budget_bytes:
            return th
    return 1


def _fold_bn(conv_b, gamma, beta, mean, var):
    scale = gamma / jnp.sqrt(var + _BN_EPS)
    bias = (conv_b - mean) * scale + beta
    return scale, bias


def _prep_conv(w_oihw, b, gamma, beta, mean, var, cin_p, cout_p, dtype):
    """PyTorch (out,in,3,3) conv weight + BN -> padded (3,3,cin_p,cout_p) weight and
    (1,cout_p) folded affine scale/bias (zero in padded channels)."""
    out_ch, in_ch = w_oihw.shape[0], w_oihw.shape[1]
    w = jnp.transpose(w_oihw, (2, 3, 1, 0))                     # (3,3,in,out)
    w = jnp.pad(w, ((0, 0), (0, 0), (0, cin_p - in_ch), (0, cout_p - out_ch)))
    scale, bias = _fold_bn(b, gamma, beta, mean, var)
    scale = jnp.pad(scale, (0, cout_p - out_ch)).reshape(1, cout_p)
    bias = jnp.pad(bias, (0, cout_p - out_ch)).reshape(1, cout_p)
    return w.astype(dtype), scale.astype(jnp.float32), bias.astype(jnp.float32)


@functools.partial(jax.jit, static_argnames=("tile_h", "compute_dtype"))
def double_conv(x_nchw, params, tile_h=None, compute_dtype=jnp.float32):
    """PyTorch-equivalent DoubleConv forward.  Input/output are NCHW float32.

    BatchNorm runs in inference mode (running stats folded into a per-channel affine).
    """
    N, in_ch, H, W = x_nchw.shape
    out_ch = params["w1"].shape[0]
    c1 = _round_up(in_ch, _LANE)
    c2 = _round_up(out_ch, _LANE)

    w1, s1, b1 = _prep_conv(params["w1"], params["b1"], params["g1"],
                            params["beta1"], params["m1"], params["v1"],
                            c1, c2, compute_dtype)
    w2, s2, b2 = _prep_conv(params["w2"], params["b2"], params["g2"],
                            params["beta2"], params["m2"], params["v2"],
                            c2, c2, compute_dtype)

    # Single layout op: NCHW -> NHWC, 2-row / 1-col halo, channel pad to lane-dense 128.
    # TODO(synk): in a full NHWC UNet keep activations NHWC/channel-padded end-to-end and
    # drop this transpose+pad from the per-block hot path.
    x = jnp.transpose(x_nchw, (0, 2, 3, 1))
    x = jnp.pad(x, ((0, 0), (2, 2), (1, 1), (0, c1 - in_ch))).astype(compute_dtype)

    itemsize = jnp.dtype(compute_dtype).itemsize
    TH = _pick_tile_h(H, W, c1, c2, itemsize) if tile_h is None else tile_h
    if H % TH != 0:
        raise ValueError(f"tile_h={TH} must divide H={H}")
    R = H // TH

    flops = 2 * 9 * N * H * W * (c1 + c2) * c2
    bytes_accessed = (x.size * itemsize + (w1.size + w2.size) * itemsize
                      + N * H * W * c2 * 4)

    out = pl.pallas_call(
        functools.partial(_double_conv_kernel, H=H, W=W, TH=TH),
        out_shape=jax.ShapeDtypeStruct((N, H, W, c2), jnp.float32),
        grid_spec=pltpu.PrefetchScalarGridSpec(
            num_scalar_prefetch=0,
            grid=(N, R),
            in_specs=[
                pl.BlockSpec(memory_space=pl.ANY),                        # x (HBM)
                pl.BlockSpec((3, 3, c1, c2), lambda n, r: (0, 0, 0, 0)),  # w1 (resident)
                pl.BlockSpec((3, 3, c2, c2), lambda n, r: (0, 0, 0, 0)),  # w2 (resident)
                pl.BlockSpec((1, c2), lambda n, r: (0, 0)),               # s1
                pl.BlockSpec((1, c2), lambda n, r: (0, 0)),               # b1
                pl.BlockSpec((1, c2), lambda n, r: (0, 0)),               # s2
                pl.BlockSpec((1, c2), lambda n, r: (0, 0)),               # b2
            ],
            out_specs=pl.BlockSpec((1, TH, W, c2), lambda n, r: (n, r, 0, 0)),
            scratch_shapes=[
                pltpu.VMEM((TH + 5, W + 2, c1), compute_dtype),   # input row tile
                pltpu.VMEM((TH + 3, W + 2, c2), compute_dtype),   # fused intermediate
                pltpu.SemaphoreType.DMA,
            ],
        ),
        compiler_params=pltpu.CompilerParams(
            dimension_semantics=("parallel", "parallel"),
            vmem_limit_bytes=32 * 1024 * 1024,
        ),
        cost_estimate=pl.CostEstimate(flops=flops, transcendentals=0,
                                      bytes_accessed=bytes_accessed),
    )(x, w1, w2, s1, b1, s2, b2)

    # Strip channel padding, NHWC -> NCHW for PyTorch parity.
    return jnp.transpose(out[..., :out_ch], (0, 3, 1, 2))


def make_params(key, in_ch, out_ch):
    """Deterministic parameters in PyTorch layouts (conv weight: (out, in, 3, 3))."""
    ks = jax.random.split(key, 4)
    return {
        "w1": 0.1 * jax.random.normal(ks[0], (out_ch, in_ch, 3, 3), jnp.float32),
        "b1": 0.05 * jax.random.normal(ks[1], (out_ch,), jnp.float32),
        "w2": 0.1 * jax.random.normal(ks[2], (out_ch, out_ch, 3, 3), jnp.float32),
        "b2": 0.05 * jax.random.normal(ks[3], (out_ch,), jnp.float32),
        # BatchNorm (inference mode; deterministic, non-trivial)
        "g1": 1.0 + 0.1 * jnp.arange(out_ch, dtype=jnp.float32),
        "beta1": 0.01 * jnp.arange(out_ch, dtype=jnp.float32),
        "m1": 0.02 * jnp.arange(out_ch, dtype=jnp.float32),
        "v1": 1.0 + 0.05 * jnp.arange(out_ch, dtype=jnp.float32),
        "g2": 1.0 - 0.05 * jnp.arange(out_ch, dtype=jnp.float32),
        "beta2": -0.01 * jnp.arange(out_ch, dtype=jnp.float32),
        "m2": -0.02 * jnp.arange(out_ch, dtype=jnp.float32),
        "v2": 1.0 + 0.03 * jnp.arange(out_ch, dtype=jnp.float32),
    }


def _reference(x_nchw, params):
    """Pure-JAX reference (lax conv, NCHW) for the sanity check."""
    def block(x, w, b, g, beta, m, v):
        y = jax.lax.conv_general_dilated(
            x, w, (1, 1), ((1, 1), (1, 1)),
            dimension_numbers=("NCHW", "OIHW", "NCHW"))
        y = y + b[None, :, None, None]
        y = (y - m[None, :, None, None]) / jnp.sqrt(v[None, :, None, None] + _BN_EPS)
        y = y * g[None, :, None, None] + beta[None, :, None, None]
        return jnp.maximum(y, 0.0)

    h = block(x_nchw, params["w1"], params["b1"], params["g1"],
              params["beta1"], params["m1"], params["v1"])
    return block(h, params["w2"], params["b2"], params["g2"],
                 params["beta2"], params["m2"], params["v2"])


if __name__ == "__main__":
    key = jax.random.PRNGKey(0)
    k_x, k_p = jax.random.split(key)

    N, in_ch, out_ch, H, W = 2, 4, 8, 16, 16
    x = jax.random.normal(k_x, (N, in_ch, H, W), jnp.float32)
    params = make_params(k_p, in_ch, out_ch)

    ref = _reference(x, params)

    # Multi-row-tile path (grid = (2, 2)): exercises halo DMA + boundary masking.
    out = jax.block_until_ready(double_conv(x, params, tile_h=8))
    assert out.shape == (N, out_ch, H, W)
    assert jnp.allclose(out, ref, atol=5e-4, rtol=5e-4), "mismatch vs reference (tile_h=8)"

    # Auto-picked tile height (single row tile per sample at this toy size).
    out2 = jax.block_until_ready(double_conv(x, params))
    assert jnp.allclose(out2, ref, atol=5e-4, rtol=5e-4), "mismatch vs reference (auto tile)"

    print("KERNEL_OK")
</pallas_src>

<mosaic_0001>
module attributes {stable_mosaic.version = 11 : i64} {
  func.func @_double_conv_kernel(%arg0: i32, %arg1: i32, %arg2: memref<2x20x18x128xf32, #tpu.memory_space<any>>, %arg3: memref<3x3x128x128xf32, #tpu.memory_space<vmem>>, %arg4: memref<3x3x128x128xf32, #tpu.memory_space<vmem>>, %arg5: memref<1x128xf32, #tpu.memory_space<vmem>>, %arg6: memref<1x128xf32, #tpu.memory_space<vmem>>, %arg7: memref<1x128xf32, #tpu.memory_space<vmem>>, %arg8: memref<1x128xf32, #tpu.memory_space<vmem>>, %arg9: memref<1x8x16x128xf32, #tpu.memory_space<vmem>>, %arg10: memref<13x18x128xf32, #tpu.memory_space<vmem>>, %arg11: memref<11x18x128xf32, #tpu.memory_space<vmem>>, %arg12: memref<!tpu.dma_semaphore, #tpu.memory_space<semaphore_mem>>) attributes {dimension_semantics = [#tpu.dimension_semantics<parallel>, #tpu.dimension_semantics<parallel>], iteration_bounds = array<i64: 2, 2>, scalar_prefetch = 0 : i64, scratch_operands = 3 : i64, tpu.core_type = #tpu.core_type<tc>, window_params = [{}, {pipeline_mode = #tpu.pipeline_mode<synchronous>, transform_indices = @transform_1, window_bounds = array<i64: 3, 3, 128, 128>}, {pipeline_mode = #tpu.pipeline_mode<synchronous>, transform_indices = @transform_2, window_bounds = array<i64: 3, 3, 128, 128>}, {pipeline_mode = #tpu.pipeline_mode<synchronous>, transform_indices = @transform_3, window_bounds = array<i64: 1, 128>}, {pipeline_mode = #tpu.pipeline_mode<synchronous>, transform_indices = @transform_4, window_bounds = array<i64: 1, 128>}, {pipeline_mode = #tpu.pipeline_mode<synchronous>, transform_indices = @transform_5, window_bounds = array<i64: 1, 128>}, {pipeline_mode = #tpu.pipeline_mode<synchronous>, transform_indices = @transform_6, window_bounds = array<i64: 1, 128>}, {transform_indices = @transform_7, window_bounds = array<i64: 1, 8, 16, 128>}]} {
    %c8_i32 = arith.constant 8 : i32
    %0 = arith.muli %arg1, %c8_i32 : i32
    %1 = tpu.assume_multiple %0, 8 : i32
    %cst = arith.constant 0.000000e+00 : f32
    %2 = vector.broadcast %cst : f32 to vector<18x128xf32>
    %c12 = arith.constant 12 : index
    %c0 = arith.constant 0 : index
    %c0_0 = arith.constant 0 : index
    %3 = vector.load %arg10[%c12, %c0, %c0_0] : memref<13x18x128xf32, #tpu.memory_space<vmem>>, vector<1x18x128xf32>
    %4 = vector.shape_cast %3 : vector<1x18x128xf32> to vector<18x128xf32>
    %5 = vector.shape_cast %2 : vector<18x128xf32> to vector<1x18x128xf32>
    tpu.vector_store %arg10[%c12, %c0, %c0_0], %5 {strides = array<i32>} : memref<13x18x128xf32, #tpu.memory_space<vmem>>, vector<1x18x128xf32>,
    %c0_i32 = arith.constant 0 : i32
    %c0_i32_1 = arith.constant 0 : i32
    %6 = tpu.memref_slice %arg2[%arg0, %1, %c0_i32, %c0_i32_1] : memref<2x20x18x128xf32, #tpu.memory_space<any>> -> memref<1x12x18x128xf32, #tpu.memory_space<any>>
    %7 = tpu.memref_squeeze %6 : memref<1x12x18x128xf32, #tpu.memory_space<any>> -> memref<12x18x128xf32, #tpu.memory_space<any>>
    %c0_i32_2 = arith.constant 0 : i32
    %c0_i32_3 = arith.constant 0 : i32
    %c0_i32_4 = arith.constant 0 : i32
    %8 = tpu.memref_slice %arg10[%c0_i32_2, %c0_i32_3, %c0_i32_4] : memref<13x18x128xf32, #tpu.memory_space<vmem>> -> memref<12x18x128xf32, #tpu.memory_space<vmem>>
    tpu.enqueue_dma source(%7 : memref<12x18x128xf32, #tpu.memory_space<any>>) target(%8 : memref<12x18x128xf32, #tpu.memory_space<vmem>>) target_semaphore(%arg12 : memref<!tpu.dma_semaphore, #tpu.memory_space<semaphore_mem>>)
    %cst_5 = arith.constant 0.000000e+00 : f32
    %9 = vector.broadcast %cst_5 : f32 to vector<11x18x128xf32>
    %c0_6 = arith.constant 0 : index
    %c0_7 = arith.constant 0 : index
    %c0_8 = arith.constant 0 : index
    %10 = vector.load %arg11[%c0_6, %c0_7, %c0_8] : memref<11x18x128xf32, #tpu.memory_space<vmem>>, vector<11x18x128xf32>
    tpu.vector_store %arg11[%c0_6, %c0_7, %c0_8], %9 {strides = array<i32>} : memref<11x18x128xf32, #tpu.memory_space<vmem>>, vector<11x18x128xf32>,
    %c0_i32_9 = arith.constant 0 : i32
    %c0_i32_10 = arith.constant 0 : i32
    %11 = tpu.memref_slice %arg2[%arg0, %1, %c0_i32_9, %c0_i32_10] : memref<2x20x18x128xf32, #tpu.memory_space<any>> -> memref<1x12x18x128xf32, #tpu.memory_space<any>>
    %12 = tpu.memref_squeeze %11 : memref<1x12x18x128xf32, #tpu.memory_space<any>> -> memref<12x18x128xf32, #tpu.memory_space<any>>
    %c0_i32_11 = arith.constant 0 : i32
    %c0_i32_12 = arith.constant 0 : i32
    %c0_i32_13 = arith.constant 0 : i32
    %13 = tpu.memref_slice %arg10[%c0_i32_11, %c0_i32_12, %c0_i32_13] : memref<13x18x128xf32, #tpu.memory_space<vmem>> -> memref<12x18x128xf32, #tpu.memory_space<vmem>>
    tpu.wait_dma2 semaphore(%arg12 : memref<!tpu.dma_semaphore, #tpu.memory_space<semaphore_mem>>) src(%12 : memref<12x18x128xf32, #tpu.memory_space<any>>) dst(%13 : memref<12x18x128xf32, #tpu.memory_space<vmem>>)
    %c0_14 = arith.constant 0 : index
    %c0_15 = arith.constant 0 : index
    %c0_16 = arith.constant 0 : index
    %14 = vector.load %arg10[%c0_14, %c0_15, %c0_16] : memref<13x18x128xf32, #tpu.memory_space<vmem>>, vector<13x18x128xf32>
    %15 = vector.shape_cast %14 : vector<13x18x128xf32> to vector<234x128xf32>
    %cst_17 = arith.constant 0.000000e+00 : f32
    %16 = vector.broadcast %cst_17 : f32 to vector<180x128xf32>
    %17 = vector.extract_strided_slice %15 {offsets = [0, 0], sizes = [180, 128], strides = [1, 1]} : vector<234x128xf32> to vector<180x128xf32>
    %c0_18 = arith.constant 0 : index
    %c0_19 = arith.constant 0 : index
    %c0_20 = arith.constant 0 : index
    %c0_21 = arith.constant 0 : index
    %18 = vector.load %arg3[%c0_18, %c0_19, %c0_20, %c0_21] : memref<3x3x128x128xf32, #tpu.memory_space<vmem>>, vector<1x1x128x128xf32>
    %19 = vector.shape_cast %18 : vector<1x1x128x128xf32> to vector<128x128xf32>
    %cst_22 = arith.constant dense<0.000000e+00> : vector<180x128xf32>
    %20 = tpu.matmul %17, %19, %cst_22 {dimension_numbers = #tpu.dot_dimension_numbers<[1], [0], [0], [1], [0, 0, 1, 1], [], []>} : vector<180x128xf32>, vector<128x128xf32>, vector<180x128xf32> -> vector<180x128xf32>
    %21 = arith.addf %16, %20 : vector<180x128xf32>
    %22 = vector.extract_strided_slice %15 {offsets = [1, 0], sizes = [180, 128], strides = [1, 1]} : vector<234x128xf32> to vector<180x128xf32>
    %c0_23 = arith.constant 0 : index
    %c1 = arith.constant 1 : index
    %c0_24 = arith.constant 0 : index
    %c0_25 = arith.constant 0 : index
    %23 = vector.load %arg3[%c0_23, %c1, %c0_24, %c0_25] : memref<3x3x128x128xf32, #tpu.memory_space<vmem>>, vector<1x1x128x128xf32>
    %24 = vector.shape_cast %23 : vector<1x1x128x128xf32> to vector<128x128xf32>
    %cst_26 = arith.constant dense<0.000000e+00> : vector<180x128xf32>
    %25 = tpu.matmul %22, %24, %cst_26 {dimension_numbers = #tpu.dot_dimension_numbers<[1], [0], [0], [1], [0, 0, 1, 1], [], []>} : vector<180x128xf32>, vector<128x128xf32>, vector<180x128xf32> -> vector<180x128xf32>
    %26 = arith.addf %21, %25 : vector<180x128xf32>
    %27 = vector.extract_strided_slice %15 {offsets = [2, 0], sizes = [180, 128], strides = [1, 1]} : vector<234x128xf32> to vector<180x128xf32>
    %c0_27 = arith.constant 0 : index
    %c2 = arith.constant 2 : index
    %c0_28 = arith.constant 0 : index
    %c0_29 = arith.constant 0 : index
    %28 = vector.load %arg3[%c0_27, %c2, %c0_28, %c0_29] : memref<3x3x128x128xf32, #tpu.memory_space<vmem>>, vector<1x1x128x128xf32>
    %29 = vector.shape_cast %28 : vector<1x1x128x128xf32> to vector<128x128xf32>
    %cst_30 = arith.constant dense<0.000000e+00> : vector<180x128xf32>
    %30 = tpu.matmul %27, %29, %cst_30 {dimension_numbers = #tpu.dot_dimension_numbers<[1], [0], [0], [1], [0, 0, 1, 1], [], []>} : vector<180x128xf32>, vector<128x128xf32>, vector<180x128xf32> -> vector<180x128xf32>
    %31 = arith.addf %26, %30 : vector<180x128xf32>
    %32 = vector.extract_strided_slice %15 {offsets = [18, 0], sizes = [180, 128], strides = [1, 1]} : vector<234x128xf32> to vector<180x128xf32>
    %c1_31 = arith.constant 1 : index
    %c0_32 = arith.constant 0 : index
    %c0_33 = arith.constant 0 : index
    %c0_34 = arith.constant 0 : index
    %33 = vector.load %arg3[%c1_31, %c0_32, %c0_33, %c0_34] : memref<3x3x128x128xf32, #tpu.memory_space<vmem>>, vector<1x1x128x128xf32>
    %34 = vector.shape_cast %33 : vector<1x1x128x128xf32> to vector<128x128xf32>
    %cst_35 = arith.constant dense<0.000000e+00> : vector<180x128xf32>
    %35 = tpu.matmul %32, %34, %cst_35 {dimension_numbers = #tpu.dot_dimension_numbers<[1], [0], [0], [1], [0, 0, 1, 1], [], []>} : vector<180x128xf32>, vector<128x128xf32>, vector<180x128xf32> -> vector<180x128xf32>
    %36 = arith.addf %31, %35 : vector<180x128xf32>
    %37 = vector.extract_strided_slice %15 {offsets = [19, 0], sizes = [180, 128], strides = [1, 1]} : vector<234x128xf32> to vector<180x128xf32>
    %c1_36 = arith.constant 1 : index
    %c1_37 = arith.constant 1 : index
    %c0_38 = arith.constant 0 : index
    %c0_39 = arith.constant 0 : index
    %38 = vector.load %arg3[%c1_36, %c1_37, %c0_38, %c0_39] : memref<3x3x128x128xf32, #tpu.memory_space<vmem>>, vector<1x1x128x128xf32>
    %39 = vector.shape_cast %38 : vector<1x1x128x128xf32> to vector<128x128xf32>
    %cst_40 = arith.constant dense<0.000000e+00> : vector<180x128xf32>
    %40 = tpu.matmul %37, %39, %cst_40 {dimension_numbers = #tpu.dot_dimension_numbers<[1], [0], [0], [1], [0, 0, 1, 1], [], []>} : vector<180x128xf32>, vector<128x128xf32>, vector<180x128xf32> -> vector<180x128xf32>
    %41 = arith.addf %36, %40 : vector<180x128xf32>
    %42 = vector.extract_strided_slice %15 {offsets = [20, 0], sizes = [180, 128], strides = [1, 1]} : vector<234x128xf32> to vector<180x128xf32>
    %c1_41 = arith.constant 1 : index
    %c2_42 = arith.constant 2 : index
    %c0_43 = arith.constant 0 : index
    %c0_44 = arith.constant 0 : index
    %43 = vector.load %arg3[%c1_41, %c2_42, %c0_43, %c0_44] : memref<3x3x128x128xf32, #tpu.memory_space<vmem>>, vector<1x1x128x128xf32>
    %44 = vector.shape_cast %43 : vector<1x1x128x128xf32> to vector<128x128xf32>
    %cst_45 = arith.constant dense<0.000000e+00> : vector<180x128xf32>
    %45 = tpu.matmul %42, %44, %cst_45 {dimension_numbers = #tpu.dot_dimension_numbers<[1], [0], [0], [1], [0, 0, 1, 1], [], []>} : vector<180x128xf32>, vector<128x128xf32>, vector<180x128xf32> -> vector<180x128xf32>
    %46 = arith.addf %41, %45 : vector<180x128xf32>
    %47 = vector.extract_strided_slice %15 {offsets = [36, 0], sizes = [180, 128], strides = [1, 1]} : vector<234x128xf32> to vector<180x128xf32>
    %c2_46 = arith.constant 2 : index
    %c0_47 = arith.constant 0 : index
    %c0_48 = arith.constant 0 : index
    %c0_49 = arith.constant 0 : index
    %48 = vector.load %arg3[%c2_46, %c0_47, %c0_48, %c0_49] : memref<3x3x128x128xf32, #tpu.memory_space<vmem>>, vector<1x1x128x128xf32>
    %49 = vector.shape_cast %48 : vector<1x1x128x128xf32> to vector<128x128xf32>
    %cst_50 = arith.constant dense<0.000000e+00> : vector<180x128xf32>
    %50 = tpu.matmul %47, %49, %cst_50 {dimension_numbers = #tpu.dot_dimension_numbers<[1], [0], [0], [1], [0, 0, 1, 1], [], []>} : vector<180x128xf32>, vector<128x128xf32>, vector<180x128xf32> -> vector<180x128xf32>
    %51 = arith.addf %46, %50 : vector<180x128xf32>
    %52 = vector.extract_strided_slice %15 {offsets = [37, 0], sizes = [180, 128], strides = [1, 1]} : vector<234x128xf32> to vector<180x128xf32>
    %c2_51 = arith.constant 2 : index
    %c1_52 = arith.constant 1 : index
    %c0_53 = arith.constant 0 : index
    %c0_54 = arith.constant 0 : index
    %53 = vector.load %arg3[%c2_51, %c1_52, %c0_53, %c0_54] : memref<3x3x128x128xf32, #tpu.memory_space<vmem>>, vector<1x1x128x128xf32>
    %54 = vector.shape_cast %53 : vector<1x1x128x128xf32> to vector<128x128xf32>
    %cst_55 = arith.constant dense<0.000000e+00> : vector<180x128xf32>
    %55 = tpu.matmul %52, %54, %cst_55 {dimension_numbers = #tpu.dot_dimension_numbers<[1], [0], [0], [1], [0, 0, 1, 1], [], []>} : vector<180x128xf32>, vector<128x128xf32>, vector<180x128xf32> -> vector<180x128xf32>
    %56 = arith.addf %51, %55 : vector<180x128xf32>
    %57 = vector.extract_strided_slice %15 {offsets = [38, 0], sizes = [180, 128], strides = [1, 1]} : vector<234x128xf32> to vector<180x128xf32>
    %c2_56 = arith.constant 2 : index
    %c2_57 = arith.constant 2 : index
    %c0_58 = arith.constant 0 : index
    %c0_59 = arith.constant 0 : index
    %58 = vector.load %arg3[%c2_56, %c2_57, %c0_58, %c0_59] : memref<3x3x128x128xf32, #tpu.memory_space<vmem>>, vector<1x1x128x128xf32>
    %59 = vector.shape_cast %58 : vector<1x1x128x128xf32> to vector<128x128xf32>
    %cst_60 = arith.constant dense<0.000000e+00> : vector<180x128xf32>
    %60 = tpu.matmul %57, %59, %cst_60 {dimension_numbers = #tpu.dot_dimension_numbers<[1], [0], [0], [1], [0, 0, 1, 1], [], []>} : vector<180x128xf32>, vector<128x128xf32>, vector<180x128xf32> -> vector<180x128xf32>
    %61 = arith.addf %56, %60 : vector<180x128xf32>
    %c0_61 = arith.constant 0 : index
    %c0_62 = arith.constant 0 : index
    %62 = vector.load %arg5[%c0_61, %c0_62] : memref<1x128xf32, #tpu.memory_space<vmem>>, vector<1x128xf32>
    %63 = vector.broadcast %62 : vector<1x128xf32> to vector<180x128xf32>
    %64 = arith.mulf %61, %63 : vector<180x128xf32>
    %c0_63 = arith.constant 0 : index
    %c0_64 = arith.constant 0 : index
    %65 = vector.load %arg6[%c0_63, %c0_64] : memref<1x128xf32, #tpu.memory_space<vmem>>, vector<1x128xf32>
    %66 = vector.broadcast %65 : vector<1x128xf32> to vector<180x128xf32>
    %67 = arith.addf %64, %66 : vector<180x128xf32>
    %cst_65 = arith.constant 0.000000e+00 : f32
    %68 = vector.broadcast %cst_65 : f32 to vector<180x128xf32>
    %69 = arith.maximumf %67, %68 : vector<180x128xf32>
    %70 = vector.shape_cast %69 : vector<180x128xf32> to vector<10x18x128xf32>
    %71 = vector.extract_strided_slice %70 {offsets = [0, 0, 0], sizes = [10, 16, 128], strides = [1, 1, 1]} : vector<10x18x128xf32> to vector<10x16x128xf32>
    %72 = tpu.iota {dimensions = array<i32: 0>} : vector<10x1xi32>
    %c1_i32 = arith.constant 1 : i32
    %73 = arith.subi %1, %c1_i32 : i32
    %74 = vector.broadcast %73 : i32 to vector<10x1xi32>
    %75 = arith.addi %72, %74 : vector<10x1xi32>
    %c0_i32_66 = arith.constant 0 : i32
    %76 = vector.broadcast %c0_i32_66 : i32 to vector<10x1xi32>
    %77 = arith.cmpi sge, %75, %76 : vector<10x1xi32>
    %c16_i32 = arith.constant 16 : i32
    %78 = vector.broadcast %c16_i32 : i32 to vector<10x1xi32>
    %79 = arith.cmpi slt, %75, %78 : vector<10x1xi32>
    %80 = arith.andi %77, %79 : vector<10x1xi1>
    %81 = vector.shape_cast %80 : vector<10x1xi1> to vector<10x1x1xi1>
    %82 = arith.extui %81 : vector<10x1x1xi1> to vector<10x1x1xi32>
    %83 = arith.sitofp %82 : vector<10x1x1xi32> to vector<10x1x1xf32>
    %84 = vector.broadcast %83 : vector<10x1x1xf32> to vector<10x16x128xf32>
    %85 = arith.mulf %71, %84 : vector<10x16x128xf32>
    %c0_67 = arith.constant 0 : index
    %c1_68 = arith.constant 1 : index
    %c0_69 = arith.constant 0 : index
    %86 = vector.load %arg11[%c0_67, %c1_68, %c0_69] : memref<11x18x128xf32, #tpu.memory_space<vmem>>, vector<10x16x128xf32>
    tpu.vector_store %arg11[%c0_67, %c1_68, %c0_69], %85 {strides = array<i32>} : memref<11x18x128xf32, #tpu.memory_space<vmem>>, vector<10x16x128xf32>,
    %c0_70 = arith.constant 0 : index
    %c0_71 = arith.constant 0 : index
    %c0_72 = arith.constant 0 : index
    %87 = vector.load %arg11[%c0_70, %c0_71, %c0_72] : memref<11x18x128xf32, #tpu.memory_space<vmem>>, vector<11x18x128xf32>
    %88 = vector.shape_cast %87 : vector<11x18x128xf32> to vector<198x128xf32>
    %cst_73 = arith.constant 0.000000e+00 : f32
    %89 = vector.broadcast %cst_73 : f32 to vector<144x128xf32>
    %90 = vector.extract_strided_slice %88 {offsets = [0, 0], sizes = [144, 128], strides = [1, 1]} : vector<198x128xf32> to vector<144x128xf32>
    %c0_74 = arith.constant 0 : index
    %c0_75 = arith.constant 0 : index
    %c0_76 = arith.constant 0 : index
    %c0_77 = arith.constant 0 : index
    %91 = vector.load %arg4[%c0_74, %c0_75, %c0_76, %c0_77] : memref<3x3x128x128xf32, #tpu.memory_space<vmem>>, vector<1x1x128x128xf32>
    %92 = vector.shape_cast %91 : vector<1x1x128x128xf32> to vector<128x128xf32>
    %cst_78 = arith.constant dense<0.000000e+00> : vector<144x128xf32>
    %93 = tpu.matmul %90, %92, %cst_78 {dimension_numbers = #tpu.dot_dimension_numbers<[1], [0], [0], [1], [0, 0, 1, 1], [], []>} : vector<144x128xf32>, vector<128x128xf32>, vector<144x128xf32> -> vector<144x128xf32>
    %94 = arith.addf %89, %93 : vector<144x128xf32>
    %95 = vector.extract_strided_slice %88 {offsets = [1, 0], sizes = [144, 128], strides = [1, 1]} : vector<198x128xf32> to vector<144x128xf32>
    %c0_79 = arith.constant 0 : index
    %c1_80 = arith.constant 1 : index
    %c0_81 = arith.constant 0 : index
    %c0_82 = arith.constant 0 : index
    %96 = vector.load %arg4[%c0_79, %c1_80, %c0_81, %c0_82] : memref<3x3x128x128xf32, #tpu.memory_space<vmem>>, vector<1x1x128x128xf32>
    %97 = vector.shape_cast %96 : vector<1x1x128x128xf32> to vector<128x128xf32>
    %cst_83 = arith.constant dense<0.000000e+00> : vector<144x128xf32>
    %98 = tpu.matmul %95, %97, %cst_83 {dimension_numbers = #tpu.dot_dimension_numbers<[1], [0], [0], [1], [0, 0, 1, 1], [], []>} : vector<144x128xf32>, vector<128x128xf32>, vector<144x128xf32> -> vector<144x128xf32>
    %99 = arith.addf %94, %98 : vector<144x128xf32>
    %100 = vector.extract_strided_slice %88 {offsets = [2, 0], sizes = [144, 128], strides = [1, 1]} : vector<198x128xf32> to vector<144x128xf32>
    %c0_84 = arith.constant 0 : index
    %c2_85 = arith.constant 2 : index
    %c0_86 = arith.constant 0 : index
    %c0_87 = arith.constant 0 : index
    %101 = vector.load %arg4[%c0_84, %c2_85, %c0_86, %c0_87] : memref<3x3x128x128xf32, #tpu.memory_space<vmem>>, vector<1x1x128x128xf32>
    %102 = vector.shape_cast %101 : vector<1x1x128x128xf32> to vector<128x128xf32>
    %cst_88 = arith.constant dense<0.000000e+00> : vector<144x128xf32>
    %103 = tpu.matmul %100, %102, %cst_88 {dimension_numbers = #tpu.dot_dimension_numbers<[1], [0], [0], [1], [0, 0, 1, 1], [], []>} : vector<144x128xf32>, vector<128x128xf32>, vector<144x128xf32> -> vector<144x128xf32>
    %104 = arith.addf %99, %103 : vector<144x128xf32>
    %105 = vector.extract_strided_slice %88 {offsets = [18, 0], sizes = [144, 128], strides = [1, 1]} : vector<198x128xf32> to vector<144x128xf32>
    %c1_89 = arith.constant 1 : index
    %c0_90 = arith.constant 0 : index
    %c0_91 = arith.constant 0 : index
    %c0_92 = arith.constant 0 : index
    %106 = vector.load %arg4[%c1_89, %c0_90, %c0_91, %c0_92] : memref<3x3x128x128xf32, #tpu.memory_space<vmem>>, vector<1x1x128x128xf32>
    %107 = vector.shape_cast %106 : vector<1x1x128x128xf32> to vector<128x128xf32>
    %cst_93 = arith.constant dense<0.000000e+00> : vector<144x128xf32>
    %108 = tpu.matmul %105, %107, %cst_93 {dimension_numbers = #tpu.dot_dimension_numbers<[1], [0], [0], [1], [0, 0, 1, 1], [], []>} : vector<144x128xf32>, vector<128x128xf32>, vector<144x128xf32> -> vector<144x128xf32>
    %109 = arith.addf %104, %108 : vector<144x128xf32>
    %110 = vector.extract_strided_slice %88 {offsets = [19, 0], sizes = [144, 128], strides = [1, 1]} : vector<198x128xf32> to vector<144x128xf32>
    %c1_94 = arith.constant 1 : index
    %c1_95 = arith.constant 1 : index
    %c0_96 = arith.constant 0 : index
    %c0_97 = arith.constant 0 : index
    %111 = vector.load %arg4[%c1_94, %c1_95, %c0_96, %c0_97] : memref<3x3x128x128xf32, #tpu.memory_space<vmem>>, vector<1x1x128x128xf32>
    %112 = vector.shape_cast %111 : vector<1x1x128x128xf32> to vector<128x128xf32>
    %cst_98 = arith.constant dense<0.000000e+00> : vector<144x128xf32>
    %113 = tpu.matmul %110, %112, %cst_98 {dimension_numbers = #tpu.dot_dimension_numbers<[1], [0], [0], [1], [0, 0, 1, 1], [], []>} : vector<144x128xf32>, vector<128x128xf32>, vector<144x128xf32> -> vector<144x128xf32>
    %114 = arith.addf %109, %113 : vector<144x128xf32>
    %115 = vector.extract_strided_slice %88 {offsets = [20, 0], sizes = [144, 128], strides = [1, 1]} : vector<198x128xf32> to vector<144x128xf32>
    %c1_99 = arith.constant 1 : index
    %c2_100 = arith.constant 2 : index
    %c0_101 = arith.constant 0 : index
    %c0_102 = arith.constant 0 : index
    %116 = vector.load %arg4[%c1_99, %c2_100, %c0_101, %c0_102] : memref<3x3x128x128xf32, #tpu.memory_space<vmem>>, vector<1x1x128x128xf32>
    %117 = vector.shape_cast %116 : vector<1x1x128x128xf32> to vector<128x128xf32>
    %cst_103 = arith.constant dense<0.000000e+00> : vector<144x128xf32>
    %118 = tpu.matmul %115, %117, %cst_103 {dimension_numbers = #tpu.dot_dimension_numbers<[1], [0], [0], [1], [0, 0, 1, 1], [], []>} : vector<144x128xf32>, vector<128x128xf32>, vector<144x128xf32> -> vector<144x128xf32>
    %119 = arith.addf %114, %118 : vector<144x128xf32>
    %120 = vector.extract_strided_slice %88 {offsets = [36, 0], sizes = [144, 128], strides = [1, 1]} : vector<198x128xf32> to vector<144x128xf32>
    %c2_104 = arith.constant 2 : index
    %c0_105 = arith.constant 0 : index
    %c0_106 = arith.constant 0 : index
    %c0_107 = arith.constant 0 : index
    %121 = vector.load %arg4[%c2_104, %c0_105, %c0_106, %c0_107] : memref<3x3x128x128xf32, #tpu.memory_space<vmem>>, vector<1x1x128x128xf32>
    %122 = vector.shape_cast %121 : vector<1x1x128x128xf32> to vector<128x128xf32>
    %cst_108 = arith.constant dense<0.000000e+00> : vector<144x128xf32>
    %123 = tpu.matmul %120, %122, %cst_108 {dimension_numbers = #tpu.dot_dimension_numbers<[1], [0], [0], [1], [0, 0, 1, 1], [], []>} : vector<144x128xf32>, vector<128x128xf32>, vector<144x128xf32> -> vector<144x128xf32>
    %124 = arith.addf %119, %123 : vector<144x128xf32>
    %125 = vector.extract_strided_slice %88 {offsets = [37, 0], sizes = [144, 128], strides = [1, 1]} : vector<198x128xf32> to vector<144x128xf32>
    %c2_109 = arith.constant 2 : index
    %c1_110 = arith.constant 1 : index
    %c0_111 = arith.constant 0 : index
    %c0_112 = arith.constant 0 : index
    %126 = vector.load %arg4[%c2_109, %c1_110, %c0_111, %c0_112] : memref<3x3x128x128xf32, #tpu.memory_space<vmem>>, vector<1x1x128x128xf32>
    %127 = vector.shape_cast %126 : vector<1x1x128x128xf32> to vector<128x128xf32>
    %cst_113 = arith.constant dense<0.000000e+00> : vector<144x128xf32>
    %128 = tpu.matmul %125, %127, %cst_113 {dimension_numbers = #tpu.dot_dimension_numbers<[1], [0], [0], [1], [0, 0, 1, 1], [], []>} : vector<144x128xf32>, vector<128x128xf32>, vector<144x128xf32> -> vector<144x128xf32>
    %129 = arith.addf %124, %128 : vector<144x128xf32>
    %130 = vector.extract_strided_slice %88 {offsets = [38, 0], sizes = [144, 128], strides = [1, 1]} : vector<198x128xf32> to vector<144x128xf32>
    %c2_114 = arith.constant 2 : index
    %c2_115 = arith.constant 2 : index
    %c0_116 = arith.constant 0 : index
    %c0_117 = arith.constant 0 : index
    %131 = vector.load %arg4[%c2_114, %c2_115, %c0_116, %c0_117] : memref<3x3x128x128xf32, #tpu.memory_space<vmem>>, vector<1x1x128x128xf32>
    %132 = vector.shape_cast %131 : vector<1x1x128x128xf32> to vector<128x128xf32>
    %cst_118 = arith.constant dense<0.000000e+00> : vector<144x128xf32>
    %133 = tpu.matmul %130, %132, %cst_118 {dimension_numbers = #tpu.dot_dimension_numbers<[1], [0], [0], [1], [0, 0, 1, 1], [], []>} : vector<144x128xf32>, vector<128x128xf32>, vector<144x128xf32> -> vector<144x128xf32>
    %134 = arith.addf %129, %133 : vector<144x128xf32>
    %c0_119 = arith.constant 0 : index
    %c0_120 = arith.constant 0 : index
    %135 = vector.load %arg7[%c0_119, %c0_120] : memref<1x128xf32, #tpu.memory_space<vmem>>, vector<1x128xf32>
    %136 = vector.broadcast %135 : vector<1x128xf32> to vector<144x128xf32>
    %137 = arith.mulf %134, %136 : vector<144x128xf32>
    %c0_121 = arith.constant 0 : index
    %c0_122 = arith.constant 0 : index
    %138 = vector.load %arg8[%c0_121, %c0_122] : memref<1x128xf32, #tpu.memory_space<vmem>>, vector<1x128xf32>
    %139 = vector.broadcast %138 : vector<1x128xf32> to vector<144x128xf32>
    %140 = arith.addf %137, %139 : vector<144x128xf32>
    %cst_123 = arith.constant 0.000000e+00 : f32
    %141 = vector.broadcast %cst_123 : f32 to vector<144x128xf32>
    %142 = arith.maximumf %140, %141 : vector<144x128xf32>
    %143 = vector.shape_cast %142 : vector<144x128xf32> to vector<8x18x128xf32>
    %144 = vector.extract_strided_slice %143 {offsets = [0, 0, 0], sizes = [8, 16, 128], strides = [1, 1, 1]} : vector<8x18x128xf32> to vector<8x16x128xf32>
    %c0_124 = arith.constant 0 : index
    %c0_125 = arith.constant 0 : index
    %c0_126 = arith.constant 0 : index
    %c0_127 = arith.constant 0 : index
    %145 = vector.load %arg9[%c0_124, %c0_125, %c0_126, %c0_127] : memref<1x8x16x128xf32, #tpu.memory_space<vmem>>, vector<1x8x16x128xf32>
    %146 = vector.shape_cast %145 : vector<1x8x16x128xf32> to vector<8x16x128xf32>
    %147 = vector.shape_cast %144 : vector<8x16x128xf32> to vector<1x8x16x128xf32>
    tpu.vector_store %arg9[%c0_124, %c0_125, %c0_126, %c0_127], %147 {strides = array<i32>} : memref<1x8x16x128xf32, #tpu.memory_space<vmem>>, vector<1x8x16x128xf32>,
    return
  }
  func.func @transform_1(%arg0: i32, %arg1: i32) -> (i32, i32, i32, i32) {
    %c0_i32 = arith.constant 0 : i32
    %c0_i32_0 = arith.constant 0 : i32
    %c0_i32_1 = arith.constant 0 : i32
    %c0_i32_2 = arith.constant 0 : i32
    %c0_i32_3 = arith.constant 0 : i32
    return %c0_i32, %c0_i32_0, %c0_i32_1, %c0_i32_2 : i32, i32, i32, i32
  }
  func.func @transform_2(%arg0: i32, %arg1: i32) -> (i32, i32, i32, i32) {
    %c0_i32 = arith.constant 0 : i32
    %c0_i32_0 = arith.constant 0 : i32
    %c0_i32_1 = arith.constant 0 : i32
    %c0_i32_2 = arith.constant 0 : i32
    %c0_i32_3 = arith.constant 0 : i32
    return %c0_i32, %c0_i32_0, %c0_i32_1, %c0_i32_2 : i32, i32, i32, i32
  }
  func.func @transform_3(%arg0: i32, %arg1: i32) -> (i32, i32) {
    %c0_i32 = arith.constant 0 : i32
    %c0_i32_0 = arith.constant 0 : i32
    %c0_i32_1 = arith.constant 0 : i32
    return %c0_i32, %c0_i32_0 : i32, i32
  }
  func.func @transform_4(%arg0: i32, %arg1: i32) -> (i32, i32) {
    %c0_i32 = arith.constant 0 : i32
    %c0_i32_0 = arith.constant 0 : i32
    %c0_i32_1 = arith.constant 0 : i32
    return %c0_i32, %c0_i32_0 : i32, i32
  }
  func.func @transform_5(%arg0: i32, %arg1: i32) -> (i32, i32) {
    %c0_i32 = arith.constant 0 : i32
    %c0_i32_0 = arith.constant 0 : i32
    %c0_i32_1 = arith.constant 0 : i32
    return %c0_i32, %c0_i32_0 : i32, i32
  }
  func.func @transform_6(%arg0: i32, %arg1: i32) -> (i32, i32) {
    %c0_i32 = arith.constant 0 : i32
    %c0_i32_0 = arith.constant 0 : i32
    %c0_i32_1 = arith.constant 0 : i32
    return %c0_i32, %c0_i32_0 : i32, i32
  }
  func.func @transform_7(%arg0: i32, %arg1: i32) -> (i32, i32, i32, i32) {
    %c0_i32 = arith.constant 0 : i32
    %c0_i32_0 = arith.constant 0 : i32
    %c0_i32_1 = arith.constant 0 : i32
    return %arg0, %arg1, %c0_i32, %c0_i32_0 : i32, i32, i32, i32
  }
}

</mosaic_0001>

<llo_original>
// kernel: double_conv.1
$region0: #{double_conv.1}
  #allocation0 [shape = 'u32[]', space=smem, size = 0x4, offset = 0x4, fixed_abs, tag = 'smem constant byte address 0x4 - core index']
  #allocation1 [shape = 'u32[72,128]{1,0:T(1,128)}', space=vmem, size = 0x9000, scoped, tag = 'internal scratch']
  #allocation2 [shape = 'f32[13,18,128]{2,1,0:T(8,128)}', space=vmem, size = 0x27000, scoped, tag = 'scratch operand']
  #allocation3 [shape = 'f32[11,18,128]{2,1,0:T(8,128)}', space=vmem, size = 0x21000, scoped, tag = 'scratch operand']
  #allocation4 [shape = 's32[1]{0}', space=sflag, size = 0x4, scoped, tag = 'scratch operand']
  #allocation5 [shape = 's32[]', space=sflag, size = 0x4, offset = 0, fixed_abs, tag = 'sflag constant byte address 0x0 - dummy sync flag']
  %s0 = inlined_call_operand.vmem [shape: f32[2,20,18,128], index: 0, kind: input, shape index: {}]
  %s1 = inlined_call_operand.vmem [shape: f32[3,3,128,128], index: 1, kind: input, shape index: {}]
  %s2 = inlined_call_operand.vmem [shape: f32[3,3,128,128], index: 2, kind: input, shape index: {}]
  %s3 = inlined_call_operand.vmem [shape: f32[1,128], index: 3, kind: input, shape index: {}]
  %s4 = inlined_call_operand.vmem [shape: f32[1,128], index: 4, kind: input, shape index: {}]
  %s5 = inlined_call_operand.vmem [shape: f32[1,128], index: 5, kind: input, shape index: {}]
  %s6 = inlined_call_operand.vmem [shape: f32[1,128], index: 6, kind: input, shape index: {}]
  %s7 = inlined_call_operand.vmem [shape: f32[2,16,16,128], index: 7, kind: output, shape index: {}]
  %s8 = sld [smem:[#allocation0]]
  $region79: #{double_conv.1} parent=0
    _
  %s10 = ssub.s32 1, %s8
  %s11 = scalar_select 0, %s10, %s8
  loop: start=0, step=1, limit=6
  $region2: #{double_conv.1} parent=0 // loop_pre_header
    _
  $region3: #{double_conv.1} parent=0 // loop_header
    %s13 = sphi 0, %s17
    %p14 = scmp.ge.s32.totalorder %s13, 6
    %s20 = sphi 0, %s32
    %s21 = sphi 0, %s28
    %s22 = sphi 0, %s20
    %s23 = sphi 0, %s21
    %s24 = sphi 0, %s22
    %s25 = sphi 0, %s23
    %s33 = sphi 0, %s33
    %s35 = sphi 0, %s33
    %s36 = sphi 0, %s35
    %s50 = sphi 0, %s36
    %s54 = sphi 0, %s54
    %s56 = sphi 0, %s54
    %s57 = sphi 0, %s56
    %s71 = sphi 0, %s57
    %s75 = sphi 0, %s75
    %s77 = sphi 0, %s75
    %s78 = sphi 0, %s77
    %s92 = sphi 0, %s78
    %s96 = sphi 0, %s96
    %s98 = sphi 0, %s96
    %s99 = sphi 0, %s98
    %s113 = sphi 0, %s99
    %s117 = sphi 0, %s117
    %s119 = sphi 0, %s117
    %s120 = sphi 0, %s119
    %s134 = sphi 0, %s120
    %s138 = sphi 0, %s138
    %s140 = sphi 0, %s138
    %s141 = sphi 0, %s140
    %s155 = sphi 0, %s141
    %s163 = sphi 0, %s165
    %s166 = sphi 0, %s163
    %s167 = sphi 0, %s166
    %s183 = sphi 0, %s167
  $region4: #{double_conv.1} parent=0 // loop_header_branch
    %16 = sbr.rel (%p14) target = $region8
  $region5: #{double_conv.1} parent=0 // loop_body
    %s18 = ssub.s32 %s13, 1
    %s19 = ssub.s32 %s13, 2
    %s26 = sadd.s32 1, %s21
    %p27 = scmp.ge.s32.totalorder %s26, 2
    %s28 = scalar_select %p27, 0, %s26
    %s29 = sadd.s32 1, %s20
    %s30 = scalar_select %p27, %s29, %s20
    %p31 = scmp.ge.s32.totalorder %s30, 2
    %s32 = scalar_select %p31, 0, %s30
    %s34 = sadd.s32 %s33, 1
    %p37 = scmp.eq.s32.totalorder %s13, 3
    %p38 = scmp.ne.s32.totalorder %s33, %s35
    %p39 = scmp.eq.s32.totalorder %s13, 0
    %p40 = por %p38, %p39
    %p41 = scmp.ne.s32.totalorder %s33, %s35
    %p42 = scmp.eq.s32.totalorder %s18, 3
    %p43 = por %p41, %p42
    %p44 = scmp.ne.s32.totalorder %s35, %s36
    %p45 = scmp.eq.s32.totalorder %s18, 0
    %p46 = por %p44, %p45
    %p47 = scmp.ne.s32.totalorder %s35, %s36
    %p48 = scmp.eq.s32.totalorder %s19, 3
    %p49 = por %p47, %p48
    %p51 = scmp.ne.s32.totalorder %s36, %s50
    %p52 = scmp.eq.s32.totalorder %s19, 0
    %p53 = por %p51, %p52
    %s55 = sadd.s32 %s54, 1
    %p58 = scmp.eq.s32.totalorder %s13, 3
    %p59 = scmp.ne.s32.totalorder %s54, %s56
    %p60 = scmp.eq.s32.totalorder %s13, 0
    %p61 = por %p59, %p60
    %p62 = scmp.ne.s32.totalorder %s54, %s56
    %p63 = scmp.eq.s32.totalorder %s18, 3
    %p64 = por %p62, %p63
    %p65 = scmp.ne.s32.totalorder %s56, %s57
    %p66 = scmp.eq.s32.totalorder %s18, 0
    %p67 = por %p65, %p66
    %p68 = scmp.ne.s32.totalorder %s56, %s57
    %p69 = scmp.eq.s32.totalorder %s19, 3
    %p70 = por %p68, %p69
    %p72 = scmp.ne.s32.totalorder %s57, %s71
    %p73 = scmp.eq.s32.totalorder %s19, 0
    %p74 = por %p72, %p73
    %s76 = sadd.s32 %s75, 1
    %p79 = scmp.eq.s32.totalorder %s13, 3
    %p80 = scmp.ne.s32.totalorder %s75, %s77
    %p81 = scmp.eq.s32.totalorder %s13, 0
    %p82 = por %p80, %p81
    %p83 = scmp.ne.s32.totalorder %s75, %s77
    %p84 = scmp.eq.s32.totalorder %s18, 3
    %p85 = por %p83, %p84
    %p86 = scmp.ne.s32.totalorder %s77, %s78
    %p87 = scmp.eq.s32.totalorder %s18, 0
    %p88 = por %p86, %p87
    %p89 = scmp.ne.s32.totalorder %s77, %s78
    %p90 = scmp.eq.s32.totalorder %s19, 3
    %p91 = por %p89, %p90
    %p93 = scmp.ne.s32.totalorder %s78, %s92
    %p94 = scmp.eq.s32.totalorder %s19, 0
    %p95 = por %p93, %p94
    %s97 = sadd.s32 %s96, 1
    %p100 = scmp.eq.s32.totalorder %s13, 3
    %p101 = scmp.ne.s32.totalorder %s96, %s98
    %p102 = scmp.eq.s32.totalorder %s13, 0
    %p103 = por %p101, %p102
    %p104 = scmp.ne.s32.totalorder %s96, %s98
    %p105 = scmp.eq.s32.totalorder %s18, 3
    %p106 = por %p104, %p105
    %p107 = scmp.ne.s32.totalorder %s98, %s99
    %p108 = scmp.eq.s32.totalorder %s18, 0
    %p109 = por %p107, %p108
    %p110 = scmp.ne.s32.totalorder %s98, %s99
    %p111 = scmp.eq.s32.totalorder %s19, 3
    %p112 = por %p110, %p111
    %p114 = scmp.ne.s32.totalorder %s99, %s113
    %p115 = scmp.eq.s32.totalorder %s19, 0
    %p116 = por %p114, %p115
    %s118 = sadd.s32 %s117, 1
    %p121 = scmp.eq.s32.totalorder %s13, 3
    %p122 = scmp.ne.s32.totalorder %s117, %s119
    %p123 = scmp.eq.s32.totalorder %s13, 0
    %p124 = por %p122, %p123
    %p125 = scmp.ne.s32.totalorder %s117, %s119
    %p126 = scmp.eq.s32.totalorder %s18, 3
    %p127 = por %p125, %p126
    %p128 = scmp.ne.s32.totalorder %s119, %s120
    %p129 = scmp.eq.s32.totalorder %s18, 0
    %p130 = por %p128, %p129
    %p131 = scmp.ne.s32.totalorder %s119, %s120
    %p132 = scmp.eq.s32.totalorder %s19, 3
    %p133 = por %p131, %p132
    %p135 = scmp.ne.s32.totalorder %s120, %s134
    %p136 = scmp.eq.s32.totalorder %s19, 0
    %p137 = por %p135, %p136
    %s139 = sadd.s32 %s138, 1
    %p142 = scmp.eq.s32.totalorder %s13, 3
    %p143 = scmp.ne.s32.totalorder %s138, %s140
    %p144 = scmp.eq.s32.totalorder %s13, 0
    %p145 = por %p143, %p144
    %p146 = scmp.ne.s32.totalorder %s138, %s140
    %p147 = scmp.eq.s32.totalorder %s18, 3
    %p148 = por %p146, %p147
    %p149 = scmp.ne.s32.totalorder %s140, %s141
    %p150 = scmp.eq.s32.totalorder %s18, 0
    %p151 = por %p149, %p150
    %p152 = scmp.ne.s32.totalorder %s140, %s141
    %p153 = scmp.eq.s32.totalorder %s19, 3
    %p154 = por %p152, %p153
    %p156 = scmp.ne.s32.totalorder %s141, %s155
    %p157 = scmp.eq.s32.totalorder %s19, 0
    %p158 = por %p156, %p157
    %s159 = ssub.s32 %s20, %s32
    %s160 = ssub.s32 %s21, %s28
    %s161 = sor.u32 %s159, %s160
    %p162 = scmp.eq.s32.totalorder %s161, 0
    %s164 = sadd.s32 %s163, 1
    %s165 = scalar_select %p162, %s163, %s164
    %p168 = pneg %p162
    %p169 = scmp.eq.s32.totalorder %s13, 3
    %p170 = por %p168, %p169
    %p171 = scmp.ne.s32.totalorder %s163, %s166
    %p172 = scmp.eq.s32.totalorder %s13, 0
    %p173 = por %p171, %p172
    %p174 = scmp.ne.s32.totalorder %s163, %s166
    %p175 = scmp.eq.s32.totalorder %s18, 3
    %p176 = por %p174, %p175
    %p177 = scmp.ne.s32.totalorder %s166, %s167
    %p178 = scmp.eq.s32.totalorder %s18, 0
    %p179 = por %p177, %p178
    %p180 = scmp.ne.s32.totalorder %s166, %s167
    %p181 = scmp.eq.s32.totalorder %s19, 3
    %p182 = por %p180, %p181
    %p184 = scmp.ne.s32.totalorder %s167, %s183
    %p185 = scmp.eq.s32.totalorder %s19, 0
    %p186 = por %p184, %p185
    %p187 = scmp.le.s32.totalorder 1, %s13
    %p188 = scmp.lt.s32.totalorder %s13, 5
    %p189 = pnand %p187, %p188
    %p190 = pneg %p189
    // Predicated region
    $region9: #{double_conv.1} parent=5 // pred_check
      _
    $region10: #{double_conv.1} parent=5 // pred_check_branch
      %192 = sbr.rel (%p189) target = $region12
    $region11: #{double_conv.1} parent=5 // pred_region
      %s193 = ssub.s32 %s13, 1
      // Predicated region
      $region13: #{double_conv.1} parent=11 // pred_check
        %p194 = pneg %p46
      $region14: #{double_conv.1} parent=11 // pred_check_branch
        %196 = sbr.rel (%p194) target = $region16
      $region15: #{double_conv.1} parent=11 // pred_region
        _
      $region16: #{double_conv.1} parent=11 // pred_fallthru
        _
      // Predicated region
      $region17: #{double_conv.1} parent=11 // pred_check
        %p197 = pneg %p67
      $region18: #{double_conv.1} parent=11 // pred_check_branch
        %199 = sbr.rel (%p197) target = $region20
      $region19: #{double_conv.1} parent=11 // pred_region
        _
      $region20: #{double_conv.1} parent=11 // pred_fallthru
        _
      // Predicated region
      $region21: #{double_conv.1} parent=11 // pred_check
        %p200 = pneg %p88
      $region22: #{double_conv.1} parent=11 // pred_check_branch
        %202 = sbr.rel (%p200) target = $region24
      $region23: #{double_conv.1} parent=11 // pred_region
        _
      $region24: #{double_conv.1} parent=11 // pred_fallthru
        _
      // Predicated region
      $region25: #{double_conv.1} parent=11 // pred_check
        %p203 = pneg %p109
      $region26: #{double_conv.1} parent=11 // pred_check_branch
        %205 = sbr.rel (%p203) target = $region28
      $region27: #{double_conv.1} parent=11 // pred_region
        _
      $region28: #{double_conv.1} parent=11 // pred_fallthru
        _
      // Predicated region
      $region29: #{double_conv.1} parent=11 // pred_check
        %p206 = pneg %p130
      $region30: #{double_conv.1} parent=11 // pred_check_branch
        %208 = sbr.rel (%p206) target = $region32
      $region31: #{double_conv.1} parent=11 // pred_region
        _
      $region32: #{double_conv.1} parent=11 // pred_fallthru
        _
      // Predicated region
      $region33: #{double_conv.1} parent=11 // pred_check
        %p209 = pneg %p151
      $region34: #{double_conv.1} parent=11 // pred_check_branch
        %211 = sbr.rel (%p209) target = $region36
      $region35: #{double_conv.1} parent=11 // pred_region
        _
      $region36: #{double_conv.1} parent=11 // pred_fallthru
        _
    $region12: #{double_conv.1} parent=5 // pred_fallthru
      _
    %p212 = scmp.lt.s32.totalorder %s13, 4
    // Predicated region
    $region37: #{double_conv.1} parent=5 // pred_check
      %p213 = pneg %p212
    $region38: #{double_conv.1} parent=5 // pred_check_branch
      %215 = sbr.rel (%p213) target = $region40
    $region39: #{double_conv.1} parent=5 // pred_region
      _
    $region40: #{double_conv.1} parent=5 // pred_fallthru
      _
    %p216 = scmp.le.s32.totalorder 1, %s13
    %p217 = scmp.lt.s32.totalorder %s13, 5
    %p218 = pnand %p216, %p217
    %p219 = pneg %p218
    // Predicated region
    $region41: #{double_conv.1} parent=5 // pred_check
      _
    $region42: #{double_conv.1} parent=5 // pred_check_branch
      %221 = sbr.rel (%p218) target = $region44
    $region43: #{double_conv.1} parent=5 // pred_region
      %s222 = ssub.s32 %s13, 1
      %p223 = pneg %p46
      %p224 = pneg %p43
      %p225 = pneg %p67
      %p226 = pneg %p64
      %p227 = pneg %p88
      %p228 = pneg %p85
      %p229 = pneg %p109
      %p230 = pneg %p106
      %p231 = pneg %p130
      %p232 = pneg %p127
      %p233 = pneg %p151
      %p234 = pneg %p148
      %p235 = pneg %p179
      %p236 = pneg %p176
      %s237 = smul.u32 8, %s23
      %p238 = scmp.lt.s32.totalorder %s22, 1
      %s239 = scalar_select %p238, %s22, 1
      %p240 = scmp.lt.s32.totalorder %s237, 15
      %s241 = scalar_select %p240, %s237, 15
      %s242 = smul.addr %s241, 2
      %s243 = smul.addr %s239, 32
      %s244 = sadd.s32 %s242, %s243
      %s245 = smul.addr %s244, 8
      %s246 = scalar_lea.vmem %s7, %s245
      %s247 = smul.u32 8, %s23
      %p248 = scmp.lt.s32.totalorder %s22, 1
      %s249 = scalar_select %p248, %s22, 1
      %p250 = scmp.lt.s32.totalorder %s247, 15
      %s251 = scalar_select %p250, %s247, 15
      %s252 = smul.addr %s251, 2
      %s253 = smul.addr %s249, 32
      %s254 = sadd.s32 %s252, %s253
      %s255 = smul.addr %s254, 8
      %s256 = scalar_lea.vmem %s7, %s255
      %s257 = smul.u32 8, %s23
      %s258 = smul.u32 %s23, 8
      %s259 = scalar_lea.vmem [#allocation2], 288
      %260 = vst [vmem:[%s259] sm:$0xff] 0.0
      %261 = vst [vmem:[%s259 + $0x8] sm:$0xff] 0.0
      %262 = vst [vmem:[%s259 + $0x10] sm:$0x3] 0.0
      %s263 = smul.u32 %s258, 24
      %s264 = smul.u32 %s22, 480
      %s265 = sadd.s32 %s263, %s264
      %s266 = scalar_lea.vmem %s0, %s265
      // Predicated region
      $region45: #{double_conv.1} parent=43 // pred_check
        _
      $region46: #{double_conv.1} parent=43 // pred_check_branch
        %268 = sbr.rel (0) target = $region48
      $region47: #{double_conv.1} parent=43 // pred_region
        %s269 = scalar_lea.vmem %s266, 16
        %s270 = scalar_lea.vmem [#allocation2], 16
        loop: start=0, step=1, limit=1
        $region49: #{double_conv.1} parent=47 // loop_pre_header
          _
        $region50: #{double_conv.1} parent=47 // loop_header
          %s272 = sphi 0, %s276
          %p273 = scmp.ge.s32.totalorder %s272, 1
          %s277 = sphi %s266, %s266
          %s278 = sphi [#allocation2], [#allocation2]
        $region51: #{double_conv.1} parent=47 // loop_header_branch
          %275 = sbr.rel (%p273) target = $region55
        $region52: #{double_conv.1} parent=47 // loop_body
          %v279 = vld [vmem:[%s277] sm:$0xff]
          %280 = vst [vmem:[%s278] sm:$0xff] %v279
          %v281 = vld [vmem:[%s277 + $0x8] sm:$0xff]
          %282 = vst [vmem:[%s278 + $0x8] sm:$0xff] %v281
          %v283 = vld [vmem:[%s277 + $0x18] sm:$0xff]
          %284 = vst [vmem:[%s278 + $0x18] sm:$0xff] %v283
          %v285 = vld [vmem:[%s277 + $0x20] sm:$0xff]
          %286 = vst [vmem:[%s278 + $0x20] sm:$0xff] %v285
          %v287 = vld [vmem:[%s277 + $0x30] sm:$0xff]
          %288 = vst [vmem:[%s278 + $0x30] sm:$0xff] %v287
          %v289 = vld [vmem:[%s277 + $0x38] sm:$0xff]
          %290 = vst [vmem:[%s278 + $0x38] sm:$0xff] %v289
          %v291 = vld [vmem:[%s277 + $0x48] sm:$0xff]
          %292 = vst [vmem:[%s278 + $0x48] sm:$0xff] %v291
          %v293 = vld [vmem:[%s277 + $0x50] sm:$0xff]
          %294 = vst [vmem:[%s278 + $0x50] sm:$0xff] %v293
          %v295 = vld [vmem:[%s277 + $0x60] sm:$0xff]
          %296 = vst [vmem:[%s278 + $0x60] sm:$0xff] %v295
          %v297 = vld [vmem:[%s277 + $0x68] sm:$0xff]
          %298 = vst [vmem:[%s278 + $0x68] sm:$0xff] %v297
          %v299 = vld [vmem:[%s277 + $0x78] sm:$0xff]
          %300 = vst [vmem:[%s278 + $0x78] sm:$0xff] %v299
          %v301 = vld [vmem:[%s277 + $0x80] sm:$0xff]
          %302 = vst [vmem:[%s278 + $0x80] sm:$0xff] %v301
          %v303 = vld [vmem:[%s277 + $0x90] sm:$0xff]
          %304 = vst [vmem:[%s278 + $0x90] sm:$0xff] %v303
          %v305 = vld [vmem:[%s277 + $0x98] sm:$0xff]
          %306 = vst [vmem:[%s278 + $0x98] sm:$0xff] %v305
          %v307 = vld [vmem:[%s277 + $0xa8] sm:$0xff]
          %308 = vst [vmem:[%s278 + $0xa8] sm:$0xff] %v307
          %v309 = vld [vmem:[%s277 + $0xb0] sm:$0xff]
          %310 = vst [vmem:[%s278 + $0xb0] sm:$0xff] %v309
          %v311 = vld [vmem:[%s277 + $0xc0] sm:$0xff]
          %312 = vst [vmem:[%s278 + $0xc0] sm:$0xff] %v311
          %v313 = vld [vmem:[%s277 + $0xc8] sm:$0xff]
          %314 = vst [vmem:[%s278 + $0xc8] sm:$0xff] %v313
          %v315 = vld [vmem:[%s277 + $0xd8] sm:$0xff]
          %316 = vst [vmem:[%s278 + $0xd8] sm:$0xff] %v315
          %v317 = vld [vmem:[%s277 + $0xe0] sm:$0xff]
          %318 = vst [vmem:[%s278 + $0xe0] sm:$0xff] %v317
          %v319 = vld [vmem:[%s277 + $0xf0] sm:$0xff]
          %320 = vst [vmem:[%s278 + $0xf0] sm:$0xff] %v319
          %v321 = vld [vmem:[%s277 + $0xf8] sm:$0xff]
          %322 = vst [vmem:[%s278 + $0xf8] sm:$0xff] %v321
          %v323 = vld [vmem:[%s277 + $0x108] sm:$0xff]
          %324 = vst [vmem:[%s278 + $0x108] sm:$0xff] %v323
          %v325 = vld [vmem:[%s277 + $0x110] sm:$0xff]
          %326 = vst [vmem:[%s278 + $0x110] sm:$0xff] %v325
        $region53: #{double_conv.1} parent=47 // loop_footer
          %s276 = sadd.s32 1, %s272
        $region54: #{double_conv.1} parent=47 // loop_footer_branch
          %271 = sbr.rel target = $region50
        $region55: #{double_conv.1} parent=47 // loop_exit
          _
        %s328 = ssub.s32 4, 1
        loop: start=0, step=1, limit=1
        $region56: #{double_conv.1} parent=47 // loop_pre_header
          _
        $region57: #{double_conv.1} parent=47 // loop_header
          %s330 = sphi 0, %s334
          %p331 = scmp.ge.s32.totalorder %s330, 1
          %s335 = sphi %s269, %s269
          %s336 = sphi %s270, %s270
        $region58: #{double_conv.1} parent=47 // loop_header_branch
          %333 = sbr.rel (%p331) target = $region62
        $region59: #{double_conv.1} parent=47 // loop_body
          %v337 = vld [vmem:[%s335] sm:%s328]
          %338 = vst [vmem:[%s336] sm:%s328] %v337
          %v339 = vld [vmem:[%s335 + $0x18] sm:%s328]
          %340 = vst [vmem:[%s336 + $0x18] sm:%s328] %v339
          %v341 = vld [vmem:[%s335 + $0x30] sm:%s328]
          %342 = vst [vmem:[%s336 + $0x30] sm:%s328] %v341
          %v343 = vld [vmem:[%s335 + $0x48] sm:%s328]
          %344 = vst [vmem:[%s336 + $0x48] sm:%s328] %v343
          %v345 = vld [vmem:[%s335 + $0x60] sm:%s328]
          %346 = vst [vmem:[%s336 + $0x60] sm:%s328] %v345
          %v347 = vld [vmem:[%s335 + $0x78] sm:%s328]
          %348 = vst [vmem:[%s336 + $0x78] sm:%s328] %v347
          %v349 = vld [vmem:[%s335 + $0x90] sm:%s328]
          %350 = vst [vmem:[%s336 + $0x90] sm:%s328] %v349
          %v351 = vld [vmem:[%s335 + $0xa8] sm:%s328]
          %352 = vst [vmem:[%s336 + $0xa8] sm:%s328] %v351
          %v353 = vld [vmem:[%s335 + $0xc0] sm:%s328]
          %354 = vst [vmem:[%s336 + $0xc0] sm:%s328] %v353
          %v355 = vld [vmem:[%s335 + $0xd8] sm:%s328]
          %356 = vst [vmem:[%s336 + $0xd8] sm:%s328] %v355
          %v357 = vld [vmem:[%s335 + $0xf0] sm:%s328]
          %358 = vst [vmem:[%s336 + $0xf0] sm:%s328] %v357
          %v359 = vld [vmem:[%s335 + $0x108] sm:%s328]
          %360 = vst [vmem:[%s336 + $0x108] sm:%s328] %v359
        $region60: #{double_conv.1} parent=47 // loop_footer
          %s334 = sadd.s32 1, %s330
        $region61: #{double_conv.1} parent=47 // loop_footer_branch
          %329 = sbr.rel target = $region57
        $region62: #{double_conv.1} parent=47 // loop_exit
          _
      $region48: #{double_conv.1} parent=43 // pred_fallthru
        _
      // Predicated region
      $region63: #{double_conv.1} parent=43 // pred_check
        _
      $region64: #{double_conv.1} parent=43 // pred_check_branch
        %363 = sbr.rel (0) target = $region66
      $region65: #{double_conv.1} parent=43 // pred_region
        %364 = vsyncadd [#allocation4], 3456
      $region66: #{double_conv.1} parent=43 // pred_fallthru
        _
      %365 = vst [vmem:[#allocation3] sm:$0xff] 0.0
      %366 = vst [vmem:[#allocation3 + $0x8] sm:$0xff] 0.0
      %367 = vst [vmem:[#allocation3 + $0x10] sm:$0x3] 0.0
      %368 = vst [vmem:[#allocation3 + $0x18] sm:$0xff] 0.0
      %369 = vst [vmem:[#allocation3 + $0x20] sm:$0xff] 0.0
      %370 = vst [vmem:[#allocation3 + $0x28] sm:$0x3] 0.0
      %371 = vst [vmem:[#allocation3 + $0x30] sm:$0xff] 0.0
      %372 = vst [vmem:[#allocation3 + $0x38] sm:$0xff] 0.0
      %373 = vst [vmem:[#allocation3 + $0x40] sm:$0x3] 0.0
      %374 = vst [vmem:[#allocation3 + $0x48] sm:$0xff] 0.0
      %375 = vst [vmem:[#allocation3 + $0x50] sm:$0xff] 0.0
      %376 = vst [vmem:[#allocation3 + $0x58] sm:$0x3] 0.0
      %377 = vst [vmem:[#allocation3 + $0x60] sm:$0xff] 0.0
      %378 = vst [vmem:[#allocation3 + $0x68] sm:$0xff] 0.0
      %379 = vst [vmem:[#allocation3 + $0x70] sm:$0x3] 0.0
      %380 = vst [vmem:[#allocation3 + $0x78] sm:$0xff] 0.0
      %381 = vst [vmem:[#allocation3 + $0x80] sm:$0xff] 0.0
      %382 = vst [vmem:[#allocation3 + $0x88] sm:$0x3] 0.0
      %383 = vst [vmem:[#allocation3 + $0x90] sm:$0xff] 0.0
      %384 = vst [vmem:[#allocation3 + $0x98] sm:$0xff] 0.0
      %385 = vst [vmem:[#allocation3 + $0xa0] sm:$0x3] 0.0
      %386 = vst [vmem:[#allocation3 + $0xa8] sm:$0xff] 0.0
      %387 = vst [vmem:[#allocation3 + $0xb0] sm:$0xff] 0.0
      %388 = vst [vmem:[#allocation3 + $0xb8] sm:$0x3] 0.0
      %389 = vst [vmem:[#allocation3 + $0xc0] sm:$0xff] 0.0
      %390 = vst [vmem:[#allocation3 + $0xc8] sm:$0xff] 0.0
      %391 = vst [vmem:[#allocation3 + $0xd0] sm:$0x3] 0.0
      %392 = vst [vmem:[#allocation3 + $0xd8] sm:$0xff] 0.0
      %393 = vst [vmem:[#allocation3 + $0xe0] sm:$0xff] 0.0
      %394 = vst [vmem:[#allocation3 + $0xe8] sm:$0x3] 0.0
      %395 = vst [vmem:[#allocation3 + $0xf0] sm:$0xff] 0.0
      %396 = vst [vmem:[#allocation3 + $0xf8] sm:$0xff] 0.0
      %397 = vst [vmem:[#allocation3 + $0x100] sm:$0x3] 0.0
      %s398 = smul.u32 12, 18
      %s399 = smul.u32 %s398, 1
      %s400 = sshll.u32 %s399, 4
      %401 = dma.done [#allocation4], %s400
      %v402 = vld [vmem:[#allocation2] sm:$0xff]
      %v403 = vld [vmem:[#allocation2 + $0x8] sm:$0xff]
      %v404 = vld [vmem:[#allocation2 + $0x10] sm:$0x3]
      %v405 = vld [vmem:[#allocation2 + $0x18] sm:$0xff]
      %v406 = vld [vmem:[#allocation2 + $0x20] sm:$0xff]
      %v407 = vld [vmem:[#allocation2 + $0x28] sm:$0x3]
      %v408 = vld [vmem:[#allocation2 + $0x30] sm:$0xff]
      %v409 = vld [vmem:[#allocation2 + $0x38] sm:$0xff]
      %v410 = vld [vmem:[#allocation2 + $0x40] sm:$0x3]
      %v411 = vld [vmem:[#allocation2 + $0x48] sm:$0xff]
      %v412 = vld [vmem:[#allocation2 + $0x50] sm:$0xff]
      %v413 = vld [vmem:[#allocation2 + $0x58] sm:$0x3]
      %v414 = vld [vmem:[#allocation2 + $0x60] sm:$0xff]
      %v415 = vld [vmem:[#allocation2 + $0x68] sm:$0xff]
      %v416 = vld [vmem:[#allocation2 + $0x70] sm:$0x3]
      %v417 = vld [vmem:[#allocation2 + $0x78] sm:$0xff]
      %v418 = vld [vmem:[#allocation2 + $0x80] sm:$0xff]
      %v419 = vld [vmem:[#allocation2 + $0x88] sm:$0x3]
      %v420 = vld [vmem:[#allocation2 + $0x90] sm:$0xff]
      %v421 = vld [vmem:[#allocation2 + $0x98] sm:$0xff]
      %v422 = vld [vmem:[#allocation2 + $0xa0] sm:$0x3]
      %v423 = vld [vmem:[#allocation2 + $0xa8] sm:$0xff]
      %v424 = vld [vmem:[#allocation2 + $0xb0] sm:$0xff]
      %v425 = vld [vmem:[#allocation2 + $0xb8] sm:$0x3]
      %v426 = vld [vmem:[#allocation2 + $0xc0] sm:$0xff]
      %v427 = vld [vmem:[#allocation2 + $0xc8] sm:$0xff]
      %v428 = vld [vmem:[#allocation2 + $0xd0] sm:$0x3]
      %v429 = vld [vmem:[#allocation2 + $0xd8] sm:$0xff]
      %v430 = vld [vmem:[#allocation2 + $0xe0] sm:$0xff]
      %v431 = vld [vmem:[#allocation2 + $0xe8] sm:$0x3]
      %v432 = vld [vmem:[#allocation2 + $0xf0] sm:$0xff]
      %v433 = vld [vmem:[#allocation2 + $0xf8] sm:$0xff]
      %v434 = vld [vmem:[#allocation2 + $0x100] sm:$0x3]
      %v435 = vld [vmem:[#allocation2 + $0x108] sm:$0xff]
      %v436 = vld [vmem:[#allocation2 + $0x110] sm:$0xff]
      %v437 = vld [vmem:[#allocation2 + $0x118] sm:$0x3]
      %v438 = vld [vmem:[#allocation2 + $0x120] sm:$0xff]
      %v476 = vrot.slane %v402, 2
      %v477 = vrot.slane %v402, 4
      %v478 = vrot.slane %v402, 6
      %v479 = vrot.slane %v403, 2
      %v480 = vrot.slane %v403, 4
      %v481 = vrot.slane %v403, 6
      %v482 = vrot.slane %v405, 2
      %v483 = vrot.slane %v405, 4
      %v484 = vrot.slane %v405, 6
      %v485 = vrot.slane %v406, 2
      %v486 = vrot.slane %v406, 4
      %v487 = vrot.slane %v406, 6
      %v488 = vrot.slane %v408, 2
      %v489 = vrot.slane %v408, 4
      %v490 = vrot.slane %v408, 6
      %v491 = vrot.slane %v409, 2
      %v492 = vrot.slane %v409, 4
      %v493 = vrot.slane %v409, 6
      %v494 = vrot.slane %v411, 2
      %v495 = vrot.slane %v411, 4
      %v496 = vrot.slane %v411, 6
      %v497 = vrot.slane %v412, 2
      %v498 = vrot.slane %v412, 4
      %v499 = vrot.slane %v412, 6
      %v500 = vrot.slane %v414, 2
      %v501 = vrot.slane %v414, 4
      %v502 = vrot.slane %v414, 6
      %v503 = vrot.slane %v415, 2
      %v504 = vrot.slane %v415, 4
      %v505 = vrot.slane %v415, 6
      %v506 = vrot.slane %v417, 2
      %v507 = vrot.slane %v417, 4
      %v508 = vrot.slane %v417, 6
      %v509 = vrot.slane %v418, 2
      %v510 = vrot.slane %v418, 4
      %v511 = vrot.slane %v418, 6
      %v512 = vrot.slane %v420, 2
      %v513 = vrot.slane %v420, 4
      %v514 = vrot.slane %v420, 6
      %v515 = vrot.slane %v421, 2
      %v516 = vrot.slane %v421, 4
      %v517 = vrot.slane %v421, 6
      %v518 = vrot.slane %v423, 2
      %v519 = vrot.slane %v423, 4
      %v520 = vrot.slane %v423, 6
      %v521 = vrot.slane %v424, 2
      %v522 = vrot.slane %v424, 4
      %v523 = vrot.slane %v424, 6
      %v524 = vrot.slane %v426, 2
      %v525 = vrot.slane %v426, 4
      %v526 = vrot.slane %v426, 6
      %v527 = vrot.slane %v427, 2
      %v528 = vrot.slane %v427, 4
      %v529 = vrot.slane %v427, 6
      %v530 = vrot.slane %v429, 2
      %v531 = vrot.slane %v429, 4
      %v532 = vrot.slane %v429, 6
      %v533 = vrot.slane %v430, 2
      %v534 = vrot.slane %v430, 4
      %v535 = vrot.slane %v430, 6
      %v536 = vrot.slane %v432, 2
      %v537 = vrot.slane %v432, 4
      %v538 = vrot.slane %v432, 6
      %v539 = vrot.slane %v433, 2
      %v540 = vrot.slane %v433, 4
      %v541 = vrot.slane %v433, 6
      %v542 = vrot.slane %v435, 2
      %v543 = vrot.slane %v435, 4
      %v544 = vrot.slane %v435, 6
      %v545 = vrot.slane %v436, 2
      %v546 = vrot.slane %v436, 4
      %v547 = vrot.slane %v436, 6
      %v548 = vld [vmem:[%s1] sm:$0xff]
      %v549 = vld [vmem:[%s1 + $0x8] sm:$0xff]
      %v550 = vld [vmem:[%s1 + $0x10] sm:$0xff]
      %v551 = vld [vmem:[%s1 + $0x18] sm:$0xff]
      %v552 = vld [vmem:[%s1 + $0x20] sm:$0xff]
      %v553 = vld [vmem:[%s1 + $0x28] sm:$0xff]
      %v554 = vld [vmem:[%s1 + $0x30] sm:$0xff]
      %v555 = vld [vmem:[%s1 + $0x38] sm:$0xff]
      %v556 = vld [vmem:[%s1 + $0x40] sm:$0xff]
      %v557 = vld [vmem:[%s1 + $0x48] sm:$0xff]
      %v558 = vld [vmem:[%s1 + $0x50] sm:$0xff]
      %v559 = vld [vmem:[%s1 + $0x58] sm:$0xff]
      %v560 = vld [vmem:[%s1 + $0x60] sm:$0xff]
      %v561 = vld [vmem:[%s1 + $0x68] sm:$0xff]
      %v562 = vld [vmem:[%s1 + $0x70] sm:$0xff]
      %v563 = vld [vmem:[%s1 + $0x78] sm:$0xff]
      %s564 = scalar_lea.vmem %s1, 128
      %v565 = vld [vmem:[%s564] sm:$0xff]
      %v566 = vld [vmem:[%s564 + $0x8] sm:$0xff]
      %v567 = vld [vmem:[%s564 + $0x10] sm:$0xff]
      %v568 = vld [vmem:[%s564 + $0x18] sm:$0xff]
      %v569 = vld [vmem:[%s564 + $0x20] sm:$0xff]
      %v570 = vld [vmem:[%s564 + $0x28] sm:$0xff]
      %v571 = vld [vmem:[%s564 + $0x30] sm:$0xff]
      %v572 = vld [vmem:[%s564 + $0x38] sm:$0xff]
      %v573 = vld [vmem:[%s564 + $0x40] sm:$0xff]
      %v574 = vld [vmem:[%s564 + $0x48] sm:$0xff]
      %v575 = vld [vmem:[%s564 + $0x50] sm:$0xff]
      %v576 = vld [vmem:[%s564 + $0x58] sm:$0xff]
      %v577 = vld [vmem:[%s564 + $0x60] sm:$0xff]
      %v578 = vld [vmem:[%s564 + $0x68] sm:$0xff]
      %v579 = vld [vmem:[%s564 + $0x70] sm:$0xff]
      %v580 = vld [vmem:[%s564 + $0x78] sm:$0xff]
      %581 = vst [vmem:[#allocation1] ss:$4 sm:$0xff] %v402
      %s582 = scalar_lea.vmem [#allocation1], 1
      %583 = vst [vmem:[%s582] ss:$4 sm:$0xff] %v476
      %s584 = scalar_lea.vmem [#allocation1], 2
      %585 = vst [vmem:[%s584] ss:$4 sm:$0xff] %v477
      %s586 = scalar_lea.vmem [#allocation1], 3
      %587 = vst [vmem:[%s586] ss:$4 sm:$0xff] %v478
      %s588 = scalar_lea.vmem [#allocation1], 32
      %589 = vst [vmem:[%s588] ss:$4 sm:$0xff] %v403
      %s590 = scalar_lea.vmem [#allocation1], 33
      %591 = vst [vmem:[%s590] ss:$4 sm:$0xff] %v479
      %s592 = scalar_lea.vmem [#allocation1], 34
      %593 = vst [vmem:[%s592] ss:$4 sm:$0xff] %v480
      %s594 = scalar_lea.vmem [#allocation1], 35
      %595 = vst [vmem:[%s594] ss:$4 sm:$0xff] %v481
      %v596 = vld.sshfl [vmem:[#allocation1] sm:$0xff pattern:$0x73625140]
      %v597 = vld.sshfl [vmem:[#allocation1 + $0x20] sm:$0xff pattern:$0x73625140]
      %598 = vst [vmem:[#allocation1] ss:$4 sm:$0xff] %v404
      %599 = vst [vmem:[%s582] ss:$4 sm:$0xff] %v405
      %600 = vst [vmem:[%s584] ss:$4 sm:$0xff] %v482
      %601 = vst [vmem:[%s586] ss:$4 sm:$0xff] %v483
      %602 = vst [vmem:[%s588] ss:$4 sm:$0xff] %v484
      %603 = vst [vmem:[%s590] ss:$4 sm:$0xff] %v406
      %604 = vst [vmem:[%s592] ss:$4 sm:$0xff] %v485
      %605 = vst [vmem:[%s594] ss:$4 sm:$0xff] %v486
      %v606 = vld.sshfl [vmem:[#allocation1] sm:$0xff pattern:$0x73625140]
      %v607 = vld.sshfl [vmem:[#allocation1 + $0x20] sm:$0xff pattern:$0x73625140]
      %608 = vst [vmem:[#allocation1] ss:$4 sm:$0xff] %v487
      %609 = vst [vmem:[%s582] ss:$4 sm:$0xff] %v407
      %610 = vst [vmem:[%s584] ss:$4 sm:$0xff] %v408
      %611 = vst [vmem:[%s586] ss:$4 sm:$0xff] %v488
      %612 = vst [vmem:[%s588] ss:$4 sm:$0xff] %v489
      %613 = vst [vmem:[%s590] ss:$4 sm:$0xff] %v490
      %614 = vst [vmem:[%s592] ss:$4 sm:$0xff] %v409
      %615 = vst [vmem:[%s594] ss:$4 sm:$0xff] %v491
      %v616 = vld.sshfl [vmem:[#allocation1] sm:$0xff pattern:$0x73625140]
      %v617 = vld.sshfl [vmem:[#allocation1 + $0x20] sm:$0xff pattern:$0x73625140]
      %618 = vst [vmem:[#allocation1] ss:$4 sm:$0xff] %v492
      %619 = vst [vmem:[%s582] ss:$4 sm:$0xff] %v493
      %620 = vst [vmem:[%s584] ss:$4 sm:$0xff] %v410
      %621 = vst [vmem:[%s586] ss:$4 sm:$0xff] %v411
      %622 = vst [vmem:[%s588] ss:$4 sm:$0xff] %v494
      %623 = vst [vmem:[%s590] ss:$4 sm:$0xff] %v495
      %624 = vst [vmem:[%s592] ss:$4 sm:$0xff] %v496
      %625 = vst [vmem:[%s594] ss:$4 sm:$0xff] %v412
      %v626 = vld.sshfl [vmem:[#allocation1] sm:$0xff pattern:$0x73625140]
      %v627 = vld.sshfl [vmem:[#allocation1 + $0x20] sm:$0xff pattern:$0x73625140]
      %628 = vst [vmem:[#allocation1] ss:$4 sm:$0xff] %v497
      %629 = vst [vmem:[%s582] ss:$4 sm:$0xff] %v498
      %630 = vst [vmem:[%s584] ss:$4 sm:$0xff] %v499
      %631 = vst [vmem:[%s586] ss:$4 sm:$0xff] %v413
      %632 = vst [vmem:[%s588] ss:$4 sm:$0xff] %v414
      %633 = vst [vmem:[%s590] ss:$4 sm:$0xff] %v500
      %634 = vst [vmem:[%s592] ss:$4 sm:$0xff] %v501
      %635 = vst [vmem:[%s594] ss:$4 sm:$0xff] %v502
      %v636 = vld.sshfl [vmem:[#allocation1] sm:$0xff pattern:$0x73625140]
      %v637 = vld.sshfl [vmem:[#allocation1 + $0x20] sm:$0xff pattern:$0x73625140]
      %638 = vst [vmem:[#allocation1] ss:$4 sm:$0xff] %v415
      %639 = vst [vmem:[%s582] ss:$4 sm:$0xff] %v503
      %640 = vst [vmem:[%s584] ss:$4 sm:$0xff] %v504
      %641 = vst [vmem:[%s586] ss:$4 sm:$0xff] %v505
      %642 = vst [vmem:[%s588] ss:$4 sm:$0xff] %v416
      %643 = vst [vmem:[%s590] ss:$4 sm:$0xff] %v417
      %644 = vst [vmem:[%s592] ss:$4 sm:$0xff] %v506
      %645 = vst [vmem:[%s594] ss:$4 sm:$0xff] %v507
      %v646 = vld.sshfl [vmem:[#allocation1] sm:$0xff pattern:$0x73625140]
      %v647 = vld.sshfl [vmem:[#allocation1 + $0x20] sm:$0xff pattern:$0x73625140]
      %648 = vst [vmem:[#allocation1] ss:$4 sm:$0xff] %v508
      %649 = vst [vmem:[%s582] ss:$4 sm:$0xff] %v418
      %650 = vst [vmem:[%s584] ss:$4 sm:$0xff] %v509
      %651 = vst [vmem:[%s586] ss:$4 sm:$0xff] %v510
      %652 = vst [vmem:[%s588] ss:$4 sm:$0xff] %v511
      %653 = vst [vmem:[%s590] ss:$4 sm:$0xff] %v419
      %654 = vst [vmem:[%s592] ss:$4 sm:$0xff] %v420
      %655 = vst [vmem:[%s594] ss:$4 sm:$0xff] %v512
      %v656 = vld.sshfl [vmem:[#allocation1] sm:$0xff pattern:$0x73625140]
      %v657 = vld.sshfl [vmem:[#allocation1 + $0x20] sm:$0xff pattern:$0x73625140]
      %658 = vst [vmem:[#allocation1] ss:$4 sm:$0xff] %v513
      %659 = vst [vmem:[%s582] ss:$4 sm:$0xff] %v514
      %660 = vst [vmem:[%s584] ss:$4 sm:$0xff] %v421
      %661 = vst [vmem:[%s586] ss:$4 sm:$0xff] %v515
      %662 = vst [vmem:[%s588] ss:$4 sm:$0xff] %v516
      %663 = vst [vmem:[%s590] ss:$4 sm:$0xff] %v517
      %664 = vst [vmem:[%s592] ss:$4 sm:$0xff] %v422
      %665 = vst [vmem:[%s594] ss:$4 sm:$0xff] %v423
      %v666 = vld.sshfl [vmem:[#allocation1] sm:$0xff pattern:$0x73625140]
      %v667 = vld.sshfl [vmem:[#allocation1 + $0x20] sm:$0xff pattern:$0x73625140]
      %668 = vst [vmem:[#allocation1] ss:$4 sm:$0xff] %v518
      %669 = vst [vmem:[%s582] ss:$4 sm:$0xff] %v519
      %670 = vst [vmem:[%s584] ss:$4 sm:$0xff] %v520
      %671 = vst [vmem:[%s586] ss:$4 sm:$0xff] %v424
      %672 = vst [vmem:[%s588] ss:$4 sm:$0xff] %v521
      %673 = vst [vmem:[%s590] ss:$4 sm:$0xff] %v522
      %674 = vst [vmem:[%s592] ss:$4 sm:$0xff] %v523
      %675 = vst [vmem:[%s594] ss:$4 sm:$0xff] %v425
      %v676 = vld.sshfl [vmem:[#allocation1] sm:$0xff pattern:$0x73625140]
      %v677 = vld.sshfl [vmem:[#allocation1 + $0x20] sm:$0xff pattern:$0x73625140]
      %678 = vst [vmem:[#allocation1] ss:$4 sm:$0xff] %v426
      %679 = vst [vmem:[%s582] ss:$4 sm:$0xff] %v524
      %680 = vst [vmem:[%s584] ss:$4 sm:$0xff] %v525
      %681 = vst [vmem:[%s586] ss:$4 sm:$0xff] %v526
      %682 = vst [vmem:[%s588] ss:$4 sm:$0xff] %v427
      %683 = vst [vmem:[%s590] ss:$4 sm:$0xff] %v527
      %684 = vst [vmem:[%s592] ss:$4 sm:$0xff] %v528
      %685 = vst [vmem:[%s594] ss:$4 sm:$0xff] %v529
      %v686 = vld.sshfl [vmem:[#allocation1] sm:$0xff pattern:$0x73625140]
      %v687 = vld.sshfl [vmem:[#allocation1 + $0x20] sm:$0xff pattern:$0x73625140]
      %688 = vst [vmem:[#allocation1] ss:$4 sm:$0xff] %v428
      %689 = vst [vmem:[%s582] ss:$4 sm:$0xff] %v429
      %690 = vst [vmem:[%s584] ss:$4 sm:$0xff] %v530
      %691 = vst [vmem:[%s586] ss:$4 sm:$0xff] %v531
      %692 = vst [vmem:[%s588] ss:$4 sm:$0xff] %v532
      %693 = vst [vmem:[%s590] ss:$4 sm:$0xff] %v430
      %694 = vst [vmem:[%s592] ss:$4 sm:$0xff] %v533
      %695 = vst [vmem:[%s594] ss:$4 sm:$0xff] %v534
      %v696 = vld.sshfl [vmem:[#allocation1] sm:$0xff pattern:$0x73625140]
      %v697 = vld.sshfl [vmem:[#allocation1 + $0x20] sm:$0xff pattern:$0x73625140]
      %698 = vst [vmem:[#allocation1] ss:$4 sm:$0xff] %v535
      %699 = vst [vmem:[%s582] ss:$4 sm:$0xff] %v431
      %700 = vst [vmem:[%s584] ss:$4 sm:$0xff] %v432
      %v701 = vld.sshfl [vmem:[#allocation1] sm:$0xff pattern:$0x73625140]
      %vm702 = vcmask 1046528
      %v703 = vrot.slane %v596, 1
      %v704 = vrot.slane %v597, 1
      %v705 = vsel %vm702, %v703, %v704
      %v706 = vrot.slane %v606, 1
      %v707 = vsel %vm702, %v704, %v706
      %v708 = vrot.slane %v607, 1
      %v709 = vsel %vm702, %v706, %v708
      %v710 = vrot.slane %v616, 1
      %v711 = vsel %vm702, %v708, %v710
      %v712 = vrot.slane %v617, 1
      %v713 = vsel %vm702, %v710, %v712
      %v714 = vrot.slane %v626, 1
      %v715 = vsel %vm702, %v712, %v714
      %v716 = vrot.slane %v627, 1
      %v717 = vsel %vm702, %v714, %v716
      %v718 = vrot.slane %v636, 1
      %v719 = vsel %vm702, %v716, %v718
      %v720 = vrot.slane %v637, 1
      %v721 = vsel %vm702, %v718, %v720
      %v722 = vrot.slane %v646, 1
      %v723 = vsel %vm702, %v720, %v722
      %v724 = vrot.slane %v647, 1
      %v725 = vsel %vm702, %v722, %v724
      %v726 = vrot.slane %v656, 1
      %v727 = vsel %vm702, %v724, %v726
      %v728 = vrot.slane %v657, 1
      %v729 = vsel %vm702, %v726, %v728
      %v730 = vrot.slane %v666, 1
      %v731 = vsel %vm702, %v728, %v730
      %v732 = vrot.slane %v667, 1
      %v733 = vsel %vm702, %v730, %v732
      %v734 = vrot.slane %v676, 1
      %v735 = vsel %vm702, %v732, %v734
      %v736 = vrot.slane %v677, 1
      %v737 = vsel %vm702, %v734, %v736
      %v738 = vrot.slane %v686, 1
      %v739 = vsel %vm702, %v736, %v738
      %v740 = vrot.slane %v687, 1
      %v741 = vsel %vm702, %v738, %v740
      %v742 = vrot.slane %v696, 1
      %v743 = vsel %vm702, %v740, %v742
      %v744 = vrot.slane %v697, 1
      %v745 = vsel %vm702, %v742, %v744
      %v746 = vrot.slane %v701, 1
      %v747 = vsel %vm702, %v744, %v746
      %771 = vmatpush.msra.mxu0 %v580
      %772 = vmatpush.msra.mxu0 %v579
      %773 = vmatpush.msra.mxu0 %v578
      %774 = vmatpush.msra.mxu0 %v577
      %775 = vmatpush.msra.mxu0 %v576
      %776 = vmatpush.msra.mxu0 %v575
      %777 = vmatpush.msra.mxu0 %v574
      %778 = vmatpush.msra.mxu0 %v573
      %779 = vmatpush.msra.mxu0 %v572
      %780 = vmatpush.msra.mxu0 %v571
      %781 = vmatpush.msra.mxu0 %v570
      %782 = vmatpush.msra.mxu0 %v569
      %783 = vmatpush.msra.mxu0 %v568
      %784 = vmatpush.msra.mxu0 %v567
      %785 = vmatpush.msra.mxu0 %v566
      %786 = vmatpush.msra.mxu0 %v565
      %787 = vmatmul.f32.gmra.mxu0 %v705
      %v788 = vpop.f32.mrf.mxu0
      %v789 = vadd.f32 0.0, %v788
      %790 = vmatmul.f32.gmra.mxu0 %v707
      %v791 = vpop.f32.mrf.mxu0
      %v792 = vadd.f32 0.0, %v791
      %793 = vmatmul.f32.gmra.mxu0 %v709
      %v794 = vpop.f32.mrf.mxu0
      %v795 = vadd.f32 0.0, %v794
      %796 = vmatmul.f32.gmra.mxu0 %v711
      %v797 = vpop.f32.mrf.mxu0
      %v798 = vadd.f32 0.0, %v797
      %799 = vmatmul.f32.gmra.mxu0 %v713
      %v800 = vpop.f32.mrf.mxu0
      %v801 = vadd.f32 0.0, %v800
      %802 = vmatmul.f32.gmra.mxu0 %v715
      %v803 = vpop.f32.mrf.mxu0
      %v804 = vadd.f32 0.0, %v803
      %805 = vmatmul.f32.gmra.mxu0 %v717
      %v806 = vpop.f32.mrf.mxu0
      %v807 = vadd.f32 0.0, %v806
      %808 = vmatmul.f32.gmra.mxu0 %v719
      %v809 = vpop.f32.mrf.mxu0
      %v810 = vadd.f32 0.0, %v809
      %811 = vmatmul.f32.gmra.mxu0 %v721
      %v812 = vpop.f32.mrf.mxu0
      %v813 = vadd.f32 0.0, %v812
      %814 = vmatmul.f32.gmra.mxu0 %v723
      %v815 = vpop.f32.mrf.mxu0
      %v816 = vadd.f32 0.0, %v815
      %817 = vmatmul.f32.gmra.mxu0 %v725
      %v818 = vpop.f32.mrf.mxu0
      %v819 = vadd.f32 0.0, %v818
      %820 = vmatmul.f32.gmra.mxu0 %v727
      %v821 = vpop.f32.mrf.mxu0
      %v822 = vadd.f32 0.0, %v821
      %823 = vmatmul.f32.gmra.mxu0 %v729
      %v824 = vpop.f32.mrf.mxu0
      %v825 = vadd.f32 0.0, %v824
      %826 = vmatmul.f32.gmra.mxu0 %v731
      %v827 = vpop.f32.mrf.mxu0
      %v828 = vadd.f32 0.0, %v827
      %829 = vmatmul.f32.gmra.mxu0 %v733
      %v830 = vpop.f32.mrf.mxu0
      %v831 = vadd.f32 0.0, %v830
      %832 = vmatmul.f32.gmra.mxu0 %v735
      %v833 = vpop.f32.mrf.mxu0
      %v834 = vadd.f32 0.0, %v833
      %835 = vmatmul.f32.gmra.mxu0 %v737
      %v836 = vpop.f32.mrf.mxu0
      %v837 = vadd.f32 0.0, %v836
      %838 = vmatmul.f32.gmra.mxu0 %v739
      %v839 = vpop.f32.mrf.mxu0
      %v840 = vadd.f32 0.0, %v839
      %841 = vmatmul.f32.gmra.mxu0 %v741
      %v842 = vpop.f32.mrf.mxu0
      %v843 = vadd.f32 0.0, %v842
      %844 = vmatmul.f32.gmra.mxu0 %v743
      %v845 = vpop.f32.mrf.mxu0
      %v846 = vadd.f32 0.0, %v845
      %847 = vmatmul.f32.gmra.mxu0 %v745
      %v848 = vpop.f32.mrf.mxu0
      %v849 = vadd.f32 0.0, %v848
      %850 = vmatmul.f32.gmra.mxu0 %v747
      %v851 = vpop.f32.mrf.mxu0
      %v852 = vadd.f32 0.0, %v851
      %853 = vmatmul.f32.gmra.mxu0 %v746
      %v854 = vpop.f32.mrf.mxu0
      %v855 = vadd.f32 0.0, %v854
      %856 = vdwg.mxu0
      %857 = vst [vmem:[#allocation1] ss:$4 sm:$0xff] %v402
      %s858 = scalar_lea.vmem [#allocation1], 1
      %859 = vst [vmem:[%s858] ss:$4 sm:$0xff] %v476
      %s860 = scalar_lea.vmem [#allocation1], 2
      %861 = vst [vmem:[%s860] ss:$4 sm:$0xff] %v477
      %s862 = scalar_lea.vmem [#allocation1], 3
      %863 = vst [vmem:[%s862] ss:$4 sm:$0xff] %v478
      %s864 = scalar_lea.vmem [#allocation1], 32
      %865 = vst [vmem:[%s864] ss:$4 sm:$0xff] %v403
      %s866 = scalar_lea.vmem [#allocation1], 33
      %867 = vst [vmem:[%s866] ss:$4 sm:$0xff] %v479
      %s868 = scalar_lea.vmem [#allocation1], 34
      %869 = vst [vmem:[%s868] ss:$4 sm:$0xff] %v480
      %s870 = scalar_lea.vmem [#allocation1], 35
      %871 = vst [vmem:[%s870] ss:$4 sm:$0xff] %v481
      %v872 = vld.sshfl [vmem:[#allocation1] sm:$0xff pattern:$0x73625140]
      %v873 = vld.sshfl [vmem:[#allocation1 + $0x20] sm:$0xff pattern:$0x73625140]
      %874 = vst [vmem:[#allocation1] ss:$4 sm:$0xff] %v404
      %875 = vst [vmem:[%s858] ss:$4 sm:$0xff] %v405
      %876 = vst [vmem:[%s860] ss:$4 sm:$0xff] %v482
      %877 = vst [vmem:[%s862] ss:$4 sm:$0xff] %v483
      %878 = vst [vmem:[%s864] ss:$4 sm:$0xff] %v484
      %879 = vst [vmem:[%s866] ss:$4 sm:$0xff] %v406
      %880 = vst [vmem:[%s868] ss:$4 sm:$0xff] %v485
      %881 = vst [vmem:[%s870] ss:$4 sm:$0xff] %v486
      %v882 = vld.sshfl [vmem:[#allocation1] sm:$0xff pattern:$0x73625140]
      %v883 = vld.sshfl [vmem:[#allocation1 + $0x20] sm:$0xff pattern:$0x73625140]
      %884 = vst [vmem:[#allocation1] ss:$4 sm:$0xff] %v487
      %885 = vst [vmem:[%s858] ss:$4 sm:$0xff] %v407
      %886 = vst [vmem:[%s860] ss:$4 sm:$0xff] %v408
      %887 = vst [vmem:[%s862] ss:$4 sm:$0xff] %v488
      %888 = vst [vmem:[%s864] ss:$4 sm:$0xff] %v489
      %889 = vst [vmem:[%s866] ss:$4 sm:$0xff] %v490
      %890 = vst [vmem:[%s868] ss:$4 sm:$0xff] %v409
      %891 = vst [vmem:[%s870] ss:$4 sm:$0xff] %v491
      %v892 = vld.sshfl [vmem:[#allocation1] sm:$0xff pattern:$0x73625140]
      %v893 = vld.sshfl [vmem:[#allocation1 + $0x20] sm:$0xff pattern:$0x73625140]
      %894 = vst [vmem:[#allocation1] ss:$4 sm:$0xff] %v492
      %895 = vst [vmem:[%s858] ss:$4 sm:$0xff] %v493
      %896 = vst [vmem:[%s860] ss:$4 sm:$0xff] %v410
      %897 = vst [vmem:[%s862] ss:$4 sm:$0xff] %v411
      %898 = vst [vmem:[%s864] ss:$4 sm:$0xff] %v494
      %899 = vst [vmem:[%s866] ss:$4 sm:$0xff] %v495
      %900 = vst [vmem:[%s868] ss:$4 sm:$0xff] %v496
      %901 = vst [vmem:[%s870] ss:$4 sm:$0xff] %v412
      %v902 = vld.sshfl [vmem:[#allocation1] sm:$0xff pattern:$0x73625140]
      %v903 = vld.sshfl [vmem:[#allocation1 + $0x20] sm:$0xff pattern:$0x73625140]
      %904 = vst [vmem:[#allocation1] ss:$4 sm:$0xff] %v497
      %905 = vst [vmem:[%s858] ss:$4 sm:$0xff] %v498
      %906 = vst [vmem:[%s860] ss:$4 sm:$0xff] %v499
      %907 = vst [vmem:[%s862] ss:$4 sm:$0xff] %v413
      %908 = vst [vmem:[%s864] ss:$4 sm:$0xff] %v414
      %909 = vst [vmem:[%s866] ss:$4 sm:$0xff] %v500
      %910 = vst [vmem:[%s868] ss:$4 sm:$0xff] %v501
      %911 = vst [vmem:[%s870] ss:$4 sm:$0xff] %v502
      %v912 = vld.sshfl [vmem:[#allocation1] sm:$0xff pattern:$0x73625140]
      %v913 = vld.sshfl [vmem:[#allocation1 + $0x20] sm:$0xff pattern:$0x73625140]
      %914 = vst [vmem:[#allocation1] ss:$4 sm:$0xff] %v415
      %915 = vst [vmem:[%s858] ss:$4 sm:$0xff] %v503
      %916 = vst [vmem:[%s860] ss:$4 sm:$0xff] %v504
      %917 = vst [vmem:[%s862] ss:$4 sm:$0xff] %v505
      %918 = vst [vmem:[%s864] ss:$4 sm:$0xff] %v416
      %919 = vst [vmem:[%s866] ss:$4 sm:$0xff] %v417
      %920 = vst [vmem:[%s868] ss:$4 sm:$0xff] %v506
      %921 = vst [vmem:[%s870] ss:$4 sm:$0xff] %v507
      %v922 = vld.sshfl [vmem:[#allocation1] sm:$0xff pattern:$0x73625140]
      %v923 = vld.sshfl [vmem:[#allocation1 + $0x20] sm:$0xff pattern:$0x73625140]
      %924 = vst [vmem:[#allocation1] ss:$4 sm:$0xff] %v508
      %925 = vst [vmem:[%s858] ss:$4 sm:$0xff] %v418
      %926 = vst [vmem:[%s860] ss:$4 sm:$0xff] %v509
      %927 = vst [vmem:[%s862] ss:$4 sm:$0xff] %v510
      %928 = vst [vmem:[%s864] ss:$4 sm:$0xff] %v511
      %929 = vst [vmem:[%s866] ss:$4 sm:$0xff] %v419
      %930 = vst [vmem:[%s868] ss:$4 sm:$0xff] %v420
      %931 = vst [vmem:[%s870] ss:$4 sm:$0xff] %v512
      %v932 = vld.sshfl [vmem:[#allocation1] sm:$0xff pattern:$0x73625140]
      %v933 = vld.sshfl [vmem:[#allocation1 + $0x20] sm:$0xff pattern:$0x73625140]
      %934 = vst [vmem:[#allocation1] ss:$4 sm:$0xff] %v513
      %935 = vst [vmem:[%s858] ss:$4 sm:$0xff] %v514
      %936 = vst [vmem:[%s860] ss:$4 sm:$0xff] %v421
      %937 = vst [vmem:[%s862] ss:$4 sm:$0xff] %v515
      %938 = vst [vmem:[%s864] ss:$4 sm:$0xff] %v516
      %939 = vst [vmem:[%s866] ss:$4 sm:$0xff] %v517
      %940 = vst [vmem:[%s868] ss:$4 sm:$0xff] %v422
      %941 = vst [vmem:[%s870] ss:$4 sm:$0xff] %v423
      %v942 = vld.sshfl [vmem:[#allocation1] sm:$0xff pattern:$0x73625140]
      %v943 = vld.sshfl [vmem:[#allocation1 + $0x20] sm:$0xff pattern:$0x73625140]
      %944 = vst [vmem:[#allocation1] ss:$4 sm:$0xff] %v518
      %945 = vst [vmem:[%s858] ss:$4 sm:$0xff] %v519
      %946 = vst [vmem:[%s860] ss:$4 sm:$0xff] %v520
      %947 = vst [vmem:[%s862] ss:$4 sm:$0xff] %v424
      %948 = vst [vmem:[%s864] ss:$4 sm:$0xff] %v521
      %949 = vst [vmem:[%s866] ss:$4 sm:$0xff] %v522
      %950 = vst [vmem:[%s868] ss:$4 sm:$0xff] %v523
      %951 = vst [vmem:[%s870] ss:$4 sm:$0xff] %v425
      %v952 = vld.sshfl [vmem:[#allocation1] sm:$0xff pattern:$0x73625140]
      %v953 = vld.sshfl [vmem:[#allocation1 + $0x20] sm:$0xff pattern:$0x73625140]
      %954 = vst [vmem:[#allocation1] ss:$4 sm:$0xff] %v426
      %955 = vst [vmem:[%s858] ss:$4 sm:$0xff] %v524
      %956 = vst [vmem:[%s860] ss:$4 sm:$0xff] %v525
      %957 = vst [vmem:[%s862] ss:$4 sm:$0xff] %v526
      %958 = vst [vmem:[%s864] ss:$4 sm:$0xff] %v427
      %959 = vst [vmem:[%s866] ss:$4 sm:$0xff] %v527
      %960 = vst [vmem:[%s868] ss:$4 sm:$0xff] %v528
      %961 = vst [vmem:[%s870] ss:$4 sm:$0xff] %v529
      %v962 = vld.sshfl [vmem:[#allocation1] sm:$0xff pattern:$0x73625140]
      %v963 = vld.sshfl [vmem:[#allocation1 + $0x20] sm:$0xff pattern:$0x73625140]
      %964 = vst [vmem:[#allocation1] ss:$4 sm:$0xff] %v428
      %965 = vst [vmem:[%s858] ss:$4 sm:$0xff] %v429
      %966 = vst [vmem:[%s860] ss:$4 sm:$0xff] %v530
      %967 = vst [vmem:[%s862] ss:$4 sm:$0xff] %v531
      %968 = vst [vmem:[%s864] ss:$4 sm:$0xff] %v532
      %969 = vst [vmem:[%s866] ss:$4 sm:$0xff] %v430
      %970 = vst [vmem:[%s868] ss:$4 sm:$0xff] %v533
      %971 = vst [vmem:[%s870] ss:$4 sm:$0xff] %v534
      %v972 = vld.sshfl [vmem:[#allocation1] sm:$0xff pattern:$0x73625140]
      %v973 = vld.sshfl [vmem:[#allocation1 + $0x20] sm:$0xff pattern:$0x73625140]
      %974 = vst [vmem:[#allocation1] ss:$4 sm:$0xff] %v535
      %975 = vst [vmem:[%s858] ss:$4 sm:$0xff] %v431
      %v976 = vld.sshfl [vmem:[#allocation1] sm:$0xff pattern:$0x73625140]
      %1000 = vmatpush.msra.mxu0 %v563
      %1001 = vmatpush.msra.mxu0 %v562
      %1002 = vmatpush.msra.mxu0 %v561
      %1003 = vmatpush.msra.mxu0 %v560
      %1004 = vmatpush.msra.mxu0 %v559
      %1005 = vmatpush.msra.mxu0 %v558
      %1006 = vmatpush.msra.mxu0 %v557
      %1007 = vmatpush.msra.mxu0 %v556
      %1008 = vmatpush.msra.mxu0 %v555
      %1009 = vmatpush.msra.mxu0 %v554
      %1010 = vmatpush.msra.mxu0 %v553
      %1011 = vmatpush.msra.mxu0 %v552
      %1012 = vmatpush.msra.mxu0 %v551
      %1013 = vmatpush.msra.mxu0 %v550
      %1014 = vmatpush.msra.mxu0 %v549
      %1015 = vmatpush.msra.mxu0 %v548
      %1016 = vmatmul.f32.gmra.mxu0 %v872
      %v1017 = vpop.f32.mrf.mxu0
      %v1018 = vadd.f32 %v789, %v1017
      %1019 = vmatmul.f32.gmra.mxu0 %v873
      %v1020 = vpop.f32.mrf.mxu0
      %v1021 = vadd.f32 %v792, %v1020
      %1022 = vmatmul.f32.gmra.mxu0 %v882
      %v1023 = vpop.f32.mrf.mxu0
      %v1024 = vadd.f32 %v795, %v1023
      %1025 = vmatmul.f32.gmra.mxu0 %v883
      %v1026 = vpop.f32.mrf.mxu0
      %v1027 = vadd.f32 %v798, %v1026
      %1028 = vmatmul.f32.gmra.mxu0 %v892
      %v1029 = vpop.f32.mrf.mxu0
      %v1030 = vadd.f32 %v801, %v1029
      %1031 = vmatmul.f32.gmra.mxu0 %v893
      %v1032 = vpop.f32.mrf.mxu0
      %v1033 = vadd.f32 %v804, %v1032
      %1034 = vmatmul.f32.gmra.mxu0 %v902
      %v1035 = vpop.f32.mrf.mxu0
      %v1036 = vadd.f32 %v807, %v1035
      %1037 = vmatmul.f32.gmra.mxu0 %v903
      %v1038 = vpop.f32.mrf.mxu0
      %v1039 = vadd.f32 %v810, %v1038
      %1040 = vmatmul.f32.gmra.mxu0 %v912
      %v1041 = vpop.f32.mrf.mxu0
      %v1042 = vadd.f32 %v813, %v1041
      %1043 = vmatmul.f32.gmra.mxu0 %v913
      %v1044 = vpop.f32.mrf.mxu0
      %v1045 = vadd.f32 %v816, %v1044
      %1046 = vmatmul.f32.gmra.mxu0 %v922
      %v1047 = vpop.f32.mrf.mxu0
      %v1048 = vadd.f32 %v819, %v1047
      %1049 = vmatmul.f32.gmra.mxu0 %v923
      %v1050 = vpop.f32.mrf.mxu0
      %v1051 = vadd.f32 %v822, %v1050
      %1052 = vmatmul.f32.gmra.mxu0 %v932
      %v1053 = vpop.f32.mrf.mxu0
      %v1054 = vadd.f32 %v825, %v1053
      %1055 = vmatmul.f32.gmra.mxu0 %v933
      %v1056 = vpop.f32.mrf.mxu0
      %v1057 = vadd.f32 %v828, %v1056
      %1058 = vmatmul.f32.gmra.mxu0 %v942
      %v1059 = vpop.f32.mrf.mxu0
      %v1060 = vadd.f32 %v831, %v1059
      %1061 = vmatmul.f32.gmra.mxu0 %v943
      %v1062 = vpop.f32.mrf.mxu0
      %v1063 = vadd.f32 %v834, %v1062
      %1064 = vmatmul.f32.gmra.mxu0 %v952
      %v1065 = vpop.f32.mrf.mxu0
      %v1066 = vadd.f32 %v837, %v1065
      %1067 = vmatmul.f32.gmra.mxu0 %v953
      %v1068 = vpop.f32.mrf.mxu0
      %v1069 = vadd.f32 %v840, %v1068
      %1070 = vmatmul.f32.gmra.mxu0 %v962
      %v1071 = vpop.f32.mrf.mxu0
      %v1072 = vadd.f32 %v843, %v1071
      %1073 = vmatmul.f32.gmra.mxu0 %v963
      %v1074 = vpop.f32.mrf.mxu0
      %v1075 = vadd.f32 %v846, %v1074
      %1076 = vmatmul.f32.gmra.mxu0 %v972
      %v1077 = vpop.f32.mrf.mxu0
      %v1078 = vadd.f32 %v849, %v1077
      %1079 = vmatmul.f32.gmra.mxu0 %v973
      %v1080 = vpop.f32.mrf.mxu0
      %v1081 = vadd.f32 %v852, %v1080
      %1082 = vmatmul.f32.gmra.mxu0 %v976
      %v1083 = vpop.f32.mrf.mxu0
      %v1084 = vadd.f32 %v855, %v1083
      %1085 = vdwg.mxu0
      %s1086 = scalar_lea.vmem %s1, 256
      %v1087 = vld [vmem:[%s1086] sm:$0xff]
      %v1088 = vld [vmem:[%s1086 + $0x8] sm:$0xff]
      %v1089 = vld [vmem:[%s1086 + $0x10] sm:$0xff]
      %v1090 = vld [vmem:[%s1086 + $0x18] sm:$0xff]
      %v1091 = vld [vmem:[%s1086 + $0x20] sm:$0xff]
      %v1092 = vld [vmem:[%s1086 + $0x28] sm:$0xff]
      %v1093 = vld [vmem:[%s1086 + $0x30] sm:$0xff]
      %v1094 = vld [vmem:[%s1086 + $0x38] sm:$0xff]
      %v1095 = vld [vmem:[%s1086 + $0x40] sm:$0xff]
      %v1096 = vld [vmem:[%s1086 + $0x48] sm:$0xff]
      %v1097 = vld [vmem:[%s1086 + $0x50] sm:$0xff]
      %v1098 = vld [vmem:[%s1086 + $0x58] sm:$0xff]
      %v1099 = vld [vmem:[%s1086 + $0x60] sm:$0xff]
      %v1100 = vld [vmem:[%s1086 + $0x68] sm:$0xff]
      %v1101 = vld [vmem:[%s1086 + $0x70] sm:$0xff]
      %v1102 = vld [vmem:[%s1086 + $0x78] sm:$0xff]
      %1103 = vst [vmem:[#allocation1] ss:$4 sm:$0xff] %v476
      %s1104 = scalar_lea.vmem [#allocation1], 1
      %1105 = vst [vmem:[%s1104] ss:$4 sm:$0xff] %v477
      %s1106 = scalar_lea.vmem [#allocation1], 2
      %1107 = vst [vmem:[%s1106] ss:$4 sm:$0xff] %v478
      %s1108 = scalar_lea.vmem [#allocation1], 3
      %1109 = vst [vmem:[%s1108] ss:$4 sm:$0xff] %v403
      %s1110 = scalar_lea.vmem [#allocation1], 32
      %1111 = vst [vmem:[%s1110] ss:$4 sm:$0xff] %v479
      %s1112 = scalar_lea.vmem [#allocation1], 33
      %1113 = vst [vmem:[%s1112] ss:$4 sm:$0xff] %v480
      %s1114 = scalar_lea.vmem [#allocation1], 34
      %1115 = vst [vmem:[%s1114] ss:$4 sm:$0xff] %v481
      %s1116 = scalar_lea.vmem [#allocation1], 35
      %1117 = vst [vmem:[%s1116] ss:$4 sm:$0xff] %v404
      %v1118 = vld.sshfl [vmem:[#allocation1] sm:$0xff pattern:$0x73625140]
      %v1119 = vld.sshfl [vmem:[#allocation1 + $0x20] sm:$0xff pattern:$0x73625140]
      %1120 = vst [vmem:[#allocation1] ss:$4 sm:$0xff] %v405
      %1121 = vst [vmem:[%s1104] ss:$4 sm:$0xff] %v482
      %1122 = vst [vmem:[%s1106] ss:$4 sm:$0xff] %v483
      %1123 = vst [vmem:[%s1108] ss:$4 sm:$0xff] %v484
      %1124 = vst [vmem:[%s1110] ss:$4 sm:$0xff] %v406
      %1125 = vst [vmem:[%s1112] ss:$4 sm:$0xff] %v485
      %1126 = vst [vmem:[%s1114] ss:$4 sm:$0xff] %v486
      %1127 = vst [vmem:[%s1116] ss:$4 sm:$0xff] %v487
      %v1128 = vld.sshfl [vmem:[#allocation1] sm:$0xff pattern:$0x73625140]
      %v1129 = vld.sshfl [vmem:[#allocation1 + $0x20] sm:$0xff pattern:$0x73625140]
      %1130 = vst [vmem:[#allocation1] ss:$4 sm:$0xff] %v407
      %1131 = vst [vmem:[%s1104] ss:$4 sm:$0xff] %v408
      %1132 = vst [vmem:[%s1106] ss:$4 sm:$0xff] %v488
      %1133 = vst [vmem:[%s1108] ss:$4 sm:$0xff] %v489
      %1134 = vst [vmem:[%s1110] ss:$4 sm:$0xff] %v490
      %1135 = vst [vmem:[%s1112] ss:$4 sm:$0xff] %v409
      %1136 = vst [vmem:[%s1114] ss:$4 sm:$0xff] %v491
      %1137 = vst [vmem:[%s1116] ss:$4 sm:$0xff] %v492
      %v1138 = vld.sshfl [vmem:[#allocation1] sm:$0xff pattern:$0x73625140]
      %v1139 = vld.sshfl [vmem:[#allocation1 + $0x20] sm:$0xff pattern:$0x73625140]
      %1140 = vst [vmem:[#allocation1] ss:$4 sm:$0xff] %v493
      %1141 = vst [vmem:[%s1104] ss:$4 sm:$0xff] %v410
      %1142 = vst [vmem:[%s1106] ss:$4 sm:$0xff] %v411
      %1143 = vst [vmem:[%s1108] ss:$4 sm:$0xff] %v494
      %1144 = vst [vmem:[%s1110] ss:$4 sm:$0xff] %v495
      %1145 = vst [vmem:[%s1112] ss:$4 sm:$0xff] %v496
      %1146 = vst [vmem:[%s1114] ss:$4 sm:$0xff] %v412
      %1147 = vst [vmem:[%s1116] ss:$4 sm:$0xff] %v497
      %v1148 = vld.sshfl [vmem:[#allocation1] sm:$0xff pattern:$0x73625140]
      %v1149 = vld.sshfl [vmem:[#allocation1 + $0x20] sm:$0xff pattern:$0x73625140]
      %1150 = vst [vmem:[#allocation1] ss:$4 sm:$0xff] %v498
      %1151 = vst [vmem:[%s1104] ss:$4 sm:$0xff] %v499
      %1152 = vst [vmem:[%s1106] ss:$4 sm:$0xff] %v413
      %1153 = vst [vmem:[%s1108] ss:$4 sm:$0xff] %v414
      %1154 = vst [vmem:[%s1110] ss:$4 sm:$0xff] %v500
      %1155 = vst [vmem:[%s1112] ss:$4 sm:$0xff] %v501
      %1156 = vst [vmem:[%s1114] ss:$4 sm:$0xff] %v502
      %1157 = vst [vmem:[%s1116] ss:$4 sm:$0xff] %v415
      %v1158 = vld.sshfl [vmem:[#allocation1] sm:$0xff pattern:$0x73625140]
      %v1159 = vld.sshfl [vmem:[#allocation1 + $0x20] sm:$0xff pattern:$0x73625140]
      %1160 = vst [vmem:[#allocation1] ss:$4 sm:$0xff] %v503
      %1161 = vst [vmem:[%s1104] ss:$4 sm:$0xff] %v504
      %1162 = vst [vmem:[%s1106] ss:$4 sm:$0xff] %v505
      %1163 = vst [vmem:[%s1108] ss:$4 sm:$0xff] %v416
      %1164 = vst [vmem:[%s1110] ss:$4 sm:$0xff] %v417
      %1165 = vst [vmem:[%s1112] ss:$4 sm:$0xff] %v506
      %1166 = vst [vmem:[%s1114] ss:$4 sm:$0xff] %v507
      %1167 = vst [vmem:[%s1116] ss:$4 sm:$0xff] %v508
      %v1168 = vld.sshfl [vmem:[#allocation1] sm:$0xff pattern:$0x73625140]
      %v1169 = vld.sshfl [vmem:[#allocation1 + $0x20] sm:$0xff pattern:$0x73625140]
      %1170 = vst [vmem:[#allocation1] ss:$4 sm:$0xff] %v418
      %1171 = vst [vmem:[%s1104] ss:$4 sm:$0xff] %v509
      %1172 = vst [vmem:[%s1106] ss:$4 sm:$0xff] %v510
      %1173 = vst [vmem:[%s1108] ss:$4 sm:$0xff] %v511
      %1174 = vst [vmem:[%s1110] ss:$4 sm:$0xff] %v419
      %1175 = vst [vmem:[%s1112] ss:$4 sm:$0xff] %v420
      %1176 = vst [vmem:[%s1114] ss:$4 sm:$0xff] %v512
      %1177 = vst [vmem:[%s1116] ss:$4 sm:$0xff] %v513
      %v1178 = vld.sshfl [vmem:[#allocation1] sm:$0xff pattern:$0x73625140]
      %v1179 = vld.sshfl [vmem:[#allocation1 + $0x20] sm:$0xff pattern:$0x73625140]
      %1180 = vst [vmem:[#allocation1] ss:$4 sm:$0xff] %v514
      %1181 = vst [vmem:[%s1104] ss:$4 sm:$0xff] %v421
      %1182 = vst [vmem:[%s1106] ss:$4 sm:$0xff] %v515
      %1183 = vst [vmem:[%s1108] ss:$4 sm:$0xff] %v516
      %1184 = vst [vmem:[%s1110] ss:$4 sm:$0xff] %v517
      %1185 = vst [vmem:[%s1112] ss:$4 sm:$0xff] %v422
      %1186 = vst [vmem:[%s1114] ss:$4 sm:$0xff] %v423
      %1187 = vst [vmem:[%s1116] ss:$4 sm:$0xff] %v518
      %v1188 = vld.sshfl [vmem:[#allocation1] sm:$0xff pattern:$0x73625140]
      %v1189 = vld.sshfl [vmem:[#allocation1 + $0x20] sm:$0xff pattern:$0x73625140]
      %1190 = vst [vmem:[#allocation1] ss:$4 sm:$0xff] %v519
      %1191 = vst [vmem:[%s1104] ss:$4 sm:$0xff] %v520
      %1192 = vst [vmem:[%s1106] ss:$4 sm:$0xff] %v424
      %1193 = vst [vmem:[%s1108] ss:$4 sm:$0xff] %v521
      %1194 = vst [vmem:[%s1110] ss:$4 sm:$0xff] %v522
      %1195 = vst [vmem:[%s1112] ss:$4 sm:$0xff] %v523
      %1196 = vst [vmem:[%s1114] ss:$4 sm:$0xff] %v425
      %1197 = vst [vmem:[%s1116] ss:$4 sm:$0xff] %v426
      %v1198 = vld.sshfl [vmem:[#allocation1] sm:$0xff pattern:$0x73625140]
      %v1199 = vld.sshfl [vmem:[#allocation1 + $0x20] sm:$0xff pattern:$0x73625140]
      %1200 = vst [vmem:[#allocation1] ss:$4 sm:$0xff] %v524
      %1201 = vst [vmem:[%s1104] ss:$4 sm:$0xff] %v525
      %1202 = vst [vmem:[%s1106] ss:$4 sm:$0xff] %v526
      %1203 = vst [vmem:[%s1108] ss:$4 sm:$0xff] %v427
      %1204 = vst [vmem:[%s1110] ss:$4 sm:$0xff] %v527
      %1205 = vst [vmem:[%s1112] ss:$4 sm:$0xff] %v528
      %1206 = vst [vmem:[%s1114] ss:$4 sm:$0xff] %v529
      %1207 = vst [vmem:[%s1116] ss:$4 sm:$0xff] %v428
      %v1208 = vld.sshfl [vmem:[#allocation1] sm:$0xff pattern:$0x73625140]
      %v1209 = vld.sshfl [vmem:[#allocation1 + $0x20] sm:$0xff pattern:$0x73625140]
      %1210 = vst [vmem:[#allocation1] ss:$4 sm:$0xff] %v429
      %1211 = vst [vmem:[%s1104] ss:$4 sm:$0xff] %v530
      %1212 = vst [vmem:[%s1106] ss:$4 sm:$0xff] %v531
      %1213 = vst [vmem:[%s1108] ss:$4 sm:$0xff] %v532
      %1214 = vst [vmem:[%s1110] ss:$4 sm:$0xff] %v430
      %1215 = vst [vmem:[%s1112] ss:$4 sm:$0xff] %v533
      %1216 = vst [vmem:[%s1114] ss:$4 sm:$0xff] %v534
      %1217 = vst [vmem:[%s1116] ss:$4 sm:$0xff] %v535
      %v1218 = vld.sshfl [vmem:[#allocation1] sm:$0xff pattern:$0x73625140]
      %v1219 = vld.sshfl [vmem:[#allocation1 + $0x20] sm:$0xff pattern:$0x73625140]
      %1220 = vst [vmem:[#allocation1] ss:$4 sm:$0xff] %v431
      %1221 = vst [vmem:[%s1104] ss:$4 sm:$0xff] %v432
      %v1222 = vld.sshfl [vmem:[#allocation1] sm:$0xff pattern:$0x73625140]
      %1246 = vmatpush.msra.mxu0 %v1102
      %1247 = vmatpush.msra.mxu0 %v1101
      %1248 = vmatpush.msra.mxu0 %v1100
      %1249 = vmatpush.msra.mxu0 %v1099
      %1250 = vmatpush.msra.mxu0 %v1098
      %1251 = vmatpush.msra.mxu0 %v1097
      %1252 = vmatpush.msra.mxu0 %v1096
      %1253 = vmatpush.msra.mxu0 %v1095
      %1254 = vmatpush.msra.mxu0 %v1094
      %1255 = vmatpush.msra.mxu0 %v1093
      %1256 = vmatpush.msra.mxu0 %v1092
      %1257 = vmatpush.msra.mxu0 %v1091
      %1258 = vmatpush.msra.mxu0 %v1090
      %1259 = vmatpush.msra.mxu0 %v1089
      %1260 = vmatpush.msra.mxu0 %v1088
      %1261 = vmatpush.msra.mxu0 %v1087
      %1262 = vmatmul.f32.gmra.mxu0 %v1118
      %v1263 = vpop.f32.mrf.mxu0
      %v1264 = vadd.f32 0.0, %v1263
      %1265 = vmatmul.f32.gmra.mxu0 %v1119
      %v1266 = vpop.f32.mrf.mxu0
      %v1267 = vadd.f32 0.0, %v1266
      %1268 = vmatmul.f32.gmra.mxu0 %v1128
      %v1269 = vpop.f32.mrf.mxu0
      %v1270 = vadd.f32 0.0, %v1269
      %1271 = vmatmul.f32.gmra.mxu0 %v1129
      %v1272 = vpop.f32.mrf.mxu0
      %v1273 = vadd.f32 0.0, %v1272
      %1274 = vmatmul.f32.gmra.mxu0 %v1138
      %v1275 = vpop.f32.mrf.mxu0
      %v1276 = vadd.f32 0.0, %v1275
      %1277 = vmatmul.f32.gmra.mxu0 %v1139
      %v1278 = vpop.f32.mrf.mxu0
      %v1279 = vadd.f32 0.0, %v1278
      %1280 = vmatmul.f32.gmra.mxu0 %v1148
      %v1281 = vpop.f32.mrf.mxu0
      %v1282 = vadd.f32 0.0, %v1281
      %1283 = vmatmul.f32.gmra.mxu0 %v1149
      %v1284 = vpop.f32.mrf.mxu0
      %v1285 = vadd.f32 0.0, %v1284
      %1286 = vmatmul.f32.gmra.mxu0 %v1158
      %v1287 = vpop.f32.mrf.mxu0
      %v1288 = vadd.f32 0.0, %v1287
      %1289 = vmatmul.f32.gmra.mxu0 %v1159
      %v1290 = vpop.f32.mrf.mxu0
      %v1291 = vadd.f32 0.0, %v1290
      %1292 = vmatmul.f32.gmra.mxu0 %v1168
      %v1293 = vpop.f32.mrf.mxu0
      %v1294 = vadd.f32 0.0, %v1293
      %1295 = vmatmul.f32.gmra.mxu0 %v1169
      %v1296 = vpop.f32.mrf.mxu0
      %v1297 = vadd.f32 0.0, %v1296
      %1298 = vmatmul.f32.gmra.mxu0 %v1178
      %v1299 = vpop.f32.mrf.mxu0
      %v1300 = vadd.f32 0.0, %v1299
      %1301 = vmatmul.f32.gmra.mxu0 %v1179
      %v1302 = vpop.f32.mrf.mxu0
      %v1303 = vadd.f32 0.0, %v1302
      %1304 = vmatmul.f32.gmra.mxu0 %v1188
      %v1305 = vpop.f32.mrf.mxu0
      %v1306 = vadd.f32 0.0, %v1305
      %1307 = vmatmul.f32.gmra.mxu0 %v1189
      %v1308 = vpop.f32.mrf.mxu0
      %v1309 = vadd.f32 0.0, %v1308
      %1310 = vmatmul.f32.gmra.mxu0 %v1198
      %v1311 = vpop.f32.mrf.mxu0
      %v1312 = vadd.f32 0.0, %v1311
      %1313 = vmatmul.f32.gmra.mxu0 %v1199
      %v1314 = vpop.f32.mrf.mxu0
      %v1315 = vadd.f32 0.0, %v1314
      %1316 = vmatmul.f32.gmra.mxu0 %v1208
      %v1317 = vpop.f32.mrf.mxu0
      %v1318 = vadd.f32 0.0, %v1317
      %1319 = vmatmul.f32.gmra.mxu0 %v1209
      %v1320 = vpop.f32.mrf.mxu0
      %v1321 = vadd.f32 0.0, %v1320
      %1322 = vmatmul.f32.gmra.mxu0 %v1218
      %v1323 = vpop.f32.mrf.mxu0
      %v1324 = vadd.f32 0.0, %v1323
      %1325 = vmatmul.f32.gmra.mxu0 %v1219
      %v1326 = vpop.f32.mrf.mxu0
      %v1327 = vadd.f32 0.0, %v1326
      %1328 = vmatmul.f32.gmra.mxu0 %v1222
      %v1329 = vpop.f32.mrf.mxu0
      %v1330 = vadd.f32 0.0, %v1329
      %1331 = vdwg.mxu0
      %v1332 = vadd.f32 %v1018, %v1264
      %v1333 = vadd.f32 %v1021, %v1267
      %v1334 = vadd.f32 %v1024, %v1270
      %v1335 = vadd.f32 %v1027, %v1273
      %v1336 = vadd.f32 %v1030, %v1276
      %v1337 = vadd.f32 %v1033, %v1279
      %v1338 = vadd.f32 %v1036, %v1282
      %v1339 = vadd.f32 %v1039, %v1285
      %v1340 = vadd.f32 %v1042, %v1288
      %v1341 = vadd.f32 %v1045, %v1291
      %v1342 = vadd.f32 %v1048, %v1294
      %v1343 = vadd.f32 %v1051, %v1297
      %v1344 = vadd.f32 %v1054, %v1300
      %v1345 = vadd.f32 %v1057, %v1303
      %v1346 = vadd.f32 %v1060, %v1306
      %v1347 = vadd.f32 %v1063, %v1309
      %v1348 = vadd.f32 %v1066, %v1312
      %v1349 = vadd.f32 %v1069, %v1315
      %v1350 = vadd.f32 %v1072, %v1318
      %v1351 = vadd.f32 %v1075, %v1321
      %v1352 = vadd.f32 %v1078, %v1324
      %v1353 = vadd.f32 %v1081, %v1327
      %v1354 = vadd.f32 %v1084, %v1330
      %s1355 = scalar_lea.vmem %s1, 384
      %v1356 = vld [vmem:[%s1355] sm:$0xff]
      %v1357 = vld [vmem:[%s1355 + $0x8] sm:$0xff]
      %v1358 = vld [vmem:[%s1355 + $0x10] sm:$0xff]
      %v1359 = vld [vmem:[%s1355 + $0x18] sm:$0xff]
      %v1360 = vld [vmem:[%s1355 + $0x20] sm:$0xff]
      %v1361 = vld [vmem:[%s1355 + $0x28] sm:$0xff]
      %v1362 = vld [vmem:[%s1355 + $0x30] sm:$0xff]
      %v1363 = vld [vmem:[%s1355 + $0x38] sm:$0xff]
      %v1364 = vld [vmem:[%s1355 + $0x40] sm:$0xff]
      %v1365 = vld [vmem:[%s1355 + $0x48] sm:$0xff]
      %v1366 = vld [vmem:[%s1355 + $0x50] sm:$0xff]
      %v1367 = vld [vmem:[%s1355 + $0x58] sm:$0xff]
      %v1368 = vld [vmem:[%s1355 + $0x60] sm:$0xff]
      %v1369 = vld [vmem:[%s1355 + $0x68] sm:$0xff]
      %v1370 = vld [vmem:[%s1355 + $0x70] sm:$0xff]
      %v1371 = vld [vmem:[%s1355 + $0x78] sm:$0xff]
      %1372 = vst [vmem:[#allocation1] ss:$4 sm:$0xff] %v405
      %s1373 = scalar_lea.vmem [#allocation1], 1
      %1374 = vst [vmem:[%s1373] ss:$4 sm:$0xff] %v482
      %s1375 = scalar_lea.vmem [#allocation1], 2
      %1376 = vst [vmem:[%s1375] ss:$4 sm:$0xff] %v483
      %s1377 = scalar_lea.vmem [#allocation1], 3
      %1378 = vst [vmem:[%s1377] ss:$4 sm:$0xff] %v484
      %s1379 = scalar_lea.vmem [#allocation1], 32
      %1380 = vst [vmem:[%s1379] ss:$4 sm:$0xff] %v406
      %s1381 = scalar_lea.vmem [#allocation1], 33
      %1382 = vst [vmem:[%s1381] ss:$4 sm:$0xff] %v485
      %s1383 = scalar_lea.vmem [#allocation1], 34
      %1384 = vst [vmem:[%s1383] ss:$4 sm:$0xff] %v486
      %s1385 = scalar_lea.vmem [#allocation1], 35
      %1386 = vst [vmem:[%s1385] ss:$4 sm:$0xff] %v487
      %v1387 = vld.sshfl [vmem:[#allocation1] sm:$0xff pattern:$0x73625140]
      %v1388 = vld.sshfl [vmem:[#allocation1 + $0x20] sm:$0xff pattern:$0x73625140]
      %1389 = vst [vmem:[#allocation1] ss:$4 sm:$0xff] %v407
      %1390 = vst [vmem:[%s1373] ss:$4 sm:$0xff] %v408
      %1391 = vst [vmem:[%s1375] ss:$4 sm:$0xff] %v488
      %1392 = vst [vmem:[%s1377] ss:$4 sm:$0xff] %v489
      %1393 = vst [vmem:[%s1379] ss:$4 sm:$0xff] %v490
      %1394 = vst [vmem:[%s1381] ss:$4 sm:$0xff] %v409
      %1395 = vst [vmem:[%s1383] ss:$4 sm:$0xff] %v491
      %1396 = vst [vmem:[%s1385] ss:$4 sm:$0xff] %v492
      %v1397 = vld.sshfl [vmem:[#allocation1] sm:$0xff pattern:$0x73625140]
      %v1398 = vld.sshfl [vmem:[#allocation1 + $0x20] sm:$0xff pattern:$0x73625140]
      %1399 = vst [vmem:[#allocation1] ss:$4 sm:$0xff] %v493
      %1400 = vst [vmem:[%s1373] ss:$4 sm:$0xff] %v410
      %1401 = vst [vmem:[%s1375] ss:$4 sm:$0xff] %v411
      %1402 = vst [vmem:[%s1377] ss:$4 sm:$0xff] %v494
      %1403 = vst [vmem:[%s1379] ss:$4 sm:$0xff] %v495
      %1404 = vst [vmem:[%s1381] ss:$4 sm:$0xff] %v496
      %1405 = vst [vmem:[%s1383] ss:$4 sm:$0xff] %v412
      %1406 = vst [vmem:[%s1385] ss:$4 sm:$0xff] %v497
      %v1407 = vld.sshfl [vmem:[#allocation1] sm:$0xff pattern:$0x73625140]
      %v1408 = vld.sshfl [vmem:[#allocation1 + $0x20] sm:$0xff pattern:$0x73625140]
      %1409 = vst [vmem:[#allocation1] ss:$4 sm:$0xff] %v498
      %1410 = vst [vmem:[%s1373] ss:$4 sm:$0xff] %v499
      %1411 = vst [vmem:[%s1375] ss:$4 sm:$0xff] %v413
      %1412 = vst [vmem:[%s1377] ss:$4 sm:$0xff] %v414
      %1413 = vst [vmem:[%s1379] ss:$4 sm:$0xff] %v500
      %1414 = vst [vmem:[%s1381] ss:$4 sm:$0xff] %v501
      %1415 = vst [vmem:[%s1383] ss:$4 sm:$0xff] %v502
      %1416 = vst [vmem:[%s1385] ss:$4 sm:$0xff] %v415
      %v1417 = vld.sshfl [vmem:[#allocation1] sm:$0xff pattern:$0x73625140]
      %v1418 = vld.sshfl [vmem:[#allocation1 + $0x20] sm:$0xff pattern:$0x73625140]
      %1419 = vst [vmem:[#allocation1] ss:$4 sm:$0xff] %v503
      %1420 = vst [vmem:[%s1373] ss:$4 sm:$0xff] %v504
      %1421 = vst [vmem:[%s1375] ss:$4 sm:$0xff] %v505
      %1422 = vst [vmem:[%s1377] ss:$4 sm:$0xff] %v416
      %1423 = vst [vmem:[%s1379] ss:$4 sm:$0xff] %v417
      %1424 = vst [vmem:[%s1381] ss:$4 sm:$0xff] %v506
      %1425 = vst [vmem:[%s1383] ss:$4 sm:$0xff] %v507
      %1426 = vst [vmem:[%s1385] ss:$4 sm:$0xff] %v508
      %v1427 = vld.sshfl [vmem:[#allocation1] sm:$0xff pattern:$0x73625140]
      %v1428 = vld.sshfl [vmem:[#allocation1 + $0x20] sm:$0xff pattern:$0x73625140]
      %1429 = vst [vmem:[#allocation1] ss:$4 sm:$0xff] %v418
      %1430 = vst [vmem:[%s1373] ss:$4 sm:$0xff] %v509
      %1431 = vst [vmem:[%s1375] ss:$4 sm:$0xff] %v510
      %1432 = vst [vmem:[%s1377] ss:$4 sm:$0xff] %v511
      %1433 = vst [vmem:[%s1379] ss:$4 sm:$0xff] %v419
      %1434 = vst [vmem:[%s1381] ss:$4 sm:$0xff] %v420
      %1435 = vst [vmem:[%s1383] ss:$4 sm:$0xff] %v512
      %1436 = vst [vmem:[%s1385] ss:$4 sm:$0xff] %v513
      %v1437 = vld.sshfl [vmem:[#allocation1] sm:$0xff pattern:$0x73625140]
      %v1438 = vld.sshfl [vmem:[#allocation1 + $0x20] sm:$0xff pattern:$0x73625140]
      %1439 = vst [vmem:[#allocation1] ss:$4 sm:$0xff] %v514
      %1440 = vst [vmem:[%s1373] ss:$4 sm:$0xff] %v421
      %1441 = vst [vmem:[%s1375] ss:$4 sm:$0xff] %v515
      %1442 = vst [vmem:[%s1377] ss:$4 sm:$0xff] %v516
      %1443 = vst [vmem:[%s1379] ss:$4 sm:$0xff] %v517
      %1444 = vst [vmem:[%s1381] ss:$4 sm:$0xff] %v422
      %1445 = vst [vmem:[%s1383] ss:$4 sm:$0xff] %v423
      %1446 = vst [vmem:[%s1385] ss:$4 sm:$0xff] %v518
      %v1447 = vld.sshfl [vmem:[#allocation1] sm:$0xff pattern:$0x73625140]
      %v1448 = vld.sshfl [vmem:[#allocation1 + $0x20] sm:$0xff pattern:$0x73625140]
      %1449 = vst [vmem:[#allocation1] ss:$4 sm:$0xff] %v519
      %1450 = vst [vmem:[%s1373] ss:$4 sm:$0xff] %v520
      %1451 = vst [vmem:[%s1375] ss:$4 sm:$0xff] %v424
      %1452 = vst [vmem:[%s1377] ss:$4 sm:$0xff] %v521
      %1453 = vst [vmem:[%s1379] ss:$4 sm:$0xff] %v522
      %1454 = vst [vmem:[%s1381] ss:$4 sm:$0xff] %v523
      %1455 = vst [vmem:[%s1383] ss:$4 sm:$0xff] %v425
      %1456 = vst [vmem:[%s1385] ss:$4 sm:$0xff] %v426
      %v1457 = vld.sshfl [vmem:[#allocation1] sm:$0xff pattern:$0x73625140]
      %v1458 = vld.sshfl [vmem:[#allocation1 + $0x20] sm:$0xff pattern:$0x73625140]
      %1459 = vst [vmem:[#allocation1] ss:$4 sm:$0xff] %v524
      %1460 = vst [vmem:[%s1373] ss:$4 sm:$0xff] %v525
      %1461 = vst [vmem:[%s1375] ss:$4 sm:$0xff] %v526
      %1462 = vst [vmem:[%s1377] ss:$4 sm:$0xff] %v427
      %1463 = vst [vmem:[%s1379] ss:$4 sm:$0xff] %v527
      %1464 = vst [vmem:[%s1381] ss:$4 sm:$0xff] %v528
      %1465 = vst [vmem:[%s1383] ss:$4 sm:$0xff] %v529
      %1466 = vst [vmem:[%s1385] ss:$4 sm:$0xff] %v428
      %v1467 = vld.sshfl [vmem:[#allocation1] sm:$0xff pattern:$0x73625140]
      %v1468 = vld.sshfl [vmem:[#allocation1 + $0x20] sm:$0xff pattern:$0x73625140]
      %1469 = vst [vmem:[#allocation1] ss:$4 sm:$0xff] %v429
      %1470 = vst [vmem:[%s1373] ss:$4 sm:$0xff] %v530
      %1471 = vst [vmem:[%s1375] ss:$4 sm:$0xff] %v531
      %1472 = vst [vmem:[%s1377] ss:$4 sm:$0xff] %v532
      %1473 = vst [vmem:[%s1379] ss:$4 sm:$0xff] %v430
      %1474 = vst [vmem:[%s1381] ss:$4 sm:$0xff] %v533
      %1475 = vst [vmem:[%s1383] ss:$4 sm:$0xff] %v534
      %1476 = vst [vmem:[%s1385] ss:$4 sm:$0xff] %v535
      %v1477 = vld.sshfl [vmem:[#allocation1] sm:$0xff pattern:$0x73625140]
      %v1478 = vld.sshfl [vmem:[#allocation1 + $0x20] sm:$0xff pattern:$0x73625140]
      %1479 = vst [vmem:[#allocation1] ss:$4 sm:$0xff] %v431
      %1480 = vst [vmem:[%s1373] ss:$4 sm:$0xff] %v432
      %1481 = vst [vmem:[%s1375] ss:$4 sm:$0xff] %v536
      %1482 = vst [vmem:[%s1377] ss:$4 sm:$0xff] %v537
      %1483 = vst [vmem:[%s1379] ss:$4 sm:$0xff] %v538
      %1484 = vst [vmem:[%s1381] ss:$4 sm:$0xff] %v433
      %1485 = vst [vmem:[%s1383] ss:$4 sm:$0xff] %v539
      %1486 = vst [vmem:[%s1385] ss:$4 sm:$0xff] %v540
      %v1487 = vld.sshfl [vmem:[#allocation1] sm:$0xff pattern:$0x73625140]
      %v1488 = vld.sshfl [vmem:[#allocation1 + $0x20] sm:$0xff pattern:$0x73625140]
      %1489 = vst [vmem:[#allocation1] ss:$4 sm:$0xff] %v541
      %1490 = vst [vmem:[%s1373] ss:$4 sm:$0xff] %v434
      %v1491 = vld.sshfl [vmem:[#allocation1] sm:$0xff pattern:$0x73625140]
      %1515 = vmatpush.msra.mxu0 %v1371
      %1516 = vmatpush.msra.mxu0 %v1370
      %1517 = vmatpush.msra.mxu0 %v1369
      %1518 = vmatpush.msra.mxu0 %v1368
      %1519 = vmatpush.msra.mxu0 %v1367
      %1520 = vmatpush.msra.mxu0 %v1366
      %1521 = vmatpush.msra.mxu0 %v1365
      %1522 = vmatpush.msra.mxu0 %v1364
      %1523 = vmatpush.msra.mxu0 %v1363
      %1524 = vmatpush.msra.mxu0 %v1362
      %1525 = vmatpush.msra.mxu0 %v1361
      %1526 = vmatpush.msra.mxu0 %v1360
      %1527 = vmatpush.msra.mxu0 %v1359
      %1528 = vmatpush.msra.mxu0 %v1358
      %1529 = vmatpush.msra.mxu0 %v1357
      %1530 = vmatpush.msra.mxu0 %v1356
      %1531 = vmatmul.f32.gmra.mxu0 %v1387
      %v1532 = vpop.f32.mrf.mxu0
      %v1533 = vadd.f32 0.0, %v1532
      %1534 = vmatmul.f32.gmra.mxu0 %v1388
      %v1535 = vpop.f32.mrf.mxu0
      %v1536 = vadd.f32 0.0, %v1535
      %1537 = vmatmul.f32.gmra.mxu0 %v1397
      %v1538 = vpop.f32.mrf.mxu0
      %v1539 = vadd.f32 0.0, %v1538
      %1540 = vmatmul.f32.gmra.mxu0 %v1398
      %v1541 = vpop.f32.mrf.mxu0
      %v1542 = vadd.f32 0.0, %v1541
      %1543 = vmatmul.f32.gmra.mxu0 %v1407
      %v1544 = vpop.f32.mrf.mxu0
      %v1545 = vadd.f32 0.0, %v1544
      %1546 = vmatmul.f32.gmra.mxu0 %v1408
      %v1547 = vpop.f32.mrf.mxu0
      %v1548 = vadd.f32 0.0, %v1547
      %1549 = vmatmul.f32.gmra.mxu0 %v1417
      %v1550 = vpop.f32.mrf.mxu0
      %v1551 = vadd.f32 0.0, %v1550
      %1552 = vmatmul.f32.gmra.mxu0 %v1418
      %v1553 = vpop.f32.mrf.mxu0
      %v1554 = vadd.f32 0.0, %v1553
      %1555 = vmatmul.f32.gmra.mxu0 %v1427
      %v1556 = vpop.f32.mrf.mxu0
      %v1557 = vadd.f32 0.0, %v1556
      %1558 = vmatmul.f32.gmra.mxu0 %v1428
      %v1559 = vpop.f32.mrf.mxu0
      %v1560 = vadd.f32 0.0, %v1559
      %1561 = vmatmul.f32.gmra.mxu0 %v1437
      %v1562 = vpop.f32.mrf.mxu0
      %v1563 = vadd.f32 0.0, %v1562
      %1564 = vmatmul.f32.gmra.mxu0 %v1438
      %v1565 = vpop.f32.mrf.mxu0
      %v1566 = vadd.f32 0.0, %v1565
      %1567 = vmatmul.f32.gmra.mxu0 %v1447
      %v1568 = vpop.f32.mrf.mxu0
      %v1569 = vadd.f32 0.0, %v1568
      %1570 = vmatmul.f32.gmra.mxu0 %v1448
      %v1571 = vpop.f32.mrf.mxu0
      %v1572 = vadd.f32 0.0, %v1571
      %1573 = vmatmul.f32.gmra.mxu0 %v1457
      %v1574 = vpop.f32.mrf.mxu0
      %v1575 = vadd.f32 0.0, %v1574
      %1576 = vmatmul.f32.gmra.mxu0 %v1458
      %v1577 = vpop.f32.mrf.mxu0
      %v1578 = vadd.f32 0.0, %v1577
      %1579 = vmatmul.f32.gmra.mxu0 %v1467
      %v1580 = vpop.f32.mrf.mxu0
      %v1581 = vadd.f32 0.0, %v1580
      %1582 = vmatmul.f32.gmra.mxu0 %v1468
      %v1583 = vpop.f32.mrf.mxu0
      %v1584 = vadd.f32 0.0, %v1583
      %1585 = vmatmul.f32.gmra.mxu0 %v1477
      %v1586 = vpop.f32.mrf.mxu0
      %v1587 = vadd.f32 0.0, %v1586
      %1588 = vmatmul.f32.gmra.mxu0 %v1478
      %v1589 = vpop.f32.mrf.mxu0
      %v1590 = vadd.f32 0.0, %v1589
      %1591 = vmatmul.f32.gmra.mxu0 %v1487
      %v1592 = vpop.f32.mrf.mxu0
      %v1593 = vadd.f32 0.0, %v1592
      %1594 = vmatmul.f32.gmra.mxu0 %v1488
      %v1595 = vpop.f32.mrf.mxu0
      %v1596 = vadd.f32 0.0, %v1595
      %1597 = vmatmul.f32.gmra.mxu0 %v1491
      %v1598 = vpop.f32.mrf.mxu0
      %v1599 = vadd.f32 0.0, %v1598
      %1600 = vdwg.mxu0
      %v1601 = vadd.f32 %v1332, %v1533
      %v1602 = vadd.f32 %v1333, %v1536
      %v1603 = vadd.f32 %v1334, %v1539
      %v1604 = vadd.f32 %v1335, %v1542
      %v1605 = vadd.f32 %v1336, %v1545
      %v1606 = vadd.f32 %v1337, %v1548
      %v1607 = vadd.f32 %v1338, %v1551
      %v1608 = vadd.f32 %v1339, %v1554
      %v1609 = vadd.f32 %v1340, %v1557
      %v1610 = vadd.f32 %v1341, %v1560
      %v1611 = vadd.f32 %v1342, %v1563
      %v1612 = vadd.f32 %v1343, %v1566
      %v1613 = vadd.f32 %v1344, %v1569
      %v1614 = vadd.f32 %v1345, %v1572
      %v1615 = vadd.f32 %v1346, %v1575
      %v1616 = vadd.f32 %v1347, %v1578
      %v1617 = vadd.f32 %v1348, %v1581
      %v1618 = vadd.f32 %v1349, %v1584
      %v1619 = vadd.f32 %v1350, %v1587
      %v1620 = vadd.f32 %v1351, %v1590
      %v1621 = vadd.f32 %v1352, %v1593
      %v1622 = vadd.f32 %v1353, %v1596
      %v1623 = vadd.f32 %v1354, %v1599
      %s1624 = scalar_lea.vmem %s1, 512
      %v1625 = vld [vmem:[%s1624] sm:$0xff]
      %v1626 = vld [vmem:[%s1624 + $0x8] sm:$0xff]
      %v1627 = vld [vmem:[%s1624 + $0x10] sm:$0xff]
      %v1628 = vld [vmem:[%s1624 + $0x18] sm:$0xff]
      %v1629 = vld [vmem:[%s1624 + $0x20] sm:$0xff]
      %v1630 = vld [vmem:[%s1624 + $0x28] sm:$0xff]
      %v1631 = vld [vmem:[%s1624 + $0x30] sm:$0xff]
      %v1632 = vld [vmem:[%s1624 + $0x38] sm:$0xff]
      %v1633 = vld [vmem:[%s1624 + $0x40] sm:$0xff]
      %v1634 = vld [vmem:[%s1624 + $0x48] sm:$0xff]
      %v1635 = vld [vmem:[%s1624 + $0x50] sm:$0xff]
      %v1636 = vld [vmem:[%s1624 + $0x58] sm:$0xff]
      %v1637 = vld [vmem:[%s1624 + $0x60] sm:$0xff]
      %v1638 = vld [vmem:[%s1624 + $0x68] sm:$0xff]
      %v1639 = vld [vmem:[%s1624 + $0x70] sm:$0xff]
      %v1640 = vld [vmem:[%s1624 + $0x78] sm:$0xff]
      %1641 = vst [vmem:[#allocation1] ss:$4 sm:$0xff] %v405
      %s1642 = scalar_lea.vmem [#allocation1], 1
      %1643 = vst [vmem:[%s1642] ss:$4 sm:$0xff] %v482
      %s1644 = scalar_lea.vmem [#allocation1], 2
      %1645 = vst [vmem:[%s1644] ss:$4 sm:$0xff] %v483
      %s1646 = scalar_lea.vmem [#allocation1], 3
      %1647 = vst [vmem:[%s1646] ss:$4 sm:$0xff] %v484
      %s1648 = scalar_lea.vmem [#allocation1], 32
      %1649 = vst [vmem:[%s1648] ss:$4 sm:$0xff] %v406
      %s1650 = scalar_lea.vmem [#allocation1], 33
      %1651 = vst [vmem:[%s1650] ss:$4 sm:$0xff] %v485
      %s1652 = scalar_lea.vmem [#allocation1], 34
      %1653 = vst [vmem:[%s1652] ss:$4 sm:$0xff] %v486
      %s1654 = scalar_lea.vmem [#allocation1], 35
      %1655 = vst [vmem:[%s1654] ss:$4 sm:$0xff] %v487
      %v1656 = vld.sshfl [vmem:[#allocation1] sm:$0xff pattern:$0x73625140]
      %v1657 = vld.sshfl [vmem:[#allocation1 + $0x20] sm:$0xff pattern:$0x73625140]
      %1658 = vst [vmem:[#allocation1] ss:$4 sm:$0xff] %v407
      %1659 = vst [vmem:[%s1642] ss:$4 sm:$0xff] %v408
      %1660 = vst [vmem:[%s1644] ss:$4 sm:$0xff] %v488
      %1661 = vst [vmem:[%s1646] ss:$4 sm:$0xff] %v489
      %1662 = vst [vmem:[%s1648] ss:$4 sm:$0xff] %v490
      %1663 = vst [vmem:[%s1650] ss:$4 sm:$0xff] %v409
      %1664 = vst [vmem:[%s1652] ss:$4 sm:$0xff] %v491
      %1665 = vst [vmem:[%s1654] ss:$4 sm:$0xff] %v492
      %v1666 = vld.sshfl [vmem:[#allocation1] sm:$0xff pattern:$0x73625140]
      %v1667 = vld.sshfl [vmem:[#allocation1 + $0x20] sm:$0xff pattern:$0x73625140]
      %1668 = vst [vmem:[#allocation1] ss:$4 sm:$0xff] %v493
      %1669 = vst [vmem:[%s1642] ss:$4 sm:$0xff] %v410
      %1670 = vst [vmem:[%s1644] ss:$4 sm:$0xff] %v411
      %1671 = vst [vmem:[%s1646] ss:$4 sm:$0xff] %v494
      %1672 = vst [vmem:[%s1648] ss:$4 sm:$0xff] %v495
      %1673 = vst [vmem:[%s1650] ss:$4 sm:$0xff] %v496
      %1674 = vst [vmem:[%s1652] ss:$4 sm:$0xff] %v412
      %1675 = vst [vmem:[%s1654] ss:$4 sm:$0xff] %v497
      %v1676 = vld.sshfl [vmem:[#allocation1] sm:$0xff pattern:$0x73625140]
      %v1677 = vld.sshfl [vmem:[#allocation1 + $0x20] sm:$0xff pattern:$0x73625140]
      %1678 = vst [vmem:[#allocation1] ss:$4 sm:$0xff] %v498
      %1679 = vst [vmem:[%s1642] ss:$4 sm:$0xff] %v499
      %1680 = vst [vmem:[%s1644] ss:$4 sm:$0xff] %v413
      %1681 = vst [vmem:[%s1646] ss:$4 sm:$0xff] %v414
      %1682 = vst [vmem:[%s1648] ss:$4 sm:$0xff] %v500
      %1683 = vst [vmem:[%s1650] ss:$4 sm:$0xff] %v501
      %1684 = vst [vmem:[%s1652] ss:$4 sm:$0xff] %v502
      %1685 = vst [vmem:[%s1654] ss:$4 sm:$0xff] %v415
      %v1686 = vld.sshfl [vmem:[#allocation1] sm:$0xff pattern:$0x73625140]
      %v1687 = vld.sshfl [vmem:[#allocation1 + $0x20] sm:$0xff pattern:$0x73625140]
      %1688 = vst [vmem:[#allocation1] ss:$4 sm:$0xff] %v503
      %1689 = vst [vmem:[%s1642] ss:$4 sm:$0xff] %v504
      %1690 = vst [vmem:[%s1644] ss:$4 sm:$0xff] %v505
      %1691 = vst [vmem:[%s1646] ss:$4 sm:$0xff] %v416
      %1692 = vst [vmem:[%s1648] ss:$4 sm:$0xff] %v417
      %1693 = vst [vmem:[%s1650] ss:$4 sm:$0xff] %v506
      %1694 = vst [vmem:[%s1652] ss:$4 sm:$0xff] %v507
      %1695 = vst [vmem:[%s1654] ss:$4 sm:$0xff] %v508
      %v1696 = vld.sshfl [vmem:[#allocation1] sm:$0xff pattern:$0x73625140]
      %v1697 = vld.sshfl [vmem:[#allocation1 + $0x20] sm:$0xff pattern:$0x73625140]
      %1698 = vst [vmem:[#allocation1] ss:$4 sm:$0xff] %v418
      %1699 = vst [vmem:[%s1642] ss:$4 sm:$0xff] %v509
      %1700 = vst [vmem:[%s1644] ss:$4 sm:$0xff] %v510
      %1701 = vst [vmem:[%s1646] ss:$4 sm:$0xff] %v511
      %1702 = vst [vmem:[%s1648] ss:$4 sm:$0xff] %v419
      %1703 = vst [vmem:[%s1650] ss:$4 sm:$0xff] %v420
      %1704 = vst [vmem:[%s1652] ss:$4 sm:$0xff] %v512
      %1705 = vst [vmem:[%s1654] ss:$4 sm:$0xff] %v513
      %v1706 = vld.sshfl [vmem:[#allocation1] sm:$0xff pattern:$0x73625140]
      %v1707 = vld.sshfl [vmem:[#allocation1 + $0x20] sm:$0xff pattern:$0x73625140]
      %1708 = vst [vmem:[#allocation1] ss:$4 sm:$0xff] %v514
      %1709 = vst [vmem:[%s1642] ss:$4 sm:$0xff] %v421
      %1710 = vst [vmem:[%s1644] ss:$4 sm:$0xff] %v515
      %1711 = vst [vmem:[%s1646] ss:$4 sm:$0xff] %v516
      %1712 = vst [vmem:[%s1648] ss:$4 sm:$0xff] %v517
      %1713 = vst [vmem:[%s1650] ss:$4 sm:$0xff] %v422
      %1714 = vst [vmem:[%s1652] ss:$4 sm:$0xff] %v423
      %1715 = vst [vmem:[%s1654] ss:$4 sm:$0xff] %v518
      %v1716 = vld.sshfl [vmem:[#allocation1] sm:$0xff pattern:$0x73625140]
      %v1717 = vld.sshfl [vmem:[#allocation1 + $0x20] sm:$0xff pattern:$0x73625140]
      %1718 = vst [vmem:[#allocation1] ss:$4 sm:$0xff] %v519
      %1719 = vst [vmem:[%s1642] ss:$4 sm:$0xff] %v520
      %1720 = vst [vmem:[%s1644] ss:$4 sm:$0xff] %v424
      %1721 = vst [vmem:[%s1646] ss:$4 sm:$0xff] %v521
      %1722 = vst [vmem:[%s1648] ss:$4 sm:$0xff] %v522
      %1723 = vst [vmem:[%s1650] ss:$4 sm:$0xff] %v523
      %1724 = vst [vmem:[%s1652] ss:$4 sm:$0xff] %v425
      %1725 = vst [vmem:[%s1654] ss:$4 sm:$0xff] %v426
      %v1726 = vld.sshfl [vmem:[#allocation1] sm:$0xff pattern:$0x73625140]
      %v1727 = vld.sshfl [vmem:[#allocation1 + $0x20] sm:$0xff pattern:$0x73625140]
      %1728 = vst [vmem:[#allocation1] ss:$4 sm:$0xff] %v524
      %1729 = vst [vmem:[%s1642] ss:$4 sm:$0xff] %v525
      %1730 = vst [vmem:[%s1644] ss:$4 sm:$0xff] %v526
      %1731 = vst [vmem:[%s1646] ss:$4 sm:$0xff] %v427
      %1732 = vst [vmem:[%s1648] ss:$4 sm:$0xff] %v527
      %1733 = vst [vmem:[%s1650] ss:$4 sm:$0xff] %v528
      %1734 = vst [vmem:[%s1652] ss:$4 sm:$0xff] %v529
      %1735 = vst [vmem:[%s1654] ss:$4 sm:$0xff] %v428
      %v1736 = vld.sshfl [vmem:[#allocation1] sm:$0xff pattern:$0x73625140]
      %v1737 = vld.sshfl [vmem:[#allocation1 + $0x20] sm:$0xff pattern:$0x73625140]
      %1738 = vst [vmem:[#allocation1] ss:$4 sm:$0xff] %v429
      %1739 = vst [vmem:[%s1642] ss:$4 sm:$0xff] %v530
      %1740 = vst [vmem:[%s1644] ss:$4 sm:$0xff] %v531
      %1741 = vst [vmem:[%s1646] ss:$4 sm:$0xff] %v532
      %1742 = vst [vmem:[%s1648] ss:$4 sm:$0xff] %v430
      %1743 = vst [vmem:[%s1650] ss:$4 sm:$0xff] %v533
      %1744 = vst [vmem:[%s1652] ss:$4 sm:$0xff] %v534
      %1745 = vst [vmem:[%s1654] ss:$4 sm:$0xff] %v535
      %v1746 = vld.sshfl [vmem:[#allocation1] sm:$0xff pattern:$0x73625140]
      %v1747 = vld.sshfl [vmem:[#allocation1 + $0x20] sm:$0xff pattern:$0x73625140]
      %1748 = vst [vmem:[#allocation1] ss:$4 sm:$0xff] %v431
      %1749 = vst [vmem:[%s1642] ss:$4 sm:$0xff] %v432
      %1750 = vst [vmem:[%s1644] ss:$4 sm:$0xff] %v536
      %1751 = vst [vmem:[%s1646] ss:$4 sm:$0xff] %v537
      %1752 = vst [vmem:[%s1648] ss:$4 sm:$0xff] %v538
      %1753 = vst [vmem:[%s1650] ss:$4 sm:$0xff] %v433
      %1754 = vst [vmem:[%s1652] ss:$4 sm:$0xff] %v539
      %1755 = vst [vmem:[%s1654] ss:$4 sm:$0xff] %v540
      %v1756 = vld.sshfl [vmem:[#allocation1] sm:$0xff pattern:$0x73625140]
      %v1757 = vld.sshfl [vmem:[#allocation1 + $0x20] sm:$0xff pattern:$0x73625140]
      %1758 = vst [vmem:[#allocation1] ss:$4 sm:$0xff] %v541
      %1759 = vst [vmem:[%s1642] ss:$4 sm:$0xff] %v434
      %1760 = vst [vmem:[%s1644] ss:$4 sm:$0xff] %v435
      %v1761 = vld.sshfl [vmem:[#allocation1] sm:$0xff pattern:$0x73625140]
      %v1762 = vrot.slane %v1656, 1
      %v1763 = vrot.slane %v1657, 1
      %v1764 = vsel %vm702, %v1762, %v1763
      %v1765 = vrot.slane %v1666, 1
      %v1766 = vsel %vm702, %v1763, %v1765
      %v1767 = vrot.slane %v1667, 1
      %v1768 = vsel %vm702, %v1765, %v1767
      %v1769 = vrot.slane %v1676, 1
      %v1770 = vsel %vm702, %v1767, %v1769
      %v1771 = vrot.slane %v1677, 1
      %v1772 = vsel %vm702, %v1769, %v1771
      %v1773 = vrot.slane %v1686, 1
      %v1774 = vsel %vm702, %v1771, %v1773
      %v1775 = vrot.slane %v1687, 1
      %v1776 = vsel %vm702, %v1773, %v1775
      %v1777 = vrot.slane %v1696, 1
      %v1778 = vsel %vm702, %v1775, %v1777
      %v1779 = vrot.slane %v1697, 1
      %v1780 = vsel %vm702, %v1777, %v1779
      %v1781 = vrot.slane %v1706, 1
      %v1782 = vsel %vm702, %v1779, %v1781
      %v1783 = vrot.slane %v1707, 1
      %v1784 = vsel %vm702, %v1781, %v1783
      %v1785 = vrot.slane %v1716, 1
      %v1786 = vsel %vm702, %v1783, %v1785
      %v1787 = vrot.slane %v1717, 1
      %v1788 = vsel %vm702, %v1785, %v1787
      %v1789 = vrot.slane %v1726, 1
      %v1790 = vsel %vm702, %v1787, %v1789
      %v1791 = vrot.slane %v1727, 1
      %v1792 = vsel %vm702, %v1789, %v1791
      %v1793 = vrot.slane %v1736, 1
      %v1794 = vsel %vm702, %v1791, %v1793
      %v1795 = vrot.slane %v1737, 1
      %v1796 = vsel %vm702, %v1793, %v1795
      %v1797 = vrot.slane %v1746, 1
      %v1798 = vsel %vm702, %v1795, %v1797
      %v1799 = vrot.slane %v1747, 1
      %v1800 = vsel %vm702, %v1797, %v1799
      %v1801 = vrot.slane %v1756, 1
      %v1802 = vsel %vm702, %v1799, %v1801
      %v1803 = vrot.slane %v1757, 1
      %v1804 = vsel %vm702, %v1801, %v1803
      %v1805 = vrot.slane %v1761, 1
      %v1806 = vsel %vm702, %v1803, %v1805
      %1830 = vmatpush.msra.mxu0 %v1640
      %1831 = vmatpush.msra.mxu0 %v1639
      %1832 = vmatpush.msra.mxu0 %v1638
      %1833 = vmatpush.msra.mxu0 %v1637
      %1834 = vmatpush.msra.mxu0 %v1636
      %1835 = vmatpush.msra.mxu0 %v1635
      %1836 = vmatpush.msra.mxu0 %v1634
      %1837 = vmatpush.msra.mxu0 %v1633
      %1838 = vmatpush.msra.mxu0 %v1632
      %1839 = vmatpush.msra.mxu0 %v1631
      %1840 = vmatpush.msra.mxu0 %v1630
      %1841 = vmatpush.msra.mxu0 %v1629
      %1842 = vmatpush.msra.mxu0 %v1628
      %1843 = vmatpush.msra.mxu0 %v1627
      %1844 = vmatpush.msra.mxu0 %v1626
      %1845 = vmatpush.msra.mxu0 %v1625
      %1846 = vmatmul.f32.gmra.mxu0 %v1764
      %v1847 = vpop.f32.mrf.mxu0
      %v1848 = vadd.f32 0.0, %v1847
      %1849 = vmatmul.f32.gmra.mxu0 %v1766
      %v1850 = vpop.f32.mrf.mxu0
      %v1851 = vadd.f32 0.0, %v1850
      %1852 = vmatmul.f32.gmra.mxu0 %v1768
      %v1853 = vpop.f32.mrf.mxu0
      %v1854 = vadd.f32 0.0, %v1853
      %1855 = vmatmul.f32.gmra.mxu0 %v1770
      %v1856 = vpop.f32.mrf.mxu0
      %v1857 = vadd.f32 0.0, %v1856
      %1858 = vmatmul.f32.gmra.mxu0 %v1772
      %v1859 = vpop.f32.mrf.mxu0
      %v1860 = vadd.f32 0.0, %v1859
      %1861 = vmatmul.f32.gmra.mxu0 %v1774
      %v1862 = vpop.f32.mrf.mxu0
      %v1863 = vadd.f32 0.0, %v1862
      %1864 = vmatmul.f32.gmra.mxu0 %v1776
      %v1865 = vpop.f32.mrf.mxu0
      %v1866 = vadd.f32 0.0, %v1865
      %1867 = vmatmul.f32.gmra.mxu0 %v1778
      %v1868 = vpop.f32.mrf.mxu0
      %v1869 = vadd.f32 0.0, %v1868
      %1870 = vmatmul.f32.gmra.mxu0 %v1780
      %v1871 = vpop.f32.mrf.mxu0
      %v1872 = vadd.f32 0.0, %v1871
      %1873 = vmatmul.f32.gmra.mxu0 %v1782
      %v1874 = vpop.f32.mrf.mxu0
      %v1875 = vadd.f32 0.0, %v1874
      %1876 = vmatmul.f32.gmra.mxu0 %v1784
      %v1877 = vpop.f32.mrf.mxu0
      %v1878 = vadd.f32 0.0, %v1877
      %1879 = vmatmul.f32.gmra.mxu0 %v1786
      %v1880 = vpop.f32.mrf.mxu0
      %v1881 = vadd.f32 0.0, %v1880
      %1882 = vmatmul.f32.gmra.mxu0 %v1788
      %v1883 = vpop.f32.mrf.mxu0
      %v1884 = vadd.f32 0.0, %v1883
      %1885 = vmatmul.f32.gmra.mxu0 %v1790
      %v1886 = vpop.f32.mrf.mxu0
      %v1887 = vadd.f32 0.0, %v1886
      %1888 = vmatmul.f32.gmra.mxu0 %v1792
      %v1889 = vpop.f32.mrf.mxu0
      %v1890 = vadd.f32 0.0, %v1889
      %1891 = vmatmul.f32.gmra.mxu0 %v1794
      %v1892 = vpop.f32.mrf.mxu0
      %v1893 = vadd.f32 0.0, %v1892
      %1894 = vmatmul.f32.gmra.mxu0 %v1796
      %v1895 = vpop.f32.mrf.mxu0
      %v1896 = vadd.f32 0.0, %v1895
      %1897 = vmatmul.f32.gmra.mxu0 %v1798
      %v1898 = vpop.f32.mrf.mxu0
      %v1899 = vadd.f32 0.0, %v1898
      %1900 = vmatmul.f32.gmra.mxu0 %v1800
      %v1901 = vpop.f32.mrf.mxu0
      %v1902 = vadd.f32 0.0, %v1901
      %1903 = vmatmul.f32.gmra.mxu0 %v1802
      %v1904 = vpop.f32.mrf.mxu0
      %v1905 = vadd.f32 0.0, %v1904
      %1906 = vmatmul.f32.gmra.mxu0 %v1804
      %v1907 = vpop.f32.mrf.mxu0
      %v1908 = vadd.f32 0.0, %v1907
      %1909 = vmatmul.f32.gmra.mxu0 %v1806
      %v1910 = vpop.f32.mrf.mxu0
      %v1911 = vadd.f32 0.0, %v1910
      %1912 = vmatmul.f32.gmra.mxu0 %v1805
      %v1913 = vpop.f32.mrf.mxu0
      %v1914 = vadd.f32 0.0, %v1913
      %1915 = vdwg.mxu0
      %v1916 = vadd.f32 %v1601, %v1848
      %v1917 = vadd.f32 %v1602, %v1851
      %v1918 = vadd.f32 %v1603, %v1854
      %v1919 = vadd.f32 %v1604, %v1857
      %v1920 = vadd.f32 %v1605, %v1860
      %v1921 = vadd.f32 %v1606, %v1863
      %v1922 = vadd.f32 %v1607, %v1866
      %v1923 = vadd.f32 %v1608, %v1869
      %v1924 = vadd.f32 %v1609, %v1872
      %v1925 = vadd.f32 %v1610, %v1875
      %v1926 = vadd.f32 %v1611, %v1878
      %v1927 = vadd.f32 %v1612, %v1881
      %v1928 = vadd.f32 %v1613, %v1884
      %v1929 = vadd.f32 %v1614, %v1887
      %v1930 = vadd.f32 %v1615, %v1890
      %v1931 = vadd.f32 %v1616, %v1893
      %v1932 = vadd.f32 %v1617, %v1896
      %v1933 = vadd.f32 %v1618, %v1899
      %v1934 = vadd.f32 %v1619, %v1902
      %v1935 = vadd.f32 %v1620, %v1905
      %v1936 = vadd.f32 %v1621, %v1908
      %v1937 = vadd.f32 %v1622, %v1911
      %v1938 = vadd.f32 %v1623, %v1914
      %s1939 = scalar_lea.vmem %s1, 640
      %v1940 = vld [vmem:[%s1939] sm:$0xff]
      %v1941 = vld [vmem:[%s1939 + $0x8] sm:$0xff]
      %v1942 = vld [vmem:[%s1939 + $0x10] sm:$0xff]
      %v1943 = vld [vmem:[%s1939 + $0x18] sm:$0xff]
      %v1944 = vld [vmem:[%s1939 + $0x20] sm:$0xff]
      %v1945 = vld [vmem:[%s1939 + $0x28] sm:$0xff]
      %v1946 = vld [vmem:[%s1939 + $0x30] sm:$0xff]
      %v1947 = vld [vmem:[%s1939 + $0x38] sm:$0xff]
      %v1948 = vld [vmem:[%s1939 + $0x40] sm:$0xff]
      %v1949 = vld [vmem:[%s1939 + $0x48] sm:$0xff]
      %v1950 = vld [vmem:[%s1939 + $0x50] sm:$0xff]
      %v1951 = vld [vmem:[%s1939 + $0x58] sm:$0xff]
      %v1952 = vld [vmem:[%s1939 + $0x60] sm:$0xff]
      %v1953 = vld [vmem:[%s1939 + $0x68] sm:$0xff]
      %v1954 = vld [vmem:[%s1939 + $0x70] sm:$0xff]
      %v1955 = vld [vmem:[%s1939 + $0x78] sm:$0xff]
      %1956 = vst [vmem:[#allocation1] ss:$4 sm:$0xff] %v482
      %s1957 = scalar_lea.vmem [#allocation1], 1
      %1958 = vst [vmem:[%s1957] ss:$4 sm:$0xff] %v483
      %s1959 = scalar_lea.vmem [#allocation1], 2
      %1960 = vst [vmem:[%s1959] ss:$4 sm:$0xff] %v484
      %s1961 = scalar_lea.vmem [#allocation1], 3
      %1962 = vst [vmem:[%s1961] ss:$4 sm:$0xff] %v406
      %s1963 = scalar_lea.vmem [#allocation1], 32
      %1964 = vst [vmem:[%s1963] ss:$4 sm:$0xff] %v485
      %s1965 = scalar_lea.vmem [#allocation1], 33
      %1966 = vst [vmem:[%s1965] ss:$4 sm:$0xff] %v486
      %s1967 = scalar_lea.vmem [#allocation1], 34
      %1968 = vst [vmem:[%s1967] ss:$4 sm:$0xff] %v487
      %s1969 = scalar_lea.vmem [#allocation1], 35
      %1970 = vst [vmem:[%s1969] ss:$4 sm:$0xff] %v407
      %v1971 = vld.sshfl [vmem:[#allocation1] sm:$0xff pattern:$0x73625140]
      %v1972 = vld.sshfl [vmem:[#allocation1 + $0x20] sm:$0xff pattern:$0x73625140]
      %1973 = vst [vmem:[#allocation1] ss:$4 sm:$0xff] %v408
      %1974 = vst [vmem:[%s1957] ss:$4 sm:$0xff] %v488
      %1975 = vst [vmem:[%s1959] ss:$4 sm:$0xff] %v489
      %1976 = vst [vmem:[%s1961] ss:$4 sm:$0xff] %v490
      %1977 = vst [vmem:[%s1963] ss:$4 sm:$0xff] %v409
      %1978 = vst [vmem:[%s1965] ss:$4 sm:$0xff] %v491
      %1979 = vst [vmem:[%s1967] ss:$4 sm:$0xff] %v492
      %1980 = vst [vmem:[%s1969] ss:$4 sm:$0xff] %v493
      %v1981 = vld.sshfl [vmem:[#allocation1] sm:$0xff pattern:$0x73625140]
      %v1982 = vld.sshfl [vmem:[#allocation1 + $0x20] sm:$0xff pattern:$0x73625140]
      %1983 = vst [vmem:[#allocation1] ss:$4 sm:$0xff] %v410
      %1984 = vst [vmem:[%s1957] ss:$4 sm:$0xff] %v411
      %1985 = vst [vmem:[%s1959] ss:$4 sm:$0xff] %v494
      %1986 = vst [vmem:[%s1961] ss:$4 sm:$0xff] %v495
      %1987 = vst [vmem:[%s1963] ss:$4 sm:$0xff] %v496
      %1988 = vst [vmem:[%s1965] ss:$4 sm:$0xff] %v412
      %1989 = vst [vmem:[%s1967] ss:$4 sm:$0xff] %v497
      %1990 = vst [vmem:[%s1969] ss:$4 sm:$0xff] %v498
      %v1991 = vld.sshfl [vmem:[#allocation1] sm:$0xff pattern:$0x73625140]
      %v1992 = vld.sshfl [vmem:[#allocation1 + $0x20] sm:$0xff pattern:$0x73625140]
      %1993 = vst [vmem:[#allocation1] ss:$4 sm:$0xff] %v499
      %1994 = vst [vmem:[%s1957] ss:$4 sm:$0xff] %v413
      %1995 = vst [vmem:[%s1959] ss:$4 sm:$0xff] %v414
      %1996 = vst [vmem:[%s1961] ss:$4 sm:$0xff] %v500
      %1997 = vst [vmem:[%s1963] ss:$4 sm:$0xff] %v501
      %1998 = vst [vmem:[%s1965] ss:$4 sm:$0xff] %v502
      %1999 = vst [vmem:[%s1967] ss:$4 sm:$0xff] %v415
      %2000 = vst [vmem:[%s1969] ss:$4 sm:$0xff] %v503
      %v2001 = vld.sshfl [vmem:[#allocation1] sm:$0xff pattern:$0x73625140]
      %v2002 = vld.sshfl [vmem:[#allocation1 + $0x20] sm:$0xff pattern:$0x73625140]
      %2003 = vst [vmem:[#allocation1] ss:$4 sm:$0xff] %v504
      %2004 = vst [vmem:[%s1957] ss:$4 sm:$0xff] %v505
      %2005 = vst [vmem:[%s1959] ss:$4 sm:$0xff] %v416
      %2006 = vst [vmem:[%s1961] ss:$4 sm:$0xff] %v417
      %2007 = vst [vmem:[%s1963] ss:$4 sm:$0xff] %v506
      %2008 = vst [vmem:[%s1965] ss:$4 sm:$0xff] %v507
      %2009 = vst [vmem:[%s1967] ss:$4 sm:$0xff] %v508
      %2010 = vst [vmem:[%s1969] ss:$4 sm:$0xff] %v418
      %v2011 = vld.sshfl [vmem:[#allocation1] sm:$0xff pattern:$0x73625140]
      %v2012 = vld.sshfl [vmem:[#allocation1 + $0x20] sm:$0xff pattern:$0x73625140]
      %2013 = vst [vmem:[#allocation1] ss:$4 sm:$0xff] %v509
      %2014 = vst [vmem:[%s1957] ss:$4 sm:$0xff] %v510
      %2015 = vst [vmem:[%s1959] ss:$4 sm:$0xff] %v511
      %2016 = vst [vmem:[%s1961] ss:$4 sm:$0xff] %v419
      %2017 = vst [vmem:[%s1963] ss:$4 sm:$0xff] %v420
      %2018 = vst [vmem:[%s1965] ss:$4 sm:$0xff] %v512
      %2019 = vst [vmem:[%s1967] ss:$4 sm:$0xff] %v513
      %2020 = vst [vmem:[%s1969] ss:$4 sm:$0xff] %v514
      %v2021 = vld.sshfl [vmem:[#allocation1] sm:$0xff pattern:$0x73625140]
      %v2022 = vld.sshfl [vmem:[#allocation1 + $0x20] sm:$0xff pattern:$0x73625140]
      %2023 = vst [vmem:[#allocation1] ss:$4 sm:$0xff] %v421
      %2024 = vst [vmem:[%s1957] ss:$4 sm:$0xff] %v515
      %2025 = vst [vmem:[%s1959] ss:$4 sm:$0xff] %v516
      %2026 = vst [vmem:[%s1961] ss:$4 sm:$0xff] %v517
      %2027 = vst [vmem:[%s1963] ss:$4 sm:$0xff] %v422
      %2028 = vst [vmem:[%s1965] ss:$4 sm:$0xff] %v423
      %2029 = vst [vmem:[%s1967] ss:$4 sm:$0xff] %v518
      %2030 = vst [vmem:[%s1969] ss:$4 sm:$0xff] %v519
      %v2031 = vld.sshfl [vmem:[#allocation1] sm:$0xff pattern:$0x73625140]
      %v2032 = vld.sshfl [vmem:[#allocation1 + $0x20] sm:$0xff pattern:$0x73625140]
      %2033 = vst [vmem:[#allocation1] ss:$4 sm:$0xff] %v520
      %2034 = vst [vmem:[%s1957] ss:$4 sm:$0xff] %v424
      %2035 = vst [vmem:[%s1959] ss:$4 sm:$0xff] %v521
      %2036 = vst [vmem:[%s1961] ss:$4 sm:$0xff] %v522
      %2037 = vst [vmem:[%s1963] ss:$4 sm:$0xff] %v523
      %2038 = vst [vmem:[%s1965] ss:$4 sm:$0xff] %v425
      %2039 = vst [vmem:[%s1967] ss:$4 sm:$0xff] %v426
      %2040 = vst [vmem:[%s1969] ss:$4 sm:$0xff] %v524
      %v2041 = vld.sshfl [vmem:[#allocation1] sm:$0xff pattern:$0x73625140]
      %v2042 = vld.sshfl [vmem:[#allocation1 + $0x20] sm:$0xff pattern:$0x73625140]
      %2043 = vst [vmem:[#allocation1] ss:$4 sm:$0xff] %v525
      %2044 = vst [vmem:[%s1957] ss:$4 sm:$0xff] %v526
      %2045 = vst [vmem:[%s1959] ss:$4 sm:$0xff] %v427
      %2046 = vst [vmem:[%s1961] ss:$4 sm:$0xff] %v527
      %2047 = vst [vmem:[%s1963] ss:$4 sm:$0xff] %v528
      %2048 = vst [vmem:[%s1965] ss:$4 sm:$0xff] %v529
      %2049 = vst [vmem:[%s1967] ss:$4 sm:$0xff] %v428
      %2050 = vst [vmem:[%s1969] ss:$4 sm:$0xff] %v429
      %v2051 = vld.sshfl [vmem:[#allocation1] sm:$0xff pattern:$0x73625140]
      %v2052 = vld.sshfl [vmem:[#allocation1 + $0x20] sm:$0xff pattern:$0x73625140]
      %2053 = vst [vmem:[#allocation1] ss:$4 sm:$0xff] %v530
      %2054 = vst [vmem:[%s1957] ss:$4 sm:$0xff] %v531
      %2055 = vst [vmem:[%s1959] ss:$4 sm:$0xff] %v532
      %2056 = vst [vmem:[%s1961] ss:$4 sm:$0xff] %v430
      %2057 = vst [vmem:[%s1963] ss:$4 sm:$0xff] %v533
      %2058 = vst [vmem:[%s1965] ss:$4 sm:$0xff] %v534
      %2059 = vst [vmem:[%s1967] ss:$4 sm:$0xff] %v535
      %2060 = vst [vmem:[%s1969] ss:$4 sm:$0xff] %v431
      %v2061 = vld.sshfl [vmem:[#allocation1] sm:$0xff pattern:$0x73625140]
      %v2062 = vld.sshfl [vmem:[#allocation1 + $0x20] sm:$0xff pattern:$0x73625140]
      %2063 = vst [vmem:[#allocation1] ss:$4 sm:$0xff] %v432
      %2064 = vst [vmem:[%s1957] ss:$4 sm:$0xff] %v536
      %2065 = vst [vmem:[%s1959] ss:$4 sm:$0xff] %v537
      %2066 = vst [vmem:[%s1961] ss:$4 sm:$0xff] %v538
      %2067 = vst [vmem:[%s1963] ss:$4 sm:$0xff] %v433
      %2068 = vst [vmem:[%s1965] ss:$4 sm:$0xff] %v539
      %2069 = vst [vmem:[%s1967] ss:$4 sm:$0xff] %v540
      %2070 = vst [vmem:[%s1969] ss:$4 sm:$0xff] %v541
      %v2071 = vld.sshfl [vmem:[#allocation1] sm:$0xff pattern:$0x73625140]
      %v2072 = vld.sshfl [vmem:[#allocation1 + $0x20] sm:$0xff pattern:$0x73625140]
      %2073 = vst [vmem:[#allocation1] ss:$4 sm:$0xff] %v434
      %2074 = vst [vmem:[%s1957] ss:$4 sm:$0xff] %v435
      %v2075 = vld.sshfl [vmem:[#allocation1] sm:$0xff pattern:$0x73625140]
      %2099 = vmatpush.msra.mxu0 %v1955
      %2100 = vmatpush.msra.mxu0 %v1954
      %2101 = vmatpush.msra.mxu0 %v1953
      %2102 = vmatpush.msra.mxu0 %v1952
      %2103 = vmatpush.msra.mxu0 %v1951
      %2104 = vmatpush.msra.mxu0 %v1950
      %2105 = vmatpush.msra.mxu0 %v1949
      %2106 = vmatpush.msra.mxu0 %v1948
      %2107 = vmatpush.msra.mxu0 %v1947
      %2108 = vmatpush.msra.mxu0 %v1946
      %2109 = vmatpush.msra.mxu0 %v1945
      %2110 = vmatpush.msra.mxu0 %v1944
      %2111 = vmatpush.msra.mxu0 %v1943
      %2112 = vmatpush.msra.mxu0 %v1942
      %2113 = vmatpush.msra.mxu0 %v1941
      %2114 = vmatpush.msra.mxu0 %v1940
      %2115 = vmatmul.f32.gmra.mxu0 %v1971
      %v2116 = vpop.f32.mrf.mxu0
      %v2117 = vadd.f32 0.0, %v2116
      %2118 = vmatmul.f32.gmra.mxu0 %v1972
      %v2119 = vpop.f32.mrf.mxu0
      %v2120 = vadd.f32 0.0, %v2119
      %2121 = vmatmul.f32.gmra.mxu0 %v1981
      %v2122 = vpop.f32.mrf.mxu0
      %v2123 = vadd.f32 0.0, %v2122
      %2124 = vmatmul.f32.gmra.mxu0 %v1982
      %v2125 = vpop.f32.mrf.mxu0
      %v2126 = vadd.f32 0.0, %v2125
      %2127 = vmatmul.f32.gmra.mxu0 %v1991
      %v2128 = vpop.f32.mrf.mxu0
      %v2129 = vadd.f32 0.0, %v2128
      %2130 = vmatmul.f32.gmra.mxu0 %v1992
      %v2131 = vpop.f32.mrf.mxu0
      %v2132 = vadd.f32 0.0, %v2131
      %2133 = vmatmul.f32.gmra.mxu0 %v2001
      %v2134 = vpop.f32.mrf.mxu0
      %v2135 = vadd.f32 0.0, %v2134
      %2136 = vmatmul.f32.gmra.mxu0 %v2002
      %v2137 = vpop.f32.mrf.mxu0
      %v2138 = vadd.f32 0.0, %v2137
      %2139 = vmatmul.f32.gmra.mxu0 %v2011
      %v2140 = vpop.f32.mrf.mxu0
      %v2141 = vadd.f32 0.0, %v2140
      %2142 = vmatmul.f32.gmra.mxu0 %v2012
      %v2143 = vpop.f32.mrf.mxu0
      %v2144 = vadd.f32 0.0, %v2143
      %2145 = vmatmul.f32.gmra.mxu0 %v2021
      %v2146 = vpop.f32.mrf.mxu0
      %v2147 = vadd.f32 0.0, %v2146
      %2148 = vmatmul.f32.gmra.mxu0 %v2022
      %v2149 = vpop.f32.mrf.mxu0
      %v2150 = vadd.f32 0.0, %v2149
      %2151 = vmatmul.f32.gmra.mxu0 %v2031
      %v2152 = vpop.f32.mrf.mxu0
      %v2153 = vadd.f32 0.0, %v2152
      %2154 = vmatmul.f32.gmra.mxu0 %v2032
      %v2155 = vpop.f32.mrf.mxu0
      %v2156 = vadd.f32 0.0, %v2155
      %2157 = vmatmul.f32.gmra.mxu0 %v2041
      %v2158 = vpop.f32.mrf.mxu0
      %v2159 = vadd.f32 0.0, %v2158
      %2160 = vmatmul.f32.gmra.mxu0 %v2042
      %v2161 = vpop.f32.mrf.mxu0
      %v2162 = vadd.f32 0.0, %v2161
      %2163 = vmatmul.f32.gmra.mxu0 %v2051
      %v2164 = vpop.f32.mrf.mxu0
      %v2165 = vadd.f32 0.0, %v2164
      %2166 = vmatmul.f32.gmra.mxu0 %v2052
      %v2167 = vpop.f32.mrf.mxu0
      %v2168 = vadd.f32 0.0, %v2167
      %2169 = vmatmul.f32.gmra.mxu0 %v2061
      %v2170 = vpop.f32.mrf.mxu0
      %v2171 = vadd.f32 0.0, %v2170
      %2172 = vmatmul.f32.gmra.mxu0 %v2062
      %v2173 = vpop.f32.mrf.mxu0
      %v2174 = vadd.f32 0.0, %v2173
      %2175 = vmatmul.f32.gmra.mxu0 %v2071
      %v2176 = vpop.f32.mrf.mxu0
      %v2177 = vadd.f32 0.0, %v2176
      %2178 = vmatmul.f32.gmra.mxu0 %v2072
      %v2179 = vpop.f32.mrf.mxu0
      %v2180 = vadd.f32 0.0, %v2179
      %2181 = vmatmul.f32.gmra.mxu0 %v2075
      %v2182 = vpop.f32.mrf.mxu0
      %v2183 = vadd.f32 0.0, %v2182
      %2184 = vdwg.mxu0
      %v2185 = vadd.f32 %v1916, %v2117
      %v2186 = vadd.f32 %v1917, %v2120
      %v2187 = vadd.f32 %v1918, %v2123
      %v2188 = vadd.f32 %v1919, %v2126
      %v2189 = vadd.f32 %v1920, %v2129
      %v2190 = vadd.f32 %v1921, %v2132
      %v2191 = vadd.f32 %v1922, %v2135
      %v2192 = vadd.f32 %v1923, %v2138
      %v2193 = vadd.f32 %v1924, %v2141
      %v2194 = vadd.f32 %v1925, %v2144
      %v2195 = vadd.f32 %v1926, %v2147
      %v2196 = vadd.f32 %v1927, %v2150
      %v2197 = vadd.f32 %v1928, %v2153
      %v2198 = vadd.f32 %v1929, %v2156
      %v2199 = vadd.f32 %v1930, %v2159
      %v2200 = vadd.f32 %v1931, %v2162
      %v2201 = vadd.f32 %v1932, %v2165
      %v2202 = vadd.f32 %v1933, %v2168
      %v2203 = vadd.f32 %v1934, %v2171
      %v2204 = vadd.f32 %v1935, %v2174
      %v2205 = vadd.f32 %v1936, %v2177
      %v2206 = vadd.f32 %v1937, %v2180
      %v2207 = vadd.f32 %v1938, %v2183
      %s2208 = scalar_lea.vmem %s1, 768
      %v2209 = vld [vmem:[%s2208] sm:$0xff]
      %v2210 = vld [vmem:[%s2208 + $0x8] sm:$0xff]
      %v2211 = vld [vmem:[%s2208 + $0x10] sm:$0xff]
      %v2212 = vld [vmem:[%s2208 + $0x18] sm:$0xff]
      %v2213 = vld [vmem:[%s2208 + $0x20] sm:$0xff]
      %v2214 = vld [vmem:[%s2208 + $0x28] sm:$0xff]
      %v2215 = vld [vmem:[%s2208 + $0x30] sm:$0xff]
      %v2216 = vld [vmem:[%s2208 + $0x38] sm:$0xff]
      %v2217 = vld [vmem:[%s2208 + $0x40] sm:$0xff]
      %v2218 = vld [vmem:[%s2208 + $0x48] sm:$0xff]
      %v2219 = vld [vmem:[%s2208 + $0x50] sm:$0xff]
      %v2220 = vld [vmem:[%s2208 + $0x58] sm:$0xff]
      %v2221 = vld [vmem:[%s2208 + $0x60] sm:$0xff]
      %v2222 = vld [vmem:[%s2208 + $0x68] sm:$0xff]
      %v2223 = vld [vmem:[%s2208 + $0x70] sm:$0xff]
      %v2224 = vld [vmem:[%s2208 + $0x78] sm:$0xff]
      %2225 = vst [vmem:[#allocation1] ss:$4 sm:$0xff] %v408
      %s2226 = scalar_lea.vmem [#allocation1], 1
      %2227 = vst [vmem:[%s2226] ss:$4 sm:$0xff] %v488
      %s2228 = scalar_lea.vmem [#allocation1], 2
      %2229 = vst [vmem:[%s2228] ss:$4 sm:$0xff] %v489
      %s2230 = scalar_lea.vmem [#allocation1], 3
      %2231 = vst [vmem:[%s2230] ss:$4 sm:$0xff] %v490
      %s2232 = scalar_lea.vmem [#allocation1], 32
      %2233 = vst [vmem:[%s2232] ss:$4 sm:$0xff] %v409
      %s2234 = scalar_lea.vmem [#allocation1], 33
      %2235 = vst [vmem:[%s2234] ss:$4 sm:$0xff] %v491
      %s2236 = scalar_lea.vmem [#allocation1], 34
      %2237 = vst [vmem:[%s2236] ss:$4 sm:$0xff] %v492
      %s2238 = scalar_lea.vmem [#allocation1], 35
      %2239 = vst [vmem:[%s2238] ss:$4 sm:$0xff] %v493
      %v2240 = vld.sshfl [vmem:[#allocation1] sm:$0xff pattern:$0x73625140]
      %v2241 = vld.sshfl [vmem:[#allocation1 + $0x20] sm:$0xff pattern:$0x73625140]
      %2242 = vst [vmem:[#allocation1] ss:$4 sm:$0xff] %v410
      %2243 = vst [vmem:[%s2226] ss:$4 sm:$0xff] %v411
      %2244 = vst [vmem:[%s2228] ss:$4 sm:$0xff] %v494
      %2245 = vst [vmem:[%s2230] ss:$4 sm:$0xff] %v495
      %2246 = vst [vmem:[%s2232] ss:$4 sm:$0xff] %v496
      %2247 = vst [vmem:[%s2234] ss:$4 sm:$0xff] %v412
      %2248 = vst [vmem:[%s2236] ss:$4 sm:$0xff] %v497
      %2249 = vst [vmem:[%s2238] ss:$4 sm:$0xff] %v498
      %v2250 = vld.sshfl [vmem:[#allocation1] sm:$0xff pattern:$0x73625140]
      %v2251 = vld.sshfl [vmem:[#allocation1 + $0x20] sm:$0xff pattern:$0x73625140]
      %2252 = vst [vmem:[#allocation1] ss:$4 sm:$0xff] %v499
      %2253 = vst [vmem:[%s2226] ss:$4 sm:$0xff] %v413
      %2254 = vst [vmem:[%s2228] ss:$4 sm:$0xff] %v414
      %2255 = vst [vmem:[%s2230] ss:$4 sm:$0xff] %v500
      %2256 = vst [vmem:[%s2232] ss:$4 sm:$0xff] %v501
      %2257 = vst [vmem:[%s2234] ss:$4 sm:$0xff] %v502
      %2258 = vst [vmem:[%s2236] ss:$4 sm:$0xff] %v415
      %2259 = vst [vmem:[%s2238] ss:$4 sm:$0xff] %v503
      %v2260 = vld.sshfl [vmem:[#allocation1] sm:$0xff pattern:$0x73625140]
      %v2261 = vld.sshfl [vmem:[#allocation1 + $0x20] sm:$0xff pattern:$0x73625140]
      %2262 = vst [vmem:[#allocation1] ss:$4 sm:$0xff] %v504
      %2263 = vst [vmem:[%s2226] ss:$4 sm:$0xff] %v505
      %2264 = vst [vmem:[%s2228] ss:$4 sm:$0xff] %v416
      %2265 = vst [vmem:[%s2230] ss:$4 sm:$0xff] %v417
      %2266 = vst [vmem:[%s2232] ss:$4 sm:$0xff] %v506
      %2267 = vst [vmem:[%s2234] ss:$4 sm:$0xff] %v507
      %2268 = vst [vmem:[%s2236] ss:$4 sm:$0xff] %v508
      %2269 = vst [vmem:[%s2238] ss:$4 sm:$0xff] %v418
      %v2270 = vld.sshfl [vmem:[#allocation1] sm:$0xff pattern:$0x73625140]
      %v2271 = vld.sshfl [vmem:[#allocation1 + $0x20] sm:$0xff pattern:$0x73625140]
      %2272 = vst [vmem:[#allocation1] ss:$4 sm:$0xff] %v509
      %2273 = vst [vmem:[%s2226] ss:$4 sm:$0xff] %v510
      %2274 = vst [vmem:[%s2228] ss:$4 sm:$0xff] %v511
      %2275 = vst [vmem:[%s2230] ss:$4 sm:$0xff] %v419
      %2276 = vst [vmem:[%s2232] ss:$4 sm:$0xff] %v420
      %2277 = vst [vmem:[%s2234] ss:$4 sm:$0xff] %v512
      %2278 = vst [vmem:[%s2236] ss:$4 sm:$0xff] %v513
      %2279 = vst [vmem:[%s2238] ss:$4 sm:$0xff] %v514
      %v2280 = vld.sshfl [vmem:[#allocation1] sm:$0xff pattern:$0x73625140]
      %v2281 = vld.sshfl [vmem:[#allocation1 + $0x20] sm:$0xff pattern:$0x73625140]
      %2282 = vst [vmem:[#allocation1] ss:$4 sm:$0xff] %v421
      %2283 = vst [vmem:[%s2226] ss:$4 sm:$0xff] %v515
      %2284 = vst [vmem:[%s2228] ss:$4 sm:$0xff] %v516
      %2285 = vst [vmem:[%s2230] ss:$4 sm:$0xff] %v517
      %2286 = vst [vmem:[%s2232] ss:$4 sm:$0xff] %v422
      %2287 = vst [vmem:[%s2234] ss:$4 sm:$0xff] %v423
      %2288 = vst [vmem:[%s2236] ss:$4 sm:$0xff] %v518
      %2289 = vst [vmem:[%s2238] ss:$4 sm:$0xff] %v519
      %v2290 = vld.sshfl [vmem:[#allocation1] sm:$0xff pattern:$0x73625140]
      %v2291 = vld.sshfl [vmem:[#allocation1 + $0x20] sm:$0xff pattern:$0x73625140]
      %2292 = vst [vmem:[#allocation1] ss:$4 sm:$0xff] %v520
      %2293 = vst [vmem:[%s2226] ss:$4 sm:$0xff] %v424
      %2294 = vst [vmem:[%s2228] ss:$4 sm:$0xff] %v521
      %2295 = vst [vmem:[%s2230] ss:$4 sm:$0xff] %v522
      %2296 = vst [vmem:[%s2232] ss:$4 sm:$0xff] %v523
      %2297 = vst [vmem:[%s2234] ss:$4 sm:$0xff] %v425
      %2298 = vst [vmem:[%s2236] ss:$4 sm:$0xff] %v426
      %2299 = vst [vmem:[%s2238] ss:$4 sm:$0xff] %v524
      %v2300 = vld.sshfl [vmem:[#allocation1] sm:$0xff pattern:$0x73625140]
      %v2301 = vld.sshfl [vmem:[#allocation1 + $0x20] sm:$0xff pattern:$0x73625140]
      %2302 = vst [vmem:[#allocation1] ss:$4 sm:$0xff] %v525
      %2303 = vst [vmem:[%s2226] ss:$4 sm:$0xff] %v526
      %2304 = vst [vmem:[%s2228] ss:$4 sm:$0xff] %v427
      %2305 = vst [vmem:[%s2230] ss:$4 sm:$0xff] %v527
      %2306 = vst [vmem:[%s2232] ss:$4 sm:$0xff] %v528
      %2307 = vst [vmem:[%s2234] ss:$4 sm:$0xff] %v529
      %2308 = vst [vmem:[%s2236] ss:$4 sm:$0xff] %v428
      %2309 = vst [vmem:[%s2238] ss:$4 sm:$0xff] %v429
      %v2310 = vld.sshfl [vmem:[#allocation1] sm:$0xff pattern:$0x73625140]
      %v2311 = vld.sshfl [vmem:[#allocation1 + $0x20] sm:$0xff pattern:$0x73625140]
      %2312 = vst [vmem:[#allocation1] ss:$4 sm:$0xff] %v530
      %2313 = vst [vmem:[%s2226] ss:$4 sm:$0xff] %v531
      %2314 = vst [vmem:[%s2228] ss:$4 sm:$0xff] %v532
      %2315 = vst [vmem:[%s2230] ss:$4 sm:$0xff] %v430
      %2316 = vst [vmem:[%s2232] ss:$4 sm:$0xff] %v533
      %2317 = vst [vmem:[%s2234] ss:$4 sm:$0xff] %v534
      %2318 = vst [vmem:[%s2236] ss:$4 sm:$0xff] %v535
      %2319 = vst [vmem:[%s2238] ss:$4 sm:$0xff] %v431
      %v2320 = vld.sshfl [vmem:[#allocation1] sm:$0xff pattern:$0x73625140]
      %v2321 = vld.sshfl [vmem:[#allocation1 + $0x20] sm:$0xff pattern:$0x73625140]
      %2322 = vst [vmem:[#allocation1] ss:$4 sm:$0xff] %v432
      %2323 = vst [vmem:[%s2226] ss:$4 sm:$0xff] %v536
      %2324 = vst [vmem:[%s2228] ss:$4 sm:$0xff] %v537
      %2325 = vst [vmem:[%s2230] ss:$4 sm:$0xff] %v538
      %2326 = vst [vmem:[%s2232] ss:$4 sm:$0xff] %v433
      %2327 = vst [vmem:[%s2234] ss:$4 sm:$0xff] %v539
      %2328 = vst [vmem:[%s2236] ss:$4 sm:$0xff] %v540
      %2329 = vst [vmem:[%s2238] ss:$4 sm:$0xff] %v541
      %v2330 = vld.sshfl [vmem:[#allocation1] sm:$0xff pattern:$0x73625140]
      %v2331 = vld.sshfl [vmem:[#allocation1 + $0x20] sm:$0xff pattern:$0x73625140]
      %2332 = vst [vmem:[#allocation1] ss:$4 sm:$0xff] %v434
      %2333 = vst [vmem:[%s2226] ss:$4 sm:$0xff] %v435
      %2334 = vst [vmem:[%s2228] ss:$4 sm:$0xff] %v542
      %2335 = vst [vmem:[%s2230] ss:$4 sm:$0xff] %v543
      %2336 = vst [vmem:[%s2232] ss:$4 sm:$0xff] %v544
      %2337 = vst [vmem:[%s2234] ss:$4 sm:$0xff] %v436
      %2338 = vst [vmem:[%s2236] ss:$4 sm:$0xff] %v545
      %2339 = vst [vmem:[%s2238] ss:$4 sm:$0xff] %v546
      %v2340 = vld.sshfl [vmem:[#allocation1] sm:$0xff pattern:$0x73625140]
      %v2341 = vld.sshfl [vmem:[#allocation1 + $0x20] sm:$0xff pattern:$0x73625140]
      %2342 = vst [vmem:[#allocation1] ss:$4 sm:$0xff] %v547
      %2343 = vst [vmem:[%s2226] ss:$4 sm:$0xff] %v437
      %v2344 = vld.sshfl [vmem:[#allocation1] sm:$0xff pattern:$0x73625140]
      %2368 = vmatpush.msra.mxu0 %v2224
      %2369 = vmatpush.msra.mxu0 %v2223
      %2370 = vmatpush.msra.mxu0 %v2222
      %2371 = vmatpush.msra.mxu0 %v2221
      %2372 = vmatpush.msra.mxu0 %v2220
      %2373 = vmatpush.msra.mxu0 %v2219
      %2374 = vmatpush.msra.mxu0 %v2218
      %2375 = vmatpush.msra.mxu0 %v2217
      %2376 = vmatpush.msra.mxu0 %v2216
      %2377 = vmatpush.msra.mxu0 %v2215
      %2378 = vmatpush.msra.mxu0 %v2214
      %2379 = vmatpush.msra.mxu0 %v2213
      %2380 = vmatpush.msra.mxu0 %v2212
      %2381 = vmatpush.msra.mxu0 %v2211
      %2382 = vmatpush.msra.mxu0 %v2210
      %2383 = vmatpush.msra.mxu0 %v2209
      %2384 = vmatmul.f32.gmra.mxu0 %v2240
      %v2385 = vpop.f32.mrf.mxu0
      %v2386 = vadd.f32 0.0, %v2385
      %2387 = vmatmul.f32.gmra.mxu0 %v2241
      %v2388 = vpop.f32.mrf.mxu0
      %v2389 = vadd.f32 0.0, %v2388
      %2390 = vmatmul.f32.gmra.mxu0 %v2250
      %v2391 = vpop.f32.mrf.mxu0
      %v2392 = vadd.f32 0.0, %v2391
      %2393 = vmatmul.f32.gmra.mxu0 %v2251
      %v2394 = vpop.f32.mrf.mxu0
      %v2395 = vadd.f32 0.0, %v2394
      %2396 = vmatmul.f32.gmra.mxu0 %v2260
      %v2397 = vpop.f32.mrf.mxu0
      %v2398 = vadd.f32 0.0, %v2397
      %2399 = vmatmul.f32.gmra.mxu0 %v2261
      %v2400 = vpop.f32.mrf.mxu0
      %v2401 = vadd.f32 0.0, %v2400
      %2402 = vmatmul.f32.gmra.mxu0 %v2270
      %v2403 = vpop.f32.mrf.mxu0
      %v2404 = vadd.f32 0.0, %v2403
      %2405 = vmatmul.f32.gmra.mxu0 %v2271
      %v2406 = vpop.f32.mrf.mxu0
      %v2407 = vadd.f32 0.0, %v2406
      %2408 = vmatmul.f32.gmra.mxu0 %v2280
      %v2409 = vpop.f32.mrf.mxu0
      %v2410 = vadd.f32 0.0, %v2409
      %2411 = vmatmul.f32.gmra.mxu0 %v2281
      %v2412 = vpop.f32.mrf.mxu0
      %v2413 = vadd.f32 0.0, %v2412
      %2414 = vmatmul.f32.gmra.mxu0 %v2290
      %v2415 = vpop.f32.mrf.mxu0
      %v2416 = vadd.f32 0.0, %v2415
      %2417 = vmatmul.f32.gmra.mxu0 %v2291
      %v2418 = vpop.f32.mrf.mxu0
      %v2419 = vadd.f32 0.0, %v2418
      %2420 = vmatmul.f32.gmra.mxu0 %v2300
      %v2421 = vpop.f32.mrf.mxu0
      %v2422 = vadd.f32 0.0, %v2421
      %2423 = vmatmul.f32.gmra.mxu0 %v2301
      %v2424 = vpop.f32.mrf.mxu0
      %v2425 = vadd.f32 0.0, %v2424
      %2426 = vmatmul.f32.gmra.mxu0 %v2310
      %v2427 = vpop.f32.mrf.mxu0
      %v2428 = vadd.f32 0.0, %v2427
      %2429 = vmatmul.f32.gmra.mxu0 %v2311
      %v2430 = vpop.f32.mrf.mxu0
      %v2431 = vadd.f32 0.0, %v2430
      %2432 = vmatmul.f32.gmra.mxu0 %v2320
      %v2433 = vpop.f32.mrf.mxu0
      %v2434 = vadd.f32 0.0, %v2433
      %2435 = vmatmul.f32.gmra.mxu0 %v2321
      %v2436 = vpop.f32.mrf.mxu0
      %v2437 = vadd.f32 0.0, %v2436
      %2438 = vmatmul.f32.gmra.mxu0 %v2330
      %v2439 = vpop.f32.mrf.mxu0
      %v2440 = vadd.f32 0.0, %v2439
      %2441 = vmatmul.f32.gmra.mxu0 %v2331
      %v2442 = vpop.f32.mrf.mxu0
      %v2443 = vadd.f32 0.0, %v2442
      %2444 = vmatmul.f32.gmra.mxu0 %v2340
      %v2445 = vpop.f32.mrf.mxu0
      %v2446 = vadd.f32 0.0, %v2445
      %2447 = vmatmul.f32.gmra.mxu0 %v2341
      %v2448 = vpop.f32.mrf.mxu0
      %v2449 = vadd.f32 0.0, %v2448
      %2450 = vmatmul.f32.gmra.mxu0 %v2344
      %v2451 = vpop.f32.mrf.mxu0
      %v2452 = vadd.f32 0.0, %v2451
      %2453 = vdwg.mxu0
      %v2454 = vadd.f32 %v2185, %v2386
      %v2455 = vadd.f32 %v2186, %v2389
      %v2456 = vadd.f32 %v2187, %v2392
      %v2457 = vadd.f32 %v2188, %v2395
      %v2458 = vadd.f32 %v2189, %v2398
      %v2459 = vadd.f32 %v2190, %v2401
      %v2460 = vadd.f32 %v2191, %v2404
      %v2461 = vadd.f32 %v2192, %v2407
      %v2462 = vadd.f32 %v2193, %v2410
      %v2463 = vadd.f32 %v2194, %v2413
      %v2464 = vadd.f32 %v2195, %v2416
      %v2465 = vadd.f32 %v2196, %v2419
      %v2466 = vadd.f32 %v2197, %v2422
      %v2467 = vadd.f32 %v2198, %v2425
      %v2468 = vadd.f32 %v2199, %v2428
      %v2469 = vadd.f32 %v2200, %v2431
      %v2470 = vadd.f32 %v2201, %v2434
      %v2471 = vadd.f32 %v2202, %v2437
      %v2472 = vadd.f32 %v2203, %v2440
      %v2473 = vadd.f32 %v2204, %v2443
      %v2474 = vadd.f32 %v2205, %v2446
      %v2475 = vadd.f32 %v2206, %v2449
      %v2476 = vadd.f32 %v2207, %v2452
      %s2477 = scalar_lea.vmem %s1, 896
      %v2478 = vld [vmem:[%s2477] sm:$0xff]
      %v2479 = vld [vmem:[%s2477 + $0x8] sm:$0xff]
      %v2480 = vld [vmem:[%s2477 + $0x10] sm:$0xff]
      %v2481 = vld [vmem:[%s2477 + $0x18] sm:$0xff]
      %v2482 = vld [vmem:[%s2477 + $0x20] sm:$0xff]
      %v2483 = vld [vmem:[%s2477 + $0x28] sm:$0xff]
      %v2484 = vld [vmem:[%s2477 + $0x30] sm:$0xff]
      %v2485 = vld [vmem:[%s2477 + $0x38] sm:$0xff]
      %v2486 = vld [vmem:[%s2477 + $0x40] sm:$0xff]
      %v2487 = vld [vmem:[%s2477 + $0x48] sm:$0xff]
      %v2488 = vld [vmem:[%s2477 + $0x50] sm:$0xff]
      %v2489 = vld [vmem:[%s2477 + $0x58] sm:$0xff]
      %v2490 = vld [vmem:[%s2477 + $0x60] sm:$0xff]
      %v2491 = vld [vmem:[%s2477 + $0x68] sm:$0xff]
      %v2492 = vld [vmem:[%s2477 + $0x70] sm:$0xff]
      %v2493 = vld [vmem:[%s2477 + $0x78] sm:$0xff]
      %2494 = vst [vmem:[#allocation1] ss:$4 sm:$0xff] %v408
      %s2495 = scalar_lea.vmem [#allocation1], 1
      %2496 = vst [vmem:[%s2495] ss:$4 sm:$0xff] %v488
      %s2497 = scalar_lea.vmem [#allocation1], 2
      %2498 = vst [vmem:[%s2497] ss:$4 sm:$0xff] %v489
      %s2499 = scalar_lea.vmem [#allocation1], 3
      %2500 = vst [vmem:[%s2499] ss:$4 sm:$0xff] %v490
      %s2501 = scalar_lea.vmem [#allocation1], 32
      %2502 = vst [vmem:[%s2501] ss:$4 sm:$0xff] %v409
      %s2503 = scalar_lea.vmem [#allocation1], 33
      %2504 = vst [vmem:[%s2503] ss:$4 sm:$0xff] %v491
      %s2505 = scalar_lea.vmem [#allocation1], 34
      %2506 = vst [vmem:[%s2505] ss:$4 sm:$0xff] %v492
      %s2507 = scalar_lea.vmem [#allocation1], 35
      %2508 = vst [vmem:[%s2507] ss:$4 sm:$0xff] %v493
      %v2509 = vld.sshfl [vmem:[#allocation1] sm:$0xff pattern:$0x73625140]
      %v2510 = vld.sshfl [vmem:[#allocation1 + $0x20] sm:$0xff pattern:$0x73625140]
      %2511 = vst [vmem:[#allocation1] ss:$4 sm:$0xff] %v410
      %2512 = vst [vmem:[%s2495] ss:$4 sm:$0xff] %v411
      %2513 = vst [vmem:[%s2497] ss:$4 sm:$0xff] %v494
      %2514 = vst [vmem:[%s2499] ss:$4 sm:$0xff] %v495
      %2515 = vst [vmem:[%s2501] ss:$4 sm:$0xff] %v496
      %2516 = vst [vmem:[%s2503] ss:$4 sm:$0xff] %v412
      %2517 = vst [vmem:[%s2505] ss:$4 sm:$0xff] %v497
      %2518 = vst [vmem:[%s2507] ss:$4 sm:$0xff] %v498
      %v2519 = vld.sshfl [vmem:[#allocation1] sm:$0xff pattern:$0x73625140]
      %v2520 = vld.sshfl [vmem:[#allocation1 + $0x20] sm:$0xff pattern:$0x73625140]
      %2521 = vst [vmem:[#allocation1] ss:$4 sm:$0xff] %v499
      %2522 = vst [vmem:[%s2495] ss:$4 sm:$0xff] %v413
      %2523 = vst [vmem:[%s2497] ss:$4 sm:$0xff] %v414
      %2524 = vst [vmem:[%s2499] ss:$4 sm:$0xff] %v500
      %2525 = vst [vmem:[%s2501] ss:$4 sm:$0xff] %v501
      %2526 = vst [vmem:[%s2503] ss:$4 sm:$0xff] %v502
      %2527 = vst [vmem:[%s2505] ss:$4 sm:$0xff] %v415
      %2528 = vst [vmem:[%s2507] ss:$4 sm:$0xff] %v503
      %v2529 = vld.sshfl [vmem:[#allocation1] sm:$0xff pattern:$0x73625140]
      %v2530 = vld.sshfl [vmem:[#allocation1 + $0x20] sm:$0xff pattern:$0x73625140]
      %2531 = vst [vmem:[#allocation1] ss:$4 sm:$0xff] %v504
      %2532 = vst [vmem:[%s2495] ss:$4 sm:$0xff] %v505
      %2533 = vst [vmem:[%s2497] ss:$4 sm:$0xff] %v416
      %2534 = vst [vmem:[%s2499] ss:$4 sm:$0xff] %v417
      %2535 = vst [vmem:[%s2501] ss:$4 sm:$0xff] %v506
      %2536 = vst [vmem:[%s2503] ss:$4 sm:$0xff] %v507
      %2537 = vst [vmem:[%s2505] ss:$4 sm:$0xff] %v508
      %2538 = vst [vmem:[%s2507] ss:$4 sm:$0xff] %v418
      %v2539 = vld.sshfl [vmem:[#allocation1] sm:$0xff pattern:$0x73625140]
      %v2540 = vld.sshfl [vmem:[#allocation1 + $0x20] sm:$0xff pattern:$0x73625140]
      %2541 = vst [vmem:[#allocation1] ss:$4 sm:$0xff] %v509
      %2542 = vst [vmem:[%s2495] ss:$4 sm:$0xff] %v510
      %2543 = vst [vmem:[%s2497] ss:$4 sm:$0xff] %v511
      %2544 = vst [vmem:[%s2499] ss:$4 sm:$0xff] %v419
      %2545 = vst [vmem:[%s2501] ss:$4 sm:$0xff] %v420
      %2546 = vst [vmem:[%s2503] ss:$4 sm:$0xff] %v512
      %2547 = vst [vmem:[%s2505] ss:$4 sm:$0xff] %v513
      %2548 = vst [vmem:[%s2507] ss:$4 sm:$0xff] %v514
      %v2549 = vld.sshfl [vmem:[#allocation1] sm:$0xff pattern:$0x73625140]
      %v2550 = vld.sshfl [vmem:[#allocation1 + $0x20] sm:$0xff pattern:$0x73625140]
      %2551 = vst [vmem:[#allocation1] ss:$4 sm:$0xff] %v421
      %2552 = vst [vmem:[%s2495] ss:$4 sm:$0xff] %v515
      %2553 = vst [vmem:[%s2497] ss:$4 sm:$0xff] %v516
      %2554 = vst [vmem:[%s2499] ss:$4 sm:$0xff] %v517
      %2555 = vst [vmem:[%s2501] ss:$4 sm:$0xff] %v422
      %2556 = vst [vmem:[%s2503] ss:$4 sm:$0xff] %v423
      %2557 = vst [vmem:[%s2505] ss:$4 sm:$0xff] %v518
      %2558 = vst [vmem:[%s2507] ss:$4 sm:$0xff] %v519
      %v2559 = vld.sshfl [vmem:[#allocation1] sm:$0xff pattern:$0x73625140]
      %v2560 = vld.sshfl [vmem:[#allocation1 + $0x20] sm:$0xff pattern:$0x73625140]
      %2561 = vst [vmem:[#allocation1] ss:$4 sm:$0xff] %v520
      %2562 = vst [vmem:[%s2495] ss:$4 sm:$0xff] %v424
      %2563 = vst [vmem:[%s2497] ss:$4 sm:$0xff] %v521
      %2564 = vst [vmem:[%s2499] ss:$4 sm:$0xff] %v522
      %2565 = vst [vmem:[%s2501] ss:$4 sm:$0xff] %v523
      %2566 = vst [vmem:[%s2503] ss:$4 sm:$0xff] %v425
      %2567 = vst [vmem:[%s2505] ss:$4 sm:$0xff] %v426
      %2568 = vst [vmem:[%s2507] ss:$4 sm:$0xff] %v524
      %v2569 = vld.sshfl [vmem:[#allocation1] sm:$0xff pattern:$0x73625140]
      %v2570 = vld.sshfl [vmem:[#allocation1 + $0x20] sm:$0xff pattern:$0x73625140]
      %2571 = vst [vmem:[#allocation1] ss:$4 sm:$0xff] %v525
      %2572 = vst [vmem:[%s2495] ss:$4 sm:$0xff] %v526
      %2573 = vst [vmem:[%s2497] ss:$4 sm:$0xff] %v427
      %2574 = vst [vmem:[%s2499] ss:$4 sm:$0xff] %v527
      %2575 = vst [vmem:[%s2501] ss:$4 sm:$0xff] %v528
      %2576 = vst [vmem:[%s2503] ss:$4 sm:$0xff] %v529
      %2577 = vst [vmem:[%s2505] ss:$4 sm:$0xff] %v428
      %2578 = vst [vmem:[%s2507] ss:$4 sm:$0xff] %v429
      %v2579 = vld.sshfl [vmem:[#allocation1] sm:$0xff pattern:$0x73625140]
      %v2580 = vld.sshfl [vmem:[#allocation1 + $0x20] sm:$0xff pattern:$0x73625140]
      %2581 = vst [vmem:[#allocation1] ss:$4 sm:$0xff] %v530
      %2582 = vst [vmem:[%s2495] ss:$4 sm:$0xff] %v531
      %2583 = vst [vmem:[%s2497] ss:$4 sm:$0xff] %v532
      %2584 = vst [vmem:[%s2499] ss:$4 sm:$0xff] %v430
      %2585 = vst [vmem:[%s2501] ss:$4 sm:$0xff] %v533
      %2586 = vst [vmem:[%s2503] ss:$4 sm:$0xff] %v534
      %2587 = vst [vmem:[%s2505] ss:$4 sm:$0xff] %v535
      %2588 = vst [vmem:[%s2507] ss:$4 sm:$0xff] %v431
      %v2589 = vld.sshfl [vmem:[#allocation1] sm:$0xff pattern:$0x73625140]
      %v2590 = vld.sshfl [vmem:[#allocation1 + $0x20] sm:$0xff pattern:$0x73625140]
      %2591 = vst [vmem:[#allocation1] ss:$4 sm:$0xff] %v432
      %2592 = vst [vmem:[%s2495] ss:$4 sm:$0xff] %v536
      %2593 = vst [vmem:[%s2497] ss:$4 sm:$0xff] %v537
      %2594 = vst [vmem:[%s2499] ss:$4 sm:$0xff] %v538
      %2595 = vst [vmem:[%s2501] ss:$4 sm:$0xff] %v433
      %2596 = vst [vmem:[%s2503] ss:$4 sm:$0xff] %v539
      %2597 = vst [vmem:[%s2505] ss:$4 sm:$0xff] %v540
      %2598 = vst [vmem:[%s2507] ss:$4 sm:$0xff] %v541
      %v2599 = vld.sshfl [vmem:[#allocation1] sm:$0xff pattern:$0x73625140]
      %v2600 = vld.sshfl [vmem:[#allocation1 + $0x20] sm:$0xff pattern:$0x73625140]
      %2601 = vst [vmem:[#allocation1] ss:$4 sm:$0xff] %v434
      %2602 = vst [vmem:[%s2495] ss:$4 sm:$0xff] %v435
      %2603 = vst [vmem:[%s2497] ss:$4 sm:$0xff] %v542
      %2604 = vst [vmem:[%s2499] ss:$4 sm:$0xff] %v543
      %2605 = vst [vmem:[%s2501] ss:$4 sm:$0xff] %v544
      %2606 = vst [vmem:[%s2503] ss:$4 sm:$0xff] %v436
      %2607 = vst [vmem:[%s2505] ss:$4 sm:$0xff] %v545
      %2608 = vst [vmem:[%s2507] ss:$4 sm:$0xff] %v546
      %v2609 = vld.sshfl [vmem:[#allocation1] sm:$0xff pattern:$0x73625140]
      %v2610 = vld.sshfl [vmem:[#allocation1 + $0x20] sm:$0xff pattern:$0x73625140]
      %2611 = vst [vmem:[#allocation1] ss:$4 sm:$0xff] %v547
      %2612 = vst [vmem:[%s2495] ss:$4 sm:$0xff] %v437
      %2613 = vst [vmem:[%s2497] ss:$4 sm:$0xff] %v438
      %v2614 = vld.sshfl [vmem:[#allocation1] sm:$0xff pattern:$0x73625140]
      %v2615 = vrot.slane %v2509, 1
      %v2616 = vrot.slane %v2510, 1
      %v2617 = vsel %vm702, %v2615, %v2616
      %v2618 = vrot.slane %v2519, 1
      %v2619 = vsel %vm702, %v2616, %v2618
      %v2620 = vrot.slane %v2520, 1
      %v2621 = vsel %vm702, %v2618, %v2620
      %v2622 = vrot.slane %v2529, 1
      %v2623 = vsel %vm702, %v2620, %v2622
      %v2624 = vrot.slane %v2530, 1
      %v2625 = vsel %vm702, %v2622, %v2624
      %v2626 = vrot.slane %v2539, 1
      %v2627 = vsel %vm702, %v2624, %v2626
      %v2628 = vrot.slane %v2540, 1
      %v2629 = vsel %vm702, %v2626, %v2628
      %v2630 = vrot.slane %v2549, 1
      %v2631 = vsel %vm702, %v2628, %v2630
      %v2632 = vrot.slane %v2550, 1
      %v2633 = vsel %vm702, %v2630, %v2632
      %v2634 = vrot.slane %v2559, 1
      %v2635 = vsel %vm702, %v2632, %v2634
      %v2636 = vrot.slane %v2560, 1
      %v2637 = vsel %vm702, %v2634, %v2636
      %v2638 = vrot.slane %v2569, 1
      %v2639 = vsel %vm702, %v2636, %v2638
      %v2640 = vrot.slane %v2570, 1
      %v2641 = vsel %vm702, %v2638, %v2640
      %v2642 = vrot.slane %v2579, 1
      %v2643 = vsel %vm702, %v2640, %v2642
      %v2644 = vrot.slane %v2580, 1
      %v2645 = vsel %vm702, %v2642, %v2644
      %v2646 = vrot.slane %v2589, 1
      %v2647 = vsel %vm702, %v2644, %v2646
      %v2648 = vrot.slane %v2590, 1
      %v2649 = vsel %vm702, %v2646, %v2648
      %v2650 = vrot.slane %v2599, 1
      %v2651 = vsel %vm702, %v2648, %v2650
      %v2652 = vrot.slane %v2600, 1
      %v2653 = vsel %vm702, %v2650, %v2652
      %v2654 = vrot.slane %v2609, 1
      %v2655 = vsel %vm702, %v2652, %v2654
      %v2656 = vrot.slane %v2610, 1
      %v2657 = vsel %vm702, %v2654, %v2656
      %v2658 = vrot.slane %v2614, 1
      %v2659 = vsel %vm702, %v2656, %v2658
      %2683 = vmatpush.msra.mxu0 %v2493
      %2684 = vmatpush.msra.mxu0 %v2492
      %2685 = vmatpush.msra.mxu0 %v2491
      %2686 = vmatpush.msra.mxu0 %v2490
      %2687 = vmatpush.msra.mxu0 %v2489
      %2688 = vmatpush.msra.mxu0 %v2488
      %2689 = vmatpush.msra.mxu0 %v2487
      %2690 = vmatpush.msra.mxu0 %v2486
      %2691 = vmatpush.msra.mxu0 %v2485
      %2692 = vmatpush.msra.mxu0 %v2484
      %2693 = vmatpush.msra.mxu0 %v2483
      %2694 = vmatpush.msra.mxu0 %v2482
      %2695 = vmatpush.msra.mxu0 %v2481
      %2696 = vmatpush.msra.mxu0 %v2480
      %2697 = vmatpush.msra.mxu0 %v2479
      %2698 = vmatpush.msra.mxu0 %v2478
      %2699 = vmatmul.f32.gmra.mxu0 %v2617
      %v2700 = vpop.f32.mrf.mxu0
      %v2701 = vadd.f32 0.0, %v2700
      %2702 = vmatmul.f32.gmra.mxu0 %v2619
      %v2703 = vpop.f32.mrf.mxu0
      %v2704 = vadd.f32 0.0, %v2703
      %2705 = vmatmul.f32.gmra.mxu0 %v2621
      %v2706 = vpop.f32.mrf.mxu0
      %v2707 = vadd.f32 0.0, %v2706
      %2708 = vmatmul.f32.gmra.mxu0 %v2623
      %v2709 = vpop.f32.mrf.mxu0
      %v2710 = vadd.f32 0.0, %v2709
      %2711 = vmatmul.f32.gmra.mxu0 %v2625
      %v2712 = vpop.f32.mrf.mxu0
      %v2713 = vadd.f32 0.0, %v2712
      %2714 = vmatmul.f32.gmra.mxu0 %v2627
      %v2715 = vpop.f32.mrf.mxu0
      %v2716 = vadd.f32 0.0, %v2715
      %2717 = vmatmul.f32.gmra.mxu0 %v2629
      %v2718 = vpop.f32.mrf.mxu0
      %v2719 = vadd.f32 0.0, %v2718
      %2720 = vmatmul.f32.gmra.mxu0 %v2631
      %v2721 = vpop.f32.mrf.mxu0
      %v2722 = vadd.f32 0.0, %v2721
      %2723 = vmatmul.f32.gmra.mxu0 %v2633
      %v2724 = vpop.f32.mrf.mxu0
      %v2725 = vadd.f32 0.0, %v2724
      %2726 = vmatmul.f32.gmra.mxu0 %v2635
      %v2727 = vpop.f32.mrf.mxu0
      %v2728 = vadd.f32 0.0, %v2727
      %2729 = vmatmul.f32.gmra.mxu0 %v2637
      %v2730 = vpop.f32.mrf.mxu0
      %v2731 = vadd.f32 0.0, %v2730
      %2732 = vmatmul.f32.gmra.mxu0 %v2639
      %v2733 = vpop.f32.mrf.mxu0
      %v2734 = vadd.f32 0.0, %v2733
      %2735 = vmatmul.f32.gmra.mxu0 %v2641
      %v2736 = vpop.f32.mrf.mxu0
      %v2737 = vadd.f32 0.0, %v2736
      %2738 = vmatmul.f32.gmra.mxu0 %v2643
      %v2739 = vpop.f32.mrf.mxu0
      %v2740 = vadd.f32 0.0, %v2739
      %2741 = vmatmul.f32.gmra.mxu0 %v2645
      %v2742 = vpop.f32.mrf.mxu0
      %v2743 = vadd.f32 0.0, %v2742
      %2744 = vmatmul.f32.gmra.mxu0 %v2647
      %v2745 = vpop.f32.mrf.mxu0
      %v2746 = vadd.f32 0.0, %v2745
      %2747 = vmatmul.f32.gmra.mxu0 %v2649
      %v2748 = vpop.f32.mrf.mxu0
      %v2749 = vadd.f32 0.0, %v2748
      %2750 = vmatmul.f32.gmra.mxu0 %v2651
      %v2751 = vpop.f32.mrf.mxu0
      %v2752 = vadd.f32 0.0, %v2751
      %2753 = vmatmul.f32.gmra.mxu0 %v2653
      %v2754 = vpop.f32.mrf.mxu0
      %v2755 = vadd.f32 0.0, %v2754
      %2756 = vmatmul.f32.gmra.mxu0 %v2655
      %v2757 = vpop.f32.mrf.mxu0
      %v2758 = vadd.f32 0.0, %v2757
      %2759 = vmatmul.f32.gmra.mxu0 %v2657
      %v2760 = vpop.f32.mrf.mxu0
      %v2761 = vadd.f32 0.0, %v2760
      %2762 = vmatmul.f32.gmra.mxu0 %v2659
      %v2763 = vpop.f32.mrf.mxu0
      %v2764 = vadd.f32 0.0, %v2763
      %2765 = vmatmul.f32.gmra.mxu0 %v2658
      %v2766 = vpop.f32.mrf.mxu0
      %v2767 = vadd.f32 0.0, %v2766
      %2768 = vdwg.mxu0
      %v2769 = vadd.f32 %v2454, %v2701
      %v2770 = vadd.f32 %v2455, %v2704
      %v2771 = vadd.f32 %v2456, %v2707
      %v2772 = vadd.f32 %v2457, %v2710
      %v2773 = vadd.f32 %v2458, %v2713
      %v2774 = vadd.f32 %v2459, %v2716
      %v2775 = vadd.f32 %v2460, %v2719
      %v2776 = vadd.f32 %v2461, %v2722
      %v2777 = vadd.f32 %v2462, %v2725
      %v2778 = vadd.f32 %v2463, %v2728
      %v2779 = vadd.f32 %v2464, %v2731
      %v2780 = vadd.f32 %v2465, %v2734
      %v2781 = vadd.f32 %v2466, %v2737
      %v2782 = vadd.f32 %v2467, %v2740
      %v2783 = vadd.f32 %v2468, %v2743
      %v2784 = vadd.f32 %v2469, %v2746
      %v2785 = vadd.f32 %v2470, %v2749
      %v2786 = vadd.f32 %v2471, %v2752
      %v2787 = vadd.f32 %v2472, %v2755
      %v2788 = vadd.f32 %v2473, %v2758
      %v2789 = vadd.f32 %v2474, %v2761
      %v2790 = vadd.f32 %v2475, %v2764
      %v2791 = vadd.f32 %v2476, %v2767
      %s2792 = scalar_lea.vmem %s1, 1024
      %v2793 = vld [vmem:[%s2792] sm:$0xff]
      %v2794 = vld [vmem:[%s2792 + $0x8] sm:$0xff]
      %v2795 = vld [vmem:[%s2792 + $0x10] sm:$0xff]
      %v2796 = vld [vmem:[%s2792 + $0x18] sm:$0xff]
      %v2797 = vld [vmem:[%s2792 + $0x20] sm:$0xff]
      %v2798 = vld [vmem:[%s2792 + $0x28] sm:$0xff]
      %v2799 = vld [vmem:[%s2792 + $0x30] sm:$0xff]
      %v2800 = vld [vmem:[%s2792 + $0x38] sm:$0xff]
      %v2801 = vld [vmem:[%s2792 + $0x40] sm:$0xff]
      %v2802 = vld [vmem:[%s2792 + $0x48] sm:$0xff]
      %v2803 = vld [vmem:[%s2792 + $0x50] sm:$0xff]
      %v2804 = vld [vmem:[%s2792 + $0x58] sm:$0xff]
      %v2805 = vld [vmem:[%s2792 + $0x60] sm:$0xff]
      %v2806 = vld [vmem:[%s2792 + $0x68] sm:$0xff]
      %v2807 = vld [vmem:[%s2792 + $0x70] sm:$0xff]
      %v2808 = vld [vmem:[%s2792 + $0x78] sm:$0xff]
      %2809 = vst [vmem:[#allocation1] ss:$4 sm:$0xff] %v488
      %s2810 = scalar_lea.vmem [#allocation1], 1
      %2811 = vst [vmem:[%s2810] ss:$4 sm:$0xff] %v489
      %s2812 = scalar_lea.vmem [#allocation1], 2
      %2813 = vst [vmem:[%s2812] ss:$4 sm:$0xff] %v490
      %s2814 = scalar_lea.vmem [#allocation1], 3
      %2815 = vst [vmem:[%s2814] ss:$4 sm:$0xff] %v409
      %s2816 = scalar_lea.vmem [#allocation1], 32
      %2817 = vst [vmem:[%s2816] ss:$4 sm:$0xff] %v491
      %s2818 = scalar_lea.vmem [#allocation1], 33
      %2819 = vst [vmem:[%s2818] ss:$4 sm:$0xff] %v492
      %s2820 = scalar_lea.vmem [#allocation1], 34
      %2821 = vst [vmem:[%s2820] ss:$4 sm:$0xff] %v493
      %s2822 = scalar_lea.vmem [#allocation1], 35
      %2823 = vst [vmem:[%s2822] ss:$4 sm:$0xff] %v410
      %v2824 = vld.sshfl [vmem:[#allocation1] sm:$0xff pattern:$0x73625140]
      %v2825 = vld.sshfl [vmem:[#allocation1 + $0x20] sm:$0xff pattern:$0x73625140]
      %2826 = vst [vmem:[#allocation1] ss:$4 sm:$0xff] %v411
      %2827 = vst [vmem:[%s2810] ss:$4 sm:$0xff] %v494
      %2828 = vst [vmem:[%s2812] ss:$4 sm:$0xff] %v495
      %2829 = vst [vmem:[%s2814] ss:$4 sm:$0xff] %v496
      %2830 = vst [vmem:[%s2816] ss:$4 sm:$0xff] %v412
      %2831 = vst [vmem:[%s2818] ss:$4 sm:$0xff] %v497
      %2832 = vst [vmem:[%s2820] ss:$4 sm:$0xff] %v498
      %2833 = vst [vmem:[%s2822] ss:$4 sm:$0xff] %v499
      %v2834 = vld.sshfl [vmem:[#allocation1] sm:$0xff pattern:$0x73625140]
      %v2835 = vld.sshfl [vmem:[#allocation1 + $0x20] sm:$0xff pattern:$0x73625140]
      %2836 = vst [vmem:[#allocation1] ss:$4 sm:$0xff] %v413
      %2837 = vst [vmem:[%s2810] ss:$4 sm:$0xff] %v414
      %2838 = vst [vmem:[%s2812] ss:$4 sm:$0xff] %v500
      %2839 = vst [vmem:[%s2814] ss:$4 sm:$0xff] %v501
      %2840 = vst [vmem:[%s2816] ss:$4 sm:$0xff] %v502
      %2841 = vst [vmem:[%s2818] ss:$4 sm:$0xff] %v415
      %2842 = vst [vmem:[%s2820] ss:$4 sm:$0xff] %v503
      %2843 = vst [vmem:[%s2822] ss:$4 sm:$0xff] %v504
      %v2844 = vld.sshfl [vmem:[#allocation1] sm:$0xff pattern:$0x73625140]
      %v2845 = vld.sshfl [vmem:[#allocation1 + $0x20] sm:$0xff pattern:$0x73625140]
      %2846 = vst [vmem:[#allocation1] ss:$4 sm:$0xff] %v505
      %2847 = vst [vmem:[%s2810] ss:$4 sm:$0xff] %v416
      %2848 = vst [vmem:[%s2812] ss:$4 sm:$0xff] %v417
      %2849 = vst [vmem:[%s2814] ss:$4 sm:$0xff] %v506
      %2850 = vst [vmem:[%s2816] ss:$4 sm:$0xff] %v507
      %2851 = vst [vmem:[%s2818] ss:$4 sm:$0xff] %v508
      %2852 = vst [vmem:[%s2820] ss:$4 sm:$0xff] %v418
      %2853 = vst [vmem:[%s2822] ss:$4 sm:$0xff] %v509
      %v2854 = vld.sshfl [vmem:[#allocation1] sm:$0xff pattern:$0x73625140]
      %v2855 = vld.sshfl [vmem:[#allocation1 + $0x20] sm:$0xff pattern:$0x73625140]
      %2856 = vst [vmem:[#allocation1] ss:$4 sm:$0xff] %v510
      %2857 = vst [vmem:[%s2810] ss:$4 sm:$0xff] %v511
      %2858 = vst [vmem:[%s2812] ss:$4 sm:$0xff] %v419
      %2859 = vst [vmem:[%s2814] ss:$4 sm:$0xff] %v420
      %2860 = vst [vmem:[%s2816] ss:$4 sm:$0xff] %v512
      %2861 = vst [vmem:[%s2818] ss:$4 sm:$0xff] %v513
      %2862 = vst [vmem:[%s2820] ss:$4 sm:$0xff] %v514
      %2863 = vst [vmem:[%s2822] ss:$4 sm:$0xff] %v421
      %v2864 = vld.sshfl [vmem:[#allocation1] sm:$0xff pattern:$0x73625140]
      %v2865 = vld.sshfl [vmem:[#allocation1 + $0x20] sm:$0xff pattern:$0x73625140]
      %2866 = vst [vmem:[#allocation1] ss:$4 sm:$0xff] %v515
      %2867 = vst [vmem:[%s2810] ss:$4 sm:$0xff] %v516
      %2868 = vst [vmem:[%s2812] ss:$4 sm:$0xff] %v517
      %2869 = vst [vmem:[%s2814] ss:$4 sm:$0xff] %v422
      %2870 = vst [vmem:[%s2816] ss:$4 sm:$0xff] %v423
      %2871 = vst [vmem:[%s2818] ss:$4 sm:$0xff] %v518
      %2872 = vst [vmem:[%s2820] ss:$4 sm:$0xff] %v519
      %2873 = vst [vmem:[%s2822] ss:$4 sm:$0xff] %v520
      %v2874 = vld.sshfl [vmem:[#allocation1] sm:$0xff pattern:$0x73625140]
      %v2875 = vld.sshfl [vmem:[#allocation1 + $0x20] sm:$0xff pattern:$0x73625140]
      %2876 = vst [vmem:[#allocation1] ss:$4 sm:$0xff] %v424
      %2877 = vst [vmem:[%s2810] ss:$4 sm:$0xff] %v521
      %2878 = vst [vmem:[%s2812] ss:$4 sm:$0xff] %v522
      %2879 = vst [vmem:[%s2814] ss:$4 sm:$0xff] %v523
      %2880 = vst [vmem:[%s2816] ss:$4 sm:$0xff] %v425
      %2881 = vst [vmem:[%s2818] ss:$4 sm:$0xff] %v426
      %2882 = vst [vmem:[%s2820] ss:$4 sm:$0xff] %v524
      %2883 = vst [vmem:[%s2822] ss:$4 sm:$0xff] %v525
      %v2884 = vld.sshfl [vmem:[#allocation1] sm:$0xff pattern:$0x73625140]
      %v2885 = vld.sshfl [vmem:[#allocation1 + $0x20] sm:$0xff pattern:$0x73625140]
      %2886 = vst [vmem:[#allocation1] ss:$4 sm:$0xff] %v526
      %2887 = vst [vmem:[%s2810] ss:$4 sm:$0xff] %v427
      %2888 = vst [vmem:[%s2812] ss:$4 sm:$0xff] %v527
      %2889 = vst [vmem:[%s2814] ss:$4 sm:$0xff] %v528
      %2890 = vst [vmem:[%s2816] ss:$4 sm:$0xff] %v529
      %2891 = vst [vmem:[%s2818] ss:$4 sm:$0xff] %v428
      %2892 = vst [vmem:[%s2820] ss:$4 sm:$0xff] %v429
      %2893 = vst [vmem:[%s2822] ss:$4 sm:$0xff] %v530
      %v2894 = vld.sshfl [vmem:[#allocation1] sm:$0xff pattern:$0x73625140]
      %v2895 = vld.sshfl [vmem:[#allocation1 + $0x20] sm:$0xff pattern:$0x73625140]
      %2896 = vst [vmem:[#allocation1] ss:$4 sm:$0xff] %v531
      %2897 = vst [vmem:[%s2810] ss:$4 sm:$0xff] %v532
      %2898 = vst [vmem:[%s2812] ss:$4 sm:$0xff] %v430
      %2899 = vst [vmem:[%s2814] ss:$4 sm:$0xff] %v533
      %2900 = vst [vmem:[%s2816] ss:$4 sm:$0xff] %v534
      %2901 = vst [vmem:[%s2818] ss:$4 sm:$0xff] %v535
      %2902 = vst [vmem:[%s2820] ss:$4 sm:$0xff] %v431
      %2903 = vst [vmem:[%s2822] ss:$4 sm:$0xff] %v432
      %v2904 = vld.sshfl [vmem:[#allocation1] sm:$0xff pattern:$0x73625140]
      %v2905 = vld.sshfl [vmem:[#allocation1 + $0x20] sm:$0xff pattern:$0x73625140]
      %2906 = vst [vmem:[#allocation1] ss:$4 sm:$0xff] %v536
      %2907 = vst [vmem:[%s2810] ss:$4 sm:$0xff] %v537
      %2908 = vst [vmem:[%s2812] ss:$4 sm:$0xff] %v538
      %2909 = vst [vmem:[%s2814] ss:$4 sm:$0xff] %v433
      %2910 = vst [vmem:[%s2816] ss:$4 sm:$0xff] %v539
      %2911 = vst [vmem:[%s2818] ss:$4 sm:$0xff] %v540
      %2912 = vst [vmem:[%s2820] ss:$4 sm:$0xff] %v541
      %2913 = vst [vmem:[%s2822] ss:$4 sm:$0xff] %v434
      %v2914 = vld.sshfl [vmem:[#allocation1] sm:$0xff pattern:$0x73625140]
      %v2915 = vld.sshfl [vmem:[#allocation1 + $0x20] sm:$0xff pattern:$0x73625140]
      %2916 = vst [vmem:[#allocation1] ss:$4 sm:$0xff] %v435
      %2917 = vst [vmem:[%s2810] ss:$4 sm:$0xff] %v542
      %2918 = vst [vmem:[%s2812] ss:$4 sm:$0xff] %v543
      %2919 = vst [vmem:[%s2814] ss:$4 sm:$0xff] %v544
      %2920 = vst [vmem:[%s2816] ss:$4 sm:$0xff] %v436
      %2921 = vst [vmem:[%s2818] ss:$4 sm:$0xff] %v545
      %2922 = vst [vmem:[%s2820] ss:$4 sm:$0xff] %v546
      %2923 = vst [vmem:[%s2822] ss:$4 sm:$0xff] %v547
      %v2924 = vld.sshfl [vmem:[#allocation1] sm:$0xff pattern:$0x73625140]
      %v2925 = vld.sshfl [vmem:[#allocation1 + $0x20] sm:$0xff pattern:$0x73625140]
      %2926 = vst [vmem:[#allocation1] ss:$4 sm:$0xff] %v437
      %2927 = vst [vmem:[%s2810] ss:$4 sm:$0xff] %v438
      %v2928 = vld.sshfl [vmem:[#allocation1] sm:$0xff pattern:$0x73625140]
      %2952 = vmatpush.msra.mxu0 %v2808
      %2953 = vmatpush.msra.mxu0 %v2807
      %2954 = vmatpush.msra.mxu0 %v2806
      %2955 = vmatpush.msra.mxu0 %v2805
      %2956 = vmatpush.msra.mxu0 %v2804
      %2957 = vmatpush.msra.mxu0 %v2803
      %2958 = vmatpush.msra.mxu0 %v2802
      %2959 = vmatpush.msra.mxu0 %v2801
      %2960 = vmatpush.msra.mxu0 %v2800
      %2961 = vmatpush.msra.mxu0 %v2799
      %2962 = vmatpush.msra.mxu0 %v2798
      %2963 = vmatpush.msra.mxu0 %v2797
      %2964 = vmatpush.msra.mxu0 %v2796
      %2965 = vmatpush.msra.mxu0 %v2795
      %2966 = vmatpush.msra.mxu0 %v2794
      %2967 = vmatpush.msra.mxu0 %v2793
      %2968 = vmatmul.f32.gmra.mxu0 %v2824
      %v2969 = vpop.f32.mrf.mxu0
      %v2970 = vadd.f32 0.0, %v2969
      %2971 = vmatmul.f32.gmra.mxu0 %v2825
      %v2972 = vpop.f32.mrf.mxu0
      %v2973 = vadd.f32 0.0, %v2972
      %2974 = vmatmul.f32.gmra.mxu0 %v2834
      %v2975 = vpop.f32.mrf.mxu0
      %v2976 = vadd.f32 0.0, %v2975
      %2977 = vmatmul.f32.gmra.mxu0 %v2835
      %v2978 = vpop.f32.mrf.mxu0
      %v2979 = vadd.f32 0.0, %v2978
      %2980 = vmatmul.f32.gmra.mxu0 %v2844
      %v2981 = vpop.f32.mrf.mxu0
      %v2982 = vadd.f32 0.0, %v2981
      %2983 = vmatmul.f32.gmra.mxu0 %v2845
      %v2984 = vpop.f32.mrf.mxu0
      %v2985 = vadd.f32 0.0, %v2984
      %2986 = vmatmul.f32.gmra.mxu0 %v2854
      %v2987 = vpop.f32.mrf.mxu0
      %v2988 = vadd.f32 0.0, %v2987
      %2989 = vmatmul.f32.gmra.mxu0 %v2855
      %v2990 = vpop.f32.mrf.mxu0
      %v2991 = vadd.f32 0.0, %v2990
      %2992 = vmatmul.f32.gmra.mxu0 %v2864
      %v2993 = vpop.f32.mrf.mxu0
      %v2994 = vadd.f32 0.0, %v2993
      %2995 = vmatmul.f32.gmra.mxu0 %v2865
      %v2996 = vpop.f32.mrf.mxu0
      %v2997 = vadd.f32 0.0, %v2996
      %2998 = vmatmul.f32.gmra.mxu0 %v2874
      %v2999 = vpop.f32.mrf.mxu0
      %v3000 = vadd.f32 0.0, %v2999
      %3001 = vmatmul.f32.gmra.mxu0 %v2875
      %v3002 = vpop.f32.mrf.mxu0
      %v3003 = vadd.f32 0.0, %v3002
      %3004 = vmatmul.f32.gmra.mxu0 %v2884
      %v3005 = vpop.f32.mrf.mxu0
      %v3006 = vadd.f32 0.0, %v3005
      %3007 = vmatmul.f32.gmra.mxu0 %v2885
      %v3008 = vpop.f32.mrf.mxu0
      %v3009 = vadd.f32 0.0, %v3008
      %3010 = vmatmul.f32.gmra.mxu0 %v2894
      %v3011 = vpop.f32.mrf.mxu0
      %v3012 = vadd.f32 0.0, %v3011
      %3013 = vmatmul.f32.gmra.mxu0 %v2895
      %v3014 = vpop.f32.mrf.mxu0
      %v3015 = vadd.f32 0.0, %v3014
      %3016 = vmatmul.f32.gmra.mxu0 %v2904
      %v3017 = vpop.f32.mrf.mxu0
      %v3018 = vadd.f32 0.0, %v3017
      %3019 = vmatmul.f32.gmra.mxu0 %v2905
      %v3020 = vpop.f32.mrf.mxu0
      %v3021 = vadd.f32 0.0, %v3020
      %3022 = vmatmul.f32.gmra.mxu0 %v2914
      %v3023 = vpop.f32.mrf.mxu0
      %v3024 = vadd.f32 0.0, %v3023
      %3025 = vmatmul.f32.gmra.mxu0 %v2915
      %v3026 = vpop.f32.mrf.mxu0
      %v3027 = vadd.f32 0.0, %v3026
      %3028 = vmatmul.f32.gmra.mxu0 %v2924
      %v3029 = vpop.f32.mrf.mxu0
      %v3030 = vadd.f32 0.0, %v3029
      %3031 = vmatmul.f32.gmra.mxu0 %v2925
      %v3032 = vpop.f32.mrf.mxu0
      %v3033 = vadd.f32 0.0, %v3032
      %3034 = vmatmul.f32.gmra.mxu0 %v2928
      %v3035 = vpop.f32.mrf.mxu0
      %v3036 = vadd.f32 0.0, %v3035
      %3037 = vdwg.mxu0
      %v3038 = vadd.f32 %v2769, %v2970
      %v3039 = vadd.f32 %v2770, %v2973
      %v3040 = vadd.f32 %v2771, %v2976
      %v3041 = vadd.f32 %v2772, %v2979
      %v3042 = vadd.f32 %v2773, %v2982
      %v3043 = vadd.f32 %v2774, %v2985
      %v3044 = vadd.f32 %v2775, %v2988
      %v3045 = vadd.f32 %v2776, %v2991
      %v3046 = vadd.f32 %v2777, %v2994
      %v3047 = vadd.f32 %v2778, %v2997
      %v3048 = vadd.f32 %v2779, %v3000
      %v3049 = vadd.f32 %v2780, %v3003
      %v3050 = vadd.f32 %v2781, %v3006
      %v3051 = vadd.f32 %v2782, %v3009
      %v3052 = vadd.f32 %v2783, %v3012
      %v3053 = vadd.f32 %v2784, %v3015
      %v3054 = vadd.f32 %v2785, %v3018
      %v3055 = vadd.f32 %v2786, %v3021
      %v3056 = vadd.f32 %v2787, %v3024
      %v3057 = vadd.f32 %v2788, %v3027
      %v3058 = vadd.f32 %v2789, %v3030
      %v3059 = vadd.f32 %v2790, %v3033
      %v3060 = vadd.f32 %v2791, %v3036
      %v3061 = vld [vmem:[%s3] sm:$0x1]
      %v3063 = vperm.slane %v3061, 0
      %v3065 = vmul.f32 %v3038, %v3063
      %v3066 = vmul.f32 %v3039, %v3063
      %v3067 = vmul.f32 %v3040, %v3063
      %v3068 = vmul.f32 %v3041, %v3063
      %v3069 = vmul.f32 %v3042, %v3063
      %v3070 = vmul.f32 %v3043, %v3063
      %v3071 = vmul.f32 %v3044, %v3063
      %v3072 = vmul.f32 %v3045, %v3063
      %v3073 = vmul.f32 %v3046, %v3063
      %v3074 = vmul.f32 %v3047, %v3063
      %v3075 = vmul.f32 %v3048, %v3063
      %v3076 = vmul.f32 %v3049, %v3063
      %v3077 = vmul.f32 %v3050, %v3063
      %v3078 = vmul.f32 %v3051, %v3063
      %v3079 = vmul.f32 %v3052, %v3063
      %v3080 = vmul.f32 %v3053, %v3063
      %v3081 = vmul.f32 %v3054, %v3063
      %v3082 = vmul.f32 %v3055, %v3063
      %v3083 = vmul.f32 %v3056, %v3063
      %v3084 = vmul.f32 %v3057, %v3063
      %v3085 = vmul.f32 %v3058, %v3063
      %v3086 = vmul.f32 %v3059, %v3063
      %v3087 = vmul.f32 %v3060, %v3063
      %v3088 = vld [vmem:[%s4] sm:$0x1]
      %v3090 = vperm.slane %v3088, 0
      %v3092 = vadd.f32 %v3065, %v3090
      %v3093 = vadd.f32 %v3066, %v3090
      %v3094 = vadd.f32 %v3067, %v3090
      %v3095 = vadd.f32 %v3068, %v3090
      %v3096 = vadd.f32 %v3069, %v3090
      %v3097 = vadd.f32 %v3070, %v3090
      %v3098 = vadd.f32 %v3071, %v3090
      %v3099 = vadd.f32 %v3072, %v3090
      %v3100 = vadd.f32 %v3073, %v3090
      %v3101 = vadd.f32 %v3074, %v3090
      %v3102 = vadd.f32 %v3075, %v3090
      %v3103 = vadd.f32 %v3076, %v3090
      %v3104 = vadd.f32 %v3077, %v3090
      %v3105 = vadd.f32 %v3078, %v3090
      %v3106 = vadd.f32 %v3079, %v3090
      %v3107 = vadd.f32 %v3080, %v3090
      %v3108 = vadd.f32 %v3081, %v3090
      %v3109 = vadd.f32 %v3082, %v3090
      %v3110 = vadd.f32 %v3083, %v3090
      %v3111 = vadd.f32 %v3084, %v3090
      %v3112 = vadd.f32 %v3085, %v3090
      %v3113 = vadd.f32 %v3086, %v3090
      %v3114 = vadd.f32 %v3087, %v3090
      %v3115 = vmax.f32 %v3092, 0.0
      %v3116 = vmax.f32 %v3093, 0.0
      %v3117 = vmax.f32 %v3094, 0.0
      %v3118 = vmax.f32 %v3095, 0.0
      %v3119 = vmax.f32 %v3096, 0.0
      %v3120 = vmax.f32 %v3097, 0.0
      %v3121 = vmax.f32 %v3098, 0.0
      %v3122 = vmax.f32 %v3099, 0.0
      %v3123 = vmax.f32 %v3100, 0.0
      %v3124 = vmax.f32 %v3101, 0.0
      %v3125 = vmax.f32 %v3102, 0.0
      %v3126 = vmax.f32 %v3103, 0.0
      %v3127 = vmax.f32 %v3104, 0.0
      %v3128 = vmax.f32 %v3105, 0.0
      %v3129 = vmax.f32 %v3106, 0.0
      %v3130 = vmax.f32 %v3107, 0.0
      %v3131 = vmax.f32 %v3108, 0.0
      %v3132 = vmax.f32 %v3109, 0.0
      %v3133 = vmax.f32 %v3110, 0.0
      %v3134 = vmax.f32 %v3111, 0.0
      %v3135 = vmax.f32 %v3112, 0.0
      %v3136 = vmax.f32 %v3113, 0.0
      %v3137 = vmax.f32 %v3114, 0.0
      %v3160 = vrot.slane %v3115, 2
      %v3161 = vrot.slane %v3115, 4
      %v3162 = vrot.slane %v3115, 6
      %v3163 = vrot.slane %v3116, 2
      %v3164 = vrot.slane %v3116, 4
      %v3165 = vrot.slane %v3116, 6
      %v3166 = vrot.slane %v3117, 2
      %v3167 = vrot.slane %v3117, 4
      %v3168 = vrot.slane %v3117, 6
      %v3169 = vrot.slane %v3118, 2
      %v3170 = vrot.slane %v3118, 4
      %v3171 = vrot.slane %v3118, 6
      %v3172 = vrot.slane %v3119, 4
      %v3173 = vrot.slane %v3119, 6
      %v3174 = vrot.slane %v3120, 2
      %v3175 = vrot.slane %v3120, 4
      %v3176 = vrot.slane %v3120, 6
      %v3177 = vrot.slane %v3121, 2
      %v3178 = vrot.slane %v3121, 6
      %v3179 = vrot.slane %v3122, 2
      %v3180 = vrot.slane %v3122, 4
      %v3181 = vrot.slane %v3122, 6
      %v3182 = vrot.slane %v3123, 2
      %v3183 = vrot.slane %v3123, 4
      %v3184 = vrot.slane %v3124, 2
      %v3185 = vrot.slane %v3124, 4
      %v3186 = vrot.slane %v3124, 6
      %v3187 = vrot.slane %v3125, 2
      %v3188 = vrot.slane %v3125, 4
      %v3189 = vrot.slane %v3125, 6
      %v3190 = vrot.slane %v3126, 2
      %v3191 = vrot.slane %v3126, 4
      %v3192 = vrot.slane %v3126, 6
      %v3193 = vrot.slane %v3127, 2
      %v3194 = vrot.slane %v3127, 4
      %v3195 = vrot.slane %v3127, 6
      %v3196 = vrot.slane %v3128, 4
      %v3197 = vrot.slane %v3128, 6
      %v3198 = vrot.slane %v3129, 2
      %v3199 = vrot.slane %v3129, 4
      %v3200 = vrot.slane %v3129, 6
      %v3201 = vrot.slane %v3130, 2
      %v3202 = vrot.slane %v3130, 6
      %v3203 = vrot.slane %v3131, 2
      %v3204 = vrot.slane %v3131, 4
      %v3205 = vrot.slane %v3131, 6
      %v3206 = vrot.slane %v3132, 2
      %v3207 = vrot.slane %v3132, 4
      %v3208 = vrot.slane %v3133, 2
      %v3209 = vrot.slane %v3133, 4
      %v3210 = vrot.slane %v3133, 6
      %v3211 = vrot.slane %v3134, 2
      %v3212 = vrot.slane %v3134, 4
      %v3213 = vrot.slane %v3134, 6
      %v3214 = vrot.slane %v3135, 2
      %v3215 = vrot.slane %v3135, 4
      %v3216 = vrot.slane %v3135, 6
      %v3217 = vrot.slane %v3136, 2
      %v3218 = vrot.slane %v3136, 4
      %v3219 = vrot.slane %v3136, 6
      %v3280 = vlaneseq
      %v3281 = vshrl.u32 %v3280, 7
      %v3282 = vadd.s32 %v3281, 8
      %s3283 = ssub.s32 %s258, 1
      %v3284 = vstv %s3283
      %v3285 = vadd.s32 %v3281, %v3284
      %v3286 = vadd.s32 %v3282, %v3284
      %vm3287 = vcmp.ge.s32.totalorder %v3285, 0
      %vm3288 = vcmp.ge.s32.totalorder %v3286, 0
      %vm3289 = vcmp.lt.s32.totalorder %v3285, 16
      %vm3290 = vcmp.lt.s32.totalorder %v3286, 16
      %vm3291 = vmand %vm3287, %vm3289
      %vm3292 = vmand %vm3288, %vm3290
      %v3293 = vsel %vm3291, 1, 0
      %v3294 = vsel %vm3292, 1, 0
      %v3295 = vperm.slane %v3293, 0
      %v3296 = vperm.slane %v3293, 1
      %v3297 = vperm.slane %v3293, 2
      %v3298 = vperm.slane %v3293, 3
      %v3299 = vperm.slane %v3293, 4
      %v3300 = vperm.slane %v3293, 5
      %v3301 = vperm.slane %v3293, 6
      %v3302 = vperm.slane %v3293, 7
      %v3303 = vperm.slane %v3294, 0
      %v3304 = vperm.slane %v3294, 1
      %vm3305 = vcmp.ne.s32.totalorder %v3295, 0
      %vm3306 = vcmp.ne.s32.totalorder %v3296, 0
      %vm3307 = vcmp.ne.s32.totalorder %v3297, 0
      %vm3308 = vcmp.ne.s32.totalorder %v3298, 0
      %vm3309 = vcmp.ne.s32.totalorder %v3299, 0
      %vm3310 = vcmp.ne.s32.totalorder %v3300, 0
      %vm3311 = vcmp.ne.s32.totalorder %v3301, 0
      %vm3312 = vcmp.ne.s32.totalorder %v3302, 0
      %vm3313 = vcmp.ne.s32.totalorder %v3303, 0
      %vm3314 = vcmp.ne.s32.totalorder %v3304, 0
      %v3315 = vsel %vm3305, 1, 0
      %v3316 = vsel %vm3306, 1, 0
      %v3317 = vsel %vm3307, 1, 0
      %v3318 = vsel %vm3308, 1, 0
      %v3319 = vsel %vm3309, 1, 0
      %v3320 = vsel %vm3310, 1, 0
      %v3321 = vsel %vm3311, 1, 0
      %v3322 = vsel %vm3312, 1, 0
      %v3323 = vsel %vm3313, 1, 0
      %v3324 = vsel %vm3314, 1, 0
      %v3325 = vcvt.s32.f32 %v3315
      %v3326 = vcvt.s32.f32 %v3316
      %v3327 = vcvt.s32.f32 %v3317
      %v3328 = vcvt.s32.f32 %v3318
      %v3329 = vcvt.s32.f32 %v3319
      %v3330 = vcvt.s32.f32 %v3320
      %v3331 = vcvt.s32.f32 %v3321
      %v3332 = vcvt.s32.f32 %v3322
      %v3333 = vcvt.s32.f32 %v3323
      %v3334 = vcvt.s32.f32 %v3324
      %v3335 = vmul.f32 %v3115, %v3325
      %v3336 = vmul.f32 %v3160, %v3325
      %v3337 = vmul.f32 %v3161, %v3325
      %v3338 = vmul.f32 %v3162, %v3325
      %v3339 = vmul.f32 %v3116, %v3325
      %v3340 = vmul.f32 %v3163, %v3325
      %v3341 = vmul.f32 %v3164, %v3325
      %v3342 = vmul.f32 %v3165, %v3325
      %v3343 = vmul.f32 %v3166, %v3326
      %v3344 = vmul.f32 %v3167, %v3326
      %v3345 = vmul.f32 %v3168, %v3326
      %v3346 = vmul.f32 %v3118, %v3326
      %v3347 = vmul.f32 %v3169, %v3326
      %v3348 = vmul.f32 %v3170, %v3326
      %v3349 = vmul.f32 %v3171, %v3326
      %v3350 = vmul.f32 %v3119, %v3326
      %v3351 = vmul.f32 %v3172, %v3327
      %v3352 = vmul.f32 %v3173, %v3327
      %v3353 = vmul.f32 %v3120, %v3327
      %v3354 = vmul.f32 %v3174, %v3327
      %v3355 = vmul.f32 %v3175, %v3327
      %v3356 = vmul.f32 %v3176, %v3327
      %v3357 = vmul.f32 %v3121, %v3327
      %v3358 = vmul.f32 %v3177, %v3327
      %v3359 = vmul.f32 %v3178, %v3328
      %v3360 = vmul.f32 %v3122, %v3328
      %v3361 = vmul.f32 %v3179, %v3328
      %v3362 = vmul.f32 %v3180, %v3328
      %v3363 = vmul.f32 %v3181, %v3328
      %v3364 = vmul.f32 %v3123, %v3328
      %v3365 = vmul.f32 %v3182, %v3328
      %v3366 = vmul.f32 %v3183, %v3328
      %v3367 = vmul.f32 %v3124, %v3329
      %v3368 = vmul.f32 %v3184, %v3329
      %v3369 = vmul.f32 %v3185, %v3329
      %v3370 = vmul.f32 %v3186, %v3329
      %v3371 = vmul.f32 %v3125, %v3329
      %v3372 = vmul.f32 %v3187, %v3329
      %v3373 = vmul.f32 %v3188, %v3329
      %v3374 = vmul.f32 %v3189, %v3329
      %v3375 = vmul.f32 %v3190, %v3330
      %v3376 = vmul.f32 %v3191, %v3330
      %v3377 = vmul.f32 %v3192, %v3330
      %v3378 = vmul.f32 %v3127, %v3330
      %v3379 = vmul.f32 %v3193, %v3330
      %v3380 = vmul.f32 %v3194, %v3330
      %v3381 = vmul.f32 %v3195, %v3330
      %v3382 = vmul.f32 %v3128, %v3330
      %v3383 = vmul.f32 %v3196, %v3331
      %v3384 = vmul.f32 %v3197, %v3331
      %v3385 = vmul.f32 %v3129, %v3331
      %v3386 = vmul.f32 %v3198, %v3331
      %v3387 = vmul.f32 %v3199, %v3331
      %v3388 = vmul.f32 %v3200, %v3331
      %v3389 = vmul.f32 %v3130, %v3331
      %v3390 = vmul.f32 %v3201, %v3331
      %v3391 = vmul.f32 %v3202, %v3332
      %v3392 = vmul.f32 %v3131, %v3332
      %v3393 = vmul.f32 %v3203, %v3332
      %v3394 = vmul.f32 %v3204, %v3332
      %v3395 = vmul.f32 %v3205, %v3332
      %v3396 = vmul.f32 %v3132, %v3332
      %v3397 = vmul.f32 %v3206, %v3332
      %v3398 = vmul.f32 %v3207, %v3332
      %v3399 = vmul.f32 %v3133, %v3333
      %v3400 = vmul.f32 %v3208, %v3333
      %v3401 = vmul.f32 %v3209, %v3333
      %v3402 = vmul.f32 %v3210, %v3333
      %v3403 = vmul.f32 %v3134, %v3333
      %v3404 = vmul.f32 %v3211, %v3333
      %v3405 = vmul.f32 %v3212, %v3333
      %v3406 = vmul.f32 %v3213, %v3333
      %v3407 = vmul.f32 %v3214, %v3334
      %v3408 = vmul.f32 %v3215, %v3334
      %v3409 = vmul.f32 %v3216, %v3334
      %v3410 = vmul.f32 %v3136, %v3334
      %v3411 = vmul.f32 %v3217, %v3334
      %v3412 = vmul.f32 %v3218, %v3334
      %v3413 = vmul.f32 %v3219, %v3334
      %v3414 = vmul.f32 %v3137, %v3334
      %3495 = vst [vmem:[#allocation1] ss:$4 sm:$0xff] %v3335
      %s3496 = scalar_lea.vmem [#allocation1], 1
      %3497 = vst [vmem:[%s3496] ss:$4 sm:$0xff] %v3336
      %s3498 = scalar_lea.vmem [#allocation1], 2
      %3499 = vst [vmem:[%s3498] ss:$4 sm:$0xff] %v3337
      %s3500 = scalar_lea.vmem [#allocation1], 3
      %3501 = vst [vmem:[%s3500] ss:$4 sm:$0xff] %v3338
      %s3502 = scalar_lea.vmem [#allocation1], 32
      %3503 = vst [vmem:[%s3502] ss:$4 sm:$0xff] %v3339
      %s3504 = scalar_lea.vmem [#allocation1], 33
      %3505 = vst [vmem:[%s3504] ss:$4 sm:$0xff] %v3340
      %s3506 = scalar_lea.vmem [#allocation1], 34
      %3507 = vst [vmem:[%s3506] ss:$4 sm:$0xff] %v3341
      %s3508 = scalar_lea.vmem [#allocation1], 35
      %3509 = vst [vmem:[%s3508] ss:$4 sm:$0xff] %v3342
      %v3510 = vld.sshfl [vmem:[#allocation1] sm:$0xff pattern:$0x73625140]
      %v3511 = vld.sshfl [vmem:[#allocation1 + $0x20] sm:$0xff pattern:$0x73625140]
      %3512 = vst [vmem:[#allocation1] ss:$4 sm:$0xff] %v3343
      %3513 = vst [vmem:[%s3496] ss:$4 sm:$0xff] %v3344
      %3514 = vst [vmem:[%s3498] ss:$4 sm:$0xff] %v3345
      %3515 = vst [vmem:[%s3500] ss:$4 sm:$0xff] %v3346
      %3516 = vst [vmem:[%s3502] ss:$4 sm:$0xff] %v3347
      %3517 = vst [vmem:[%s3504] ss:$4 sm:$0xff] %v3348
      %3518 = vst [vmem:[%s3506] ss:$4 sm:$0xff] %v3349
      %3519 = vst [vmem:[%s3508] ss:$4 sm:$0xff] %v3350
      %v3520 = vld.sshfl [vmem:[#allocation1] sm:$0xff pattern:$0x73625140]
      %v3521 = vld.sshfl [vmem:[#allocation1 + $0x20] sm:$0xff pattern:$0x73625140]
      %3522 = vst [vmem:[#allocation1] ss:$4 sm:$0xff] %v3351
      %3523 = vst [vmem:[%s3496] ss:$4 sm:$0xff] %v3352
      %3524 = vst [vmem:[%s3498] ss:$4 sm:$0xff] %v3353
      %3525 = vst [vmem:[%s3500] ss:$4 sm:$0xff] %v3354
      %3526 = vst [vmem:[%s3502] ss:$4 sm:$0xff] %v3355
      %3527 = vst [vmem:[%s3504] ss:$4 sm:$0xff] %v3356
      %3528 = vst [vmem:[%s3506] ss:$4 sm:$0xff] %v3357
      %3529 = vst [vmem:[%s3508] ss:$4 sm:$0xff] %v3358
      %v3530 = vld.sshfl [vmem:[#allocation1] sm:$0xff pattern:$0x73625140]
      %v3531 = vld.sshfl [vmem:[#allocation1 + $0x20] sm:$0xff pattern:$0x73625140]
      %3532 = vst [vmem:[#allocation1] ss:$4 sm:$0xff] %v3359
      %3533 = vst [vmem:[%s3496] ss:$4 sm:$0xff] %v3360
      %3534 = vst [vmem:[%s3498] ss:$4 sm:$0xff] %v3361
      %3535 = vst [vmem:[%s3500] ss:$4 sm:$0xff] %v3362
      %3536 = vst [vmem:[%s3502] ss:$4 sm:$0xff] %v3363
      %3537 = vst [vmem:[%s3504] ss:$4 sm:$0xff] %v3364
      %3538 = vst [vmem:[%s3506] ss:$4 sm:$0xff] %v3365
      %3539 = vst [vmem:[%s3508] ss:$4 sm:$0xff] %v3366
      %v3540 = vld.sshfl [vmem:[#allocation1] sm:$0xff pattern:$0x73625140]
      %v3541 = vld.sshfl [vmem:[#allocation1 + $0x20] sm:$0xff pattern:$0x73625140]
      %3542 = vst [vmem:[#allocation1] ss:$4 sm:$0xff] %v3367
      %3543 = vst [vmem:[%s3496] ss:$4 sm:$0xff] %v3368
      %3544 = vst [vmem:[%s3498] ss:$4 sm:$0xff] %v3369
      %3545 = vst [vmem:[%s3500] ss:$4 sm:$0xff] %v3370
      %3546 = vst [vmem:[%s3502] ss:$4 sm:$0xff] %v3371
      %3547 = vst [vmem:[%s3504] ss:$4 sm:$0xff] %v3372
      %3548 = vst [vmem:[%s3506] ss:$4 sm:$0xff] %v3373
      %3549 = vst [vmem:[%s3508] ss:$4 sm:$0xff] %v3374
      %v3550 = vld.sshfl [vmem:[#allocation1] sm:$0xff pattern:$0x73625140]
      %v3551 = vld.sshfl [vmem:[#allocation1 + $0x20] sm:$0xff pattern:$0x73625140]
      %3552 = vst [vmem:[#allocation1] ss:$4 sm:$0xff] %v3375
      %3553 = vst [vmem:[%s3496] ss:$4 sm:$0xff] %v3376
      %3554 = vst [vmem:[%s3498] ss:$4 sm:$0xff] %v3377
      %3555 = vst [vmem:[%s3500] ss:$4 sm:$0xff] %v3378
      %3556 = vst [vmem:[%s3502] ss:$4 sm:$0xff] %v3379
      %3557 = vst [vmem:[%s3504] ss:$4 sm:$0xff] %v3380
      %3558 = vst [vmem:[%s3506] ss:$4 sm:$0xff] %v3381
      %3559 = vst [vmem:[%s3508] ss:$4 sm:$0xff] %v3382
      %v3560 = vld.sshfl [vmem:[#allocation1] sm:$0xff pattern:$0x73625140]
      %v3561 = vld.sshfl [vmem:[#allocation1 + $0x20] sm:$0xff pattern:$0x73625140]
      %3562 = vst [vmem:[#allocation1] ss:$4 sm:$0xff] %v3383
      %3563 = vst [vmem:[%s3496] ss:$4 sm:$0xff] %v3384
      %3564 = vst [vmem:[%s3498] ss:$4 sm:$0xff] %v3385
      %3565 = vst [vmem:[%s3500] ss:$4 sm:$0xff] %v3386
      %3566 = vst [vmem:[%s3502] ss:$4 sm:$0xff] %v3387
      %3567 = vst [vmem:[%s3504] ss:$4 sm:$0xff] %v3388
      %3568 = vst [vmem:[%s3506] ss:$4 sm:$0xff] %v3389
      %3569 = vst [vmem:[%s3508] ss:$4 sm:$0xff] %v3390
      %v3570 = vld.sshfl [vmem:[#allocation1] sm:$0xff pattern:$0x73625140]
      %v3571 = vld.sshfl [vmem:[#allocation1 + $0x20] sm:$0xff pattern:$0x73625140]
      %3572 = vst [vmem:[#allocation1] ss:$4 sm:$0xff] %v3391
      %3573 = vst [vmem:[%s3496] ss:$4 sm:$0xff] %v3392
      %3574 = vst [vmem:[%s3498] ss:$4 sm:$0xff] %v3393
      %3575 = vst [vmem:[%s3500] ss:$4 sm:$0xff] %v3394
      %3576 = vst [vmem:[%s3502] ss:$4 sm:$0xff] %v3395
      %3577 = vst [vmem:[%s3504] ss:$4 sm:$0xff] %v3396
      %3578 = vst [vmem:[%s3506] ss:$4 sm:$0xff] %v3397
      %3579 = vst [vmem:[%s3508] ss:$4 sm:$0xff] %v3398
      %v3580 = vld.sshfl [vmem:[#allocation1] sm:$0xff pattern:$0x73625140]
      %v3581 = vld.sshfl [vmem:[#allocation1 + $0x20] sm:$0xff pattern:$0x73625140]
      %3582 = vst [vmem:[#allocation1] ss:$4 sm:$0xff] %v3399
      %3583 = vst [vmem:[%s3496] ss:$4 sm:$0xff] %v3400
      %3584 = vst [vmem:[%s3498] ss:$4 sm:$0xff] %v3401
      %3585 = vst [vmem:[%s3500] ss:$4 sm:$0xff] %v3402
      %3586 = vst [vmem:[%s3502] ss:$4 sm:$0xff] %v3403
      %3587 = vst [vmem:[%s3504] ss:$4 sm:$0xff] %v3404
      %3588 = vst [vmem:[%s3506] ss:$4 sm:$0xff] %v3405
      %3589 = vst [vmem:[%s3508] ss:$4 sm:$0xff] %v3406
      %v3590 = vld.sshfl [vmem:[#allocation1] sm:$0xff pattern:$0x73625140]
      %v3591 = vld.sshfl [vmem:[#allocation1 + $0x20] sm:$0xff pattern:$0x73625140]
      %3592 = vst [vmem:[#allocation1] ss:$4 sm:$0xff] %v3407
      %3593 = vst [vmem:[%s3496] ss:$4 sm:$0xff] %v3408
      %3594 = vst [vmem:[%s3498] ss:$4 sm:$0xff] %v3409
      %3595 = vst [vmem:[%s3500] ss:$4 sm:$0xff] %v3410
      %3596 = vst [vmem:[%s3502] ss:$4 sm:$0xff] %v3411
      %3597 = vst [vmem:[%s3504] ss:$4 sm:$0xff] %v3412
      %3598 = vst [vmem:[%s3506] ss:$4 sm:$0xff] %v3413
      %3599 = vst [vmem:[%s3508] ss:$4 sm:$0xff] %v3414
      %v3600 = vld.sshfl [vmem:[#allocation1] sm:$0xff pattern:$0x73625140]
      %v3601 = vld.sshfl [vmem:[#allocation1 + $0x20] sm:$0xff pattern:$0x73625140]
      %3622 = vst [vmem:[#allocation3 + $0x1] sm:$0xff] %v3510
      %3623 = vst [vmem:[#allocation3 + $0x9] sm:$0xff] %v3511
      %3624 = vst [vmem:[#allocation3 + $0x19] sm:$0xff] %v3520
      %3625 = vst [vmem:[#allocation3 + $0x21] sm:$0xff] %v3521
      %3626 = vst [vmem:[#allocation3 + $0x31] sm:$0xff] %v3530
      %3627 = vst [vmem:[#allocation3 + $0x39] sm:$0xff] %v3531
      %3628 = vst [vmem:[#allocation3 + $0x49] sm:$0xff] %v3540
      %3629 = vst [vmem:[#allocation3 + $0x51] sm:$0xff] %v3541
      %3630 = vst [vmem:[#allocation3 + $0x61] sm:$0xff] %v3550
      %3631 = vst [vmem:[#allocation3 + $0x69] sm:$0xff] %v3551
      %3632 = vst [vmem:[#allocation3 + $0x79] sm:$0xff] %v3560
      %3633 = vst [vmem:[#allocation3 + $0x81] sm:$0xff] %v3561
      %3634 = vst [vmem:[#allocation3 + $0x91] sm:$0xff] %v3570
      %3635 = vst [vmem:[#allocation3 + $0x99] sm:$0xff] %v3571
      %3636 = vst [vmem:[#allocation3 + $0xa9] sm:$0xff] %v3580
      %3637 = vst [vmem:[#allocation3 + $0xb1] sm:$0xff] %v3581
      %3638 = vst [vmem:[#allocation3 + $0xc1] sm:$0xff] %v3590
      %3639 = vst [vmem:[#allocation3 + $0xc9] sm:$0xff] %v3591
      %3640 = vst [vmem:[#allocation3 + $0xd9] sm:$0xff] %v3600
      %3641 = vst [vmem:[#allocation3 + $0xe1] sm:$0xff] %v3601
      %v3642 = vld [vmem:[#allocation3] sm:$0xff]
      %v3643 = vld [vmem:[#allocation3 + $0x8] sm:$0xff]
      %v3644 = vld [vmem:[#allocation3 + $0x10] sm:$0x3]
      %v3645 = vld [vmem:[#allocation3 + $0x18] sm:$0xff]
      %v3646 = vld [vmem:[#allocation3 + $0x20] sm:$0xff]
      %v3647 = vld [vmem:[#allocation3 + $0x28] sm:$0x3]
      %v3648 = vld [vmem:[#allocation3 + $0x30] sm:$0xff]
      %v3649 = vld [vmem:[#allocation3 + $0x38] sm:$0xff]
      %v3650 = vld [vmem:[#allocation3 + $0x40] sm:$0x3]
      %v3651 = vld [vmem:[#allocation3 + $0x48] sm:$0xff]
      %v3652 = vld [vmem:[#allocation3 + $0x50] sm:$0xff]
      %v3653 = vld [vmem:[#allocation3 + $0x58] sm:$0x3]
      %v3654 = vld [vmem:[#allocation3 + $0x60] sm:$0xff]
      %v3655 = vld [vmem:[#allocation3 + $0x68] sm:$0xff]
      %v3656 = vld [vmem:[#allocation3 + $0x70] sm:$0x3]
      %v3657 = vld [vmem:[#allocation3 + $0x78] sm:$0xff]
      %v3658 = vld [vmem:[#allocation3 + $0x80] sm:$0xff]
      %v3659 = vld [vmem:[#allocation3 + $0x88] sm:$0x3]
      %v3660 = vld [vmem:[#allocation3 + $0x90] sm:$0xff]
      %v3661 = vld [vmem:[#allocation3 + $0x98] sm:$0xff]
      %v3662 = vld [vmem:[#allocation3 + $0xa0] sm:$0x3]
      %v3663 = vld [vmem:[#allocation3 + $0xa8] sm:$0xff]
      %v3664 = vld [vmem:[#allocation3 + $0xb0] sm:$0xff]
      %v3665 = vld [vmem:[#allocation3 + $0xb8] sm:$0x3]
      %v3666 = vld [vmem:[#allocation3 + $0xc0] sm:$0xff]
      %v3667 = vld [vmem:[#allocation3 + $0xc8] sm:$0xff]
      %v3668 = vld [vmem:[#allocation3 + $0xd0] sm:$0x3]
      %v3669 = vld [vmem:[#allocation3 + $0xd8] sm:$0xff]
      %v3670 = vld [vmem:[#allocation3 + $0xe0] sm:$0xff]
      %v3671 = vld [vmem:[#allocation3 + $0xe8] sm:$0x3]
      %v3672 = vld [vmem:[#allocation3 + $0xf0] sm:$0xff]
      %v3704 = vrot.slane %v3642, 2
      %v3705 = vrot.slane %v3642, 4
      %v3706 = vrot.slane %v3642, 6
      %v3707 = vrot.slane %v3643, 2
      %v3708 = vrot.slane %v3643, 4
      %v3709 = vrot.slane %v3643, 6
      %v3710 = vrot.slane %v3645, 2
      %v3711 = vrot.slane %v3645, 4
      %v3712 = vrot.slane %v3645, 6
      %v3713 = vrot.slane %v3646, 2
      %v3714 = vrot.slane %v3646, 4
      %v3715 = vrot.slane %v3646, 6
      %v3716 = vrot.slane %v3648, 2
      %v3717 = vrot.slane %v3648, 4
      %v3718 = vrot.slane %v3648, 6
      %v3719 = vrot.slane %v3649, 2
      %v3720 = vrot.slane %v3649, 4
      %v3721 = vrot.slane %v3649, 6
      %v3722 = vrot.slane %v3651, 2
      %v3723 = vrot.slane %v3651, 4
      %v3724 = vrot.slane %v3651, 6
      %v3725 = vrot.slane %v3652, 2
      %v3726 = vrot.slane %v3652, 4
      %v3727 = vrot.slane %v3652, 6
      %v3728 = vrot.slane %v3654, 2
      %v3729 = vrot.slane %v3654, 4
      %v3730 = vrot.slane %v3654, 6
      %v3731 = vrot.slane %v3655, 2
      %v3732 = vrot.slane %v3655, 4
      %v3733 = vrot.slane %v3655, 6
      %v3734 = vrot.slane %v3657, 2
      %v3735 = vrot.slane %v3657, 4
      %v3736 = vrot.slane %v3657, 6
      %v3737 = vrot.slane %v3658, 2
      %v3738 = vrot.slane %v3658, 4
      %v3739 = vrot.slane %v3658, 6
      %v3740 = vrot.slane %v3660, 2
      %v3741 = vrot.slane %v3660, 4
      %v3742 = vrot.slane %v3660, 6
      %v3743 = vrot.slane %v3661, 2
      %v3744 = vrot.slane %v3661, 4
      %v3745 = vrot.slane %v3661, 6
      %v3746 = vrot.slane %v3663, 2
      %v3747 = vrot.slane %v3663, 4
      %v3748 = vrot.slane %v3663, 6
      %v3749 = vrot.slane %v3664, 2
      %v3750 = vrot.slane %v3664, 4
      %v3751 = vrot.slane %v3664, 6
      %v3752 = vrot.slane %v3666, 2
      %v3753 = vrot.slane %v3666, 4
      %v3754 = vrot.slane %v3666, 6
      %v3755 = vrot.slane %v3667, 2
      %v3756 = vrot.slane %v3667, 4
      %v3757 = vrot.slane %v3667, 6
      %v3758 = vrot.slane %v3669, 2
      %v3759 = vrot.slane %v3669, 4
      %v3760 = vrot.slane %v3669, 6
      %v3761 = vrot.slane %v3670, 2
      %v3762 = vrot.slane %v3670, 4
      %v3763 = vrot.slane %v3670, 6
      %v3764 = vld [vmem:[%s2] sm:$0xff]
      %v3765 = vld [vmem:[%s2 + $0x8] sm:$0xff]
      %v3766 = vld [vmem:[%s2 + $0x10] sm:$0xff]
      %v3767 = vld [vmem:[%s2 + $0x18] sm:$0xff]
      %v3768 = vld [vmem:[%s2 + $0x20] sm:$0xff]
      %v3769 = vld [vmem:[%s2 + $0x28] sm:$0xff]
      %v3770 = vld [vmem:[%s2 + $0x30] sm:$0xff]
      %v3771 = vld [vmem:[%s2 + $0x38] sm:$0xff]
      %v3772 = vld [vmem:[%s2 + $0x40] sm:$0xff]
      %v3773 = vld [vmem:[%s2 + $0x48] sm:$0xff]
      %v3774 = vld [vmem:[%s2 + $0x50] sm:$0xff]
      %v3775 = vld [vmem:[%s2 + $0x58] sm:$0xff]
      %v3776 = vld [vmem:[%s2 + $0x60] sm:$0xff]
      %v3777 = vld [vmem:[%s2 + $0x68] sm:$0xff]
      %v3778 = vld [vmem:[%s2 + $0x70] sm:$0xff]
      %v3779 = vld [vmem:[%s2 + $0x78] sm:$0xff]
      %s3780 = scalar_lea.vmem %s2, 128
      %v3781 = vld [vmem:[%s3780] sm:$0xff]
      %v3782 = vld [vmem:[%s3780 + $0x8] sm:$0xff]
      %v3783 = vld [vmem:[%s3780 + $0x10] sm:$0xff]
      %v3784 = vld [vmem:[%s3780 + $0x18] sm:$0xff]
      %v3785 = vld [vmem:[%s3780 + $0x20] sm:$0xff]
      %v3786 = vld [vmem:[%s3780 + $0x28] sm:$0xff]
      %v3787 = vld [vmem:[%s3780 + $0x30] sm:$0xff]
      %v3788 = vld [vmem:[%s3780 + $0x38] sm:$0xff]
      %v3789 = vld [vmem:[%s3780 + $0x40] sm:$0xff]
      %v3790 = vld [vmem:[%s3780 + $0x48] sm:$0xff]
      %v3791 = vld [vmem:[%s3780 + $0x50] sm:$0xff]
      %v3792 = vld [vmem:[%s3780 + $0x58] sm:$0xff]
      %v3793 = vld [vmem:[%s3780 + $0x60] sm:$0xff]
      %v3794 = vld [vmem:[%s3780 + $0x68] sm:$0xff]
      %v3795 = vld [vmem:[%s3780 + $0x70] sm:$0xff]
      %v3796 = vld [vmem:[%s3780 + $0x78] sm:$0xff]
      %3797 = vst [vmem:[#allocation1] ss:$4 sm:$0xff] %v3642
      %s3798 = scalar_lea.vmem [#allocation1], 1
      %3799 = vst [vmem:[%s3798] ss:$4 sm:$0xff] %v3704
      %s3800 = scalar_lea.vmem [#allocation1], 2
      %3801 = vst [vmem:[%s3800] ss:$4 sm:$0xff] %v3705
      %s3802 = scalar_lea.vmem [#allocation1], 3
      %3803 = vst [vmem:[%s3802] ss:$4 sm:$0xff] %v3706
      %s3804 = scalar_lea.vmem [#allocation1], 32
      %3805 = vst [vmem:[%s3804] ss:$4 sm:$0xff] %v3643
      %s3806 = scalar_lea.vmem [#allocation1], 33
      %3807 = vst [vmem:[%s3806] ss:$4 sm:$0xff] %v3707
      %s3808 = scalar_lea.vmem [#allocation1], 34
      %3809 = vst [vmem:[%s3808] ss:$4 sm:$0xff] %v3708
      %s3810 = scalar_lea.vmem [#allocation1], 35
      %3811 = vst [vmem:[%s3810] ss:$4 sm:$0xff] %v3709
      %v3812 = vld.sshfl [vmem:[#allocation1] sm:$0xff pattern:$0x73625140]
      %v3813 = vld.sshfl [vmem:[#allocation1 + $0x20] sm:$0xff pattern:$0x73625140]
      %3814 = vst [vmem:[#allocation1] ss:$4 sm:$0xff] %v3644
      %3815 = vst [vmem:[%s3798] ss:$4 sm:$0xff] %v3645
      %3816 = vst [vmem:[%s3800] ss:$4 sm:$0xff] %v3710
      %3817 = vst [vmem:[%s3802] ss:$4 sm:$0xff] %v3711
      %3818 = vst [vmem:[%s3804] ss:$4 sm:$0xff] %v3712
      %3819 = vst [vmem:[%s3806] ss:$4 sm:$0xff] %v3646
      %3820 = vst [vmem:[%s3808] ss:$4 sm:$0xff] %v3713
      %3821 = vst [vmem:[%s3810] ss:$4 sm:$0xff] %v3714
      %v3822 = vld.sshfl [vmem:[#allocation1] sm:$0xff pattern:$0x73625140]
      %v3823 = vld.sshfl [vmem:[#allocation1 + $0x20] sm:$0xff pattern:$0x73625140]
      %3824 = vst [vmem:[#allocation1] ss:$4 sm:$0xff] %v3715
      %3825 = vst [vmem:[%s3798] ss:$4 sm:$0xff] %v3647
      %3826 = vst [vmem:[%s3800] ss:$4 sm:$0xff] %v3648
      %3827 = vst [vmem:[%s3802] ss:$4 sm:$0xff] %v3716
      %3828 = vst [vmem:[%s3804] ss:$4 sm:$0xff] %v3717
      %3829 = vst [vmem:[%s3806] ss:$4 sm:$0xff] %v3718
      %3830 = vst [vmem:[%s3808] ss:$4 sm:$0xff] %v3649
      %3831 = vst [vmem:[%s3810] ss:$4 sm:$0xff] %v3719
      %v3832 = vld.sshfl [vmem:[#allocation1] sm:$0xff pattern:$0x73625140]
      %v3833 = vld.sshfl [vmem:[#allocation1 + $0x20] sm:$0xff pattern:$0x73625140]
      %3834 = vst [vmem:[#allocation1] ss:$4 sm:$0xff] %v3720
      %3835 = vst [vmem:[%s3798] ss:$4 sm:$0xff] %v3721
      %3836 = vst [vmem:[%s3800] ss:$4 sm:$0xff] %v3650
      %3837 = vst [vmem:[%s3802] ss:$4 sm:$0xff] %v3651
      %3838 = vst [vmem:[%s3804] ss:$4 sm:$0xff] %v3722
      %3839 = vst [vmem:[%s3806] ss:$4 sm:$0xff] %v3723
      %3840 = vst [vmem:[%s3808] ss:$4 sm:$0xff] %v3724
      %3841 = vst [vmem:[%s3810] ss:$4 sm:$0xff] %v3652
      %v3842 = vld.sshfl [vmem:[#allocation1] sm:$0xff pattern:$0x73625140]
      %v3843 = vld.sshfl [vmem:[#allocation1 + $0x20] sm:$0xff pattern:$0x73625140]
      %3844 = vst [vmem:[#allocation1] ss:$4 sm:$0xff] %v3725
      %3845 = vst [vmem:[%s3798] ss:$4 sm:$0xff] %v3726
      %3846 = vst [vmem:[%s3800] ss:$4 sm:$0xff] %v3727
      %3847 = vst [vmem:[%s3802] ss:$4 sm:$0xff] %v3653
      %3848 = vst [vmem:[%s3804] ss:$4 sm:$0xff] %v3654
      %3849 = vst [vmem:[%s3806] ss:$4 sm:$0xff] %v3728
      %3850 = vst [vmem:[%s3808] ss:$4 sm:$0xff] %v3729
      %3851 = vst [vmem:[%s3810] ss:$4 sm:$0xff] %v3730
      %v3852 = vld.sshfl [vmem:[#allocation1] sm:$0xff pattern:$0x73625140]
      %v3853 = vld.sshfl [vmem:[#allocation1 + $0x20] sm:$0xff pattern:$0x73625140]
      %3854 = vst [vmem:[#allocation1] ss:$4 sm:$0xff] %v3655
      %3855 = vst [vmem:[%s3798] ss:$4 sm:$0xff] %v3731
      %3856 = vst [vmem:[%s3800] ss:$4 sm:$0xff] %v3732
      %3857 = vst [vmem:[%s3802] ss:$4 sm:$0xff] %v3733
      %3858 = vst [vmem:[%s3804] ss:$4 sm:$0xff] %v3656
      %3859 = vst [vmem:[%s3806] ss:$4 sm:$0xff] %v3657
      %3860 = vst [vmem:[%s3808] ss:$4 sm:$0xff] %v3734
      %3861 = vst [vmem:[%s3810] ss:$4 sm:$0xff] %v3735
      %v3862 = vld.sshfl [vmem:[#allocation1] sm:$0xff pattern:$0x73625140]
      %v3863 = vld.sshfl [vmem:[#allocation1 + $0x20] sm:$0xff pattern:$0x73625140]
      %3864 = vst [vmem:[#allocation1] ss:$4 sm:$0xff] %v3736
      %3865 = vst [vmem:[%s3798] ss:$4 sm:$0xff] %v3658
      %3866 = vst [vmem:[%s3800] ss:$4 sm:$0xff] %v3737
      %3867 = vst [vmem:[%s3802] ss:$4 sm:$0xff] %v3738
      %3868 = vst [vmem:[%s3804] ss:$4 sm:$0xff] %v3739
      %3869 = vst [vmem:[%s3806] ss:$4 sm:$0xff] %v3659
      %3870 = vst [vmem:[%s3808] ss:$4 sm:$0xff] %v3660
      %3871 = vst [vmem:[%s3810] ss:$4 sm:$0xff] %v3740
      %v3872 = vld.sshfl [vmem:[#allocation1] sm:$0xff pattern:$0x73625140]
      %v3873 = vld.sshfl [vmem:[#allocation1 + $0x20] sm:$0xff pattern:$0x73625140]
      %3874 = vst [vmem:[#allocation1] ss:$4 sm:$0xff] %v3741
      %3875 = vst [vmem:[%s3798] ss:$4 sm:$0xff] %v3742
      %3876 = vst [vmem:[%s3800] ss:$4 sm:$0xff] %v3661
      %3877 = vst [vmem:[%s3802] ss:$4 sm:$0xff] %v3743
      %3878 = vst [vmem:[%s3804] ss:$4 sm:$0xff] %v3744
      %3879 = vst [vmem:[%s3806] ss:$4 sm:$0xff] %v3745
      %3880 = vst [vmem:[%s3808] ss:$4 sm:$0xff] %v3662
      %3881 = vst [vmem:[%s3810] ss:$4 sm:$0xff] %v3663
      %v3882 = vld.sshfl [vmem:[#allocation1] sm:$0xff pattern:$0x73625140]
      %v3883 = vld.sshfl [vmem:[#allocation1 + $0x20] sm:$0xff pattern:$0x73625140]
      %3884 = vst [vmem:[#allocation1] ss:$4 sm:$0xff] %v3746
      %3885 = vst [vmem:[%s3798] ss:$4 sm:$0xff] %v3747
      %3886 = vst [vmem:[%s3800] ss:$4 sm:$0xff] %v3748
      %3887 = vst [vmem:[%s3802] ss:$4 sm:$0xff] %v3664
      %3888 = vst [vmem:[%s3804] ss:$4 sm:$0xff] %v3749
      %3889 = vst [vmem:[%s3806] ss:$4 sm:$0xff] %v3750
      %3890 = vst [vmem:[%s3808] ss:$4 sm:$0xff] %v3751
      %3891 = vst [vmem:[%s3810] ss:$4 sm:$0xff] %v3665
      %v3892 = vld.sshfl [vmem:[#allocation1] sm:$0xff pattern:$0x73625140]
      %v3893 = vld.sshfl [vmem:[#allocation1 + $0x20] sm:$0xff pattern:$0x73625140]
      %3894 = vst [vmem:[#allocation1] ss:$4 sm:$0xff] %v3666
      %v3895 = vld.sshfl [vmem:[#allocation1] sm:$0xff pattern:$0x73625140]
      %v3896 = vrot.slane %v3812, 1
      %v3897 = vrot.slane %v3813, 1
      %v3898 = vsel %vm702, %v3896, %v3897
      %v3899 = vrot.slane %v3822, 1
      %v3900 = vsel %vm702, %v3897, %v3899
      %v3901 = vrot.slane %v3823, 1
      %v3902 = vsel %vm702, %v3899, %v3901
      %v3903 = vrot.slane %v3832, 1
      %v3904 = vsel %vm702, %v3901, %v3903
      %v3905 = vrot.slane %v3833, 1
      %v3906 = vsel %vm702, %v3903, %v3905
      %v3907 = vrot.slane %v3842, 1
      %v3908 = vsel %vm702, %v3905, %v3907
      %v3909 = vrot.slane %v3843, 1
      %v3910 = vsel %vm702, %v3907, %v3909
      %v3911 = vrot.slane %v3852, 1
      %v3912 = vsel %vm702, %v3909, %v3911
      %v3913 = vrot.slane %v3853, 1
      %v3914 = vsel %vm702, %v3911, %v3913
      %v3915 = vrot.slane %v3862, 1
      %v3916 = vsel %vm702, %v3913, %v3915
      %v3917 = vrot.slane %v3863, 1
      %v3918 = vsel %vm702, %v3915, %v3917
      %v3919 = vrot.slane %v3872, 1
      %v3920 = vsel %vm702, %v3917, %v3919
      %v3921 = vrot.slane %v3873, 1
      %v3922 = vsel %vm702, %v3919, %v3921
      %v3923 = vrot.slane %v3882, 1
      %v3924 = vsel %vm702, %v3921, %v3923
      %v3925 = vrot.slane %v3883, 1
      %v3926 = vsel %vm702, %v3923, %v3925
      %v3927 = vrot.slane %v3892, 1
      %v3928 = vsel %vm702, %v3925, %v3927
      %v3929 = vrot.slane %v3893, 1
      %v3930 = vsel %vm702, %v3927, %v3929
      %v3931 = vrot.slane %v3895, 1
      %v3932 = vsel %vm702, %v3929, %v3931
      %3951 = vmatpush.msra.mxu0 %v3796
      %3952 = vmatpush.msra.mxu0 %v3795
      %3953 = vmatpush.msra.mxu0 %v3794
      %3954 = vmatpush.msra.mxu0 %v3793
      %3955 = vmatpush.msra.mxu0 %v3792
      %3956 = vmatpush.msra.mxu0 %v3791
      %3957 = vmatpush.msra.mxu0 %v3790
      %3958 = vmatpush.msra.mxu0 %v3789
      %3959 = vmatpush.msra.mxu0 %v3788
      %3960 = vmatpush.msra.mxu0 %v3787
      %3961 = vmatpush.msra.mxu0 %v3786
      %3962 = vmatpush.msra.mxu0 %v3785
      %3963 = vmatpush.msra.mxu0 %v3784
      %3964 = vmatpush.msra.mxu0 %v3783
      %3965 = vmatpush.msra.mxu0 %v3782
      %3966 = vmatpush.msra.mxu0 %v3781
      %3967 = vmatmul.f32.gmra.mxu0 %v3898
      %v3968 = vpop.f32.mrf.mxu0
      %v3969 = vadd.f32 0.0, %v3968
      %3970 = vmatmul.f32.gmra.mxu0 %v3900
      %v3971 = vpop.f32.mrf.mxu0
      %v3972 = vadd.f32 0.0, %v3971
      %3973 = vmatmul.f32.gmra.mxu0 %v3902
      %v3974 = vpop.f32.mrf.mxu0
      %v3975 = vadd.f32 0.0, %v3974
      %3976 = vmatmul.f32.gmra.mxu0 %v3904
      %v3977 = vpop.f32.mrf.mxu0
      %v3978 = vadd.f32 0.0, %v3977
      %3979 = vmatmul.f32.gmra.mxu0 %v3906
      %v3980 = vpop.f32.mrf.mxu0
      %v3981 = vadd.f32 0.0, %v3980
      %3982 = vmatmul.f32.gmra.mxu0 %v3908
      %v3983 = vpop.f32.mrf.mxu0
      %v3984 = vadd.f32 0.0, %v3983
      %3985 = vmatmul.f32.gmra.mxu0 %v3910
      %v3986 = vpop.f32.mrf.mxu0
      %v3987 = vadd.f32 0.0, %v3986
      %3988 = vmatmul.f32.gmra.mxu0 %v3912
      %v3989 = vpop.f32.mrf.mxu0
      %v3990 = vadd.f32 0.0, %v3989
      %3991 = vmatmul.f32.gmra.mxu0 %v3914
      %v3992 = vpop.f32.mrf.mxu0
      %v3993 = vadd.f32 0.0, %v3992
      %3994 = vmatmul.f32.gmra.mxu0 %v3916
      %v3995 = vpop.f32.mrf.mxu0
      %v3996 = vadd.f32 0.0, %v3995
      %3997 = vmatmul.f32.gmra.mxu0 %v3918
      %v3998 = vpop.f32.mrf.mxu0
      %v3999 = vadd.f32 0.0, %v3998
      %4000 = vmatmul.f32.gmra.mxu0 %v3920
      %v4001 = vpop.f32.mrf.mxu0
      %v4002 = vadd.f32 0.0, %v4001
      %4003 = vmatmul.f32.gmra.mxu0 %v3922
      %v4004 = vpop.f32.mrf.mxu0
      %v4005 = vadd.f32 0.0, %v4004
      %4006 = vmatmul.f32.gmra.mxu0 %v3924
      %v4007 = vpop.f32.mrf.mxu0
      %v4008 = vadd.f32 0.0, %v4007
      %4009 = vmatmul.f32.gmra.mxu0 %v3926
      %v4010 = vpop.f32.mrf.mxu0
      %v4011 = vadd.f32 0.0, %v4010
      %4012 = vmatmul.f32.gmra.mxu0 %v3928
      %v4013 = vpop.f32.mrf.mxu0
      %v4014 = vadd.f32 0.0, %v4013
      %4015 = vmatmul.f32.gmra.mxu0 %v3930
      %v4016 = vpop.f32.mrf.mxu0
      %v4017 = vadd.f32 0.0, %v4016
      %4018 = vmatmul.f32.gmra.mxu0 %v3932
      %v4019 = vpop.f32.mrf.mxu0
      %v4020 = vadd.f32 0.0, %v4019
      %4021 = vdwg.mxu0
      %4022 = vst [vmem:[#allocation1] ss:$4 sm:$0xff] %v3642
      %s4023 = scalar_lea.vmem [#allocation1], 1
      %4024 = vst [vmem:[%s4023] ss:$4 sm:$0xff] %v3704
      %s4025 = scalar_lea.vmem [#allocation1], 2
      %4026 = vst [vmem:[%s4025] ss:$4 sm:$0xff] %v3705
      %s4027 = scalar_lea.vmem [#allocation1], 3
      %4028 = vst [vmem:[%s4027] ss:$4 sm:$0xff] %v3706
      %s4029 = scalar_lea.vmem [#allocation1], 32
      %4030 = vst [vmem:[%s4029] ss:$4 sm:$0xff] %v3643
      %s4031 = scalar_lea.vmem [#allocation1], 33
      %4032 = vst [vmem:[%s4031] ss:$4 sm:$0xff] %v3707
      %s4033 = scalar_lea.vmem [#allocation1], 34
      %4034 = vst [vmem:[%s4033] ss:$4 sm:$0xff] %v3708
      %s4035 = scalar_lea.vmem [#allocation1], 35
      %4036 = vst [vmem:[%s4035] ss:$4 sm:$0xff] %v3709
      %v4037 = vld.sshfl [vmem:[#allocation1] sm:$0xff pattern:$0x73625140]
      %v4038 = vld.sshfl [vmem:[#allocation1 + $0x20] sm:$0xff pattern:$0x73625140]
      %4039 = vst [vmem:[#allocation1] ss:$4 sm:$0xff] %v3644
      %4040 = vst [vmem:[%s4023] ss:$4 sm:$0xff] %v3645
      %4041 = vst [vmem:[%s4025] ss:$4 sm:$0xff] %v3710
      %4042 = vst [vmem:[%s4027] ss:$4 sm:$0xff] %v3711
      %4043 = vst [vmem:[%s4029] ss:$4 sm:$0xff] %v3712
      %4044 = vst [vmem:[%s4031] ss:$4 sm:$0xff] %v3646
      %4045 = vst [vmem:[%s4033] ss:$4 sm:$0xff] %v3713
      %4046 = vst [vmem:[%s4035] ss:$4 sm:$0xff] %v3714
      %v4047 = vld.sshfl [vmem:[#allocation1] sm:$0xff pattern:$0x73625140]
      %v4048 = vld.sshfl [vmem:[#allocation1 + $0x20] sm:$0xff pattern:$0x73625140]
      %4049 = vst [vmem:[#allocation1] ss:$4 sm:$0xff] %v3715
      %4050 = vst [vmem:[%s4023] ss:$4 sm:$0xff] %v3647
      %4051 = vst [vmem:[%s4025] ss:$4 sm:$0xff] %v3648
      %4052 = vst [vmem:[%s4027] ss:$4 sm:$0xff] %v3716
      %4053 = vst [vmem:[%s4029] ss:$4 sm:$0xff] %v3717
      %4054 = vst [vmem:[%s4031] ss:$4 sm:$0xff] %v3718
      %4055 = vst [vmem:[%s4033] ss:$4 sm:$0xff] %v3649
      %4056 = vst [vmem:[%s4035] ss:$4 sm:$0xff] %v3719
      %v4057 = vld.sshfl [vmem:[#allocation1] sm:$0xff pattern:$0x73625140]
      %v4058 = vld.sshfl [vmem:[#allocation1 + $0x20] sm:$0xff pattern:$0x73625140]
      %4059 = vst [vmem:[#allocation1] ss:$4 sm:$0xff] %v3720
      %4060 = vst [vmem:[%s4023] ss:$4 sm:$0xff] %v3721
      %4061 = vst [vmem:[%s4025] ss:$4 sm:$0xff] %v3650
      %4062 = vst [vmem:[%s4027] ss:$4 sm:$0xff] %v3651
      %4063 = vst [vmem:[%s4029] ss:$4 sm:$0xff] %v3722
      %4064 = vst [vmem:[%s4031] ss:$4 sm:$0xff] %v3723
      %4065 = vst [vmem:[%s4033] ss:$4 sm:$0xff] %v3724
      %4066 = vst [vmem:[%s4035] ss:$4 sm:$0xff] %v3652
      %v4067 = vld.sshfl [vmem:[#allocation1] sm:$0xff pattern:$0x73625140]
      %v4068 = vld.sshfl [vmem:[#allocation1 + $0x20] sm:$0xff pattern:$0x73625140]
      %4069 = vst [vmem:[#allocation1] ss:$4 sm:$0xff] %v3725
      %4070 = vst [vmem:[%s4023] ss:$4 sm:$0xff] %v3726
      %4071 = vst [vmem:[%s4025] ss:$4 sm:$0xff] %v3727
      %4072 = vst [vmem:[%s4027] ss:$4 sm:$0xff] %v3653
      %4073 = vst [vmem:[%s4029] ss:$4 sm:$0xff] %v3654
      %4074 = vst [vmem:[%s4031] ss:$4 sm:$0xff] %v3728
      %4075 = vst [vmem:[%s4033] ss:$4 sm:$0xff] %v3729
      %4076 = vst [vmem:[%s4035] ss:$4 sm:$0xff] %v3730
      %v4077 = vld.sshfl [vmem:[#allocation1] sm:$0xff pattern:$0x73625140]
      %v4078 = vld.sshfl [vmem:[#allocation1 + $0x20] sm:$0xff pattern:$0x73625140]
      %4079 = vst [vmem:[#allocation1] ss:$4 sm:$0xff] %v3655
      %4080 = vst [vmem:[%s4023] ss:$4 sm:$0xff] %v3731
      %4081 = vst [vmem:[%s4025] ss:$4 sm:$0xff] %v3732
      %4082 = vst [vmem:[%s4027] ss:$4 sm:$0xff] %v3733
      %4083 = vst [vmem:[%s4029] ss:$4 sm:$0xff] %v3656
      %4084 = vst [vmem:[%s4031] ss:$4 sm:$0xff] %v3657
      %4085 = vst [vmem:[%s4033] ss:$4 sm:$0xff] %v3734
      %4086 = vst [vmem:[%s4035] ss:$4 sm:$0xff] %v3735
      %v4087 = vld.sshfl [vmem:[#allocation1] sm:$0xff pattern:$0x73625140]
      %v4088 = vld.sshfl [vmem:[#allocation1 + $0x20] sm:$0xff pattern:$0x73625140]
      %4089 = vst [vmem:[#allocation1] ss:$4 sm:$0xff] %v3736
      %4090 = vst [vmem:[%s4023] ss:$4 sm:$0xff] %v3658
      %4091 = vst [vmem:[%s4025] ss:$4 sm:$0xff] %v3737
      %4092 = vst [vmem:[%s4027] ss:$4 sm:$0xff] %v3738
      %4093 = vst [vmem:[%s4029] ss:$4 sm:$0xff] %v3739
      %4094 = vst [vmem:[%s4031] ss:$4 sm:$0xff] %v3659
      %4095 = vst [vmem:[%s4033] ss:$4 sm:$0xff] %v3660
      %4096 = vst [vmem:[%s4035] ss:$4 sm:$0xff] %v3740
      %v4097 = vld.sshfl [vmem:[#allocation1] sm:$0xff pattern:$0x73625140]
      %v4098 = vld.sshfl [vmem:[#allocation1 + $0x20] sm:$0xff pattern:$0x73625140]
      %4099 = vst [vmem:[#allocation1] ss:$4 sm:$0xff] %v3741
      %4100 = vst [vmem:[%s4023] ss:$4 sm:$0xff] %v3742
      %4101 = vst [vmem:[%s4025] ss:$4 sm:$0xff] %v3661
      %4102 = vst [vmem:[%s4027] ss:$4 sm:$0xff] %v3743
      %4103 = vst [vmem:[%s4029] ss:$4 sm:$0xff] %v3744
      %4104 = vst [vmem:[%s4031] ss:$4 sm:$0xff] %v3745
      %4105 = vst [vmem:[%s4033] ss:$4 sm:$0xff] %v3662
      %4106 = vst [vmem:[%s4035] ss:$4 sm:$0xff] %v3663
      %v4107 = vld.sshfl [vmem:[#allocation1] sm:$0xff pattern:$0x73625140]
      %v4108 = vld.sshfl [vmem:[#allocation1 + $0x20] sm:$0xff pattern:$0x73625140]
      %4109 = vst [vmem:[#allocation1] ss:$4 sm:$0xff] %v3746
      %4110 = vst [vmem:[%s4023] ss:$4 sm:$0xff] %v3747
      %4111 = vst [vmem:[%s4025] ss:$4 sm:$0xff] %v3748
      %4112 = vst [vmem:[%s4027] ss:$4 sm:$0xff] %v3664
      %4113 = vst [vmem:[%s4029] ss:$4 sm:$0xff] %v3749
      %4114 = vst [vmem:[%s4031] ss:$4 sm:$0xff] %v3750
      %4115 = vst [vmem:[%s4033] ss:$4 sm:$0xff] %v3751
      %4116 = vst [vmem:[%s4035] ss:$4 sm:$0xff] %v3665
      %v4117 = vld.sshfl [vmem:[#allocation1] sm:$0xff pattern:$0x73625140]
      %v4118 = vld.sshfl [vmem:[#allocation1 + $0x20] sm:$0xff pattern:$0x73625140]
      %4137 = vmatpush.msra.mxu0 %v3779
      %4138 = vmatpush.msra.mxu0 %v3778
      %4139 = vmatpush.msra.mxu0 %v3777
      %4140 = vmatpush.msra.mxu0 %v3776
      %4141 = vmatpush.msra.mxu0 %v3775
      %4142 = vmatpush.msra.mxu0 %v3774
      %4143 = vmatpush.msra.mxu0 %v3773
      %4144 = vmatpush.msra.mxu0 %v3772
      %4145 = vmatpush.msra.mxu0 %v3771
      %4146 = vmatpush.msra.mxu0 %v3770
      %4147 = vmatpush.msra.mxu0 %v3769
      %4148 = vmatpush.msra.mxu0 %v3768
      %4149 = vmatpush.msra.mxu0 %v3767
      %4150 = vmatpush.msra.mxu0 %v3766
      %4151 = vmatpush.msra.mxu0 %v3765
      %4152 = vmatpush.msra.mxu0 %v3764
      %4153 = vmatmul.f32.gmra.mxu0 %v4037
      %v4154 = vpop.f32.mrf.mxu0
      %v4155 = vadd.f32 %v3969, %v4154
      %4156 = vmatmul.f32.gmra.mxu0 %v4038
      %v4157 = vpop.f32.mrf.mxu0
      %v4158 = vadd.f32 %v3972, %v4157
      %4159 = vmatmul.f32.gmra.mxu0 %v4047
      %v4160 = vpop.f32.mrf.mxu0
      %v4161 = vadd.f32 %v3975, %v4160
      %4162 = vmatmul.f32.gmra.mxu0 %v4048
      %v4163 = vpop.f32.mrf.mxu0
      %v4164 = vadd.f32 %v3978, %v4163
      %4165 = vmatmul.f32.gmra.mxu0 %v4057
      %v4166 = vpop.f32.mrf.mxu0
      %v4167 = vadd.f32 %v3981, %v4166
      %4168 = vmatmul.f32.gmra.mxu0 %v4058
      %v4169 = vpop.f32.mrf.mxu0
      %v4170 = vadd.f32 %v3984, %v4169
      %4171 = vmatmul.f32.gmra.mxu0 %v4067
      %v4172 = vpop.f32.mrf.mxu0
      %v4173 = vadd.f32 %v3987, %v4172
      %4174 = vmatmul.f32.gmra.mxu0 %v4068
      %v4175 = vpop.f32.mrf.mxu0
      %v4176 = vadd.f32 %v3990, %v4175
      %4177 = vmatmul.f32.gmra.mxu0 %v4077
      %v4178 = vpop.f32.mrf.mxu0
      %v4179 = vadd.f32 %v3993, %v4178
      %4180 = vmatmul.f32.gmra.mxu0 %v4078
      %v4181 = vpop.f32.mrf.mxu0
      %v4182 = vadd.f32 %v3996, %v4181
      %4183 = vmatmul.f32.gmra.mxu0 %v4087
      %v4184 = vpop.f32.mrf.mxu0
      %v4185 = vadd.f32 %v3999, %v4184
      %4186 = vmatmul.f32.gmra.mxu0 %v4088
      %v4187 = vpop.f32.mrf.mxu0
      %v4188 = vadd.f32 %v4002, %v4187
      %4189 = vmatmul.f32.gmra.mxu0 %v4097
      %v4190 = vpop.f32.mrf.mxu0
      %v4191 = vadd.f32 %v4005, %v4190
      %4192 = vmatmul.f32.gmra.mxu0 %v4098
      %v4193 = vpop.f32.mrf.mxu0
      %v4194 = vadd.f32 %v4008, %v4193
      %4195 = vmatmul.f32.gmra.mxu0 %v4107
      %v4196 = vpop.f32.mrf.mxu0
      %v4197 = vadd.f32 %v4011, %v4196
      %4198 = vmatmul.f32.gmra.mxu0 %v4108
      %v4199 = vpop.f32.mrf.mxu0
      %v4200 = vadd.f32 %v4014, %v4199
      %4201 = vmatmul.f32.gmra.mxu0 %v4117
      %v4202 = vpop.f32.mrf.mxu0
      %v4203 = vadd.f32 %v4017, %v4202
      %4204 = vmatmul.f32.gmra.mxu0 %v4118
      %v4205 = vpop.f32.mrf.mxu0
      %v4206 = vadd.f32 %v4020, %v4205
      %4207 = vdwg.mxu0
      %s4208 = scalar_lea.vmem %s2, 256
      %v4209 = vld [vmem:[%s4208] sm:$0xff]
      %v4210 = vld [vmem:[%s4208 + $0x8] sm:$0xff]
      %v4211 = vld [vmem:[%s4208 + $0x10] sm:$0xff]
      %v4212 = vld [vmem:[%s4208 + $0x18] sm:$0xff]
      %v4213 = vld [vmem:[%s4208 + $0x20] sm:$0xff]
      %v4214 = vld [vmem:[%s4208 + $0x28] sm:$0xff]
      %v4215 = vld [vmem:[%s4208 + $0x30] sm:$0xff]
      %v4216 = vld [vmem:[%s4208 + $0x38] sm:$0xff]
      %v4217 = vld [vmem:[%s4208 + $0x40] sm:$0xff]
      %v4218 = vld [vmem:[%s4208 + $0x48] sm:$0xff]
      %v4219 = vld [vmem:[%s4208 + $0x50] sm:$0xff]
      %v4220 = vld [vmem:[%s4208 + $0x58] sm:$0xff]
      %v4221 = vld [vmem:[%s4208 + $0x60] sm:$0xff]
      %v4222 = vld [vmem:[%s4208 + $0x68] sm:$0xff]
      %v4223 = vld [vmem:[%s4208 + $0x70] sm:$0xff]
      %v4224 = vld [vmem:[%s4208 + $0x78] sm:$0xff]
      %4225 = vst [vmem:[#allocation1] ss:$4 sm:$0xff] %v3704
      %s4226 = scalar_lea.vmem [#allocation1], 1
      %4227 = vst [vmem:[%s4226] ss:$4 sm:$0xff] %v3705
      %s4228 = scalar_lea.vmem [#allocation1], 2
      %4229 = vst [vmem:[%s4228] ss:$4 sm:$0xff] %v3706
      %s4230 = scalar_lea.vmem [#allocation1], 3
      %4231 = vst [vmem:[%s4230] ss:$4 sm:$0xff] %v3643
      %s4232 = scalar_lea.vmem [#allocation1], 32
      %4233 = vst [vmem:[%s4232] ss:$4 sm:$0xff] %v3707
      %s4234 = scalar_lea.vmem [#allocation1], 33
      %4235 = vst [vmem:[%s4234] ss:$4 sm:$0xff] %v3708
      %s4236 = scalar_lea.vmem [#allocation1], 34
      %4237 = vst [vmem:[%s4236] ss:$4 sm:$0xff] %v3709
      %s4238 = scalar_lea.vmem [#allocation1], 35
      %4239 = vst [vmem:[%s4238] ss:$4 sm:$0xff] %v3644
      %v4240 = vld.sshfl [vmem:[#allocation1] sm:$0xff pattern:$0x73625140]
      %v4241 = vld.sshfl [vmem:[#allocation1 + $0x20] sm:$0xff pattern:$0x73625140]
      %4242 = vst [vmem:[#allocation1] ss:$4 sm:$0xff] %v3645
      %4243 = vst [vmem:[%s4226] ss:$4 sm:$0xff] %v3710
      %4244 = vst [vmem:[%s4228] ss:$4 sm:$0xff] %v3711
      %4245 = vst [vmem:[%s4230] ss:$4 sm:$0xff] %v3712
      %4246 = vst [vmem:[%s4232] ss:$4 sm:$0xff] %v3646
      %4247 = vst [vmem:[%s4234] ss:$4 sm:$0xff] %v3713
      %4248 = vst [vmem:[%s4236] ss:$4 sm:$0xff] %v3714
      %4249 = vst [vmem:[%s4238] ss:$4 sm:$0xff] %v3715
      %v4250 = vld.sshfl [vmem:[#allocation1] sm:$0xff pattern:$0x73625140]
      %v4251 = vld.sshfl [vmem:[#allocation1 + $0x20] sm:$0xff pattern:$0x73625140]
      %4252 = vst [vmem:[#allocation1] ss:$4 sm:$0xff] %v3647
      %4253 = vst [vmem:[%s4226] ss:$4 sm:$0xff] %v3648
      %4254 = vst [vmem:[%s4228] ss:$4 sm:$0xff] %v3716
      %4255 = vst [vmem:[%s4230] ss:$4 sm:$0xff] %v3717
      %4256 = vst [vmem:[%s4232] ss:$4 sm:$0xff] %v3718
      %4257 = vst [vmem:[%s4234] ss:$4 sm:$0xff] %v3649
      %4258 = vst [vmem:[%s4236] ss:$4 sm:$0xff] %v3719
      %4259 = vst [vmem:[%s4238] ss:$4 sm:$0xff] %v3720
      %v4260 = vld.sshfl [vmem:[#allocation1] sm:$0xff pattern:$0x73625140]
      %v4261 = vld.sshfl [vmem:[#allocation1 + $0x20] sm:$0xff pattern:$0x73625140]
      %4262 = vst [vmem:[#allocation1] ss:$4 sm:$0xff] %v3721
      %4263 = vst [vmem:[%s4226] ss:$4 sm:$0xff] %v3650
      %4264 = vst [vmem:[%s4228] ss:$4 sm:$0xff] %v3651
      %4265 = vst [vmem:[%s4230] ss:$4 sm:$0xff] %v3722
      %4266 = vst [vmem:[%s4232] ss:$4 sm:$0xff] %v3723
      %4267 = vst [vmem:[%s4234] ss:$4 sm:$0xff] %v3724
      %4268 = vst [vmem:[%s4236] ss:$4 sm:$0xff] %v3652
      %4269 = vst [vmem:[%s4238] ss:$4 sm:$0xff] %v3725
      %v4270 = vld.sshfl [vmem:[#allocation1] sm:$0xff pattern:$0x73625140]
      %v4271 = vld.sshfl [vmem:[#allocation1 + $0x20] sm:$0xff pattern:$0x73625140]
      %4272 = vst [vmem:[#allocation1] ss:$4 sm:$0xff] %v3726
      %4273 = vst [vmem:[%s4226] ss:$4 sm:$0xff] %v3727
      %4274 = vst [vmem:[%s4228] ss:$4 sm:$0xff] %v3653
      %4275 = vst [vmem:[%s4230] ss:$4 sm:$0xff] %v3654
      %4276 = vst [vmem:[%s4232] ss:$4 sm:$0xff] %v3728
      %4277 = vst [vmem:[%s4234] ss:$4 sm:$0xff] %v3729
      %4278 = vst [vmem:[%s4236] ss:$4 sm:$0xff] %v3730
      %4279 = vst [vmem:[%s4238] ss:$4 sm:$0xff] %v3655
      %v4280 = vld.sshfl [vmem:[#allocation1] sm:$0xff pattern:$0x73625140]
      %v4281 = vld.sshfl [vmem:[#allocation1 + $0x20] sm:$0xff pattern:$0x73625140]
      %4282 = vst [vmem:[#allocation1] ss:$4 sm:$0xff] %v3731
      %4283 = vst [vmem:[%s4226] ss:$4 sm:$0xff] %v3732
      %4284 = vst [vmem:[%s4228] ss:$4 sm:$0xff] %v3733
      %4285 = vst [vmem:[%s4230] ss:$4 sm:$0xff] %v3656
      %4286 = vst [vmem:[%s4232] ss:$4 sm:$0xff] %v3657
      %4287 = vst [vmem:[%s4234] ss:$4 sm:$0xff] %v3734
      %4288 = vst [vmem:[%s4236] ss:$4 sm:$0xff] %v3735
      %4289 = vst [vmem:[%s4238] ss:$4 sm:$0xff] %v3736
      %v4290 = vld.sshfl [vmem:[#allocation1] sm:$0xff pattern:$0x73625140]
      %v4291 = vld.sshfl [vmem:[#allocation1 + $0x20] sm:$0xff pattern:$0x73625140]
      %4292 = vst [vmem:[#allocation1] ss:$4 sm:$0xff] %v3658
      %4293 = vst [vmem:[%s4226] ss:$4 sm:$0xff] %v3737
      %4294 = vst [vmem:[%s4228] ss:$4 sm:$0xff] %v3738
      %4295 = vst [vmem:[%s4230] ss:$4 sm:$0xff] %v3739
      %4296 = vst [vmem:[%s4232] ss:$4 sm:$0xff] %v3659
      %4297 = vst [vmem:[%s4234] ss:$4 sm:$0xff] %v3660
      %4298 = vst [vmem:[%s4236] ss:$4 sm:$0xff] %v3740
      %4299 = vst [vmem:[%s4238] ss:$4 sm:$0xff] %v3741
      %v4300 = vld.sshfl [vmem:[#allocation1] sm:$0xff pattern:$0x73625140]
      %v4301 = vld.sshfl [vmem:[#allocation1 + $0x20] sm:$0xff pattern:$0x73625140]
      %4302 = vst [vmem:[#allocation1] ss:$4 sm:$0xff] %v3742
      %4303 = vst [vmem:[%s4226] ss:$4 sm:$0xff] %v3661
      %4304 = vst [vmem:[%s4228] ss:$4 sm:$0xff] %v3743
      %4305 = vst [vmem:[%s4230] ss:$4 sm:$0xff] %v3744
      %4306 = vst [vmem:[%s4232] ss:$4 sm:$0xff] %v3745
      %4307 = vst [vmem:[%s4234] ss:$4 sm:$0xff] %v3662
      %4308 = vst [vmem:[%s4236] ss:$4 sm:$0xff] %v3663
      %4309 = vst [vmem:[%s4238] ss:$4 sm:$0xff] %v3746
      %v4310 = vld.sshfl [vmem:[#allocation1] sm:$0xff pattern:$0x73625140]
      %v4311 = vld.sshfl [vmem:[#allocation1 + $0x20] sm:$0xff pattern:$0x73625140]
      %4312 = vst [vmem:[#allocation1] ss:$4 sm:$0xff] %v3747
      %4313 = vst [vmem:[%s4226] ss:$4 sm:$0xff] %v3748
      %4314 = vst [vmem:[%s4228] ss:$4 sm:$0xff] %v3664
      %4315 = vst [vmem:[%s4230] ss:$4 sm:$0xff] %v3749
      %4316 = vst [vmem:[%s4232] ss:$4 sm:$0xff] %v3750
      %4317 = vst [vmem:[%s4234] ss:$4 sm:$0xff] %v3751
      %4318 = vst [vmem:[%s4236] ss:$4 sm:$0xff] %v3665
      %4319 = vst [vmem:[%s4238] ss:$4 sm:$0xff] %v3666
      %v4320 = vld.sshfl [vmem:[#allocation1] sm:$0xff pattern:$0x73625140]
      %v4321 = vld.sshfl [vmem:[#allocation1 + $0x20] sm:$0xff pattern:$0x73625140]
      %4340 = vmatpush.msra.mxu0 %v4224
      %4341 = vmatpush.msra.mxu0 %v4223
      %4342 = vmatpush.msra.mxu0 %v4222
      %4343 = vmatpush.msra.mxu0 %v4221
      %4344 = vmatpush.msra.mxu0 %v4220
      %4345 = vmatpush.msra.mxu0 %v4219
      %4346 = vmatpush.msra.mxu0 %v4218
      %4347 = vmatpush.msra.mxu0 %v4217
      %4348 = vmatpush.msra.mxu0 %v4216
      %4349 = vmatpush.msra.mxu0 %v4215
      %4350 = vmatpush.msra.mxu0 %v4214
      %4351 = vmatpush.msra.mxu0 %v4213
      %4352 = vmatpush.msra.mxu0 %v4212
      %4353 = vmatpush.msra.mxu0 %v4211
      %4354 = vmatpush.msra.mxu0 %v4210
      %4355 = vmatpush.msra.mxu0 %v4209
      %4356 = vmatmul.f32.gmra.mxu0 %v4240
      %v4357 = vpop.f32.mrf.mxu0
      %v4358 = vadd.f32 0.0, %v4357
      %4359 = vmatmul.f32.gmra.mxu0 %v4241
      %v4360 = vpop.f32.mrf.mxu0
      %v4361 = vadd.f32 0.0, %v4360
      %4362 = vmatmul.f32.gmra.mxu0 %v4250
      %v4363 = vpop.f32.mrf.mxu0
      %v4364 = vadd.f32 0.0, %v4363
      %4365 = vmatmul.f32.gmra.mxu0 %v4251
      %v4366 = vpop.f32.mrf.mxu0
      %v4367 = vadd.f32 0.0, %v4366
      %4368 = vmatmul.f32.gmra.mxu0 %v4260
      %v4369 = vpop.f32.mrf.mxu0
      %v4370 = vadd.f32 0.0, %v4369
      %4371 = vmatmul.f32.gmra.mxu0 %v4261
      %v4372 = vpop.f32.mrf.mxu0
      %v4373 = vadd.f32 0.0, %v4372
      %4374 = vmatmul.f32.gmra.mxu0 %v4270
      %v4375 = vpop.f32.mrf.mxu0
      %v4376 = vadd.f32 0.0, %v4375
      %4377 = vmatmul.f32.gmra.mxu0 %v4271
      %v4378 = vpop.f32.mrf.mxu0
      %v4379 = vadd.f32 0.0, %v4378
      %4380 = vmatmul.f32.gmra.mxu0 %v4280
      %v4381 = vpop.f32.mrf.mxu0
      %v4382 = vadd.f32 0.0, %v4381
      %4383 = vmatmul.f32.gmra.mxu0 %v4281
      %v4384 = vpop.f32.mrf.mxu0
      %v4385 = vadd.f32 0.0, %v4384
      %4386 = vmatmul.f32.gmra.mxu0 %v4290
      %v4387 = vpop.f32.mrf.mxu0
      %v4388 = vadd.f32 0.0, %v4387
      %4389 = vmatmul.f32.gmra.mxu0 %v4291
      %v4390 = vpop.f32.mrf.mxu0
      %v4391 = vadd.f32 0.0, %v4390
      %4392 = vmatmul.f32.gmra.mxu0 %v4300
      %v4393 = vpop.f32.mrf.mxu0
      %v4394 = vadd.f32 0.0, %v4393
      %4395 = vmatmul.f32.gmra.mxu0 %v4301
      %v4396 = vpop.f32.mrf.mxu0
      %v4397 = vadd.f32 0.0, %v4396
      %4398 = vmatmul.f32.gmra.mxu0 %v4310
      %v4399 = vpop.f32.mrf.mxu0
      %v4400 = vadd.f32 0.0, %v4399
      %4401 = vmatmul.f32.gmra.mxu0 %v4311
      %v4402 = vpop.f32.mrf.mxu0
      %v4403 = vadd.f32 0.0, %v4402
      %4404 = vmatmul.f32.gmra.mxu0 %v4320
      %v4405 = vpop.f32.mrf.mxu0
      %v4406 = vadd.f32 0.0, %v4405
      %4407 = vmatmul.f32.gmra.mxu0 %v4321
      %v4408 = vpop.f32.mrf.mxu0
      %v4409 = vadd.f32 0.0, %v4408
      %4410 = vdwg.mxu0
      %v4411 = vadd.f32 %v4155, %v4358
      %v4412 = vadd.f32 %v4158, %v4361
      %v4413 = vadd.f32 %v4161, %v4364
      %v4414 = vadd.f32 %v4164, %v4367
      %v4415 = vadd.f32 %v4167, %v4370
      %v4416 = vadd.f32 %v4170, %v4373
      %v4417 = vadd.f32 %v4173, %v4376
      %v4418 = vadd.f32 %v4176, %v4379
      %v4419 = vadd.f32 %v4179, %v4382
      %v4420 = vadd.f32 %v4182, %v4385
      %v4421 = vadd.f32 %v4185, %v4388
      %v4422 = vadd.f32 %v4188, %v4391
      %v4423 = vadd.f32 %v4191, %v4394
      %v4424 = vadd.f32 %v4194, %v4397
      %v4425 = vadd.f32 %v4197, %v4400
      %v4426 = vadd.f32 %v4200, %v4403
      %v4427 = vadd.f32 %v4203, %v4406
      %v4428 = vadd.f32 %v4206, %v4409
      %s4429 = scalar_lea.vmem %s2, 384
      %v4430 = vld [vmem:[%s4429] sm:$0xff]
      %v4431 = vld [vmem:[%s4429 + $0x8] sm:$0xff]
      %v4432 = vld [vmem:[%s4429 + $0x10] sm:$0xff]
      %v4433 = vld [vmem:[%s4429 + $0x18] sm:$0xff]
      %v4434 = vld [vmem:[%s4429 + $0x20] sm:$0xff]
      %v4435 = vld [vmem:[%s4429 + $0x28] sm:$0xff]
      %v4436 = vld [vmem:[%s4429 + $0x30] sm:$0xff]
      %v4437 = vld [vmem:[%s4429 + $0x38] sm:$0xff]
      %v4438 = vld [vmem:[%s4429 + $0x40] sm:$0xff]
      %v4439 = vld [vmem:[%s4429 + $0x48] sm:$0xff]
      %v4440 = vld [vmem:[%s4429 + $0x50] sm:$0xff]
      %v4441 = vld [vmem:[%s4429 + $0x58] sm:$0xff]
      %v4442 = vld [vmem:[%s4429 + $0x60] sm:$0xff]
      %v4443 = vld [vmem:[%s4429 + $0x68] sm:$0xff]
      %v4444 = vld [vmem:[%s4429 + $0x70] sm:$0xff]
      %v4445 = vld [vmem:[%s4429 + $0x78] sm:$0xff]
      %4446 = vst [vmem:[#allocation1] ss:$4 sm:$0xff] %v3645
      %s4447 = scalar_lea.vmem [#allocation1], 1
      %4448 = vst [vmem:[%s4447] ss:$4 sm:$0xff] %v3710
      %s4449 = scalar_lea.vmem [#allocation1], 2
      %4450 = vst [vmem:[%s4449] ss:$4 sm:$0xff] %v3711
      %s4451 = scalar_lea.vmem [#allocation1], 3
      %4452 = vst [vmem:[%s4451] ss:$4 sm:$0xff] %v3712
      %s4453 = scalar_lea.vmem [#allocation1], 32
      %4454 = vst [vmem:[%s4453] ss:$4 sm:$0xff] %v3646
      %s4455 = scalar_lea.vmem [#allocation1], 33
      %4456 = vst [vmem:[%s4455] ss:$4 sm:$0xff] %v3713
      %s4457 = scalar_lea.vmem [#allocation1], 34
      %4458 = vst [vmem:[%s4457] ss:$4 sm:$0xff] %v3714
      %s4459 = scalar_lea.vmem [#allocation1], 35
      %4460 = vst [vmem:[%s4459] ss:$4 sm:$0xff] %v3715
      %v4461 = vld.sshfl [vmem:[#allocation1] sm:$0xff pattern:$0x73625140]
      %v4462 = vld.sshfl [vmem:[#allocation1 + $0x20] sm:$0xff pattern:$0x73625140]
      %4463 = vst [vmem:[#allocation1] ss:$4 sm:$0xff] %v3647
      %4464 = vst [vmem:[%s4447] ss:$4 sm:$0xff] %v3648
      %4465 = vst [vmem:[%s4449] ss:$4 sm:$0xff] %v3716
      %4466 = vst [vmem:[%s4451] ss:$4 sm:$0xff] %v3717
      %4467 = vst [vmem:[%s4453] ss:$4 sm:$0xff] %v3718
      %4468 = vst [vmem:[%s4455] ss:$4 sm:$0xff] %v3649
      %4469 = vst [vmem:[%s4457] ss:$4 sm:$0xff] %v3719
      %4470 = vst [vmem:[%s4459] ss:$4 sm:$0xff] %v3720
      %v4471 = vld.sshfl [vmem:[#allocation1] sm:$0xff pattern:$0x73625140]
      %v4472 = vld.sshfl [vmem:[#allocation1 + $0x20] sm:$0xff pattern:$0x73625140]
      %4473 = vst [vmem:[#allocation1] ss:$4 sm:$0xff] %v3721
      %4474 = vst [vmem:[%s4447] ss:$4 sm:$0xff] %v3650
      %4475 = vst [vmem:[%s4449] ss:$4 sm:$0xff] %v3651
      %4476 = vst [vmem:[%s4451] ss:$4 sm:$0xff] %v3722
      %4477 = vst [vmem:[%s4453] ss:$4 sm:$0xff] %v3723
      %4478 = vst [vmem:[%s4455] ss:$4 sm:$0xff] %v3724
      %4479 = vst [vmem:[%s4457] ss:$4 sm:$0xff] %v3652
      %4480 = vst [vmem:[%s4459] ss:$4 sm:$0xff] %v3725
      %v4481 = vld.sshfl [vmem:[#allocation1] sm:$0xff pattern:$0x73625140]
      %v4482 = vld.sshfl [vmem:[#allocation1 + $0x20] sm:$0xff pattern:$0x73625140]
      %4483 = vst [vmem:[#allocation1] ss:$4 sm:$0xff] %v3726
      %4484 = vst [vmem:[%s4447] ss:$4 sm:$0xff] %v3727
      %4485 = vst [vmem:[%s4449] ss:$4 sm:$0xff] %v3653
      %4486 = vst [vmem:[%s4451] ss:$4 sm:$0xff] %v3654
      %4487 = vst [vmem:[%s4453] ss:$4 sm:$0xff] %v3728
      %4488 = vst [vmem:[%s4455] ss:$4 sm:$0xff] %v3729
      %4489 = vst [vmem:[%s4457] ss:$4 sm:$0xff] %v3730
      %4490 = vst [vmem:[%s4459] ss:$4 sm:$0xff] %v3655
      %v4491 = vld.sshfl [vmem:[#allocation1] sm:$0xff pattern:$0x73625140]
      %v4492 = vld.sshfl [vmem:[#allocation1 + $0x20] sm:$0xff pattern:$0x73625140]
      %4493 = vst [vmem:[#allocation1] ss:$4 sm:$0xff] %v3731
      %4494 = vst [vmem:[%s4447] ss:$4 sm:$0xff] %v3732
      %4495 = vst [vmem:[%s4449] ss:$4 sm:$0xff] %v3733
      %4496 = vst [vmem:[%s4451] ss:$4 sm:$0xff] %v3656
      %4497 = vst [vmem:[%s4453] ss:$4 sm:$0xff] %v3657
      %4498 = vst [vmem:[%s4455] ss:$4 sm:$0xff] %v3734
      %4499 = vst [vmem:[%s4457] ss:$4 sm:$0xff] %v3735
      %4500 = vst [vmem:[%s4459] ss:$4 sm:$0xff] %v3736
      %v4501 = vld.sshfl [vmem:[#allocation1] sm:$0xff pattern:$0x73625140]
      %v4502 = vld.sshfl [vmem:[#allocation1 + $0x20] sm:$0xff pattern:$0x73625140]
      %4503 = vst [vmem:[#allocation1] ss:$4 sm:$0xff] %v3658
      %4504 = vst [vmem:[%s4447] ss:$4 sm:$0xff] %v3737
      %4505 = vst [vmem:[%s4449] ss:$4 sm:$0xff] %v3738
      %4506 = vst [vmem:[%s4451] ss:$4 sm:$0xff] %v3739
      %4507 = vst [vmem:[%s4453] ss:$4 sm:$0xff] %v3659
      %4508 = vst [vmem:[%s4455] ss:$4 sm:$0xff] %v3660
      %4509 = vst [vmem:[%s4457] ss:$4 sm:$0xff] %v3740
      %4510 = vst [vmem:[%s4459] ss:$4 sm:$0xff] %v3741
      %v4511 = vld.sshfl [vmem:[#allocation1] sm:$0xff pattern:$0x73625140]
      %v4512 = vld.sshfl [vmem:[#allocation1 + $0x20] sm:$0xff pattern:$0x73625140]
      %4513 = vst [vmem:[#allocation1] ss:$4 sm:$0xff] %v3742
      %4514 = vst [vmem:[%s4447] ss:$4 sm:$0xff] %v3661
      %4515 = vst [vmem:[%s4449] ss:$4 sm:$0xff] %v3743
      %4516 = vst [vmem:[%s4451] ss:$4 sm:$0xff] %v3744
      %4517 = vst [vmem:[%s4453] ss:$4 sm:$0xff] %v3745
      %4518 = vst [vmem:[%s4455] ss:$4 sm:$0xff] %v3662
      %4519 = vst [vmem:[%s4457] ss:$4 sm:$0xff] %v3663
      %4520 = vst [vmem:[%s4459] ss:$4 sm:$0xff] %v3746
      %v4521 = vld.sshfl [vmem:[#allocation1] sm:$0xff pattern:$0x73625140]
      %v4522 = vld.sshfl [vmem:[#allocation1 + $0x20] sm:$0xff pattern:$0x73625140]
      %4523 = vst [vmem:[#allocation1] ss:$4 sm:$0xff] %v3747
      %4524 = vst [vmem:[%s4447] ss:$4 sm:$0xff] %v3748
      %4525 = vst [vmem:[%s4449] ss:$4 sm:$0xff] %v3664
      %4526 = vst [vmem:[%s4451] ss:$4 sm:$0xff] %v3749
      %4527 = vst [vmem:[%s4453] ss:$4 sm:$0xff] %v3750
      %4528 = vst [vmem:[%s4455] ss:$4 sm:$0xff] %v3751
      %4529 = vst [vmem:[%s4457] ss:$4 sm:$0xff] %v3665
      %4530 = vst [vmem:[%s4459] ss:$4 sm:$0xff] %v3666
      %v4531 = vld.sshfl [vmem:[#allocation1] sm:$0xff pattern:$0x73625140]
      %v4532 = vld.sshfl [vmem:[#allocation1 + $0x20] sm:$0xff pattern:$0x73625140]
      %4533 = vst [vmem:[#allocation1] ss:$4 sm:$0xff] %v3752
      %4534 = vst [vmem:[%s4447] ss:$4 sm:$0xff] %v3753
      %4535 = vst [vmem:[%s4449] ss:$4 sm:$0xff] %v3754
      %4536 = vst [vmem:[%s4451] ss:$4 sm:$0xff] %v3667
      %4537 = vst [vmem:[%s4453] ss:$4 sm:$0xff] %v3755
      %4538 = vst [vmem:[%s4455] ss:$4 sm:$0xff] %v3756
      %4539 = vst [vmem:[%s4457] ss:$4 sm:$0xff] %v3757
      %4540 = vst [vmem:[%s4459] ss:$4 sm:$0xff] %v3668
      %v4541 = vld.sshfl [vmem:[#allocation1] sm:$0xff pattern:$0x73625140]
      %v4542 = vld.sshfl [vmem:[#allocation1 + $0x20] sm:$0xff pattern:$0x73625140]
      %4561 = vmatpush.msra.mxu0 %v4445
      %4562 = vmatpush.msra.mxu0 %v4444
      %4563 = vmatpush.msra.mxu0 %v4443
      %4564 = vmatpush.msra.mxu0 %v4442
      %4565 = vmatpush.msra.mxu0 %v4441
      %4566 = vmatpush.msra.mxu0 %v4440
      %4567 = vmatpush.msra.mxu0 %v4439
      %4568 = vmatpush.msra.mxu0 %v4438
      %4569 = vmatpush.msra.mxu0 %v4437
      %4570 = vmatpush.msra.mxu0 %v4436
      %4571 = vmatpush.msra.mxu0 %v4435
      %4572 = vmatpush.msra.mxu0 %v4434
      %4573 = vmatpush.msra.mxu0 %v4433
      %4574 = vmatpush.msra.mxu0 %v4432
      %4575 = vmatpush.msra.mxu0 %v4431
      %4576 = vmatpush.msra.mxu0 %v4430
      %4577 = vmatmul.f32.gmra.mxu0 %v4461
      %v4578 = vpop.f32.mrf.mxu0
      %v4579 = vadd.f32 0.0, %v4578
      %4580 = vmatmul.f32.gmra.mxu0 %v4462
      %v4581 = vpop.f32.mrf.mxu0
      %v4582 = vadd.f32 0.0, %v4581
      %4583 = vmatmul.f32.gmra.mxu0 %v4471
      %v4584 = vpop.f32.mrf.mxu0
      %v4585 = vadd.f32 0.0, %v4584
      %4586 = vmatmul.f32.gmra.mxu0 %v4472
      %v4587 = vpop.f32.mrf.mxu0
      %v4588 = vadd.f32 0.0, %v4587
      %4589 = vmatmul.f32.gmra.mxu0 %v4481
      %v4590 = vpop.f32.mrf.mxu0
      %v4591 = vadd.f32 0.0, %v4590
      %4592 = vmatmul.f32.gmra.mxu0 %v4482
      %v4593 = vpop.f32.mrf.mxu0
      %v4594 = vadd.f32 0.0, %v4593
      %4595 = vmatmul.f32.gmra.mxu0 %v4491
      %v4596 = vpop.f32.mrf.mxu0
      %v4597 = vadd.f32 0.0, %v4596
      %4598 = vmatmul.f32.gmra.mxu0 %v4492
      %v4599 = vpop.f32.mrf.mxu0
      %v4600 = vadd.f32 0.0, %v4599
      %4601 = vmatmul.f32.gmra.mxu0 %v4501
      %v4602 = vpop.f32.mrf.mxu0
      %v4603 = vadd.f32 0.0, %v4602
      %4604 = vmatmul.f32.gmra.mxu0 %v4502
      %v4605 = vpop.f32.mrf.mxu0
      %v4606 = vadd.f32 0.0, %v4605
      %4607 = vmatmul.f32.gmra.mxu0 %v4511
      %v4608 = vpop.f32.mrf.mxu0
      %v4609 = vadd.f32 0.0, %v4608
      %4610 = vmatmul.f32.gmra.mxu0 %v4512
      %v4611 = vpop.f32.mrf.mxu0
      %v4612 = vadd.f32 0.0, %v4611
      %4613 = vmatmul.f32.gmra.mxu0 %v4521
      %v4614 = vpop.f32.mrf.mxu0
      %v4615 = vadd.f32 0.0, %v4614
      %4616 = vmatmul.f32.gmra.mxu0 %v4522
      %v4617 = vpop.f32.mrf.mxu0
      %v4618 = vadd.f32 0.0, %v4617
      %4619 = vmatmul.f32.gmra.mxu0 %v4531
      %v4620 = vpop.f32.mrf.mxu0
      %v4621 = vadd.f32 0.0, %v4620
      %4622 = vmatmul.f32.gmra.mxu0 %v4532
      %v4623 = vpop.f32.mrf.mxu0
      %v4624 = vadd.f32 0.0, %v4623
      %4625 = vmatmul.f32.gmra.mxu0 %v4541
      %v4626 = vpop.f32.mrf.mxu0
      %v4627 = vadd.f32 0.0, %v4626
      %4628 = vmatmul.f32.gmra.mxu0 %v4542
      %v4629 = vpop.f32.mrf.mxu0
      %v4630 = vadd.f32 0.0, %v4629
      %4631 = vdwg.mxu0
      %v4632 = vadd.f32 %v4411, %v4579
      %v4633 = vadd.f32 %v4412, %v4582
      %v4634 = vadd.f32 %v4413, %v4585
      %v4635 = vadd.f32 %v4414, %v4588
      %v4636 = vadd.f32 %v4415, %v4591
      %v4637 = vadd.f32 %v4416, %v4594
      %v4638 = vadd.f32 %v4417, %v4597
      %v4639 = vadd.f32 %v4418, %v4600
      %v4640 = vadd.f32 %v4419, %v4603
      %v4641 = vadd.f32 %v4420, %v4606
      %v4642 = vadd.f32 %v4421, %v4609
      %v4643 = vadd.f32 %v4422, %v4612
      %v4644 = vadd.f32 %v4423, %v4615
      %v4645 = vadd.f32 %v4424, %v4618
      %v4646 = vadd.f32 %v4425, %v4621
      %v4647 = vadd.f32 %v4426, %v4624
      %v4648 = vadd.f32 %v4427, %v4627
      %v4649 = vadd.f32 %v4428, %v4630
      %s4650 = scalar_lea.vmem %s2, 512
      %v4651 = vld [vmem:[%s4650] sm:$0xff]
      %v4652 = vld [vmem:[%s4650 + $0x8] sm:$0xff]
      %v4653 = vld [vmem:[%s4650 + $0x10] sm:$0xff]
      %v4654 = vld [vmem:[%s4650 + $0x18] sm:$0xff]
      %v4655 = vld [vmem:[%s4650 + $0x20] sm:$0xff]
      %v4656 = vld [vmem:[%s4650 + $0x28] sm:$0xff]
      %v4657 = vld [vmem:[%s4650 + $0x30] sm:$0xff]
      %v4658 = vld [vmem:[%s4650 + $0x38] sm:$0xff]
      %v4659 = vld [vmem:[%s4650 + $0x40] sm:$0xff]
      %v4660 = vld [vmem:[%s4650 + $0x48] sm:$0xff]
      %v4661 = vld [vmem:[%s4650 + $0x50] sm:$0xff]
      %v4662 = vld [vmem:[%s4650 + $0x58] sm:$0xff]
      %v4663 = vld [vmem:[%s4650 + $0x60] sm:$0xff]
      %v4664 = vld [vmem:[%s4650 + $0x68] sm:$0xff]
      %v4665 = vld [vmem:[%s4650 + $0x70] sm:$0xff]
      %v4666 = vld [vmem:[%s4650 + $0x78] sm:$0xff]
      %4667 = vst [vmem:[#allocation1] ss:$4 sm:$0xff] %v3645
      %s4668 = scalar_lea.vmem [#allocation1], 1
      %4669 = vst [vmem:[%s4668] ss:$4 sm:$0xff] %v3710
      %s4670 = scalar_lea.vmem [#allocation1], 2
      %4671 = vst [vmem:[%s4670] ss:$4 sm:$0xff] %v3711
      %s4672 = scalar_lea.vmem [#allocation1], 3
      %4673 = vst [vmem:[%s4672] ss:$4 sm:$0xff] %v3712
      %s4674 = scalar_lea.vmem [#allocation1], 32
      %4675 = vst [vmem:[%s4674] ss:$4 sm:$0xff] %v3646
      %s4676 = scalar_lea.vmem [#allocation1], 33
      %4677 = vst [vmem:[%s4676] ss:$4 sm:$0xff] %v3713
      %s4678 = scalar_lea.vmem [#allocation1], 34
      %4679 = vst [vmem:[%s4678] ss:$4 sm:$0xff] %v3714
      %s4680 = scalar_lea.vmem [#allocation1], 35
      %4681 = vst [vmem:[%s4680] ss:$4 sm:$0xff] %v3715
      %v4682 = vld.sshfl [vmem:[#allocation1] sm:$0xff pattern:$0x73625140]
      %v4683 = vld.sshfl [vmem:[#allocation1 + $0x20] sm:$0xff pattern:$0x73625140]
      %4684 = vst [vmem:[#allocation1] ss:$4 sm:$0xff] %v3647
      %4685 = vst [vmem:[%s4668] ss:$4 sm:$0xff] %v3648
      %4686 = vst [vmem:[%s4670] ss:$4 sm:$0xff] %v3716
      %4687 = vst [vmem:[%s4672] ss:$4 sm:$0xff] %v3717
      %4688 = vst [vmem:[%s4674] ss:$4 sm:$0xff] %v3718
      %4689 = vst [vmem:[%s4676] ss:$4 sm:$0xff] %v3649
      %4690 = vst [vmem:[%s4678] ss:$4 sm:$0xff] %v3719
      %4691 = vst [vmem:[%s4680] ss:$4 sm:$0xff] %v3720
      %v4692 = vld.sshfl [vmem:[#allocation1] sm:$0xff pattern:$0x73625140]
      %v4693 = vld.sshfl [vmem:[#allocation1 + $0x20] sm:$0xff pattern:$0x73625140]
      %4694 = vst [vmem:[#allocation1] ss:$4 sm:$0xff] %v3721
      %4695 = vst [vmem:[%s4668] ss:$4 sm:$0xff] %v3650
      %4696 = vst [vmem:[%s4670] ss:$4 sm:$0xff] %v3651
      %4697 = vst [vmem:[%s4672] ss:$4 sm:$0xff] %v3722
      %4698 = vst [vmem:[%s4674] ss:$4 sm:$0xff] %v3723
      %4699 = vst [vmem:[%s4676] ss:$4 sm:$0xff] %v3724
      %4700 = vst [vmem:[%s4678] ss:$4 sm:$0xff] %v3652
      %4701 = vst [vmem:[%s4680] ss:$4 sm:$0xff] %v3725
      %v4702 = vld.sshfl [vmem:[#allocation1] sm:$0xff pattern:$0x73625140]
      %v4703 = vld.sshfl [vmem:[#allocation1 + $0x20] sm:$0xff pattern:$0x73625140]
      %4704 = vst [vmem:[#allocation1] ss:$4 sm:$0xff] %v3726
      %4705 = vst [vmem:[%s4668] ss:$4 sm:$0xff] %v3727
      %4706 = vst [vmem:[%s4670] ss:$4 sm:$0xff] %v3653
      %4707 = vst [vmem:[%s4672] ss:$4 sm:$0xff] %v3654
      %4708 = vst [vmem:[%s4674] ss:$4 sm:$0xff] %v3728
      %4709 = vst [vmem:[%s4676] ss:$4 sm:$0xff] %v3729
      %4710 = vst [vmem:[%s4678] ss:$4 sm:$0xff] %v3730
      %4711 = vst [vmem:[%s4680] ss:$4 sm:$0xff] %v3655
      %v4712 = vld.sshfl [vmem:[#allocation1] sm:$0xff pattern:$0x73625140]
      %v4713 = vld.sshfl [vmem:[#allocation1 + $0x20] sm:$0xff pattern:$0x73625140]
      %4714 = vst [vmem:[#allocation1] ss:$4 sm:$0xff] %v3731
      %4715 = vst [vmem:[%s4668] ss:$4 sm:$0xff] %v3732
      %4716 = vst [vmem:[%s4670] ss:$4 sm:$0xff] %v3733
      %4717 = vst [vmem:[%s4672] ss:$4 sm:$0xff] %v3656
      %4718 = vst [vmem:[%s4674] ss:$4 sm:$0xff] %v3657
      %4719 = vst [vmem:[%s4676] ss:$4 sm:$0xff] %v3734
      %4720 = vst [vmem:[%s4678] ss:$4 sm:$0xff] %v3735
      %4721 = vst [vmem:[%s4680] ss:$4 sm:$0xff] %v3736
      %v4722 = vld.sshfl [vmem:[#allocation1] sm:$0xff pattern:$0x73625140]
      %v4723 = vld.sshfl [vmem:[#allocation1 + $0x20] sm:$0xff pattern:$0x73625140]
      %4724 = vst [vmem:[#allocation1] ss:$4 sm:$0xff] %v3658
      %4725 = vst [vmem:[%s4668] ss:$4 sm:$0xff] %v3737
      %4726 = vst [vmem:[%s4670] ss:$4 sm:$0xff] %v3738
      %4727 = vst [vmem:[%s4672] ss:$4 sm:$0xff] %v3739
      %4728 = vst [vmem:[%s4674] ss:$4 sm:$0xff] %v3659
      %4729 = vst [vmem:[%s4676] ss:$4 sm:$0xff] %v3660
      %4730 = vst [vmem:[%s4678] ss:$4 sm:$0xff] %v3740
      %4731 = vst [vmem:[%s4680] ss:$4 sm:$0xff] %v3741
      %v4732 = vld.sshfl [vmem:[#allocation1] sm:$0xff pattern:$0x73625140]
      %v4733 = vld.sshfl [vmem:[#allocation1 + $0x20] sm:$0xff pattern:$0x73625140]
      %4734 = vst [vmem:[#allocation1] ss:$4 sm:$0xff] %v3742
      %4735 = vst [vmem:[%s4668] ss:$4 sm:$0xff] %v3661
      %4736 = vst [vmem:[%s4670] ss:$4 sm:$0xff] %v3743
      %4737 = vst [vmem:[%s4672] ss:$4 sm:$0xff] %v3744
      %4738 = vst [vmem:[%s4674] ss:$4 sm:$0xff] %v3745
      %4739 = vst [vmem:[%s4676] ss:$4 sm:$0xff] %v3662
      %4740 = vst [vmem:[%s4678] ss:$4 sm:$0xff] %v3663
      %4741 = vst [vmem:[%s4680] ss:$4 sm:$0xff] %v3746
      %v4742 = vld.sshfl [vmem:[#allocation1] sm:$0xff pattern:$0x73625140]
      %v4743 = vld.sshfl [vmem:[#allocation1 + $0x20] sm:$0xff pattern:$0x73625140]
      %4744 = vst [vmem:[#allocation1] ss:$4 sm:$0xff] %v3747
      %4745 = vst [vmem:[%s4668] ss:$4 sm:$0xff] %v3748
      %4746 = vst [vmem:[%s4670] ss:$4 sm:$0xff] %v3664
      %4747 = vst [vmem:[%s4672] ss:$4 sm:$0xff] %v3749
      %4748 = vst [vmem:[%s4674] ss:$4 sm:$0xff] %v3750
      %4749 = vst [vmem:[%s4676] ss:$4 sm:$0xff] %v3751
      %4750 = vst [vmem:[%s4678] ss:$4 sm:$0xff] %v3665
      %4751 = vst [vmem:[%s4680] ss:$4 sm:$0xff] %v3666
      %v4752 = vld.sshfl [vmem:[#allocation1] sm:$0xff pattern:$0x73625140]
      %v4753 = vld.sshfl [vmem:[#allocation1 + $0x20] sm:$0xff pattern:$0x73625140]
      %4754 = vst [vmem:[#allocation1] ss:$4 sm:$0xff] %v3752
      %4755 = vst [vmem:[%s4668] ss:$4 sm:$0xff] %v3753
      %4756 = vst [vmem:[%s4670] ss:$4 sm:$0xff] %v3754
      %4757 = vst [vmem:[%s4672] ss:$4 sm:$0xff] %v3667
      %4758 = vst [vmem:[%s4674] ss:$4 sm:$0xff] %v3755
      %4759 = vst [vmem:[%s4676] ss:$4 sm:$0xff] %v3756
      %4760 = vst [vmem:[%s4678] ss:$4 sm:$0xff] %v3757
      %4761 = vst [vmem:[%s4680] ss:$4 sm:$0xff] %v3668
      %v4762 = vld.sshfl [vmem:[#allocation1] sm:$0xff pattern:$0x73625140]
      %v4763 = vld.sshfl [vmem:[#allocation1 + $0x20] sm:$0xff pattern:$0x73625140]
      %4764 = vst [vmem:[#allocation1] ss:$4 sm:$0xff] %v3669
      %v4765 = vld.sshfl [vmem:[#allocation1] sm:$0xff pattern:$0x73625140]
      %v4766 = vrot.slane %v4682, 1
      %v4767 = vrot.slane %v4683, 1
      %v4768 = vsel %vm702, %v4766, %v4767
      %v4769 = vrot.slane %v4692, 1
      %v4770 = vsel %vm702, %v4767, %v4769
      %v4771 = vrot.slane %v4693, 1
      %v4772 = vsel %vm702, %v4769, %v4771
      %v4773 = vrot.slane %v4702, 1
      %v4774 = vsel %vm702, %v4771, %v4773
      %v4775 = vrot.slane %v4703, 1
      %v4776 = vsel %vm702, %v4773, %v4775
      %v4777 = vrot.slane %v4712, 1
      %v4778 = vsel %vm702, %v4775, %v4777
      %v4779 = vrot.slane %v4713, 1
      %v4780 = vsel %vm702, %v4777, %v4779
      %v4781 = vrot.slane %v4722, 1
      %v4782 = vsel %vm702, %v4779, %v4781
      %v4783 = vrot.slane %v4723, 1
      %v4784 = vsel %vm702, %v4781, %v4783
      %v4785 = vrot.slane %v4732, 1
      %v4786 = vsel %vm702, %v4783, %v4785
      %v4787 = vrot.slane %v4733, 1
      %v4788 = vsel %vm702, %v4785, %v4787
      %v4789 = vrot.slane %v4742, 1
      %v4790 = vsel %vm702, %v4787, %v4789
      %v4791 = vrot.slane %v4743, 1
      %v4792 = vsel %vm702, %v4789, %v4791
      %v4793 = vrot.slane %v4752, 1
      %v4794 = vsel %vm702, %v4791, %v4793
      %v4795 = vrot.slane %v4753, 1
      %v4796 = vsel %vm702, %v4793, %v4795
      %v4797 = vrot.slane %v4762, 1
      %v4798 = vsel %vm702, %v4795, %v4797
      %v4799 = vrot.slane %v4763, 1
      %v4800 = vsel %vm702, %v4797, %v4799
      %v4801 = vrot.slane %v4765, 1
      %v4802 = vsel %vm702, %v4799, %v4801
      %4821 = vmatpush.msra.mxu0 %v4666
      %4822 = vmatpush.msra.mxu0 %v4665
      %4823 = vmatpush.msra.mxu0 %v4664
      %4824 = vmatpush.msra.mxu0 %v4663
      %4825 = vmatpush.msra.mxu0 %v4662
      %4826 = vmatpush.msra.mxu0 %v4661
      %4827 = vmatpush.msra.mxu0 %v4660
      %4828 = vmatpush.msra.mxu0 %v4659
      %4829 = vmatpush.msra.mxu0 %v4658
      %4830 = vmatpush.msra.mxu0 %v4657
      %4831 = vmatpush.msra.mxu0 %v4656
      %4832 = vmatpush.msra.mxu0 %v4655
      %4833 = vmatpush.msra.mxu0 %v4654
      %4834 = vmatpush.msra.mxu0 %v4653
      %4835 = vmatpush.msra.mxu0 %v4652
      %4836 = vmatpush.msra.mxu0 %v4651
      %4837 = vmatmul.f32.gmra.mxu0 %v4768
      %v4838 = vpop.f32.mrf.mxu0
      %v4839 = vadd.f32 0.0, %v4838
      %4840 = vmatmul.f32.gmra.mxu0 %v4770
      %v4841 = vpop.f32.mrf.mxu0
      %v4842 = vadd.f32 0.0, %v4841
      %4843 = vmatmul.f32.gmra.mxu0 %v4772
      %v4844 = vpop.f32.mrf.mxu0
      %v4845 = vadd.f32 0.0, %v4844
      %4846 = vmatmul.f32.gmra.mxu0 %v4774
      %v4847 = vpop.f32.mrf.mxu0
      %v4848 = vadd.f32 0.0, %v4847
      %4849 = vmatmul.f32.gmra.mxu0 %v4776
      %v4850 = vpop.f32.mrf.mxu0
      %v4851 = vadd.f32 0.0, %v4850
      %4852 = vmatmul.f32.gmra.mxu0 %v4778
      %v4853 = vpop.f32.mrf.mxu0
      %v4854 = vadd.f32 0.0, %v4853
      %4855 = vmatmul.f32.gmra.mxu0 %v4780
      %v4856 = vpop.f32.mrf.mxu0
      %v4857 = vadd.f32 0.0, %v4856
      %4858 = vmatmul.f32.gmra.mxu0 %v4782
      %v4859 = vpop.f32.mrf.mxu0
      %v4860 = vadd.f32 0.0, %v4859
      %4861 = vmatmul.f32.gmra.mxu0 %v4784
      %v4862 = vpop.f32.mrf.mxu0
      %v4863 = vadd.f32 0.0, %v4862
      %4864 = vmatmul.f32.gmra.mxu0 %v4786
      %v4865 = vpop.f32.mrf.mxu0
      %v4866 = vadd.f32 0.0, %v4865
      %4867 = vmatmul.f32.gmra.mxu0 %v4788
      %v4868 = vpop.f32.mrf.mxu0
      %v4869 = vadd.f32 0.0, %v4868
      %4870 = vmatmul.f32.gmra.mxu0 %v4790
      %v4871 = vpop.f32.mrf.mxu0
      %v4872 = vadd.f32 0.0, %v4871
      %4873 = vmatmul.f32.gmra.mxu0 %v4792
      %v4874 = vpop.f32.mrf.mxu0
      %v4875 = vadd.f32 0.0, %v4874
      %4876 = vmatmul.f32.gmra.mxu0 %v4794
      %v4877 = vpop.f32.mrf.mxu0
      %v4878 = vadd.f32 0.0, %v4877
      %4879 = vmatmul.f32.gmra.mxu0 %v4796
      %v4880 = vpop.f32.mrf.mxu0
      %v4881 = vadd.f32 0.0, %v4880
      %4882 = vmatmul.f32.gmra.mxu0 %v4798
      %v4883 = vpop.f32.mrf.mxu0
      %v4884 = vadd.f32 0.0, %v4883
      %4885 = vmatmul.f32.gmra.mxu0 %v4800
      %v4886 = vpop.f32.mrf.mxu0
      %v4887 = vadd.f32 0.0, %v4886
      %4888 = vmatmul.f32.gmra.mxu0 %v4802
      %v4889 = vpop.f32.mrf.mxu0
      %v4890 = vadd.f32 0.0, %v4889
      %4891 = vdwg.mxu0
      %v4892 = vadd.f32 %v4632, %v4839
      %v4893 = vadd.f32 %v4633, %v4842
      %v4894 = vadd.f32 %v4634, %v4845
      %v4895 = vadd.f32 %v4635, %v4848
      %v4896 = vadd.f32 %v4636, %v4851
      %v4897 = vadd.f32 %v4637, %v4854
      %v4898 = vadd.f32 %v4638, %v4857
      %v4899 = vadd.f32 %v4639, %v4860
      %v4900 = vadd.f32 %v4640, %v4863
      %v4901 = vadd.f32 %v4641, %v4866
      %v4902 = vadd.f32 %v4642, %v4869
      %v4903 = vadd.f32 %v4643, %v4872
      %v4904 = vadd.f32 %v4644, %v4875
      %v4905 = vadd.f32 %v4645, %v4878
      %v4906 = vadd.f32 %v4646, %v4881
      %v4907 = vadd.f32 %v4647, %v4884
      %v4908 = vadd.f32 %v4648, %v4887
      %v4909 = vadd.f32 %v4649, %v4890
      %s4910 = scalar_lea.vmem %s2, 640
      %v4911 = vld [vmem:[%s4910] sm:$0xff]
      %v4912 = vld [vmem:[%s4910 + $0x8] sm:$0xff]
      %v4913 = vld [vmem:[%s4910 + $0x10] sm:$0xff]
      %v4914 = vld [vmem:[%s4910 + $0x18] sm:$0xff]
      %v4915 = vld [vmem:[%s4910 + $0x20] sm:$0xff]
      %v4916 = vld [vmem:[%s4910 + $0x28] sm:$0xff]
      %v4917 = vld [vmem:[%s4910 + $0x30] sm:$0xff]
      %v4918 = vld [vmem:[%s4910 + $0x38] sm:$0xff]
      %v4919 = vld [vmem:[%s4910 + $0x40] sm:$0xff]
      %v4920 = vld [vmem:[%s4910 + $0x48] sm:$0xff]
      %v4921 = vld [vmem:[%s4910 + $0x50] sm:$0xff]
      %v4922 = vld [vmem:[%s4910 + $0x58] sm:$0xff]
      %v4923 = vld [vmem:[%s4910 + $0x60] sm:$0xff]
      %v4924 = vld [vmem:[%s4910 + $0x68] sm:$0xff]
      %v4925 = vld [vmem:[%s4910 + $0x70] sm:$0xff]
      %v4926 = vld [vmem:[%s4910 + $0x78] sm:$0xff]
      %4927 = vst [vmem:[#allocation1] ss:$4 sm:$0xff] %v3710
      %s4928 = scalar_lea.vmem [#allocation1], 1
      %4929 = vst [vmem:[%s4928] ss:$4 sm:$0xff] %v3711
      %s4930 = scalar_lea.vmem [#allocation1], 2
      %4931 = vst [vmem:[%s4930] ss:$4 sm:$0xff] %v3712
      %s4932 = scalar_lea.vmem [#allocation1], 3
      %4933 = vst [vmem:[%s4932] ss:$4 sm:$0xff] %v3646
      %s4934 = scalar_lea.vmem [#allocation1], 32
      %4935 = vst [vmem:[%s4934] ss:$4 sm:$0xff] %v3713
      %s4936 = scalar_lea.vmem [#allocation1], 33
      %4937 = vst [vmem:[%s4936] ss:$4 sm:$0xff] %v3714
      %s4938 = scalar_lea.vmem [#allocation1], 34
      %4939 = vst [vmem:[%s4938] ss:$4 sm:$0xff] %v3715
      %s4940 = scalar_lea.vmem [#allocation1], 35
      %4941 = vst [vmem:[%s4940] ss:$4 sm:$0xff] %v3647
      %v4942 = vld.sshfl [vmem:[#allocation1] sm:$0xff pattern:$0x73625140]
      %v4943 = vld.sshfl [vmem:[#allocation1 + $0x20] sm:$0xff pattern:$0x73625140]
      %4944 = vst [vmem:[#allocation1] ss:$4 sm:$0xff] %v3648
      %4945 = vst [vmem:[%s4928] ss:$4 sm:$0xff] %v3716
      %4946 = vst [vmem:[%s4930] ss:$4 sm:$0xff] %v3717
      %4947 = vst [vmem:[%s4932] ss:$4 sm:$0xff] %v3718
      %4948 = vst [vmem:[%s4934] ss:$4 sm:$0xff] %v3649
      %4949 = vst [vmem:[%s4936] ss:$4 sm:$0xff] %v3719
      %4950 = vst [vmem:[%s4938] ss:$4 sm:$0xff] %v3720
      %4951 = vst [vmem:[%s4940] ss:$4 sm:$0xff] %v3721
      %v4952 = vld.sshfl [vmem:[#allocation1] sm:$0xff pattern:$0x73625140]
      %v4953 = vld.sshfl [vmem:[#allocation1 + $0x20] sm:$0xff pattern:$0x73625140]
      %4954 = vst [vmem:[#allocation1] ss:$4 sm:$0xff] %v3650
      %4955 = vst [vmem:[%s4928] ss:$4 sm:$0xff] %v3651
      %4956 = vst [vmem:[%s4930] ss:$4 sm:$0xff] %v3722
      %4957 = vst [vmem:[%s4932] ss:$4 sm:$0xff] %v3723
      %4958 = vst [vmem:[%s4934] ss:$4 sm:$0xff] %v3724
      %4959 = vst [vmem:[%s4936] ss:$4 sm:$0xff] %v3652
      %4960 = vst [vmem:[%s4938] ss:$4 sm:$0xff] %v3725
      %4961 = vst [vmem:[%s4940] ss:$4 sm:$0xff] %v3726
      %v4962 = vld.sshfl [vmem:[#allocation1] sm:$0xff pattern:$0x73625140]
      %v4963 = vld.sshfl [vmem:[#allocation1 + $0x20] sm:$0xff pattern:$0x73625140]
      %4964 = vst [vmem:[#allocation1] ss:$4 sm:$0xff] %v3727
      %4965 = vst [vmem:[%s4928] ss:$4 sm:$0xff] %v3653
      %4966 = vst [vmem:[%s4930] ss:$4 sm:$0xff] %v3654
      %4967 = vst [vmem:[%s4932] ss:$4 sm:$0xff] %v3728
      %4968 = vst [vmem:[%s4934] ss:$4 sm:$0xff] %v3729
      %4969 = vst [vmem:[%s4936] ss:$4 sm:$0xff] %v3730
      %4970 = vst [vmem:[%s4938] ss:$4 sm:$0xff] %v3655
      %4971 = vst [vmem:[%s4940] ss:$4 sm:$0xff] %v3731
      %v4972 = vld.sshfl [vmem:[#allocation1] sm:$0xff pattern:$0x73625140]
      %v4973 = vld.sshfl [vmem:[#allocation1 + $0x20] sm:$0xff pattern:$0x73625140]
      %4974 = vst [vmem:[#allocation1] ss:$4 sm:$0xff] %v3732
      %4975 = vst [vmem:[%s4928] ss:$4 sm:$0xff] %v3733
      %4976 = vst [vmem:[%s4930] ss:$4 sm:$0xff] %v3656
      %4977 = vst [vmem:[%s4932] ss:$4 sm:$0xff] %v3657
      %4978 = vst [vmem:[%s4934] ss:$4 sm:$0xff] %v3734
      %4979 = vst [vmem:[%s4936] ss:$4 sm:$0xff] %v3735
      %4980 = vst [vmem:[%s4938] ss:$4 sm:$0xff] %v3736
      %4981 = vst [vmem:[%s4940] ss:$4 sm:$0xff] %v3658
      %v4982 = vld.sshfl [vmem:[#allocation1] sm:$0xff pattern:$0x73625140]
      %v4983 = vld.sshfl [vmem:[#allocation1 + $0x20] sm:$0xff pattern:$0x73625140]
      %4984 = vst [vmem:[#allocation1] ss:$4 sm:$0xff] %v3737
      %4985 = vst [vmem:[%s4928] ss:$4 sm:$0xff] %v3738
      %4986 = vst [vmem:[%s4930] ss:$4 sm:$0xff] %v3739
      %4987 = vst [vmem:[%s4932] ss:$4 sm:$0xff] %v3659
      %4988 = vst [vmem:[%s4934] ss:$4 sm:$0xff] %v3660
      %4989 = vst [vmem:[%s4936] ss:$4 sm:$0xff] %v3740
      %4990 = vst [vmem:[%s4938] ss:$4 sm:$0xff] %v3741
      %4991 = vst [vmem:[%s4940] ss:$4 sm:$0xff] %v3742
      %v4992 = vld.sshfl [vmem:[#allocation1] sm:$0xff pattern:$0x73625140]
      %v4993 = vld.sshfl [vmem:[#allocation1 + $0x20] sm:$0xff pattern:$0x73625140]
      %4994 = vst [vmem:[#allocation1] ss:$4 sm:$0xff] %v3661
      %4995 = vst [vmem:[%s4928] ss:$4 sm:$0xff] %v3743
      %4996 = vst [vmem:[%s4930] ss:$4 sm:$0xff] %v3744
      %4997 = vst [vmem:[%s4932] ss:$4 sm:$0xff] %v3745
      %4998 = vst [vmem:[%s4934] ss:$4 sm:$0xff] %v3662
      %4999 = vst [vmem:[%s4936] ss:$4 sm:$0xff] %v3663
      %5000 = vst [vmem:[%s4938] ss:$4 sm:$0xff] %v3746
      %5001 = vst [vmem:[%s4940] ss:$4 sm:$0xff] %v3747
      %v5002 = vld.sshfl [vmem:[#allocation1] sm:$0xff pattern:$0x73625140]
      %v5003 = vld.sshfl [vmem:[#allocation1 + $0x20] sm:$0xff pattern:$0x73625140]
      %5004 = vst [vmem:[#allocation1] ss:$4 sm:$0xff] %v3748
      %5005 = vst [vmem:[%s4928] ss:$4 sm:$0xff] %v3664
      %5006 = vst [vmem:[%s4930] ss:$4 sm:$0xff] %v3749
      %5007 = vst [vmem:[%s4932] ss:$4 sm:$0xff] %v3750
      %5008 = vst [vmem:[%s4934] ss:$4 sm:$0xff] %v3751
      %5009 = vst [vmem:[%s4936] ss:$4 sm:$0xff] %v3665
      %5010 = vst [vmem:[%s4938] ss:$4 sm:$0xff] %v3666
      %5011 = vst [vmem:[%s4940] ss:$4 sm:$0xff] %v3752
      %v5012 = vld.sshfl [vmem:[#allocation1] sm:$0xff pattern:$0x73625140]
      %v5013 = vld.sshfl [vmem:[#allocation1 + $0x20] sm:$0xff pattern:$0x73625140]
      %5014 = vst [vmem:[#allocation1] ss:$4 sm:$0xff] %v3753
      %5015 = vst [vmem:[%s4928] ss:$4 sm:$0xff] %v3754
      %5016 = vst [vmem:[%s4930] ss:$4 sm:$0xff] %v3667
      %5017 = vst [vmem:[%s4932] ss:$4 sm:$0xff] %v3755
      %5018 = vst [vmem:[%s4934] ss:$4 sm:$0xff] %v3756
      %5019 = vst [vmem:[%s4936] ss:$4 sm:$0xff] %v3757
      %5020 = vst [vmem:[%s4938] ss:$4 sm:$0xff] %v3668
      %5021 = vst [vmem:[%s4940] ss:$4 sm:$0xff] %v3669
      %v5022 = vld.sshfl [vmem:[#allocation1] sm:$0xff pattern:$0x73625140]
      %v5023 = vld.sshfl [vmem:[#allocation1 + $0x20] sm:$0xff pattern:$0x73625140]
      %5042 = vmatpush.msra.mxu0 %v4926
      %5043 = vmatpush.msra.mxu0 %v4925
      %5044 = vmatpush.msra.mxu0 %v4924
      %5045 = vmatpush.msra.mxu0 %v4923
      %5046 = vmatpush.msra.mxu0 %v4922
      %5047 = vmatpush.msra.mxu0 %v4921
      %5048 = vmatpush.msra.mxu0 %v4920
      %5049 = vmatpush.msra.mxu0 %v4919
      %5050 = vmatpush.msra.mxu0 %v4918
      %5051 = vmatpush.msra.mxu0 %v4917
      %5052 = vmatpush.msra.mxu0 %v4916
      %5053 = vmatpush.msra.mxu0 %v4915
      %5054 = vmatpush.msra.mxu0 %v4914
      %5055 = vmatpush.msra.mxu0 %v4913
      %5056 = vmatpush.msra.mxu0 %v4912
      %5057 = vmatpush.msra.mxu0 %v4911
      %5058 = vmatmul.f32.gmra.mxu0 %v4942
      %v5059 = vpop.f32.mrf.mxu0
      %v5060 = vadd.f32 0.0, %v5059
      %5061 = vmatmul.f32.gmra.mxu0 %v4943
      %v5062 = vpop.f32.mrf.mxu0
      %v5063 = vadd.f32 0.0, %v5062
      %5064 = vmatmul.f32.gmra.mxu0 %v4952
      %v5065 = vpop.f32.mrf.mxu0
      %v5066 = vadd.f32 0.0, %v5065
      %5067 = vmatmul.f32.gmra.mxu0 %v4953
      %v5068 = vpop.f32.mrf.mxu0
      %v5069 = vadd.f32 0.0, %v5068
      %5070 = vmatmul.f32.gmra.mxu0 %v4962
      %v5071 = vpop.f32.mrf.mxu0
      %v5072 = vadd.f32 0.0, %v5071
      %5073 = vmatmul.f32.gmra.mxu0 %v4963
      %v5074 = vpop.f32.mrf.mxu0
      %v5075 = vadd.f32 0.0, %v5074
      %5076 = vmatmul.f32.gmra.mxu0 %v4972
      %v5077 = vpop.f32.mrf.mxu0
      %v5078 = vadd.f32 0.0, %v5077
      %5079 = vmatmul.f32.gmra.mxu0 %v4973
      %v5080 = vpop.f32.mrf.mxu0
      %v5081 = vadd.f32 0.0, %v5080
      %5082 = vmatmul.f32.gmra.mxu0 %v4982
      %v5083 = vpop.f32.mrf.mxu0
      %v5084 = vadd.f32 0.0, %v5083
      %5085 = vmatmul.f32.gmra.mxu0 %v4983
      %v5086 = vpop.f32.mrf.mxu0
      %v5087 = vadd.f32 0.0, %v5086
      %5088 = vmatmul.f32.gmra.mxu0 %v4992
      %v5089 = vpop.f32.mrf.mxu0
      %v5090 = vadd.f32 0.0, %v5089
      %5091 = vmatmul.f32.gmra.mxu0 %v4993
      %v5092 = vpop.f32.mrf.mxu0
      %v5093 = vadd.f32 0.0, %v5092
      %5094 = vmatmul.f32.gmra.mxu0 %v5002
      %v5095 = vpop.f32.mrf.mxu0
      %v5096 = vadd.f32 0.0, %v5095
      %5097 = vmatmul.f32.gmra.mxu0 %v5003
      %v5098 = vpop.f32.mrf.mxu0
      %v5099 = vadd.f32 0.0, %v5098
      %5100 = vmatmul.f32.gmra.mxu0 %v5012
      %v5101 = vpop.f32.mrf.mxu0
      %v5102 = vadd.f32 0.0, %v5101
      %5103 = vmatmul.f32.gmra.mxu0 %v5013
      %v5104 = vpop.f32.mrf.mxu0
      %v5105 = vadd.f32 0.0, %v5104
      %5106 = vmatmul.f32.gmra.mxu0 %v5022
      %v5107 = vpop.f32.mrf.mxu0
      %v5108 = vadd.f32 0.0, %v5107
      %5109 = vmatmul.f32.gmra.mxu0 %v5023
      %v5110 = vpop.f32.mrf.mxu0
      %v5111 = vadd.f32 0.0, %v5110
      %5112 = vdwg.mxu0
      %v5113 = vadd.f32 %v4892, %v5060
      %v5114 = vadd.f32 %v4893, %v5063
      %v5115 = vadd.f32 %v4894, %v5066
      %v5116 = vadd.f32 %v4895, %v5069
      %v5117 = vadd.f32 %v4896, %v5072
      %v5118 = vadd.f32 %v4897, %v5075
      %v5119 = vadd.f32 %v4898, %v5078
      %v5120 = vadd.f32 %v4899, %v5081
      %v5121 = vadd.f32 %v4900, %v5084
      %v5122 = vadd.f32 %v4901, %v5087
      %v5123 = vadd.f32 %v4902, %v5090
      %v5124 = vadd.f32 %v4903, %v5093
      %v5125 = vadd.f32 %v4904, %v5096
      %v5126 = vadd.f32 %v4905, %v5099
      %v5127 = vadd.f32 %v4906, %v5102
      %v5128 = vadd.f32 %v4907, %v5105
      %v5129 = vadd.f32 %v4908, %v5108
      %v5130 = vadd.f32 %v4909, %v5111
      %s5131 = scalar_lea.vmem %s2, 768
      %v5132 = vld [vmem:[%s5131] sm:$0xff]
      %v5133 = vld [vmem:[%s5131 + $0x8] sm:$0xff]
      %v5134 = vld [vmem:[%s5131 + $0x10] sm:$0xff]
      %v5135 = vld [vmem:[%s5131 + $0x18] sm:$0xff]
      %v5136 = vld [vmem:[%s5131 + $0x20] sm:$0xff]
      %v5137 = vld [vmem:[%s5131 + $0x28] sm:$0xff]
      %v5138 = vld [vmem:[%s5131 + $0x30] sm:$0xff]
      %v5139 = vld [vmem:[%s5131 + $0x38] sm:$0xff]
      %v5140 = vld [vmem:[%s5131 + $0x40] sm:$0xff]
      %v5141 = vld [vmem:[%s5131 + $0x48] sm:$0xff]
      %v5142 = vld [vmem:[%s5131 + $0x50] sm:$0xff]
      %v5143 = vld [vmem:[%s5131 + $0x58] sm:$0xff]
      %v5144 = vld [vmem:[%s5131 + $0x60] sm:$0xff]
      %v5145 = vld [vmem:[%s5131 + $0x68] sm:$0xff]
      %v5146 = vld [vmem:[%s5131 + $0x70] sm:$0xff]
      %v5147 = vld [vmem:[%s5131 + $0x78] sm:$0xff]
      %5148 = vst [vmem:[#allocation1] ss:$4 sm:$0xff] %v3648
      %s5149 = scalar_lea.vmem [#allocation1], 1
      %5150 = vst [vmem:[%s5149] ss:$4 sm:$0xff] %v3716
      %s5151 = scalar_lea.vmem [#allocation1], 2
      %5152 = vst [vmem:[%s5151] ss:$4 sm:$0xff] %v3717
      %s5153 = scalar_lea.vmem [#allocation1], 3
      %5154 = vst [vmem:[%s5153] ss:$4 sm:$0xff] %v3718
      %s5155 = scalar_lea.vmem [#allocation1], 32
      %5156 = vst [vmem:[%s5155] ss:$4 sm:$0xff] %v3649
      %s5157 = scalar_lea.vmem [#allocation1], 33
      %5158 = vst [vmem:[%s5157] ss:$4 sm:$0xff] %v3719
      %s5159 = scalar_lea.vmem [#allocation1], 34
      %5160 = vst [vmem:[%s5159] ss:$4 sm:$0xff] %v3720
      %s5161 = scalar_lea.vmem [#allocation1], 35
      %5162 = vst [vmem:[%s5161] ss:$4 sm:$0xff] %v3721
      %v5163 = vld.sshfl [vmem:[#allocation1] sm:$0xff pattern:$0x73625140]
      %v5164 = vld.sshfl [vmem:[#allocation1 + $0x20] sm:$0xff pattern:$0x73625140]
      %5165 = vst [vmem:[#allocation1] ss:$4 sm:$0xff] %v3650
      %5166 = vst [vmem:[%s5149] ss:$4 sm:$0xff] %v3651
      %5167 = vst [vmem:[%s5151] ss:$4 sm:$0xff] %v3722
      %5168 = vst [vmem:[%s5153] ss:$4 sm:$0xff] %v3723
      %5169 = vst [vmem:[%s5155] ss:$4 sm:$0xff] %v3724
      %5170 = vst [vmem:[%s5157] ss:$4 sm:$0xff] %v3652
      %5171 = vst [vmem:[%s5159] ss:$4 sm:$0xff] %v3725
      %5172 = vst [vmem:[%s5161] ss:$4 sm:$0xff] %v3726
      %v5173 = vld.sshfl [vmem:[#allocation1] sm:$0xff pattern:$0x73625140]
      %v5174 = vld.sshfl [vmem:[#allocation1 + $0x20] sm:$0xff pattern:$0x73625140]
      %5175 = vst [vmem:[#allocation1] ss:$4 sm:$0xff] %v3727
      %5176 = vst [vmem:[%s5149] ss:$4 sm:$0xff] %v3653
      %5177 = vst [vmem:[%s5151] ss:$4 sm:$0xff] %v3654
      %5178 = vst [vmem:[%s5153] ss:$4 sm:$0xff] %v3728
      %5179 = vst [vmem:[%s5155] ss:$4 sm:$0xff] %v3729
      %5180 = vst [vmem:[%s5157] ss:$4 sm:$0xff] %v3730
      %5181 = vst [vmem:[%s5159] ss:$4 sm:$0xff] %v3655
      %5182 = vst [vmem:[%s5161] ss:$4 sm:$0xff] %v3731
      %v5183 = vld.sshfl [vmem:[#allocation1] sm:$0xff pattern:$0x73625140]
      %v5184 = vld.sshfl [vmem:[#allocation1 + $0x20] sm:$0xff pattern:$0x73625140]
      %5185 = vst [vmem:[#allocation1] ss:$4 sm:$0xff] %v3732
      %5186 = vst [vmem:[%s5149] ss:$4 sm:$0xff] %v3733
      %5187 = vst [vmem:[%s5151] ss:$4 sm:$0xff] %v3656
      %5188 = vst [vmem:[%s5153] ss:$4 sm:$0xff] %v3657
      %5189 = vst [vmem:[%s5155] ss:$4 sm:$0xff] %v3734
      %5190 = vst [vmem:[%s5157] ss:$4 sm:$0xff] %v3735
      %5191 = vst [vmem:[%s5159] ss:$4 sm:$0xff] %v3736
      %5192 = vst [vmem:[%s5161] ss:$4 sm:$0xff] %v3658
      %v5193 = vld.sshfl [vmem:[#allocation1] sm:$0xff pattern:$0x73625140]
      %v5194 = vld.sshfl [vmem:[#allocation1 + $0x20] sm:$0xff pattern:$0x73625140]
      %5195 = vst [vmem:[#allocation1] ss:$4 sm:$0xff] %v3737
      %5196 = vst [vmem:[%s5149] ss:$4 sm:$0xff] %v3738
      %5197 = vst [vmem:[%s5151] ss:$4 sm:$0xff] %v3739
      %5198 = vst [vmem:[%s5153] ss:$4 sm:$0xff] %v3659
      %5199 = vst [vmem:[%s5155] ss:$4 sm:$0xff] %v3660
      %5200 = vst [vmem:[%s5157] ss:$4 sm:$0xff] %v3740
      %5201 = vst [vmem:[%s5159] ss:$4 sm:$0xff] %v3741
      %5202 = vst [vmem:[%s5161] ss:$4 sm:$0xff] %v3742
      %v5203 = vld.sshfl [vmem:[#allocation1] sm:$0xff pattern:$0x73625140]
      %v5204 = vld.sshfl [vmem:[#allocation1 + $0x20] sm:$0xff pattern:$0x73625140]
      %5205 = vst [vmem:[#allocation1] ss:$4 sm:$0xff] %v3661
      %5206 = vst [vmem:[%s5149] ss:$4 sm:$0xff] %v3743
      %5207 = vst [vmem:[%s5151] ss:$4 sm:$0xff] %v3744
      %5208 = vst [vmem:[%s5153] ss:$4 sm:$0xff] %v3745
      %5209 = vst [vmem:[%s5155] ss:$4 sm:$0xff] %v3662
      %5210 = vst [vmem:[%s5157] ss:$4 sm:$0xff] %v3663
      %5211 = vst [vmem:[%s5159] ss:$4 sm:$0xff] %v3746
      %5212 = vst [vmem:[%s5161] ss:$4 sm:$0xff] %v3747
      %v5213 = vld.sshfl [vmem:[#allocation1] sm:$0xff pattern:$0x73625140]
      %v5214 = vld.sshfl [vmem:[#allocation1 + $0x20] sm:$0xff pattern:$0x73625140]
      %5215 = vst [vmem:[#allocation1] ss:$4 sm:$0xff] %v3748
      %5216 = vst [vmem:[%s5149] ss:$4 sm:$0xff] %v3664
      %5217 = vst [vmem:[%s5151] ss:$4 sm:$0xff] %v3749
      %5218 = vst [vmem:[%s5153] ss:$4 sm:$0xff] %v3750
      %5219 = vst [vmem:[%s5155] ss:$4 sm:$0xff] %v3751
      %5220 = vst [vmem:[%s5157] ss:$4 sm:$0xff] %v3665
      %5221 = vst [vmem:[%s5159] ss:$4 sm:$0xff] %v3666
      %5222 = vst [vmem:[%s5161] ss:$4 sm:$0xff] %v3752
      %v5223 = vld.sshfl [vmem:[#allocation1] sm:$0xff pattern:$0x73625140]
      %v5224 = vld.sshfl [vmem:[#allocation1 + $0x20] sm:$0xff pattern:$0x73625140]
      %5225 = vst [vmem:[#allocation1] ss:$4 sm:$0xff] %v3753
      %5226 = vst [vmem:[%s5149] ss:$4 sm:$0xff] %v3754
      %5227 = vst [vmem:[%s5151] ss:$4 sm:$0xff] %v3667
      %5228 = vst [vmem:[%s5153] ss:$4 sm:$0xff] %v3755
      %5229 = vst [vmem:[%s5155] ss:$4 sm:$0xff] %v3756
      %5230 = vst [vmem:[%s5157] ss:$4 sm:$0xff] %v3757
      %5231 = vst [vmem:[%s5159] ss:$4 sm:$0xff] %v3668
      %5232 = vst [vmem:[%s5161] ss:$4 sm:$0xff] %v3669
      %v5233 = vld.sshfl [vmem:[#allocation1] sm:$0xff pattern:$0x73625140]
      %v5234 = vld.sshfl [vmem:[#allocation1 + $0x20] sm:$0xff pattern:$0x73625140]
      %5235 = vst [vmem:[#allocation1] ss:$4 sm:$0xff] %v3758
      %5236 = vst [vmem:[%s5149] ss:$4 sm:$0xff] %v3759
      %5237 = vst [vmem:[%s5151] ss:$4 sm:$0xff] %v3760
      %5238 = vst [vmem:[%s5153] ss:$4 sm:$0xff] %v3670
      %5239 = vst [vmem:[%s5155] ss:$4 sm:$0xff] %v3761
      %5240 = vst [vmem:[%s5157] ss:$4 sm:$0xff] %v3762
      %5241 = vst [vmem:[%s5159] ss:$4 sm:$0xff] %v3763
      %5242 = vst [vmem:[%s5161] ss:$4 sm:$0xff] %v3671
      %v5243 = vld.sshfl [vmem:[#allocation1] sm:$0xff pattern:$0x73625140]
      %v5244 = vld.sshfl [vmem:[#allocation1 + $0x20] sm:$0xff pattern:$0x73625140]
      %5263 = vmatpush.msra.mxu0 %v5147
      %5264 = vmatpush.msra.mxu0 %v5146
      %5265 = vmatpush.msra.mxu0 %v5145
      %5266 = vmatpush.msra.mxu0 %v5144
      %5267 = vmatpush.msra.mxu0 %v5143
      %5268 = vmatpush.msra.mxu0 %v5142
      %5269 = vmatpush.msra.mxu0 %v5141
      %5270 = vmatpush.msra.mxu0 %v5140
      %5271 = vmatpush.msra.mxu0 %v5139
      %5272 = vmatpush.msra.mxu0 %v5138
      %5273 = vmatpush.msra.mxu0 %v5137
      %5274 = vmatpush.msra.mxu0 %v5136
      %5275 = vmatpush.msra.mxu0 %v5135
      %5276 = vmatpush.msra.mxu0 %v5134
      %5277 = vmatpush.msra.mxu0 %v5133
      %5278 = vmatpush.msra.mxu0 %v5132
      %5279 = vmatmul.f32.gmra.mxu0 %v5163
      %v5280 = vpop.f32.mrf.mxu0
      %v5281 = vadd.f32 0.0, %v5280
      %5282 = vmatmul.f32.gmra.mxu0 %v5164
      %v5283 = vpop.f32.mrf.mxu0
      %v5284 = vadd.f32 0.0, %v5283
      %5285 = vmatmul.f32.gmra.mxu0 %v5173
      %v5286 = vpop.f32.mrf.mxu0
      %v5287 = vadd.f32 0.0, %v5286
      %5288 = vmatmul.f32.gmra.mxu0 %v5174
      %v5289 = vpop.f32.mrf.mxu0
      %v5290 = vadd.f32 0.0, %v5289
      %5291 = vmatmul.f32.gmra.mxu0 %v5183
      %v5292 = vpop.f32.mrf.mxu0
      %v5293 = vadd.f32 0.0, %v5292
      %5294 = vmatmul.f32.gmra.mxu0 %v5184
      %v5295 = vpop.f32.mrf.mxu0
      %v5296 = vadd.f32 0.0, %v5295
      %5297 = vmatmul.f32.gmra.mxu0 %v5193
      %v5298 = vpop.f32.mrf.mxu0
      %v5299 = vadd.f32 0.0, %v5298
      %5300 = vmatmul.f32.gmra.mxu0 %v5194
      %v5301 = vpop.f32.mrf.mxu0
      %v5302 = vadd.f32 0.0, %v5301
      %5303 = vmatmul.f32.gmra.mxu0 %v5203
      %v5304 = vpop.f32.mrf.mxu0
      %v5305 = vadd.f32 0.0, %v5304
      %5306 = vmatmul.f32.gmra.mxu0 %v5204
      %v5307 = vpop.f32.mrf.mxu0
      %v5308 = vadd.f32 0.0, %v5307
      %5309 = vmatmul.f32.gmra.mxu0 %v5213
      %v5310 = vpop.f32.mrf.mxu0
      %v5311 = vadd.f32 0.0, %v5310
      %5312 = vmatmul.f32.gmra.mxu0 %v5214
      %v5313 = vpop.f32.mrf.mxu0
      %v5314 = vadd.f32 0.0, %v5313
      %5315 = vmatmul.f32.gmra.mxu0 %v5223
      %v5316 = vpop.f32.mrf.mxu0
      %v5317 = vadd.f32 0.0, %v5316
      %5318 = vmatmul.f32.gmra.mxu0 %v5224
      %v5319 = vpop.f32.mrf.mxu0
      %v5320 = vadd.f32 0.0, %v5319
      %5321 = vmatmul.f32.gmra.mxu0 %v5233
      %v5322 = vpop.f32.mrf.mxu0
      %v5323 = vadd.f32 0.0, %v5322
      %5324 = vmatmul.f32.gmra.mxu0 %v5234
      %v5325 = vpop.f32.mrf.mxu0
      %v5326 = vadd.f32 0.0, %v5325
      %5327 = vmatmul.f32.gmra.mxu0 %v5243
      %v5328 = vpop.f32.mrf.mxu0
      %v5329 = vadd.f32 0.0, %v5328
      %5330 = vmatmul.f32.gmra.mxu0 %v5244
      %v5331 = vpop.f32.mrf.mxu0
      %v5332 = vadd.f32 0.0, %v5331
      %5333 = vdwg.mxu0
      %v5334 = vadd.f32 %v5113, %v5281
      %v5335 = vadd.f32 %v5114, %v5284
      %v5336 = vadd.f32 %v5115, %v5287
      %v5337 = vadd.f32 %v5116, %v5290
      %v5338 = vadd.f32 %v5117, %v5293
      %v5339 = vadd.f32 %v5118, %v5296
      %v5340 = vadd.f32 %v5119, %v5299
      %v5341 = vadd.f32 %v5120, %v5302
      %v5342 = vadd.f32 %v5121, %v5305
      %v5343 = vadd.f32 %v5122, %v5308
      %v5344 = vadd.f32 %v5123, %v5311
      %v5345 = vadd.f32 %v5124, %v5314
      %v5346 = vadd.f32 %v5125, %v5317
      %v5347 = vadd.f32 %v5126, %v5320
      %v5348 = vadd.f32 %v5127, %v5323
      %v5349 = vadd.f32 %v5128, %v5326
      %v5350 = vadd.f32 %v5129, %v5329
      %v5351 = vadd.f32 %v5130, %v5332
      %s5352 = scalar_lea.vmem %s2, 896
      %v5353 = vld [vmem:[%s5352] sm:$0xff]
      %v5354 = vld [vmem:[%s5352 + $0x8] sm:$0xff]
      %v5355 = vld [vmem:[%s5352 + $0x10] sm:$0xff]
      %v5356 = vld [vmem:[%s5352 + $0x18] sm:$0xff]
      %v5357 = vld [vmem:[%s5352 + $0x20] sm:$0xff]
      %v5358 = vld [vmem:[%s5352 + $0x28] sm:$0xff]
      %v5359 = vld [vmem:[%s5352 + $0x30] sm:$0xff]
      %v5360 = vld [vmem:[%s5352 + $0x38] sm:$0xff]
      %v5361 = vld [vmem:[%s5352 + $0x40] sm:$0xff]
      %v5362 = vld [vmem:[%s5352 + $0x48] sm:$0xff]
      %v5363 = vld [vmem:[%s5352 + $0x50] sm:$0xff]
      %v5364 = vld [vmem:[%s5352 + $0x58] sm:$0xff]
      %v5365 = vld [vmem:[%s5352 + $0x60] sm:$0xff]
      %v5366 = vld [vmem:[%s5352 + $0x68] sm:$0xff]
      %v5367 = vld [vmem:[%s5352 + $0x70] sm:$0xff]
      %v5368 = vld [vmem:[%s5352 + $0x78] sm:$0xff]
      %5369 = vst [vmem:[#allocation1] ss:$4 sm:$0xff] %v3648
      %s5370 = scalar_lea.vmem [#allocation1], 1
      %5371 = vst [vmem:[%s5370] ss:$4 sm:$0xff] %v3716
      %s5372 = scalar_lea.vmem [#allocation1], 2
      %5373 = vst [vmem:[%s5372] ss:$4 sm:$0xff] %v3717
      %s5374 = scalar_lea.vmem [#allocation1], 3
      %5375 = vst [vmem:[%s5374] ss:$4 sm:$0xff] %v3718
      %s5376 = scalar_lea.vmem [#allocation1], 32
      %5377 = vst [vmem:[%s5376] ss:$4 sm:$0xff] %v3649
      %s5378 = scalar_lea.vmem [#allocation1], 33
      %5379 = vst [vmem:[%s5378] ss:$4 sm:$0xff] %v3719
      %s5380 = scalar_lea.vmem [#allocation1], 34
      %5381 = vst [vmem:[%s5380] ss:$4 sm:$0xff] %v3720
      %s5382 = scalar_lea.vmem [#allocation1], 35
      %5383 = vst [vmem:[%s5382] ss:$4 sm:$0xff] %v3721
      %v5384 = vld.sshfl [vmem:[#allocation1] sm:$0xff pattern:$0x73625140]
      %v5385 = vld.sshfl [vmem:[#allocation1 + $0x20] sm:$0xff pattern:$0x73625140]
      %5386 = vst [vmem:[#allocation1] ss:$4 sm:$0xff] %v3650
      %5387 = vst [vmem:[%s5370] ss:$4 sm:$0xff] %v3651
      %5388 = vst [vmem:[%s5372] ss:$4 sm:$0xff] %v3722
      %5389 = vst [vmem:[%s5374] ss:$4 sm:$0xff] %v3723
      %5390 = vst [vmem:[%s5376] ss:$4 sm:$0xff] %v3724
      %5391 = vst [vmem:[%s5378] ss:$4 sm:$0xff] %v3652
      %5392 = vst [vmem:[%s5380] ss:$4 sm:$0xff] %v3725
      %5393 = vst [vmem:[%s5382] ss:$4 sm:$0xff] %v3726
      %v5394 = vld.sshfl [vmem:[#allocation1] sm:$0xff pattern:$0x73625140]
      %v5395 = vld.sshfl [vmem:[#allocation1 + $0x20] sm:$0xff pattern:$0x73625140]
      %5396 = vst [vmem:[#allocation1] ss:$4 sm:$0xff] %v3727
      %5397 = vst [vmem:[%s5370] ss:$4 sm:$0xff] %v3653
      %5398 = vst [vmem:[%s5372] ss:$4 sm:$0xff] %v3654
      %5399 = vst [vmem:[%s5374] ss:$4 sm:$0xff] %v3728
      %5400 = vst [vmem:[%s5376] ss:$4 sm:$0xff] %v3729
      %5401 = vst [vmem:[%s5378] ss:$4 sm:$0xff] %v3730
      %5402 = vst [vmem:[%s5380] ss:$4 sm:$0xff] %v3655
      %5403 = vst [vmem:[%s5382] ss:$4 sm:$0xff] %v3731
      %v5404 = vld.sshfl [vmem:[#allocation1] sm:$0xff pattern:$0x73625140]
      %v5405 = vld.sshfl [vmem:[#allocation1 + $0x20] sm:$0xff pattern:$0x73625140]
      %5406 = vst [vmem:[#allocation1] ss:$4 sm:$0xff] %v3732
      %5407 = vst [vmem:[%s5370] ss:$4 sm:$0xff] %v3733
      %5408 = vst [vmem:[%s5372] ss:$4 sm:$0xff] %v3656
      %5409 = vst [vmem:[%s5374] ss:$4 sm:$0xff] %v3657
      %5410 = vst [vmem:[%s5376] ss:$4 sm:$0xff] %v3734
      %5411 = vst [vmem:[%s5378] ss:$4 sm:$0xff] %v3735
      %5412 = vst [vmem:[%s5380] ss:$4 sm:$0xff] %v3736
      %5413 = vst [vmem:[%s5382] ss:$4 sm:$0xff] %v3658
      %v5414 = vld.sshfl [vmem:[#allocation1] sm:$0xff pattern:$0x73625140]
      %v5415 = vld.sshfl [vmem:[#allocation1 + $0x20] sm:$0xff pattern:$0x73625140]
      %5416 = vst [vmem:[#allocation1] ss:$4 sm:$0xff] %v3737
      %5417 = vst [vmem:[%s5370] ss:$4 sm:$0xff] %v3738
      %5418 = vst [vmem:[%s5372] ss:$4 sm:$0xff] %v3739
      %5419 = vst [vmem:[%s5374] ss:$4 sm:$0xff] %v3659
      %5420 = vst [vmem:[%s5376] ss:$4 sm:$0xff] %v3660
      %5421 = vst [vmem:[%s5378] ss:$4 sm:$0xff] %v3740
      %5422 = vst [vmem:[%s5380] ss:$4 sm:$0xff] %v3741
      %5423 = vst [vmem:[%s5382] ss:$4 sm:$0xff] %v3742
      %v5424 = vld.sshfl [vmem:[#allocation1] sm:$0xff pattern:$0x73625140]
      %v5425 = vld.sshfl [vmem:[#allocation1 + $0x20] sm:$0xff pattern:$0x73625140]
      %5426 = vst [vmem:[#allocation1] ss:$4 sm:$0xff] %v3661
      %5427 = vst [vmem:[%s5370] ss:$4 sm:$0xff] %v3743
      %5428 = vst [vmem:[%s5372] ss:$4 sm:$0xff] %v3744
      %5429 = vst [vmem:[%s5374] ss:$4 sm:$0xff] %v3745
      %5430 = vst [vmem:[%s5376] ss:$4 sm:$0xff] %v3662
      %5431 = vst [vmem:[%s5378] ss:$4 sm:$0xff] %v3663
      %5432 = vst [vmem:[%s5380] ss:$4 sm:$0xff] %v3746
      %5433 = vst [vmem:[%s5382] ss:$4 sm:$0xff] %v3747
      %v5434 = vld.sshfl [vmem:[#allocation1] sm:$0xff pattern:$0x73625140]
      %v5435 = vld.sshfl [vmem:[#allocation1 + $0x20] sm:$0xff pattern:$0x73625140]
      %5436 = vst [vmem:[#allocation1] ss:$4 sm:$0xff] %v3748
      %5437 = vst [vmem:[%s5370] ss:$4 sm:$0xff] %v3664
      %5438 = vst [vmem:[%s5372] ss:$4 sm:$0xff] %v3749
      %5439 = vst [vmem:[%s5374] ss:$4 sm:$0xff] %v3750
      %5440 = vst [vmem:[%s5376] ss:$4 sm:$0xff] %v3751
      %5441 = vst [vmem:[%s5378] ss:$4 sm:$0xff] %v3665
      %5442 = vst [vmem:[%s5380] ss:$4 sm:$0xff] %v3666
      %5443 = vst [vmem:[%s5382] ss:$4 sm:$0xff] %v3752
      %v5444 = vld.sshfl [vmem:[#allocation1] sm:$0xff pattern:$0x73625140]
      %v5445 = vld.sshfl [vmem:[#allocation1 + $0x20] sm:$0xff pattern:$0x73625140]
      %5446 = vst [vmem:[#allocation1] ss:$4 sm:$0xff] %v3753
      %5447 = vst [vmem:[%s5370] ss:$4 sm:$0xff] %v3754
      %5448 = vst [vmem:[%s5372] ss:$4 sm:$0xff] %v3667
      %5449 = vst [vmem:[%s5374] ss:$4 sm:$0xff] %v3755
      %5450 = vst [vmem:[%s5376] ss:$4 sm:$0xff] %v3756
      %5451 = vst [vmem:[%s5378] ss:$4 sm:$0xff] %v3757
      %5452 = vst [vmem:[%s5380] ss:$4 sm:$0xff] %v3668
      %5453 = vst [vmem:[%s5382] ss:$4 sm:$0xff] %v3669
      %v5454 = vld.sshfl [vmem:[#allocation1] sm:$0xff pattern:$0x73625140]
      %v5455 = vld.sshfl [vmem:[#allocation1 + $0x20] sm:$0xff pattern:$0x73625140]
      %5456 = vst [vmem:[#allocation1] ss:$4 sm:$0xff] %v3758
      %5457 = vst [vmem:[%s5370] ss:$4 sm:$0xff] %v3759
      %5458 = vst [vmem:[%s5372] ss:$4 sm:$0xff] %v3760
      %5459 = vst [vmem:[%s5374] ss:$4 sm:$0xff] %v3670
      %5460 = vst [vmem:[%s5376] ss:$4 sm:$0xff] %v3761
      %5461 = vst [vmem:[%s5378] ss:$4 sm:$0xff] %v3762
      %5462 = vst [vmem:[%s5380] ss:$4 sm:$0xff] %v3763
      %5463 = vst [vmem:[%s5382] ss:$4 sm:$0xff] %v3671
      %v5464 = vld.sshfl [vmem:[#allocation1] sm:$0xff pattern:$0x73625140]
      %v5465 = vld.sshfl [vmem:[#allocation1 + $0x20] sm:$0xff pattern:$0x73625140]
      %5466 = vst [vmem:[#allocation1] ss:$4 sm:$0xff] %v3672
      %v5467 = vld.sshfl [vmem:[#allocation1] sm:$0xff pattern:$0x73625140]
      %v5468 = vrot.slane %v5384, 1
      %v5469 = vrot.slane %v5385, 1
      %v5470 = vsel %vm702, %v5468, %v5469
      %v5471 = vrot.slane %v5394, 1
      %v5472 = vsel %vm702, %v5469, %v5471
      %v5473 = vrot.slane %v5395, 1
      %v5474 = vsel %vm702, %v5471, %v5473
      %v5475 = vrot.slane %v5404, 1
      %v5476 = vsel %vm702, %v5473, %v5475
      %v5477 = vrot.slane %v5405, 1
      %v5478 = vsel %vm702, %v5475, %v5477
      %v5479 = vrot.slane %v5414, 1
      %v5480 = vsel %vm702, %v5477, %v5479
      %v5481 = vrot.slane %v5415, 1
      %v5482 = vsel %vm702, %v5479, %v5481
      %v5483 = vrot.slane %v5424, 1
      %v5484 = vsel %vm702, %v5481, %v5483
      %v5485 = vrot.slane %v5425, 1
      %v5486 = vsel %vm702, %v5483, %v5485
      %v5487 = vrot.slane %v5434, 1
      %v5488 = vsel %vm702, %v5485, %v5487
      %v5489 = vrot.slane %v5435, 1
      %v5490 = vsel %vm702, %v5487, %v5489
      %v5491 = vrot.slane %v5444, 1
      %v5492 = vsel %vm702, %v5489, %v5491
      %v5493 = vrot.slane %v5445, 1
      %v5494 = vsel %vm702, %v5491, %v5493
      %v5495 = vrot.slane %v5454, 1
      %v5496 = vsel %vm702, %v5493, %v5495
      %v5497 = vrot.slane %v5455, 1
      %v5498 = vsel %vm702, %v5495, %v5497
      %v5499 = vrot.slane %v5464, 1
      %v5500 = vsel %vm702, %v5497, %v5499
      %v5501 = vrot.slane %v5465, 1
      %v5502 = vsel %vm702, %v5499, %v5501
      %v5503 = vrot.slane %v5467, 1
      %v5504 = vsel %vm702, %v5501, %v5503
      %5523 = vmatpush.msra.mxu0 %v5368
      %5524 = vmatpush.msra.mxu0 %v5367
      %5525 = vmatpush.msra.mxu0 %v5366
      %5526 = vmatpush.msra.mxu0 %v5365
      %5527 = vmatpush.msra.mxu0 %v5364
      %5528 = vmatpush.msra.mxu0 %v5363
      %5529 = vmatpush.msra.mxu0 %v5362
      %5530 = vmatpush.msra.mxu0 %v5361
      %5531 = vmatpush.msra.mxu0 %v5360
      %5532 = vmatpush.msra.mxu0 %v5359
      %5533 = vmatpush.msra.mxu0 %v5358
      %5534 = vmatpush.msra.mxu0 %v5357
      %5535 = vmatpush.msra.mxu0 %v5356
      %5536 = vmatpush.msra.mxu0 %v5355
      %5537 = vmatpush.msra.mxu0 %v5354
      %5538 = vmatpush.msra.mxu0 %v5353
      %5539 = vmatmul.f32.gmra.mxu0 %v5470
      %v5540 = vpop.f32.mrf.mxu0
      %v5541 = vadd.f32 0.0, %v5540
      %5542 = vmatmul.f32.gmra.mxu0 %v5472
      %v5543 = vpop.f32.mrf.mxu0
      %v5544 = vadd.f32 0.0, %v5543
      %5545 = vmatmul.f32.gmra.mxu0 %v5474
      %v5546 = vpop.f32.mrf.mxu0
      %v5547 = vadd.f32 0.0, %v5546
      %5548 = vmatmul.f32.gmra.mxu0 %v5476
      %v5549 = vpop.f32.mrf.mxu0
      %v5550 = vadd.f32 0.0, %v5549
      %5551 = vmatmul.f32.gmra.mxu0 %v5478
      %v5552 = vpop.f32.mrf.mxu0
      %v5553 = vadd.f32 0.0, %v5552
      %5554 = vmatmul.f32.gmra.mxu0 %v5480
      %v5555 = vpop.f32.mrf.mxu0
      %v5556 = vadd.f32 0.0, %v5555
      %5557 = vmatmul.f32.gmra.mxu0 %v5482
      %v5558 = vpop.f32.mrf.mxu0
      %v5559 = vadd.f32 0.0, %v5558
      %5560 = vmatmul.f32.gmra.mxu0 %v5484
      %v5561 = vpop.f32.mrf.mxu0
      %v5562 = vadd.f32 0.0, %v5561
      %5563 = vmatmul.f32.gmra.mxu0 %v5486
      %v5564 = vpop.f32.mrf.mxu0
      %v5565 = vadd.f32 0.0, %v5564
      %5566 = vmatmul.f32.gmra.mxu0 %v5488
      %v5567 = vpop.f32.mrf.mxu0
      %v5568 = vadd.f32 0.0, %v5567
      %5569 = vmatmul.f32.gmra.mxu0 %v5490
      %v5570 = vpop.f32.mrf.mxu0
      %v5571 = vadd.f32 0.0, %v5570
      %5572 = vmatmul.f32.gmra.mxu0 %v5492
      %v5573 = vpop.f32.mrf.mxu0
      %v5574 = vadd.f32 0.0, %v5573
      %5575 = vmatmul.f32.gmra.mxu0 %v5494
      %v5576 = vpop.f32.mrf.mxu0
      %v5577 = vadd.f32 0.0, %v5576
      %5578 = vmatmul.f32.gmra.mxu0 %v5496
      %v5579 = vpop.f32.mrf.mxu0
      %v5580 = vadd.f32 0.0, %v5579
      %5581 = vmatmul.f32.gmra.mxu0 %v5498
      %v5582 = vpop.f32.mrf.mxu0
      %v5583 = vadd.f32 0.0, %v5582
      %5584 = vmatmul.f32.gmra.mxu0 %v5500
      %v5585 = vpop.f32.mrf.mxu0
      %v5586 = vadd.f32 0.0, %v5585
      %5587 = vmatmul.f32.gmra.mxu0 %v5502
      %v5588 = vpop.f32.mrf.mxu0
      %v5589 = vadd.f32 0.0, %v5588
      %5590 = vmatmul.f32.gmra.mxu0 %v5504
      %v5591 = vpop.f32.mrf.mxu0
      %v5592 = vadd.f32 0.0, %v5591
      %5593 = vdwg.mxu0
      %v5594 = vadd.f32 %v5334, %v5541
      %v5595 = vadd.f32 %v5335, %v5544
      %v5596 = vadd.f32 %v5336, %v5547
      %v5597 = vadd.f32 %v5337, %v5550
      %v5598 = vadd.f32 %v5338, %v5553
      %v5599 = vadd.f32 %v5339, %v5556
      %v5600 = vadd.f32 %v5340, %v5559
      %v5601 = vadd.f32 %v5341, %v5562
      %v5602 = vadd.f32 %v5342, %v5565
      %v5603 = vadd.f32 %v5343, %v5568
      %v5604 = vadd.f32 %v5344, %v5571
      %v5605 = vadd.f32 %v5345, %v5574
      %v5606 = vadd.f32 %v5346, %v5577
      %v5607 = vadd.f32 %v5347, %v5580
      %v5608 = vadd.f32 %v5348, %v5583
      %v5609 = vadd.f32 %v5349, %v5586
      %v5610 = vadd.f32 %v5350, %v5589
      %v5611 = vadd.f32 %v5351, %v5592
      %s5612 = scalar_lea.vmem %s2, 1024
      %v5613 = vld [vmem:[%s5612] sm:$0xff]
      %v5614 = vld [vmem:[%s5612 + $0x8] sm:$0xff]
      %v5615 = vld [vmem:[%s5612 + $0x10] sm:$0xff]
      %v5616 = vld [vmem:[%s5612 + $0x18] sm:$0xff]
      %v5617 = vld [vmem:[%s5612 + $0x20] sm:$0xff]
      %v5618 = vld [vmem:[%s5612 + $0x28] sm:$0xff]
      %v5619 = vld [vmem:[%s5612 + $0x30] sm:$0xff]
      %v5620 = vld [vmem:[%s5612 + $0x38] sm:$0xff]
      %v5621 = vld [vmem:[%s5612 + $0x40] sm:$0xff]
      %v5622 = vld [vmem:[%s5612 + $0x48] sm:$0xff]
      %v5623 = vld [vmem:[%s5612 + $0x50] sm:$0xff]
      %v5624 = vld [vmem:[%s5612 + $0x58] sm:$0xff]
      %v5625 = vld [vmem:[%s5612 + $0x60] sm:$0xff]
      %v5626 = vld [vmem:[%s5612 + $0x68] sm:$0xff]
      %v5627 = vld [vmem:[%s5612 + $0x70] sm:$0xff]
      %v5628 = vld [vmem:[%s5612 + $0x78] sm:$0xff]
      %5629 = vst [vmem:[#allocation1] ss:$4 sm:$0xff] %v3716
      %s5630 = scalar_lea.vmem [#allocation1], 1
      %5631 = vst [vmem:[%s5630] ss:$4 sm:$0xff] %v3717
      %s5632 = scalar_lea.vmem [#allocation1], 2
      %5633 = vst [vmem:[%s5632] ss:$4 sm:$0xff] %v3718
      %s5634 = scalar_lea.vmem [#allocation1], 3
      %5635 = vst [vmem:[%s5634] ss:$4 sm:$0xff] %v3649
      %s5636 = scalar_lea.vmem [#allocation1], 32
      %5637 = vst [vmem:[%s5636] ss:$4 sm:$0xff] %v3719
      %s5638 = scalar_lea.vmem [#allocation1], 33
      %5639 = vst [vmem:[%s5638] ss:$4 sm:$0xff] %v3720
      %s5640 = scalar_lea.vmem [#allocation1], 34
      %5641 = vst [vmem:[%s5640] ss:$4 sm:$0xff] %v3721
      %s5642 = scalar_lea.vmem [#allocation1], 35
      %5643 = vst [vmem:[%s5642] ss:$4 sm:$0xff] %v3650
      %v5644 = vld.sshfl [vmem:[#allocation1] sm:$0xff pattern:$0x73625140]
      %v5645 = vld.sshfl [vmem:[#allocation1 + $0x20] sm:$0xff pattern:$0x73625140]
      %5646 = vst [vmem:[#allocation1] ss:$4 sm:$0xff] %v3651
      %5647 = vst [vmem:[%s5630] ss:$4 sm:$0xff] %v3722
      %5648 = vst [vmem:[%s5632] ss:$4 sm:$0xff] %v3723
      %5649 = vst [vmem:[%s5634] ss:$4 sm:$0xff] %v3724
      %5650 = vst [vmem:[%s5636] ss:$4 sm:$0xff] %v3652
      %5651 = vst [vmem:[%s5638] ss:$4 sm:$0xff] %v3725
      %5652 = vst [vmem:[%s5640] ss:$4 sm:$0xff] %v3726
      %5653 = vst [vmem:[%s5642] ss:$4 sm:$0xff] %v3727
      %v5654 = vld.sshfl [vmem:[#allocation1] sm:$0xff pattern:$0x73625140]
      %v5655 = vld.sshfl [vmem:[#allocation1 + $0x20] sm:$0xff pattern:$0x73625140]
      %5656 = vst [vmem:[#allocation1] ss:$4 sm:$0xff] %v3653
      %5657 = vst [vmem:[%s5630] ss:$4 sm:$0xff] %v3654
      %5658 = vst [vmem:[%s5632] ss:$4 sm:$0xff] %v3728
      %5659 = vst [vmem:[%s5634] ss:$4 sm:$0xff] %v3729
      %5660 = vst [vmem:[%s5636] ss:$4 sm:$0xff] %v3730
      %5661 = vst [vmem:[%s5638] ss:$4 sm:$0xff] %v3655
      %5662 = vst [vmem:[%s5640] ss:$4 sm:$0xff] %v3731
      %5663 = vst [vmem:[%s5642] ss:$4 sm:$0xff] %v3732
      %v5664 = vld.sshfl [vmem:[#allocation1] sm:$0xff pattern:$0x73625140]
      %v5665 = vld.sshfl [vmem:[#allocation1 + $0x20] sm:$0xff pattern:$0x73625140]
      %5666 = vst [vmem:[#allocation1] ss:$4 sm:$0xff] %v3733
      %5667 = vst [vmem:[%s5630] ss:$4 sm:$0xff] %v3656
      %5668 = vst [vmem:[%s5632] ss:$4 sm:$0xff] %v3657
      %5669 = vst [vmem:[%s5634] ss:$4 sm:$0xff] %v3734
      %5670 = vst [vmem:[%s5636] ss:$4 sm:$0xff] %v3735
      %5671 = vst [vmem:[%s5638] ss:$4 sm:$0xff] %v3736
      %5672 = vst [vmem:[%s5640] ss:$4 sm:$0xff] %v3658
      %5673 = vst [vmem:[%s5642] ss:$4 sm:$0xff] %v3737
      %v5674 = vld.sshfl [vmem:[#allocation1] sm:$0xff pattern:$0x73625140]
      %v5675 = vld.sshfl [vmem:[#allocation1 + $0x20] sm:$0xff pattern:$0x73625140]
      %5676 = vst [vmem:[#allocation1] ss:$4 sm:$0xff] %v3738
      %5677 = vst [vmem:[%s5630] ss:$4 sm:$0xff] %v3739
      %5678 = vst [vmem:[%s5632] ss:$4 sm:$0xff] %v3659
      %5679 = vst [vmem:[%s5634] ss:$4 sm:$0xff] %v3660
      %5680 = vst [vmem:[%s5636] ss:$4 sm:$0xff] %v3740
      %5681 = vst [vmem:[%s5638] ss:$4 sm:$0xff] %v3741
      %5682 = vst [vmem:[%s5640] ss:$4 sm:$0xff] %v3742
      %5683 = vst [vmem:[%s5642] ss:$4 sm:$0xff] %v3661
      %v5684 = vld.sshfl [vmem:[#allocation1] sm:$0xff pattern:$0x73625140]
      %v5685 = vld.sshfl [vmem:[#allocation1 + $0x20] sm:$0xff pattern:$0x73625140]
      %5686 = vst [vmem:[#allocation1] ss:$4 sm:$0xff] %v3743
      %5687 = vst [vmem:[%s5630] ss:$4 sm:$0xff] %v3744
      %5688 = vst [vmem:[%s5632] ss:$4 sm:$0xff] %v3745
      %5689 = vst [vmem:[%s5634] ss:$4 sm:$0xff] %v3662
      %5690 = vst [vmem:[%s5636] ss:$4 sm:$0xff] %v3663
      %5691 = vst [vmem:[%s5638] ss:$4 sm:$0xff] %v3746
      %5692 = vst [vmem:[%s5640] ss:$4 sm:$0xff] %v3747
      %5693 = vst [vmem:[%s5642] ss:$4 sm:$0xff] %v3748
      %v5694 = vld.sshfl [vmem:[#allocation1] sm:$0xff pattern:$0x73625140]
      %v5695 = vld.sshfl [vmem:[#allocation1 + $0x20] sm:$0xff pattern:$0x73625140]
      %5696 = vst [vmem:[#allocation1] ss:$4 sm:$0xff] %v3664
      %5697 = vst [vmem:[%s5630] ss:$4 sm:$0xff] %v3749
      %5698 = vst [vmem:[%s5632] ss:$4 sm:$0xff] %v3750
      %5699 = vst [vmem:[%s5634] ss:$4 sm:$0xff] %v3751
      %5700 = vst [vmem:[%s5636] ss:$4 sm:$0xff] %v3665
      %5701 = vst [vmem:[%s5638] ss:$4 sm:$0xff] %v3666
      %5702 = vst [vmem:[%s5640] ss:$4 sm:$0xff] %v3752
      %5703 = vst [vmem:[%s5642] ss:$4 sm:$0xff] %v3753
      %v5704 = vld.sshfl [vmem:[#allocation1] sm:$0xff pattern:$0x73625140]
      %v5705 = vld.sshfl [vmem:[#allocation1 + $0x20] sm:$0xff pattern:$0x73625140]
      %5706 = vst [vmem:[#allocation1] ss:$4 sm:$0xff] %v3754
      %5707 = vst [vmem:[%s5630] ss:$4 sm:$0xff] %v3667
      %5708 = vst [vmem:[%s5632] ss:$4 sm:$0xff] %v3755
      %5709 = vst [vmem:[%s5634] ss:$4 sm:$0xff] %v3756
      %5710 = vst [vmem:[%s5636] ss:$4 sm:$0xff] %v3757
      %5711 = vst [vmem:[%s5638] ss:$4 sm:$0xff] %v3668
      %5712 = vst [vmem:[%s5640] ss:$4 sm:$0xff] %v3669
      %5713 = vst [vmem:[%s5642] ss:$4 sm:$0xff] %v3758
      %v5714 = vld.sshfl [vmem:[#allocation1] sm:$0xff pattern:$0x73625140]
      %v5715 = vld.sshfl [vmem:[#allocation1 + $0x20] sm:$0xff pattern:$0x73625140]
      %5716 = vst [vmem:[#allocation1] ss:$4 sm:$0xff] %v3759
      %5717 = vst [vmem:[%s5630] ss:$4 sm:$0xff] %v3760
      %5718 = vst [vmem:[%s5632] ss:$4 sm:$0xff] %v3670
      %5719 = vst [vmem:[%s5634] ss:$4 sm:$0xff] %v3761
      %5720 = vst [vmem:[%s5636] ss:$4 sm:$0xff] %v3762
      %5721 = vst [vmem:[%s5638] ss:$4 sm:$0xff] %v3763
      %5722 = vst [vmem:[%s5640] ss:$4 sm:$0xff] %v3671
      %5723 = vst [vmem:[%s5642] ss:$4 sm:$0xff] %v3672
      %v5724 = vld.sshfl [vmem:[#allocation1] sm:$0xff pattern:$0x73625140]
      %v5725 = vld.sshfl [vmem:[#allocation1 + $0x20] sm:$0xff pattern:$0x73625140]
      %5744 = vmatpush.msra.mxu0 %v5628
      %5745 = vmatpush.msra.mxu0 %v5627
      %5746 = vmatpush.msra.mxu0 %v5626
      %5747 = vmatpush.msra.mxu0 %v5625
      %5748 = vmatpush.msra.mxu0 %v5624
      %5749 = vmatpush.msra.mxu0 %v5623
      %5750 = vmatpush.msra.mxu0 %v5622
      %5751 = vmatpush.msra.mxu0 %v5621
      %5752 = vmatpush.msra.mxu0 %v5620
      %5753 = vmatpush.msra.mxu0 %v5619
      %5754 = vmatpush.msra.mxu0 %v5618
      %5755 = vmatpush.msra.mxu0 %v5617
      %5756 = vmatpush.msra.mxu0 %v5616
      %5757 = vmatpush.msra.mxu0 %v5615
      %5758 = vmatpush.msra.mxu0 %v5614
      %5759 = vmatpush.msra.mxu0 %v5613
      %5760 = vmatmul.f32.gmra.mxu0 %v5644
      %v5761 = vpop.f32.mrf.mxu0
      %v5762 = vadd.f32 0.0, %v5761
      %5763 = vmatmul.f32.gmra.mxu0 %v5645
      %v5764 = vpop.f32.mrf.mxu0
      %v5765 = vadd.f32 0.0, %v5764
      %5766 = vmatmul.f32.gmra.mxu0 %v5654
      %v5767 = vpop.f32.mrf.mxu0
      %v5768 = vadd.f32 0.0, %v5767
      %5769 = vmatmul.f32.gmra.mxu0 %v5655
      %v5770 = vpop.f32.mrf.mxu0
      %v5771 = vadd.f32 0.0, %v5770
      %5772 = vmatmul.f32.gmra.mxu0 %v5664
      %v5773 = vpop.f32.mrf.mxu0
      %v5774 = vadd.f32 0.0, %v5773
      %5775 = vmatmul.f32.gmra.mxu0 %v5665
      %v5776 = vpop.f32.mrf.mxu0
      %v5777 = vadd.f32 0.0, %v5776
      %5778 = vmatmul.f32.gmra.mxu0 %v5674
      %v5779 = vpop.f32.mrf.mxu0
      %v5780 = vadd.f32 0.0, %v5779
      %5781 = vmatmul.f32.gmra.mxu0 %v5675
      %v5782 = vpop.f32.mrf.mxu0
      %v5783 = vadd.f32 0.0, %v5782
      %5784 = vmatmul.f32.gmra.mxu0 %v5684
      %v5785 = vpop.f32.mrf.mxu0
      %v5786 = vadd.f32 0.0, %v5785
      %5787 = vmatmul.f32.gmra.mxu0 %v5685
      %v5788 = vpop.f32.mrf.mxu0
      %v5789 = vadd.f32 0.0, %v5788
      %5790 = vmatmul.f32.gmra.mxu0 %v5694
      %v5791 = vpop.f32.mrf.mxu0
      %v5792 = vadd.f32 0.0, %v5791
      %5793 = vmatmul.f32.gmra.mxu0 %v5695
      %v5794 = vpop.f32.mrf.mxu0
      %v5795 = vadd.f32 0.0, %v5794
      %5796 = vmatmul.f32.gmra.mxu0 %v5704
      %v5797 = vpop.f32.mrf.mxu0
      %v5798 = vadd.f32 0.0, %v5797
      %5799 = vmatmul.f32.gmra.mxu0 %v5705
      %v5800 = vpop.f32.mrf.mxu0
      %v5801 = vadd.f32 0.0, %v5800
      %5802 = vmatmul.f32.gmra.mxu0 %v5714
      %v5803 = vpop.f32.mrf.mxu0
      %v5804 = vadd.f32 0.0, %v5803
      %5805 = vmatmul.f32.gmra.mxu0 %v5715
      %v5806 = vpop.f32.mrf.mxu0
      %v5807 = vadd.f32 0.0, %v5806
      %5808 = vmatmul.f32.gmra.mxu0 %v5724
      %v5809 = vpop.f32.mrf.mxu0
      %v5810 = vadd.f32 0.0, %v5809
      %5811 = vmatmul.f32.gmra.mxu0 %v5725
      %v5812 = vpop.f32.mrf.mxu0
      %v5813 = vadd.f32 0.0, %v5812
      %5814 = vdwg.mxu0
      %v5815 = vadd.f32 %v5594, %v5762
      %v5816 = vadd.f32 %v5595, %v5765
      %v5817 = vadd.f32 %v5596, %v5768
      %v5818 = vadd.f32 %v5597, %v5771
      %v5819 = vadd.f32 %v5598, %v5774
      %v5820 = vadd.f32 %v5599, %v5777
      %v5821 = vadd.f32 %v5600, %v5780
      %v5822 = vadd.f32 %v5601, %v5783
      %v5823 = vadd.f32 %v5602, %v5786
      %v5824 = vadd.f32 %v5603, %v5789
      %v5825 = vadd.f32 %v5604, %v5792
      %v5826 = vadd.f32 %v5605, %v5795
      %v5827 = vadd.f32 %v5606, %v5798
      %v5828 = vadd.f32 %v5607, %v5801
      %v5829 = vadd.f32 %v5608, %v5804
      %v5830 = vadd.f32 %v5609, %v5807
      %v5831 = vadd.f32 %v5610, %v5810
      %v5832 = vadd.f32 %v5611, %v5813
      %v5833 = vld [vmem:[%s5] sm:$0x1]
      %v5835 = vperm.slane %v5833, 0
      %v5837 = vmul.f32 %v5815, %v5835
      %v5838 = vmul.f32 %v5816, %v5835
      %v5839 = vmul.f32 %v5817, %v5835
      %v5840 = vmul.f32 %v5818, %v5835
      %v5841 = vmul.f32 %v5819, %v5835
      %v5842 = vmul.f32 %v5820, %v5835
      %v5843 = vmul.f32 %v5821, %v5835
      %v5844 = vmul.f32 %v5822, %v5835
      %v5845 = vmul.f32 %v5823, %v5835
      %v5846 = vmul.f32 %v5824, %v5835
      %v5847 = vmul.f32 %v5825, %v5835
      %v5848 = vmul.f32 %v5826, %v5835
      %v5849 = vmul.f32 %v5827, %v5835
      %v5850 = vmul.f32 %v5828, %v5835
      %v5851 = vmul.f32 %v5829, %v5835
      %v5852 = vmul.f32 %v5830, %v5835
      %v5853 = vmul.f32 %v5831, %v5835
      %v5854 = vmul.f32 %v5832, %v5835
      %v5855 = vld [vmem:[%s6] sm:$0x1]
      %v5857 = vperm.slane %v5855, 0
      %v5859 = vadd.f32 %v5837, %v5857
      %v5860 = vadd.f32 %v5838, %v5857
      %v5861 = vadd.f32 %v5839, %v5857
      %v5862 = vadd.f32 %v5840, %v5857
      %v5863 = vadd.f32 %v5841, %v5857
      %v5864 = vadd.f32 %v5842, %v5857
      %v5865 = vadd.f32 %v5843, %v5857
      %v5866 = vadd.f32 %v5844, %v5857
      %v5867 = vadd.f32 %v5845, %v5857
      %v5868 = vadd.f32 %v5846, %v5857
      %v5869 = vadd.f32 %v5847, %v5857
      %v5870 = vadd.f32 %v5848, %v5857
      %v5871 = vadd.f32 %v5849, %v5857
      %v5872 = vadd.f32 %v5850, %v5857
      %v5873 = vadd.f32 %v5851, %v5857
      %v5874 = vadd.f32 %v5852, %v5857
      %v5875 = vadd.f32 %v5853, %v5857
      %v5876 = vadd.f32 %v5854, %v5857
      %v5877 = vmax.f32 %v5859, 0.0
      %v5878 = vmax.f32 %v5860, 0.0
      %v5879 = vmax.f32 %v5861, 0.0
      %v5880 = vmax.f32 %v5862, 0.0
      %v5881 = vmax.f32 %v5863, 0.0
      %v5882 = vmax.f32 %v5864, 0.0
      %v5883 = vmax.f32 %v5865, 0.0
      %v5884 = vmax.f32 %v5866, 0.0
      %v5885 = vmax.f32 %v5867, 0.0
      %v5886 = vmax.f32 %v5868, 0.0
      %v5887 = vmax.f32 %v5869, 0.0
      %v5888 = vmax.f32 %v5870, 0.0
      %v5889 = vmax.f32 %v5871, 0.0
      %v5890 = vmax.f32 %v5872, 0.0
      %v5891 = vmax.f32 %v5873, 0.0
      %v5892 = vmax.f32 %v5874, 0.0
      %v5893 = vmax.f32 %v5875, 0.0
      %v5894 = vmax.f32 %v5876, 0.0
      %v5913 = vrot.slane %v5877, 2
      %v5914 = vrot.slane %v5877, 4
      %v5915 = vrot.slane %v5877, 6
      %v5916 = vrot.slane %v5878, 2
      %v5917 = vrot.slane %v5878, 4
      %v5918 = vrot.slane %v5878, 6
      %v5919 = vrot.slane %v5879, 2
      %v5920 = vrot.slane %v5879, 4
      %v5921 = vrot.slane %v5879, 6
      %v5922 = vrot.slane %v5880, 2
      %v5923 = vrot.slane %v5880, 4
      %v5924 = vrot.slane %v5880, 6
      %v5925 = vrot.slane %v5881, 4
      %v5926 = vrot.slane %v5881, 6
      %v5927 = vrot.slane %v5882, 2
      %v5928 = vrot.slane %v5882, 4
      %v5929 = vrot.slane %v5882, 6
      %v5930 = vrot.slane %v5883, 2
      %v5931 = vrot.slane %v5883, 6
      %v5932 = vrot.slane %v5884, 2
      %v5933 = vrot.slane %v5884, 4
      %v5934 = vrot.slane %v5884, 6
      %v5935 = vrot.slane %v5885, 2
      %v5936 = vrot.slane %v5885, 4
      %v5937 = vrot.slane %v5886, 2
      %v5938 = vrot.slane %v5886, 4
      %v5939 = vrot.slane %v5886, 6
      %v5940 = vrot.slane %v5887, 2
      %v5941 = vrot.slane %v5887, 4
      %v5942 = vrot.slane %v5887, 6
      %v5943 = vrot.slane %v5888, 2
      %v5944 = vrot.slane %v5888, 4
      %v5945 = vrot.slane %v5888, 6
      %v5946 = vrot.slane %v5889, 2
      %v5947 = vrot.slane %v5889, 4
      %v5948 = vrot.slane %v5889, 6
      %v5949 = vrot.slane %v5890, 4
      %v5950 = vrot.slane %v5890, 6
      %v5951 = vrot.slane %v5891, 2
      %v5952 = vrot.slane %v5891, 4
      %v5953 = vrot.slane %v5891, 6
      %v5954 = vrot.slane %v5892, 2
      %v5955 = vrot.slane %v5892, 6
      %v5956 = vrot.slane %v5893, 2
      %v5957 = vrot.slane %v5893, 4
      %v5958 = vrot.slane %v5893, 6
      %v5959 = vrot.slane %v5894, 2
      %v5960 = vrot.slane %v5894, 4
      %5961 = vst [vmem:[#allocation1] ss:$4 sm:$0xff] %v5877
      %s5962 = scalar_lea.vmem [#allocation1], 1
      %5963 = vst [vmem:[%s5962] ss:$4 sm:$0xff] %v5913
      %s5964 = scalar_lea.vmem [#allocation1], 2
      %5965 = vst [vmem:[%s5964] ss:$4 sm:$0xff] %v5914
      %s5966 = scalar_lea.vmem [#allocation1], 3
      %5967 = vst [vmem:[%s5966] ss:$4 sm:$0xff] %v5915
      %s5968 = scalar_lea.vmem [#allocation1], 32
      %5969 = vst [vmem:[%s5968] ss:$4 sm:$0xff] %v5878
      %s5970 = scalar_lea.vmem [#allocation1], 33
      %5971 = vst [vmem:[%s5970] ss:$4 sm:$0xff] %v5916
      %s5972 = scalar_lea.vmem [#allocation1], 34
      %5973 = vst [vmem:[%s5972] ss:$4 sm:$0xff] %v5917
      %s5974 = scalar_lea.vmem [#allocation1], 35
      %5975 = vst [vmem:[%s5974] ss:$4 sm:$0xff] %v5918
      %v5976 = vld.sshfl [vmem:[#allocation1] sm:$0xff pattern:$0x73625140]
      %v5977 = vld.sshfl [vmem:[#allocation1 + $0x20] sm:$0xff pattern:$0x73625140]
      %5978 = vst [vmem:[#allocation1] ss:$4 sm:$0xff] %v5919
      %5979 = vst [vmem:[%s5962] ss:$4 sm:$0xff] %v5920
      %5980 = vst [vmem:[%s5964] ss:$4 sm:$0xff] %v5921
      %5981 = vst [vmem:[%s5966] ss:$4 sm:$0xff] %v5880
      %5982 = vst [vmem:[%s5968] ss:$4 sm:$0xff] %v5922
      %5983 = vst [vmem:[%s5970] ss:$4 sm:$0xff] %v5923
      %5984 = vst [vmem:[%s5972] ss:$4 sm:$0xff] %v5924
      %5985 = vst [vmem:[%s5974] ss:$4 sm:$0xff] %v5881
      %v5986 = vld.sshfl [vmem:[#allocation1] sm:$0xff pattern:$0x73625140]
      %v5987 = vld.sshfl [vmem:[#allocation1 + $0x20] sm:$0xff pattern:$0x73625140]
      %5988 = vst [vmem:[#allocation1] ss:$4 sm:$0xff] %v5925
      %5989 = vst [vmem:[%s5962] ss:$4 sm:$0xff] %v5926
      %5990 = vst [vmem:[%s5964] ss:$4 sm:$0xff] %v5882
      %5991 = vst [vmem:[%s5966] ss:$4 sm:$0xff] %v5927
      %5992 = vst [vmem:[%s5968] ss:$4 sm:$0xff] %v5928
      %5993 = vst [vmem:[%s5970] ss:$4 sm:$0xff] %v5929
      %5994 = vst [vmem:[%s5972] ss:$4 sm:$0xff] %v5883
      %5995 = vst [vmem:[%s5974] ss:$4 sm:$0xff] %v5930
      %v5996 = vld.sshfl [vmem:[#allocation1] sm:$0xff pattern:$0x73625140]
      %v5997 = vld.sshfl [vmem:[#allocation1 + $0x20] sm:$0xff pattern:$0x73625140]
      %5998 = vst [vmem:[#allocation1] ss:$4 sm:$0xff] %v5931
      %5999 = vst [vmem:[%s5962] ss:$4 sm:$0xff] %v5884
      %6000 = vst [vmem:[%s5964] ss:$4 sm:$0xff] %v5932
      %6001 = vst [vmem:[%s5966] ss:$4 sm:$0xff] %v5933
      %6002 = vst [vmem:[%s5968] ss:$4 sm:$0xff] %v5934
      %6003 = vst [vmem:[%s5970] ss:$4 sm:$0xff] %v5885
      %6004 = vst [vmem:[%s5972] ss:$4 sm:$0xff] %v5935
      %6005 = vst [vmem:[%s5974] ss:$4 sm:$0xff] %v5936
      %v6006 = vld.sshfl [vmem:[#allocation1] sm:$0xff pattern:$0x73625140]
      %v6007 = vld.sshfl [vmem:[#allocation1 + $0x20] sm:$0xff pattern:$0x73625140]
      %6008 = vst [vmem:[#allocation1] ss:$4 sm:$0xff] %v5886
      %6009 = vst [vmem:[%s5962] ss:$4 sm:$0xff] %v5937
      %6010 = vst [vmem:[%s5964] ss:$4 sm:$0xff] %v5938
      %6011 = vst [vmem:[%s5966] ss:$4 sm:$0xff] %v5939
      %6012 = vst [vmem:[%s5968] ss:$4 sm:$0xff] %v5887
      %6013 = vst [vmem:[%s5970] ss:$4 sm:$0xff] %v5940
      %6014 = vst [vmem:[%s5972] ss:$4 sm:$0xff] %v5941
      %6015 = vst [vmem:[%s5974] ss:$4 sm:$0xff] %v5942
      %v6016 = vld.sshfl [vmem:[#allocation1] sm:$0xff pattern:$0x73625140]
      %v6017 = vld.sshfl [vmem:[#allocation1 + $0x20] sm:$0xff pattern:$0x73625140]
      %6018 = vst [vmem:[#allocation1] ss:$4 sm:$0xff] %v5943
      %6019 = vst [vmem:[%s5962] ss:$4 sm:$0xff] %v5944
      %6020 = vst [vmem:[%s5964] ss:$4 sm:$0xff] %v5945
      %6021 = vst [vmem:[%s5966] ss:$4 sm:$0xff] %v5889
      %6022 = vst [vmem:[%s5968] ss:$4 sm:$0xff] %v5946
      %6023 = vst [vmem:[%s5970] ss:$4 sm:$0xff] %v5947
      %6024 = vst [vmem:[%s5972] ss:$4 sm:$0xff] %v5948
      %6025 = vst [vmem:[%s5974] ss:$4 sm:$0xff] %v5890
      %v6026 = vld.sshfl [vmem:[#allocation1] sm:$0xff pattern:$0x73625140]
      %v6027 = vld.sshfl [vmem:[#allocation1 + $0x20] sm:$0xff pattern:$0x73625140]
      %6028 = vst [vmem:[#allocation1] ss:$4 sm:$0xff] %v5949
      %6029 = vst [vmem:[%s5962] ss:$4 sm:$0xff] %v5950
      %6030 = vst [vmem:[%s5964] ss:$4 sm:$0xff] %v5891
      %6031 = vst [vmem:[%s5966] ss:$4 sm:$0xff] %v5951
      %6032 = vst [vmem:[%s5968] ss:$4 sm:$0xff] %v5952
      %6033 = vst [vmem:[%s5970] ss:$4 sm:$0xff] %v5953
      %6034 = vst [vmem:[%s5972] ss:$4 sm:$0xff] %v5892
      %6035 = vst [vmem:[%s5974] ss:$4 sm:$0xff] %v5954
      %v6036 = vld.sshfl [vmem:[#allocation1] sm:$0xff pattern:$0x73625140]
      %v6037 = vld.sshfl [vmem:[#allocation1 + $0x20] sm:$0xff pattern:$0x73625140]
      %6038 = vst [vmem:[#allocation1] ss:$4 sm:$0xff] %v5955
      %6039 = vst [vmem:[%s5962] ss:$4 sm:$0xff] %v5893
      %6040 = vst [vmem:[%s5964] ss:$4 sm:$0xff] %v5956
      %6041 = vst [vmem:[%s5966] ss:$4 sm:$0xff] %v5957
      %6042 = vst [vmem:[%s5968] ss:$4 sm:$0xff] %v5958
      %6043 = vst [vmem:[%s5970] ss:$4 sm:$0xff] %v5894
      %6044 = vst [vmem:[%s5972] ss:$4 sm:$0xff] %v5959
      %6045 = vst [vmem:[%s5974] ss:$4 sm:$0xff] %v5960
      %v6046 = vld.sshfl [vmem:[#allocation1] sm:$0xff pattern:$0x73625140]
      %v6047 = vld.sshfl [vmem:[#allocation1 + $0x20] sm:$0xff pattern:$0x73625140]
      %6064 = vst [vmem:[%s256] sm:$0xff] %v5976
      %6065 = vst [vmem:[%s256 + $0x8] sm:$0xff] %v5977
      %6066 = vst [vmem:[%s256 + $0x10] sm:$0xff] %v5986
      %6067 = vst [vmem:[%s256 + $0x18] sm:$0xff] %v5987
      %6068 = vst [vmem:[%s256 + $0x20] sm:$0xff] %v5996
      %6069 = vst [vmem:[%s256 + $0x28] sm:$0xff] %v5997
      %6070 = vst [vmem:[%s256 + $0x30] sm:$0xff] %v6006
      %6071 = vst [vmem:[%s256 + $0x38] sm:$0xff] %v6007
      %6072 = vst [vmem:[%s256 + $0x40] sm:$0xff] %v6016
      %6073 = vst [vmem:[%s256 + $0x48] sm:$0xff] %v6017
      %6074 = vst [vmem:[%s256 + $0x50] sm:$0xff] %v6026
      %6075 = vst [vmem:[%s256 + $0x58] sm:$0xff] %v6027
      %6076 = vst [vmem:[%s256 + $0x60] sm:$0xff] %v6036
      %6077 = vst [vmem:[%s256 + $0x68] sm:$0xff] %v6037
      %6078 = vst [vmem:[%s256 + $0x70] sm:$0xff] %v6046
      %6079 = vst [vmem:[%s256 + $0x78] sm:$0xff] %v6047
      %s6080 = smul.u32 8, %s23
      %p6081 = scmp.lt.s32.totalorder %s22, 1
      %s6082 = scalar_select %p6081, %s22, 1
      %p6083 = scmp.lt.s32.totalorder %s6080, 15
      %s6084 = scalar_select %p6083, %s6080, 15
      %s6085 = smul.addr %s6084, 2
      %s6086 = smul.addr %s6082, 32
      %s6087 = sadd.s32 %s6085, %s6086
      %s6088 = smul.addr %s6087, 8
      %s6089 = scalar_lea.vmem %s7, %s6088
      // Predicated region
      $region67: #{double_conv.1} parent=43 // pred_check
        %p6090 = pneg %p176
      $region68: #{double_conv.1} parent=43 // pred_check_branch
        %6092 = sbr.rel (%p6090) target = $region70
      $region69: #{double_conv.1} parent=43 // pred_region
        %s6093 = smul.u32 8, %s23
      $region70: #{double_conv.1} parent=43 // pred_fallthru
        _
    $region44: #{double_conv.1} parent=5 // pred_fallthru
      _
    %p6094 = scmp.le.s32.totalorder 2, %s13
    // Predicated region
    $region71: #{double_conv.1} parent=5 // pred_check
      %p6095 = pneg %p6094
    $region72: #{double_conv.1} parent=5 // pred_check_branch
      %6097 = sbr.rel (%p6095) target = $region74
    $region73: #{double_conv.1} parent=5 // pred_region
      %s6098 = ssub.s32 %s13, 2
      // Predicated region
      $region75: #{double_conv.1} parent=73 // pred_check
        %p6099 = pneg %p182
      $region76: #{double_conv.1} parent=73 // pred_check_branch
        %6101 = sbr.rel (%p6099) target = $region78
      $region77: #{double_conv.1} parent=73 // pred_region
        %s6102 = smul.u32 8, %s25
        %p6103 = scmp.lt.s32.totalorder %s24, 1
        %s6104 = scalar_select %p6103, %s24, 1
        %p6105 = scmp.lt.s32.totalorder %s6102, 15
        %s6106 = scalar_select %p6105, %s6102, 15
        %s6107 = smul.addr %s6106, 2
        %s6108 = smul.addr %s6104, 32
        %s6109 = sadd.s32 %s6107, %s6108
        %s6110 = smul.addr %s6109, 8
        %s6111 = scalar_lea.vmem %s7, %s6110
      $region78: #{double_conv.1} parent=73 // pred_fallthru
        _
    $region74: #{double_conv.1} parent=5 // pred_fallthru
      _
  $region6: #{double_conv.1} parent=0 // loop_footer
    %s17 = sadd.s32 1, %s13
  $region7: #{double_conv.1} parent=0 // loop_footer_branch
    %12 = sbr.rel target = $region3
  $region8: #{double_conv.1} parent=0 // loop_exit
    _
  %6112 = vsyncmov [#allocation4]
  %s6113 = vpop.sfrf %6112
  %p6114 = scmp.eq.s32.totalorder %s6113, 0
  %p6115 = pneg %p6114
  %6117 = shalt.err (%p6115)

</llo_original>
